<compile_context>
chip_gen: v6e
topology: v6e:2x2x1
jax: 0.10.0
libtpu: 0.0.40
codegen_flags: <defaults>
</compile_context>

<pallas_src>
import math

import jax
import jax.numpy as jnp
import numpy as np
from jax.experimental import pallas as pl
from jax.experimental.pallas import tpu as pltpu

# The PyTorch module explicitly constructs BatchNorm2d(..., eps=1.001e-05).
BN_EPS = 1.001e-05


# ---------------------------------------------------------------------------
# Host-side preparation (runs once, outside jit): banded / fused weights.
# ---------------------------------------------------------------------------
def _banded_group(branch_ws, dil, W, Ph):
    """Fuse a list of same-dilation conv weights (K,K,Cin,oc) into per-row
    "banded" matmul weights for the lane-dense (w, channel) layout.

    Returns (rows, B):
      rows : sorted tuple of sublane offsets into the H-padded activation.
      B    : f32 (len(rows), W*Cin, W*Cg), Cg = sum of branch out-channels.
             B[r, w_in*Cin+ci, w_out*Cg+off_b+co] accumulates wt_b[kh,kw,ci,co]
             for taps landing on padded row r / input column w_in.  Taps whose
             w_in falls outside [0, W) are omitted, which implements the 'same'
             zero padding along W; the H padding is a zeroed halo in VMEM.
    """
    Cin = int(branch_ws[0].shape[2])
    ocs = [int(bw.shape[3]) for bw in branch_ws]
    Cg = int(sum(ocs))
    row_set = set()
    for bw in branch_ws:
        K = int(bw.shape[0])
        left = dil * (K - 1) // 2
        for kh in range(K):
            row_set.add(Ph + kh * dil - left)
    rows = tuple(sorted(row_set))
    ridx = {r: i for i, r in enumerate(rows)}
    B = np.zeros((len(rows), W * Cin, W * Cg), np.float32)
    off = 0
    for bw, oc in zip(branch_ws, ocs):
        K = int(bw.shape[0])
        left = dil * (K - 1) // 2
        for kh in range(K):
            r = ridx[Ph + kh * dil - left]
            for kw in range(K):
                for wo in range(W):
                    wi = wo + kw * dil - left
                    if 0 <= wi < W:
                        B[r, wi * Cin:(wi + 1) * Cin,
                          wo * Cg + off: wo * Cg + off + oc] += bw[kh, kw]
        off += oc
    return rows, B


def _fold_matrix(C, W):
    """(W*C, C) f32 with fold[w*C+c, c'] = (c == c'): folds the lane-tiled
    (w, c) axis down to per-channel sums for the BatchNorm statistics."""
    return np.tile(np.eye(C, dtype=np.float32), (W, 1))


def prepare_multiscale_params(params, kernel_sizes, dil_rates, W):
    """Build all fused kernel operands ONCE on the host (hoisted out of jit)."""
    w0, g0, b0 = [np.asarray(a, np.float32) for a in params["b0"]]
    w5, g5, b5 = [np.asarray(a, np.float32) for a in params["b5"]]
    Cin, C0 = int(w0.shape[2]), int(w0.shape[3])
    oc = int(w5.shape[3])

    branches = []
    for i in range(4):
        wb, gb, bb = [np.asarray(a, np.float32) for a in params[f"b{i + 1}"]]
        branches.append((wb, gb, bb, int(kernel_sizes[i]), int(dil_rates[i])))
    assert all(int(b[0].shape[2]) == C0 for b in branches), \
        "isDense forward requires branch in_channels == 4*out_channels"
    ocs = [int(b[0].shape[3]) for b in branches]
    cat_offsets = np.cumsum([0] + ocs)[:4]
    assert int(w5.shape[2]) == int(sum(ocs))

    # conv_block_0 (1x1): block-diagonal banded weight, no halo needed.
    _, B0 = _banded_group([w0], 1, W, 0)
    B0 = B0[0]

    # conv_block_1..4 fused, grouped by dilation rate (cuts the structural-zero
    # MXU work of a single all-tap union).
    Ph = max(d * (k - 1) // 2 for (_, _, _, k, d) in branches)
    group_dils = []
    for (_, _, _, _, d) in branches:
        if d not in group_dils:
            group_dils.append(d)

    kargs = [jnp.asarray(B0, jnp.bfloat16),
             jnp.asarray(g0.reshape(1, C0)),
             jnp.asarray(b0.reshape(1, C0)),
             jnp.asarray(_fold_matrix(C0, W))]
    groups_meta = []
    for d in group_dils:
        idxs = [i for i in range(4) if branches[i][4] == d]
        bws = [branches[i][0] for i in idxs]
        rows, Bg = _banded_group(bws, d, W, Ph)
        Cg = int(sum(ocs[i] for i in idxs))
        gcat = np.concatenate([branches[i][1] for i in idxs])
        bcat = np.concatenate([branches[i][2] for i in idxs])
        # conv_block_5 consumes the branch concat; the concat is internal, so we
        # keep it split per dilation group and slice conv5's input channels to
        # match -- no lane re-interleave is needed anywhere.
        cat_idx = np.concatenate(
            [np.arange(int(cat_offsets[i]), int(cat_offsets[i]) + ocs[i]) for i in idxs])
        _, B5g = _banded_group([w5[:, :, cat_idx, :]], 1, W, 1)   # rows == (0, 1, 2)
        kargs += [jnp.asarray(Bg, jnp.bfloat16),
                  jnp.asarray(B5g, jnp.bfloat16),
                  jnp.asarray(gcat.reshape(1, Cg)),
                  jnp.asarray(bcat.reshape(1, Cg)),
                  jnp.asarray(_fold_matrix(Cg, W))]
        groups_meta.append(dict(rows=tuple(int(r) for r in rows), Cg=Cg))
    kargs += [jnp.asarray(g5.reshape(1, oc)),
              jnp.asarray(b5.reshape(1, oc)),
              jnp.asarray(_fold_matrix(oc, W))]

    meta = dict(W=int(W), Cin=Cin, C0=C0, oc=oc, Ph=int(Ph), groups=groups_meta)
    return tuple(kargs), meta


# ---------------------------------------------------------------------------
# Fused Pallas kernel + forward builder.
# ---------------------------------------------------------------------------
def build_forward(meta):
    W = meta["W"]
    Cin, C0, oc, Ph = meta["Cin"], meta["C0"], meta["oc"], meta["Ph"]
    groups = meta["groups"]
    G = len(groups)
    WC0 = W * C0

    def kernel(*refs):
        # ---- unpack (order fixed by prepare_multiscale_params) ----
        x_ref, w0_ref, g0_ref, b0_ref, f0_ref = refs[:5]
        pos = 5
        grefs = []
        for _ in range(G):
            grefs.append(refs[pos:pos + 5])          # (Bg, B5g, gcat, bcat, foldg)
            pos += 5
        g5_ref, b5_ref, f5_ref = refs[pos:pos + 3]
        pos += 3
        o_ref = refs[pos]
        pad0_ref = refs[pos + 1]
        padcat_refs = refs[pos + 2:pos + 2 + G]

        N = pad0_ref.shape[0]
        H = pad0_ref.shape[1] - 2 * Ph
        NH = x_ref.shape[0]
        inv_m = 1.0 / float(NH * W)                  # 1 / (N*H*W)

        def bn_relu(acc, fold_ref, gamma_ref, beta_ref):
            # BatchNorm2d (training-mode batch stats, eps=1.001e-5) + ReLU on a
            # lane-tiled (rows, w*C+c) f32 accumulator.
            fold = fold_ref[...]                                      # (W*C, C) f32
            fsum = jnp.dot(acc, fold, preferred_element_type=jnp.float32)
            fsq = jnp.dot(acc * acc, fold, preferred_element_type=jnp.float32)
            mean = jnp.sum(fsum, axis=0, keepdims=True) * inv_m       # (1, C)
            msq = jnp.sum(fsq, axis=0, keepdims=True) * inv_m
            var = jnp.maximum(msq - mean * mean, 0.0)
            inv = jax.lax.rsqrt(var + BN_EPS)
            scale_c = gamma_ref[...] * inv
            shift_c = beta_ref[...] - mean * scale_c
            scale = jnp.concatenate([scale_c] * W, axis=1)            # (1, W*C)
            shift = jnp.concatenate([shift_c] * W, axis=1)
            return jnp.maximum(acc * scale + shift, 0.0)

        # ---- conv_block_0: 1x1 conv (block-diag banded weight) + BN + ReLU ----
        xb = x_ref[...].astype(jnp.bfloat16)
        acc0 = jnp.dot(xb, w0_ref[...], preferred_element_type=jnp.float32)
        y0 = bn_relu(acc0, f0_ref, g0_ref, b0_ref)                    # (NH, W*C0) f32

        # Stage conv0 in an H-halo VMEM scratch: 'same' padding along H is the
        # zeroed halo; along W it is already folded into the banded weights.
        if Ph > 0:
            zeros_h = jnp.zeros((N, Ph, WC0), jnp.float32)
            pad0_ref[:, :Ph, :] = zeros_h
            pad0_ref[:, Ph + H:, :] = zeros_h
        pad0_ref[:, Ph:Ph + H, :] = y0.reshape(N, H, WC0)

        # ---- conv_block_1..4: fused per dilation group, + BN + ReLU ----
        for g in range(G):
            wg_ref, _, gcat_ref, bcat_ref, fg_ref = grefs[g]
            rows = groups[g]["rows"]
            WCg = W * groups[g]["Cg"]
            acc = None
            for r, oh in enumerate(rows):
                slab = pad0_ref[:, oh:oh + H, :].reshape(NH, WC0).astype(jnp.bfloat16)
                part = jnp.dot(slab, wg_ref[r], preferred_element_type=jnp.float32)
                acc = part if acc is None else acc + part
            ycat = bn_relu(acc, fg_ref, gcat_ref, bcat_ref)
            pc = padcat_refs[g]
            zrow = jnp.zeros((N, 1, WCg), jnp.float32)
            pc[:, :1, :] = zrow
            pc[:, 1 + H:, :] = zrow
            pc[:, 1:1 + H, :] = ycat.reshape(N, H, WCg)

        # ---- conv_block_5: 3x3 conv over the (group-split) concat + BN + ReLU ----
        acc5 = None
        for g in range(G):
            w5g_ref = grefs[g][1]
            WCg = W * groups[g]["Cg"]
            for r in range(3):
                slab = padcat_refs[g][:, r:r + H, :].reshape(NH, WCg).astype(jnp.bfloat16)
                part = jnp.dot(slab, w5g_ref[r], preferred_element_type=jnp.float32)
                acc5 = part if acc5 is None else acc5 + part
        y5 = bn_relu(acc5, f5_ref, g5_ref, b5_ref)
        # Lane-dense output store: (N*H, W*out_ch) -> full-width unmasked vst.
        o_ref[...] = y5.astype(o_ref.dtype)

    def forward(x_nchw, kargs):
        N, Cx, Hx, Wx = x_nchw.shape
        assert Cx == Cin and Wx == W, "input shape does not match prepared weights"
        # NCHW -> lane-dense (N*H, W*Cin); layout only, once at the boundary.
        x_nhwc = jnp.transpose(x_nchw, (0, 2, 3, 1))
        x2d = x_nhwc.reshape(N * Hx, Wx * Cin)

        vmem = pl.BlockSpec(memory_space=pltpu.MemorySpace.VMEM)
        scratch = [pltpu.VMEM((N, Hx + 2 * Ph, WC0), jnp.float32)]
        scratch += [pltpu.VMEM((N, Hx + 2, Wx * g["Cg"]), jnp.float32) for g in groups]

        o2d = pl.pallas_call(
            kernel,
            out_shape=jax.ShapeDtypeStruct((N * Hx, Wx * oc), x_nchw.dtype),
            in_specs=[vmem] * (1 + len(kargs)),
            out_specs=vmem,
            scratch_shapes=scratch,
            compiler_params=pltpu.CompilerParams(vmem_limit_bytes=32 * 1024 * 1024),
        )(x2d, *kargs)

        conv5_nchw = jnp.transpose(o2d.reshape(N, Hx, Wx, oc), (0, 3, 1, 2))
        # output_map = cat([input, conv5], channel axis) in NCHW.
        return jnp.concatenate([x_nchw, conv5_nchw], axis=1)

    return forward


# ---------------------------------------------------------------------------
# Plain-XLA f32 reference (for an end-to-end check of the fused kernel).
# ---------------------------------------------------------------------------
def _ref_conv_bn_relu(x_nhwc, w, gamma, beta, d):
    k = int(w.shape[0])
    left = d * (k - 1) // 2
    xp = jnp.pad(x_nhwc, ((0, 0), (left, left), (left, left), (0, 0)))
    y = jax.lax.conv_general_dilated(
        xp, w, window_strides=(1, 1), padding="VALID", rhs_dilation=(d, d),
        dimension_numbers=("NHWC", "HWIO", "NHWC"))
    mean = jnp.mean(y, axis=(0, 1, 2))
    var = jnp.mean(jnp.square(y - mean), axis=(0, 1, 2))
    y = (y - mean) * jax.lax.rsqrt(var + BN_EPS) * gamma + beta
    return jnp.maximum(y, 0.0)


def reference_forward(x_nchw, params, kernel_sizes, dil_rates):
    del kernel_sizes  # encoded in the weight shapes
    x = jnp.transpose(x_nchw, (0, 2, 3, 1))
    w0, g0, b0 = params["b0"]
    c0 = _ref_conv_bn_relu(x, w0, g0, b0, 1)
    outs = []
    for i in range(4):
        wb, gb, bb = params[f"b{i + 1}"]
        outs.append(_ref_conv_bn_relu(c0, wb, gb, bb, int(dil_rates[i])))
    cat = jnp.concatenate(outs, axis=-1)
    w5, g5, b5 = params["b5"]
    c5 = _ref_conv_bn_relu(cat, w5, g5, b5, 1)
    return jnp.concatenate([x_nchw, jnp.transpose(c5, (0, 3, 1, 2))], axis=1)


def make_block_params(key, kh, kw, cin, cout):
    """Xavier-uniform conv weight (torch init for actv='relu'); BN gamma=1, beta=0."""
    fan_in = cin * kh * kw
    fan_out = cout * kh * kw
    bound = math.sqrt(6.0 / (fan_in + fan_out))
    w = jax.random.uniform(key, (kh, kw, cin, cout), jnp.float32, -bound, bound)
    return w, jnp.ones((cout,), jnp.float32), jnp.zeros((cout,), jnp.float32)


if __name__ == "__main__":
    # The module's forward (isDense=True) requires in_channels == 4*out_channels.
    N, H, W = 2, 16, 16
    out_ch = 8
    in_ch = 4 * out_ch  # 32
    kernel_sizes = (3, 3, 5, 5)
    dil_rates = (1, 2, 1, 2)

    key = jax.random.PRNGKey(0)
    keys = jax.random.split(key, 8)
    x = jax.random.normal(keys[0], (N, in_ch, H, W), jnp.float32)

    params = {"b0": make_block_params(keys[1], 1, 1, in_ch, 4 * out_ch)}
    for i in range(4):
        k = kernel_sizes[i]
        params[f"b{i + 1}"] = make_block_params(keys[2 + i], k, k, 4 * out_ch, out_ch)
    params["b5"] = make_block_params(keys[6], 3, 3, 4 * out_ch, out_ch)

    # Host-side weight fusion (hoisted out of jit), then the jitted forward.
    kargs, meta = prepare_multiscale_params(params, kernel_sizes, dil_rates, W)
    fwd = jax.jit(build_forward(meta))
    out = jax.block_until_ready(fwd(x, kargs))
    assert out.shape == (N, in_ch + out_ch, H, W), out.shape
    assert out.dtype == jnp.float32

    # End-to-end check against a plain-XLA f32 reference (the kernel uses bf16
    # MXU operands, so allow a generous tolerance vs O(1) post-BN activations).
    ref = jax.block_until_ready(reference_forward(x, params, kernel_sizes, dil_rates))
    err = float(jnp.max(jnp.abs(out - ref)))
    assert err < 2e-1, f"kernel vs reference max abs err = {err}"
    print("KERNEL_OK")
</pallas_src>

<mosaic_0001>
module attributes {stable_mosaic.version = 11 : i64} {
  func.func @kernel(%arg0: memref<32x512xf32, #tpu.memory_space<vmem>>, %arg1: memref<512x512xbf16, #tpu.memory_space<vmem>>, %arg2: memref<1x32xf32, #tpu.memory_space<vmem>>, %arg3: memref<1x32xf32, #tpu.memory_space<vmem>>, %arg4: memref<512x32xf32, #tpu.memory_space<vmem>>, %arg5: memref<5x512x256xbf16, #tpu.memory_space<vmem>>, %arg6: memref<3x256x128xbf16, #tpu.memory_space<vmem>>, %arg7: memref<1x16xf32, #tpu.memory_space<vmem>>, %arg8: memref<1x16xf32, #tpu.memory_space<vmem>>, %arg9: memref<256x16xf32, #tpu.memory_space<vmem>>, %arg10: memref<5x512x256xbf16, #tpu.memory_space<vmem>>, %arg11: memref<3x256x128xbf16, #tpu.memory_space<vmem>>, %arg12: memref<1x16xf32, #tpu.memory_space<vmem>>, %arg13: memref<1x16xf32, #tpu.memory_space<vmem>>, %arg14: memref<256x16xf32, #tpu.memory_space<vmem>>, %arg15: memref<1x8xf32, #tpu.memory_space<vmem>>, %arg16: memref<1x8xf32, #tpu.memory_space<vmem>>, %arg17: memref<128x8xf32, #tpu.memory_space<vmem>>, %arg18: memref<32x128xf32, #tpu.memory_space<vmem>>, %arg19: memref<2x24x512xf32, #tpu.memory_space<vmem>>, %arg20: memref<2x18x256xf32, #tpu.memory_space<vmem>>, %arg21: memref<2x18x256xf32, #tpu.memory_space<vmem>>) attributes {dimension_semantics = [], scalar_prefetch = 0 : i64, scratch_operands = 3 : i64, tpu.core_type = #tpu.core_type<tc>} {
    %c0 = arith.constant 0 : index
    %c0_0 = arith.constant 0 : index
    %0 = vector.load %arg0[%c0, %c0_0] : memref<32x512xf32, #tpu.memory_space<vmem>>, vector<32x512xf32>
    %1 = arith.truncf %0 : vector<32x512xf32> to vector<32x512xbf16>
    %c0_1 = arith.constant 0 : index
    %c0_2 = arith.constant 0 : index
    %2 = vector.load %arg1[%c0_1, %c0_2] : memref<512x512xbf16, #tpu.memory_space<vmem>>, vector<512x512xbf16>
    %cst = arith.constant dense<0.000000e+00> : vector<32x512xf32>
    %3 = tpu.matmul %1, %2, %cst {dimension_numbers = #tpu.dot_dimension_numbers<[1], [0], [0], [1], [0, 0, 1, 1], [], []>} : vector<32x512xbf16>, vector<512x512xbf16>, vector<32x512xf32> -> vector<32x512xf32>
    %c0_3 = arith.constant 0 : index
    %c0_4 = arith.constant 0 : index
    %4 = vector.load %arg4[%c0_3, %c0_4] : memref<512x32xf32, #tpu.memory_space<vmem>>, vector<512x32xf32>
    %cst_5 = arith.constant dense<0.000000e+00> : vector<32x32xf32>
    %5 = tpu.matmul %3, %4, %cst_5 {dimension_numbers = #tpu.dot_dimension_numbers<[1], [0], [0], [1], [0, 0, 1, 1], [], []>} : vector<32x512xf32>, vector<512x32xf32>, vector<32x32xf32> -> vector<32x32xf32>
    %6 = arith.mulf %3, %3 : vector<32x512xf32>
    %cst_6 = arith.constant dense<0.000000e+00> : vector<32x32xf32>
    %7 = tpu.matmul %6, %4, %cst_6 {dimension_numbers = #tpu.dot_dimension_numbers<[1], [0], [0], [1], [0, 0, 1, 1], [], []>} : vector<32x512xf32>, vector<512x32xf32>, vector<32x32xf32> -> vector<32x32xf32>
    %cst_7 = arith.constant dense<0.000000e+00> : vector<32xf32>
    %8 = vector.multi_reduction <add>, %5, %cst_7 [0] : vector<32x32xf32> to vector<32xf32>
    %9 = vector.shape_cast %8 : vector<32xf32> to vector<1x32xf32>
    %cst_8 = arith.constant 0.001953125 : f32
    %10 = vector.broadcast %cst_8 : f32 to vector<1x32xf32>
    %11 = arith.mulf %9, %10 : vector<1x32xf32>
    %cst_9 = arith.constant dense<0.000000e+00> : vector<32xf32>
    %12 = vector.multi_reduction <add>, %7, %cst_9 [0] : vector<32x32xf32> to vector<32xf32>
    %13 = vector.shape_cast %12 : vector<32xf32> to vector<1x32xf32>
    %cst_10 = arith.constant 0.001953125 : f32
    %14 = vector.broadcast %cst_10 : f32 to vector<1x32xf32>
    %15 = arith.mulf %13, %14 : vector<1x32xf32>
    %16 = arith.mulf %11, %11 : vector<1x32xf32>
    %17 = arith.subf %15, %16 : vector<1x32xf32>
    %cst_11 = arith.constant 0.000000e+00 : f32
    %18 = vector.broadcast %cst_11 : f32 to vector<1x32xf32>
    %19 = arith.maximumf %17, %18 : vector<1x32xf32>
    %cst_12 = arith.constant 1.001000e-05 : f32
    %20 = vector.broadcast %cst_12 : f32 to vector<1x32xf32>
    %21 = arith.addf %19, %20 : vector<1x32xf32>
    %22 = math.rsqrt %21 : vector<1x32xf32>
    %c0_13 = arith.constant 0 : index
    %c0_14 = arith.constant 0 : index
    %23 = vector.load %arg2[%c0_13, %c0_14] : memref<1x32xf32, #tpu.memory_space<vmem>>, vector<1x32xf32>
    %24 = arith.mulf %23, %22 : vector<1x32xf32>
    %c0_15 = arith.constant 0 : index
    %c0_16 = arith.constant 0 : index
    %25 = vector.load %arg3[%c0_15, %c0_16] : memref<1x32xf32, #tpu.memory_space<vmem>>, vector<1x32xf32>
    %26 = arith.mulf %11, %24 : vector<1x32xf32>
    %27 = arith.subf %25, %26 : vector<1x32xf32>
    %28 = tpu.concatenate %24, %24, %24, %24, %24, %24, %24, %24, %24, %24, %24, %24, %24, %24, %24, %24 in 1 : vector<1x32xf32>, vector<1x32xf32>, vector<1x32xf32>, vector<1x32xf32>, vector<1x32xf32>, vector<1x32xf32>, vector<1x32xf32>, vector<1x32xf32>, vector<1x32xf32>, vector<1x32xf32>, vector<1x32xf32>, vector<1x32xf32>, vector<1x32xf32>, vector<1x32xf32>, vector<1x32xf32>, vector<1x32xf32> -> vector<1x512xf32>
    %29 = tpu.concatenate %27, %27, %27, %27, %27, %27, %27, %27, %27, %27, %27, %27, %27, %27, %27, %27 in 1 : vector<1x32xf32>, vector<1x32xf32>, vector<1x32xf32>, vector<1x32xf32>, vector<1x32xf32>, vector<1x32xf32>, vector<1x32xf32>, vector<1x32xf32>, vector<1x32xf32>, vector<1x32xf32>, vector<1x32xf32>, vector<1x32xf32>, vector<1x32xf32>, vector<1x32xf32>, vector<1x32xf32>, vector<1x32xf32> -> vector<1x512xf32>
    %30 = vector.broadcast %28 : vector<1x512xf32> to vector<32x512xf32>
    %31 = arith.mulf %3, %30 : vector<32x512xf32>
    %32 = vector.broadcast %29 : vector<1x512xf32> to vector<32x512xf32>
    %33 = arith.addf %31, %32 : vector<32x512xf32>
    %cst_17 = arith.constant 0.000000e+00 : f32
    %34 = vector.broadcast %cst_17 : f32 to vector<32x512xf32>
    %35 = arith.maximumf %33, %34 : vector<32x512xf32>
    %cst_18 = arith.constant 0.000000e+00 : f32
    %36 = vector.broadcast %cst_18 : f32 to vector<2x4x512xf32>
    %c0_19 = arith.constant 0 : index
    %c0_20 = arith.constant 0 : index
    %c0_21 = arith.constant 0 : index
    %37 = vector.load %arg19[%c0_19, %c0_20, %c0_21] : memref<2x24x512xf32, #tpu.memory_space<vmem>>, vector<2x4x512xf32>
    tpu.vector_store %arg19[%c0_19, %c0_20, %c0_21], %36 {strides = array<i32>} : memref<2x24x512xf32, #tpu.memory_space<vmem>>, vector<2x4x512xf32>,
    %c0_22 = arith.constant 0 : index
    %c20 = arith.constant 20 : index
    %c0_23 = arith.constant 0 : index
    %38 = vector.load %arg19[%c0_22, %c20, %c0_23] : memref<2x24x512xf32, #tpu.memory_space<vmem>>, vector<2x4x512xf32>
    tpu.vector_store %arg19[%c0_22, %c20, %c0_23], %36 {strides = array<i32>} : memref<2x24x512xf32, #tpu.memory_space<vmem>>, vector<2x4x512xf32>,
    %39 = vector.shape_cast %35 : vector<32x512xf32> to vector<2x16x512xf32>
    %c0_24 = arith.constant 0 : index
    %c4 = arith.constant 4 : index
    %c0_25 = arith.constant 0 : index
    %40 = vector.load %arg19[%c0_24, %c4, %c0_25] : memref<2x24x512xf32, #tpu.memory_space<vmem>>, vector<2x16x512xf32>
    tpu.vector_store %arg19[%c0_24, %c4, %c0_25], %39 {strides = array<i32>} : memref<2x24x512xf32, #tpu.memory_space<vmem>>, vector<2x16x512xf32>,
    %c0_26 = arith.constant 0 : index
    %c2 = arith.constant 2 : index
    %c0_27 = arith.constant 0 : index
    %41 = vector.load %arg19[%c0_26, %c2, %c0_27] : memref<2x24x512xf32, #tpu.memory_space<vmem>>, vector<2x16x512xf32>
    %42 = vector.shape_cast %41 : vector<2x16x512xf32> to vector<32x512xf32>
    %43 = arith.truncf %42 : vector<32x512xf32> to vector<32x512xbf16>
    %c0_28 = arith.constant 0 : index
    %c0_29 = arith.constant 0 : index
    %c0_30 = arith.constant 0 : index
    %44 = vector.load %arg5[%c0_28, %c0_29, %c0_30] : memref<5x512x256xbf16, #tpu.memory_space<vmem>>, vector<1x512x256xbf16>
    %45 = vector.shape_cast %44 : vector<1x512x256xbf16> to vector<512x256xbf16>
    %cst_31 = arith.constant dense<0.000000e+00> : vector<32x256xf32>
    %46 = tpu.matmul %43, %45, %cst_31 {dimension_numbers = #tpu.dot_dimension_numbers<[1], [0], [0], [1], [0, 0, 1, 1], [], []>} : vector<32x512xbf16>, vector<512x256xbf16>, vector<32x256xf32> -> vector<32x256xf32>
    %c0_32 = arith.constant 0 : index
    %c3 = arith.constant 3 : index
    %c0_33 = arith.constant 0 : index
    %47 = vector.load %arg19[%c0_32, %c3, %c0_33] : memref<2x24x512xf32, #tpu.memory_space<vmem>>, vector<2x16x512xf32>
    %48 = vector.shape_cast %47 : vector<2x16x512xf32> to vector<32x512xf32>
    %49 = arith.truncf %48 : vector<32x512xf32> to vector<32x512xbf16>
    %c1 = arith.constant 1 : index
    %c0_34 = arith.constant 0 : index
    %c0_35 = arith.constant 0 : index
    %50 = vector.load %arg5[%c1, %c0_34, %c0_35] : memref<5x512x256xbf16, #tpu.memory_space<vmem>>, vector<1x512x256xbf16>
    %51 = vector.shape_cast %50 : vector<1x512x256xbf16> to vector<512x256xbf16>
    %cst_36 = arith.constant dense<0.000000e+00> : vector<32x256xf32>
    %52 = tpu.matmul %49, %51, %cst_36 {dimension_numbers = #tpu.dot_dimension_numbers<[1], [0], [0], [1], [0, 0, 1, 1], [], []>} : vector<32x512xbf16>, vector<512x256xbf16>, vector<32x256xf32> -> vector<32x256xf32>
    %53 = arith.addf %46, %52 : vector<32x256xf32>
    %c0_37 = arith.constant 0 : index
    %c4_38 = arith.constant 4 : index
    %c0_39 = arith.constant 0 : index
    %54 = vector.load %arg19[%c0_37, %c4_38, %c0_39] : memref<2x24x512xf32, #tpu.memory_space<vmem>>, vector<2x16x512xf32>
    %55 = vector.shape_cast %54 : vector<2x16x512xf32> to vector<32x512xf32>
    %56 = arith.truncf %55 : vector<32x512xf32> to vector<32x512xbf16>
    %c2_40 = arith.constant 2 : index
    %c0_41 = arith.constant 0 : index
    %c0_42 = arith.constant 0 : index
    %57 = vector.load %arg5[%c2_40, %c0_41, %c0_42] : memref<5x512x256xbf16, #tpu.memory_space<vmem>>, vector<1x512x256xbf16>
    %58 = vector.shape_cast %57 : vector<1x512x256xbf16> to vector<512x256xbf16>
    %cst_43 = arith.constant dense<0.000000e+00> : vector<32x256xf32>
    %59 = tpu.matmul %56, %58, %cst_43 {dimension_numbers = #tpu.dot_dimension_numbers<[1], [0], [0], [1], [0, 0, 1, 1], [], []>} : vector<32x512xbf16>, vector<512x256xbf16>, vector<32x256xf32> -> vector<32x256xf32>
    %60 = arith.addf %53, %59 : vector<32x256xf32>
    %c0_44 = arith.constant 0 : index
    %c5 = arith.constant 5 : index
    %c0_45 = arith.constant 0 : index
    %61 = vector.load %arg19[%c0_44, %c5, %c0_45] : memref<2x24x512xf32, #tpu.memory_space<vmem>>, vector<2x16x512xf32>
    %62 = vector.shape_cast %61 : vector<2x16x512xf32> to vector<32x512xf32>
    %63 = arith.truncf %62 : vector<32x512xf32> to vector<32x512xbf16>
    %c3_46 = arith.constant 3 : index
    %c0_47 = arith.constant 0 : index
    %c0_48 = arith.constant 0 : index
    %64 = vector.load %arg5[%c3_46, %c0_47, %c0_48] : memref<5x512x256xbf16, #tpu.memory_space<vmem>>, vector<1x512x256xbf16>
    %65 = vector.shape_cast %64 : vector<1x512x256xbf16> to vector<512x256xbf16>
    %cst_49 = arith.constant dense<0.000000e+00> : vector<32x256xf32>
    %66 = tpu.matmul %63, %65, %cst_49 {dimension_numbers = #tpu.dot_dimension_numbers<[1], [0], [0], [1], [0, 0, 1, 1], [], []>} : vector<32x512xbf16>, vector<512x256xbf16>, vector<32x256xf32> -> vector<32x256xf32>
    %67 = arith.addf %60, %66 : vector<32x256xf32>
    %c0_50 = arith.constant 0 : index
    %c6 = arith.constant 6 : index
    %c0_51 = arith.constant 0 : index
    %68 = vector.load %arg19[%c0_50, %c6, %c0_51] : memref<2x24x512xf32, #tpu.memory_space<vmem>>, vector<2x16x512xf32>
    %69 = vector.shape_cast %68 : vector<2x16x512xf32> to vector<32x512xf32>
    %70 = arith.truncf %69 : vector<32x512xf32> to vector<32x512xbf16>
    %c4_52 = arith.constant 4 : index
    %c0_53 = arith.constant 0 : index
    %c0_54 = arith.constant 0 : index
    %71 = vector.load %arg5[%c4_52, %c0_53, %c0_54] : memref<5x512x256xbf16, #tpu.memory_space<vmem>>, vector<1x512x256xbf16>
    %72 = vector.shape_cast %71 : vector<1x512x256xbf16> to vector<512x256xbf16>
    %cst_55 = arith.constant dense<0.000000e+00> : vector<32x256xf32>
    %73 = tpu.matmul %70, %72, %cst_55 {dimension_numbers = #tpu.dot_dimension_numbers<[1], [0], [0], [1], [0, 0, 1, 1], [], []>} : vector<32x512xbf16>, vector<512x256xbf16>, vector<32x256xf32> -> vector<32x256xf32>
    %74 = arith.addf %67, %73 : vector<32x256xf32>
    %c0_56 = arith.constant 0 : index
    %c0_57 = arith.constant 0 : index
    %75 = vector.load %arg9[%c0_56, %c0_57] : memref<256x16xf32, #tpu.memory_space<vmem>>, vector<256x16xf32>
    %cst_58 = arith.constant dense<0.000000e+00> : vector<32x16xf32>
    %76 = tpu.matmul %74, %75, %cst_58 {dimension_numbers = #tpu.dot_dimension_numbers<[1], [0], [0], [1], [0, 0, 1, 1], [], []>} : vector<32x256xf32>, vector<256x16xf32>, vector<32x16xf32> -> vector<32x16xf32>
    %77 = arith.mulf %74, %74 : vector<32x256xf32>
    %cst_59 = arith.constant dense<0.000000e+00> : vector<32x16xf32>
    %78 = tpu.matmul %77, %75, %cst_59 {dimension_numbers = #tpu.dot_dimension_numbers<[1], [0], [0], [1], [0, 0, 1, 1], [], []>} : vector<32x256xf32>, vector<256x16xf32>, vector<32x16xf32> -> vector<32x16xf32>
    %cst_60 = arith.constant dense<0.000000e+00> : vector<16xf32>
    %79 = vector.multi_reduction <add>, %76, %cst_60 [0] : vector<32x16xf32> to vector<16xf32>
    %80 = vector.shape_cast %79 : vector<16xf32> to vector<1x16xf32>
    %cst_61 = arith.constant 0.001953125 : f32
    %81 = vector.broadcast %cst_61 : f32 to vector<1x16xf32>
    %82 = arith.mulf %80, %81 : vector<1x16xf32>
    %cst_62 = arith.constant dense<0.000000e+00> : vector<16xf32>
    %83 = vector.multi_reduction <add>, %78, %cst_62 [0] : vector<32x16xf32> to vector<16xf32>
    %84 = vector.shape_cast %83 : vector<16xf32> to vector<1x16xf32>
    %cst_63 = arith.constant 0.001953125 : f32
    %85 = vector.broadcast %cst_63 : f32 to vector<1x16xf32>
    %86 = arith.mulf %84, %85 : vector<1x16xf32>
    %87 = arith.mulf %82, %82 : vector<1x16xf32>
    %88 = arith.subf %86, %87 : vector<1x16xf32>
    %cst_64 = arith.constant 0.000000e+00 : f32
    %89 = vector.broadcast %cst_64 : f32 to vector<1x16xf32>
    %90 = arith.maximumf %88, %89 : vector<1x16xf32>
    %cst_65 = arith.constant 1.001000e-05 : f32
    %91 = vector.broadcast %cst_65 : f32 to vector<1x16xf32>
    %92 = arith.addf %90, %91 : vector<1x16xf32>
    %93 = math.rsqrt %92 : vector<1x16xf32>
    %c0_66 = arith.constant 0 : index
    %c0_67 = arith.constant 0 : index
    %94 = vector.load %arg7[%c0_66, %c0_67] : memref<1x16xf32, #tpu.memory_space<vmem>>, vector<1x16xf32>
    %95 = arith.mulf %94, %93 : vector<1x16xf32>
    %c0_68 = arith.constant 0 : index
    %c0_69 = arith.constant 0 : index
    %96 = vector.load %arg8[%c0_68, %c0_69] : memref<1x16xf32, #tpu.memory_space<vmem>>, vector<1x16xf32>
    %97 = arith.mulf %82, %95 : vector<1x16xf32>
    %98 = arith.subf %96, %97 : vector<1x16xf32>
    %99 = tpu.concatenate %95, %95, %95, %95, %95, %95, %95, %95, %95, %95, %95, %95, %95, %95, %95, %95 in 1 : vector<1x16xf32>, vector<1x16xf32>, vector<1x16xf32>, vector<1x16xf32>, vector<1x16xf32>, vector<1x16xf32>, vector<1x16xf32>, vector<1x16xf32>, vector<1x16xf32>, vector<1x16xf32>, vector<1x16xf32>, vector<1x16xf32>, vector<1x16xf32>, vector<1x16xf32>, vector<1x16xf32>, vector<1x16xf32> -> vector<1x256xf32>
    %100 = tpu.concatenate %98, %98, %98, %98, %98, %98, %98, %98, %98, %98, %98, %98, %98, %98, %98, %98 in 1 : vector<1x16xf32>, vector<1x16xf32>, vector<1x16xf32>, vector<1x16xf32>, vector<1x16xf32>, vector<1x16xf32>, vector<1x16xf32>, vector<1x16xf32>, vector<1x16xf32>, vector<1x16xf32>, vector<1x16xf32>, vector<1x16xf32>, vector<1x16xf32>, vector<1x16xf32>, vector<1x16xf32>, vector<1x16xf32> -> vector<1x256xf32>
    %101 = vector.broadcast %99 : vector<1x256xf32> to vector<32x256xf32>
    %102 = arith.mulf %74, %101 : vector<32x256xf32>
    %103 = vector.broadcast %100 : vector<1x256xf32> to vector<32x256xf32>
    %104 = arith.addf %102, %103 : vector<32x256xf32>
    %cst_70 = arith.constant 0.000000e+00 : f32
    %105 = vector.broadcast %cst_70 : f32 to vector<32x256xf32>
    %106 = arith.maximumf %104, %105 : vector<32x256xf32>
    %cst_71 = arith.constant 0.000000e+00 : f32
    %107 = vector.broadcast %cst_71 : f32 to vector<2x1x256xf32>
    %c0_72 = arith.constant 0 : index
    %c0_73 = arith.constant 0 : index
    %c0_74 = arith.constant 0 : index
    %108 = vector.load %arg20[%c0_72, %c0_73, %c0_74] : memref<2x18x256xf32, #tpu.memory_space<vmem>>, vector<2x1x256xf32>
    tpu.vector_store %arg20[%c0_72, %c0_73, %c0_74], %107 {strides = array<i32>} : memref<2x18x256xf32, #tpu.memory_space<vmem>>, vector<2x1x256xf32>,
    %c0_75 = arith.constant 0 : index
    %c17 = arith.constant 17 : index
    %c0_76 = arith.constant 0 : index
    %109 = vector.load %arg20[%c0_75, %c17, %c0_76] : memref<2x18x256xf32, #tpu.memory_space<vmem>>, vector<2x1x256xf32>
    tpu.vector_store %arg20[%c0_75, %c17, %c0_76], %107 {strides = array<i32>} : memref<2x18x256xf32, #tpu.memory_space<vmem>>, vector<2x1x256xf32>,
    %110 = vector.shape_cast %106 : vector<32x256xf32> to vector<2x16x256xf32>
    %c0_77 = arith.constant 0 : index
    %c1_78 = arith.constant 1 : index
    %c0_79 = arith.constant 0 : index
    %111 = vector.load %arg20[%c0_77, %c1_78, %c0_79] : memref<2x18x256xf32, #tpu.memory_space<vmem>>, vector<2x16x256xf32>
    tpu.vector_store %arg20[%c0_77, %c1_78, %c0_79], %110 {strides = array<i32>} : memref<2x18x256xf32, #tpu.memory_space<vmem>>, vector<2x16x256xf32>,
    %c0_80 = arith.constant 0 : index
    %c0_81 = arith.constant 0 : index
    %c0_82 = arith.constant 0 : index
    %112 = vector.load %arg19[%c0_80, %c0_81, %c0_82] : memref<2x24x512xf32, #tpu.memory_space<vmem>>, vector<2x16x512xf32>
    %113 = vector.shape_cast %112 : vector<2x16x512xf32> to vector<32x512xf32>
    %114 = arith.truncf %113 : vector<32x512xf32> to vector<32x512xbf16>
    %c0_83 = arith.constant 0 : index
    %c0_84 = arith.constant 0 : index
    %c0_85 = arith.constant 0 : index
    %115 = vector.load %arg10[%c0_83, %c0_84, %c0_85] : memref<5x512x256xbf16, #tpu.memory_space<vmem>>, vector<1x512x256xbf16>
    %116 = vector.shape_cast %115 : vector<1x512x256xbf16> to vector<512x256xbf16>
    %cst_86 = arith.constant dense<0.000000e+00> : vector<32x256xf32>
    %117 = tpu.matmul %114, %116, %cst_86 {dimension_numbers = #tpu.dot_dimension_numbers<[1], [0], [0], [1], [0, 0, 1, 1], [], []>} : vector<32x512xbf16>, vector<512x256xbf16>, vector<32x256xf32> -> vector<32x256xf32>
    %c0_87 = arith.constant 0 : index
    %c2_88 = arith.constant 2 : index
    %c0_89 = arith.constant 0 : index
    %118 = vector.load %arg19[%c0_87, %c2_88, %c0_89] : memref<2x24x512xf32, #tpu.memory_space<vmem>>, vector<2x16x512xf32>
    %119 = vector.shape_cast %118 : vector<2x16x512xf32> to vector<32x512xf32>
    %120 = arith.truncf %119 : vector<32x512xf32> to vector<32x512xbf16>
    %c1_90 = arith.constant 1 : index
    %c0_91 = arith.constant 0 : index
    %c0_92 = arith.constant 0 : index
    %121 = vector.load %arg10[%c1_90, %c0_91, %c0_92] : memref<5x512x256xbf16, #tpu.memory_space<vmem>>, vector<1x512x256xbf16>
    %122 = vector.shape_cast %121 : vector<1x512x256xbf16> to vector<512x256xbf16>
    %cst_93 = arith.constant dense<0.000000e+00> : vector<32x256xf32>
    %123 = tpu.matmul %120, %122, %cst_93 {dimension_numbers = #tpu.dot_dimension_numbers<[1], [0], [0], [1], [0, 0, 1, 1], [], []>} : vector<32x512xbf16>, vector<512x256xbf16>, vector<32x256xf32> -> vector<32x256xf32>
    %124 = arith.addf %117, %123 : vector<32x256xf32>
    %c0_94 = arith.constant 0 : index
    %c4_95 = arith.constant 4 : index
    %c0_96 = arith.constant 0 : index
    %125 = vector.load %arg19[%c0_94, %c4_95, %c0_96] : memref<2x24x512xf32, #tpu.memory_space<vmem>>, vector<2x16x512xf32>
    %126 = vector.shape_cast %125 : vector<2x16x512xf32> to vector<32x512xf32>
    %127 = arith.truncf %126 : vector<32x512xf32> to vector<32x512xbf16>
    %c2_97 = arith.constant 2 : index
    %c0_98 = arith.constant 0 : index
    %c0_99 = arith.constant 0 : index
    %128 = vector.load %arg10[%c2_97, %c0_98, %c0_99] : memref<5x512x256xbf16, #tpu.memory_space<vmem>>, vector<1x512x256xbf16>
    %129 = vector.shape_cast %128 : vector<1x512x256xbf16> to vector<512x256xbf16>
    %cst_100 = arith.constant dense<0.000000e+00> : vector<32x256xf32>
    %130 = tpu.matmul %127, %129, %cst_100 {dimension_numbers = #tpu.dot_dimension_numbers<[1], [0], [0], [1], [0, 0, 1, 1], [], []>} : vector<32x512xbf16>, vector<512x256xbf16>, vector<32x256xf32> -> vector<32x256xf32>
    %131 = arith.addf %124, %130 : vector<32x256xf32>
    %c0_101 = arith.constant 0 : index
    %c6_102 = arith.constant 6 : index
    %c0_103 = arith.constant 0 : index
    %132 = vector.load %arg19[%c0_101, %c6_102, %c0_103] : memref<2x24x512xf32, #tpu.memory_space<vmem>>, vector<2x16x512xf32>
    %133 = vector.shape_cast %132 : vector<2x16x512xf32> to vector<32x512xf32>
    %134 = arith.truncf %133 : vector<32x512xf32> to vector<32x512xbf16>
    %c3_104 = arith.constant 3 : index
    %c0_105 = arith.constant 0 : index
    %c0_106 = arith.constant 0 : index
    %135 = vector.load %arg10[%c3_104, %c0_105, %c0_106] : memref<5x512x256xbf16, #tpu.memory_space<vmem>>, vector<1x512x256xbf16>
    %136 = vector.shape_cast %135 : vector<1x512x256xbf16> to vector<512x256xbf16>
    %cst_107 = arith.constant dense<0.000000e+00> : vector<32x256xf32>
    %137 = tpu.matmul %134, %136, %cst_107 {dimension_numbers = #tpu.dot_dimension_numbers<[1], [0], [0], [1], [0, 0, 1, 1], [], []>} : vector<32x512xbf16>, vector<512x256xbf16>, vector<32x256xf32> -> vector<32x256xf32>
    %138 = arith.addf %131, %137 : vector<32x256xf32>
    %c0_108 = arith.constant 0 : index
    %c8 = arith.constant 8 : index
    %c0_109 = arith.constant 0 : index
    %139 = vector.load %arg19[%c0_108, %c8, %c0_109] : memref<2x24x512xf32, #tpu.memory_space<vmem>>, vector<2x16x512xf32>
    %140 = vector.shape_cast %139 : vector<2x16x512xf32> to vector<32x512xf32>
    %141 = arith.truncf %140 : vector<32x512xf32> to vector<32x512xbf16>
    %c4_110 = arith.constant 4 : index
    %c0_111 = arith.constant 0 : index
    %c0_112 = arith.constant 0 : index
    %142 = vector.load %arg10[%c4_110, %c0_111, %c0_112] : memref<5x512x256xbf16, #tpu.memory_space<vmem>>, vector<1x512x256xbf16>
    %143 = vector.shape_cast %142 : vector<1x512x256xbf16> to vector<512x256xbf16>
    %cst_113 = arith.constant dense<0.000000e+00> : vector<32x256xf32>
    %144 = tpu.matmul %141, %143, %cst_113 {dimension_numbers = #tpu.dot_dimension_numbers<[1], [0], [0], [1], [0, 0, 1, 1], [], []>} : vector<32x512xbf16>, vector<512x256xbf16>, vector<32x256xf32> -> vector<32x256xf32>
    %145 = arith.addf %138, %144 : vector<32x256xf32>
    %c0_114 = arith.constant 0 : index
    %c0_115 = arith.constant 0 : index
    %146 = vector.load %arg14[%c0_114, %c0_115] : memref<256x16xf32, #tpu.memory_space<vmem>>, vector<256x16xf32>
    %cst_116 = arith.constant dense<0.000000e+00> : vector<32x16xf32>
    %147 = tpu.matmul %145, %146, %cst_116 {dimension_numbers = #tpu.dot_dimension_numbers<[1], [0], [0], [1], [0, 0, 1, 1], [], []>} : vector<32x256xf32>, vector<256x16xf32>, vector<32x16xf32> -> vector<32x16xf32>
    %148 = arith.mulf %145, %145 : vector<32x256xf32>
    %cst_117 = arith.constant dense<0.000000e+00> : vector<32x16xf32>
    %149 = tpu.matmul %148, %146, %cst_117 {dimension_numbers = #tpu.dot_dimension_numbers<[1], [0], [0], [1], [0, 0, 1, 1], [], []>} : vector<32x256xf32>, vector<256x16xf32>, vector<32x16xf32> -> vector<32x16xf32>
    %cst_118 = arith.constant dense<0.000000e+00> : vector<16xf32>
    %150 = vector.multi_reduction <add>, %147, %cst_118 [0] : vector<32x16xf32> to vector<16xf32>
    %151 = vector.shape_cast %150 : vector<16xf32> to vector<1x16xf32>
    %cst_119 = arith.constant 0.001953125 : f32
    %152 = vector.broadcast %cst_119 : f32 to vector<1x16xf32>
    %153 = arith.mulf %151, %152 : vector<1x16xf32>
    %cst_120 = arith.constant dense<0.000000e+00> : vector<16xf32>
    %154 = vector.multi_reduction <add>, %149, %cst_120 [0] : vector<32x16xf32> to vector<16xf32>
    %155 = vector.shape_cast %154 : vector<16xf32> to vector<1x16xf32>
    %cst_121 = arith.constant 0.001953125 : f32
    %156 = vector.broadcast %cst_121 : f32 to vector<1x16xf32>
    %157 = arith.mulf %155, %156 : vector<1x16xf32>
    %158 = arith.mulf %153, %153 : vector<1x16xf32>
    %159 = arith.subf %157, %158 : vector<1x16xf32>
    %cst_122 = arith.constant 0.000000e+00 : f32
    %160 = vector.broadcast %cst_122 : f32 to vector<1x16xf32>
    %161 = arith.maximumf %159, %160 : vector<1x16xf32>
    %cst_123 = arith.constant 1.001000e-05 : f32
    %162 = vector.broadcast %cst_123 : f32 to vector<1x16xf32>
    %163 = arith.addf %161, %162 : vector<1x16xf32>
    %164 = math.rsqrt %163 : vector<1x16xf32>
    %c0_124 = arith.constant 0 : index
    %c0_125 = arith.constant 0 : index
    %165 = vector.load %arg12[%c0_124, %c0_125] : memref<1x16xf32, #tpu.memory_space<vmem>>, vector<1x16xf32>
    %166 = arith.mulf %165, %164 : vector<1x16xf32>
    %c0_126 = arith.constant 0 : index
    %c0_127 = arith.constant 0 : index
    %167 = vector.load %arg13[%c0_126, %c0_127] : memref<1x16xf32, #tpu.memory_space<vmem>>, vector<1x16xf32>
    %168 = arith.mulf %153, %166 : vector<1x16xf32>
    %169 = arith.subf %167, %168 : vector<1x16xf32>
    %170 = tpu.concatenate %166, %166, %166, %166, %166, %166, %166, %166, %166, %166, %166, %166, %166, %166, %166, %166 in 1 : vector<1x16xf32>, vector<1x16xf32>, vector<1x16xf32>, vector<1x16xf32>, vector<1x16xf32>, vector<1x16xf32>, vector<1x16xf32>, vector<1x16xf32>, vector<1x16xf32>, vector<1x16xf32>, vector<1x16xf32>, vector<1x16xf32>, vector<1x16xf32>, vector<1x16xf32>, vector<1x16xf32>, vector<1x16xf32> -> vector<1x256xf32>
    %171 = tpu.concatenate %169, %169, %169, %169, %169, %169, %169, %169, %169, %169, %169, %169, %169, %169, %169, %169 in 1 : vector<1x16xf32>, vector<1x16xf32>, vector<1x16xf32>, vector<1x16xf32>, vector<1x16xf32>, vector<1x16xf32>, vector<1x16xf32>, vector<1x16xf32>, vector<1x16xf32>, vector<1x16xf32>, vector<1x16xf32>, vector<1x16xf32>, vector<1x16xf32>, vector<1x16xf32>, vector<1x16xf32>, vector<1x16xf32> -> vector<1x256xf32>
    %172 = vector.broadcast %170 : vector<1x256xf32> to vector<32x256xf32>
    %173 = arith.mulf %145, %172 : vector<32x256xf32>
    %174 = vector.broadcast %171 : vector<1x256xf32> to vector<32x256xf32>
    %175 = arith.addf %173, %174 : vector<32x256xf32>
    %cst_128 = arith.constant 0.000000e+00 : f32
    %176 = vector.broadcast %cst_128 : f32 to vector<32x256xf32>
    %177 = arith.maximumf %175, %176 : vector<32x256xf32>
    %cst_129 = arith.constant 0.000000e+00 : f32
    %178 = vector.broadcast %cst_129 : f32 to vector<2x1x256xf32>
    %c0_130 = arith.constant 0 : index
    %c0_131 = arith.constant 0 : index
    %c0_132 = arith.constant 0 : index
    %179 = vector.load %arg21[%c0_130, %c0_131, %c0_132] : memref<2x18x256xf32, #tpu.memory_space<vmem>>, vector<2x1x256xf32>
    tpu.vector_store %arg21[%c0_130, %c0_131, %c0_132], %178 {strides = array<i32>} : memref<2x18x256xf32, #tpu.memory_space<vmem>>, vector<2x1x256xf32>,
    %c0_133 = arith.constant 0 : index
    %c17_134 = arith.constant 17 : index
    %c0_135 = arith.constant 0 : index
    %180 = vector.load %arg21[%c0_133, %c17_134, %c0_135] : memref<2x18x256xf32, #tpu.memory_space<vmem>>, vector<2x1x256xf32>
    tpu.vector_store %arg21[%c0_133, %c17_134, %c0_135], %178 {strides = array<i32>} : memref<2x18x256xf32, #tpu.memory_space<vmem>>, vector<2x1x256xf32>,
    %181 = vector.shape_cast %177 : vector<32x256xf32> to vector<2x16x256xf32>
    %c0_136 = arith.constant 0 : index
    %c1_137 = arith.constant 1 : index
    %c0_138 = arith.constant 0 : index
    %182 = vector.load %arg21[%c0_136, %c1_137, %c0_138] : memref<2x18x256xf32, #tpu.memory_space<vmem>>, vector<2x16x256xf32>
    tpu.vector_store %arg21[%c0_136, %c1_137, %c0_138], %181 {strides = array<i32>} : memref<2x18x256xf32, #tpu.memory_space<vmem>>, vector<2x16x256xf32>,
    %c0_139 = arith.constant 0 : index
    %c0_140 = arith.constant 0 : index
    %c0_141 = arith.constant 0 : index
    %183 = vector.load %arg20[%c0_139, %c0_140, %c0_141] : memref<2x18x256xf32, #tpu.memory_space<vmem>>, vector<2x16x256xf32>
    %184 = vector.shape_cast %183 : vector<2x16x256xf32> to vector<32x256xf32>
    %185 = arith.truncf %184 : vector<32x256xf32> to vector<32x256xbf16>
    %c0_142 = arith.constant 0 : index
    %c0_143 = arith.constant 0 : index
    %c0_144 = arith.constant 0 : index
    %186 = vector.load %arg6[%c0_142, %c0_143, %c0_144] : memref<3x256x128xbf16, #tpu.memory_space<vmem>>, vector<1x256x128xbf16>
    %187 = vector.shape_cast %186 : vector<1x256x128xbf16> to vector<256x128xbf16>
    %cst_145 = arith.constant dense<0.000000e+00> : vector<32x128xf32>
    %188 = tpu.matmul %185, %187, %cst_145 {dimension_numbers = #tpu.dot_dimension_numbers<[1], [0], [0], [1], [0, 0, 1, 1], [], []>} : vector<32x256xbf16>, vector<256x128xbf16>, vector<32x128xf32> -> vector<32x128xf32>
    %c0_146 = arith.constant 0 : index
    %c1_147 = arith.constant 1 : index
    %c0_148 = arith.constant 0 : index
    %189 = vector.load %arg20[%c0_146, %c1_147, %c0_148] : memref<2x18x256xf32, #tpu.memory_space<vmem>>, vector<2x16x256xf32>
    %190 = vector.shape_cast %189 : vector<2x16x256xf32> to vector<32x256xf32>
    %191 = arith.truncf %190 : vector<32x256xf32> to vector<32x256xbf16>
    %c1_149 = arith.constant 1 : index
    %c0_150 = arith.constant 0 : index
    %c0_151 = arith.constant 0 : index
    %192 = vector.load %arg6[%c1_149, %c0_150, %c0_151] : memref<3x256x128xbf16, #tpu.memory_space<vmem>>, vector<1x256x128xbf16>
    %193 = vector.shape_cast %192 : vector<1x256x128xbf16> to vector<256x128xbf16>
    %cst_152 = arith.constant dense<0.000000e+00> : vector<32x128xf32>
    %194 = tpu.matmul %191, %193, %cst_152 {dimension_numbers = #tpu.dot_dimension_numbers<[1], [0], [0], [1], [0, 0, 1, 1], [], []>} : vector<32x256xbf16>, vector<256x128xbf16>, vector<32x128xf32> -> vector<32x128xf32>
    %195 = arith.addf %188, %194 : vector<32x128xf32>
    %c0_153 = arith.constant 0 : index
    %c2_154 = arith.constant 2 : index
    %c0_155 = arith.constant 0 : index
    %196 = vector.load %arg20[%c0_153, %c2_154, %c0_155] : memref<2x18x256xf32, #tpu.memory_space<vmem>>, vector<2x16x256xf32>
    %197 = vector.shape_cast %196 : vector<2x16x256xf32> to vector<32x256xf32>
    %198 = arith.truncf %197 : vector<32x256xf32> to vector<32x256xbf16>
    %c2_156 = arith.constant 2 : index
    %c0_157 = arith.constant 0 : index
    %c0_158 = arith.constant 0 : index
    %199 = vector.load %arg6[%c2_156, %c0_157, %c0_158] : memref<3x256x128xbf16, #tpu.memory_space<vmem>>, vector<1x256x128xbf16>
    %200 = vector.shape_cast %199 : vector<1x256x128xbf16> to vector<256x128xbf16>
    %cst_159 = arith.constant dense<0.000000e+00> : vector<32x128xf32>
    %201 = tpu.matmul %198, %200, %cst_159 {dimension_numbers = #tpu.dot_dimension_numbers<[1], [0], [0], [1], [0, 0, 1, 1], [], []>} : vector<32x256xbf16>, vector<256x128xbf16>, vector<32x128xf32> -> vector<32x128xf32>
    %202 = arith.addf %195, %201 : vector<32x128xf32>
    %c0_160 = arith.constant 0 : index
    %c0_161 = arith.constant 0 : index
    %c0_162 = arith.constant 0 : index
    %203 = vector.load %arg21[%c0_160, %c0_161, %c0_162] : memref<2x18x256xf32, #tpu.memory_space<vmem>>, vector<2x16x256xf32>
    %204 = vector.shape_cast %203 : vector<2x16x256xf32> to vector<32x256xf32>
    %205 = arith.truncf %204 : vector<32x256xf32> to vector<32x256xbf16>
    %c0_163 = arith.constant 0 : index
    %c0_164 = arith.constant 0 : index
    %c0_165 = arith.constant 0 : index
    %206 = vector.load %arg11[%c0_163, %c0_164, %c0_165] : memref<3x256x128xbf16, #tpu.memory_space<vmem>>, vector<1x256x128xbf16>
    %207 = vector.shape_cast %206 : vector<1x256x128xbf16> to vector<256x128xbf16>
    %cst_166 = arith.constant dense<0.000000e+00> : vector<32x128xf32>
    %208 = tpu.matmul %205, %207, %cst_166 {dimension_numbers = #tpu.dot_dimension_numbers<[1], [0], [0], [1], [0, 0, 1, 1], [], []>} : vector<32x256xbf16>, vector<256x128xbf16>, vector<32x128xf32> -> vector<32x128xf32>
    %209 = arith.addf %202, %208 : vector<32x128xf32>
    %c0_167 = arith.constant 0 : index
    %c1_168 = arith.constant 1 : index
    %c0_169 = arith.constant 0 : index
    %210 = vector.load %arg21[%c0_167, %c1_168, %c0_169] : memref<2x18x256xf32, #tpu.memory_space<vmem>>, vector<2x16x256xf32>
    %211 = vector.shape_cast %210 : vector<2x16x256xf32> to vector<32x256xf32>
    %212 = arith.truncf %211 : vector<32x256xf32> to vector<32x256xbf16>
    %c1_170 = arith.constant 1 : index
    %c0_171 = arith.constant 0 : index
    %c0_172 = arith.constant 0 : index
    %213 = vector.load %arg11[%c1_170, %c0_171, %c0_172] : memref<3x256x128xbf16, #tpu.memory_space<vmem>>, vector<1x256x128xbf16>
    %214 = vector.shape_cast %213 : vector<1x256x128xbf16> to vector<256x128xbf16>
    %cst_173 = arith.constant dense<0.000000e+00> : vector<32x128xf32>
    %215 = tpu.matmul %212, %214, %cst_173 {dimension_numbers = #tpu.dot_dimension_numbers<[1], [0], [0], [1], [0, 0, 1, 1], [], []>} : vector<32x256xbf16>, vector<256x128xbf16>, vector<32x128xf32> -> vector<32x128xf32>
    %216 = arith.addf %209, %215 : vector<32x128xf32>
    %c0_174 = arith.constant 0 : index
    %c2_175 = arith.constant 2 : index
    %c0_176 = arith.constant 0 : index
    %217 = vector.load %arg21[%c0_174, %c2_175, %c0_176] : memref<2x18x256xf32, #tpu.memory_space<vmem>>, vector<2x16x256xf32>
    %218 = vector.shape_cast %217 : vector<2x16x256xf32> to vector<32x256xf32>
    %219 = arith.truncf %218 : vector<32x256xf32> to vector<32x256xbf16>
    %c2_177 = arith.constant 2 : index
    %c0_178 = arith.constant 0 : index
    %c0_179 = arith.constant 0 : index
    %220 = vector.load %arg11[%c2_177, %c0_178, %c0_179] : memref<3x256x128xbf16, #tpu.memory_space<vmem>>, vector<1x256x128xbf16>
    %221 = vector.shape_cast %220 : vector<1x256x128xbf16> to vector<256x128xbf16>
    %cst_180 = arith.constant dense<0.000000e+00> : vector<32x128xf32>
    %222 = tpu.matmul %219, %221, %cst_180 {dimension_numbers = #tpu.dot_dimension_numbers<[1], [0], [0], [1], [0, 0, 1, 1], [], []>} : vector<32x256xbf16>, vector<256x128xbf16>, vector<32x128xf32> -> vector<32x128xf32>
    %223 = arith.addf %216, %222 : vector<32x128xf32>
    %c0_181 = arith.constant 0 : index
    %c0_182 = arith.constant 0 : index
    %224 = vector.load %arg17[%c0_181, %c0_182] : memref<128x8xf32, #tpu.memory_space<vmem>>, vector<128x8xf32>
    %cst_183 = arith.constant dense<0.000000e+00> : vector<32x8xf32>
    %225 = tpu.matmul %223, %224, %cst_183 {dimension_numbers = #tpu.dot_dimension_numbers<[1], [0], [0], [1], [0, 0, 1, 1], [], []>} : vector<32x128xf32>, vector<128x8xf32>, vector<32x8xf32> -> vector<32x8xf32>
    %226 = arith.mulf %223, %223 : vector<32x128xf32>
    %cst_184 = arith.constant dense<0.000000e+00> : vector<32x8xf32>
    %227 = tpu.matmul %226, %224, %cst_184 {dimension_numbers = #tpu.dot_dimension_numbers<[1], [0], [0], [1], [0, 0, 1, 1], [], []>} : vector<32x128xf32>, vector<128x8xf32>, vector<32x8xf32> -> vector<32x8xf32>
    %cst_185 = arith.constant dense<0.000000e+00> : vector<8xf32>
    %228 = vector.multi_reduction <add>, %225, %cst_185 [0] : vector<32x8xf32> to vector<8xf32>
    %229 = vector.shape_cast %228 : vector<8xf32> to vector<1x8xf32>
    %cst_186 = arith.constant 0.001953125 : f32
    %230 = vector.broadcast %cst_186 : f32 to vector<1x8xf32>
    %231 = arith.mulf %229, %230 : vector<1x8xf32>
    %cst_187 = arith.constant dense<0.000000e+00> : vector<8xf32>
    %232 = vector.multi_reduction <add>, %227, %cst_187 [0] : vector<32x8xf32> to vector<8xf32>
    %233 = vector.shape_cast %232 : vector<8xf32> to vector<1x8xf32>
    %cst_188 = arith.constant 0.001953125 : f32
    %234 = vector.broadcast %cst_188 : f32 to vector<1x8xf32>
    %235 = arith.mulf %233, %234 : vector<1x8xf32>
    %236 = arith.mulf %231, %231 : vector<1x8xf32>
    %237 = arith.subf %235, %236 : vector<1x8xf32>
    %cst_189 = arith.constant 0.000000e+00 : f32
    %238 = vector.broadcast %cst_189 : f32 to vector<1x8xf32>
    %239 = arith.maximumf %237, %238 : vector<1x8xf32>
    %cst_190 = arith.constant 1.001000e-05 : f32
    %240 = vector.broadcast %cst_190 : f32 to vector<1x8xf32>
    %241 = arith.addf %239, %240 : vector<1x8xf32>
    %242 = math.rsqrt %241 : vector<1x8xf32>
    %c0_191 = arith.constant 0 : index
    %c0_192 = arith.constant 0 : index
    %243 = vector.load %arg15[%c0_191, %c0_192] : memref<1x8xf32, #tpu.memory_space<vmem>>, vector<1x8xf32>
    %244 = arith.mulf %243, %242 : vector<1x8xf32>
    %c0_193 = arith.constant 0 : index
    %c0_194 = arith.constant 0 : index
    %245 = vector.load %arg16[%c0_193, %c0_194] : memref<1x8xf32, #tpu.memory_space<vmem>>, vector<1x8xf32>
    %246 = arith.mulf %231, %244 : vector<1x8xf32>
    %247 = arith.subf %245, %246 : vector<1x8xf32>
    %248 = tpu.concatenate %244, %244, %244, %244, %244, %244, %244, %244, %244, %244, %244, %244, %244, %244, %244, %244 in 1 : vector<1x8xf32>, vector<1x8xf32>, vector<1x8xf32>, vector<1x8xf32>, vector<1x8xf32>, vector<1x8xf32>, vector<1x8xf32>, vector<1x8xf32>, vector<1x8xf32>, vector<1x8xf32>, vector<1x8xf32>, vector<1x8xf32>, vector<1x8xf32>, vector<1x8xf32>, vector<1x8xf32>, vector<1x8xf32> -> vector<1x128xf32>
    %249 = tpu.concatenate %247, %247, %247, %247, %247, %247, %247, %247, %247, %247, %247, %247, %247, %247, %247, %247 in 1 : vector<1x8xf32>, vector<1x8xf32>, vector<1x8xf32>, vector<1x8xf32>, vector<1x8xf32>, vector<1x8xf32>, vector<1x8xf32>, vector<1x8xf32>, vector<1x8xf32>, vector<1x8xf32>, vector<1x8xf32>, vector<1x8xf32>, vector<1x8xf32>, vector<1x8xf32>, vector<1x8xf32>, vector<1x8xf32> -> vector<1x128xf32>
    %250 = vector.broadcast %248 : vector<1x128xf32> to vector<32x128xf32>
    %251 = arith.mulf %223, %250 : vector<32x128xf32>
    %252 = vector.broadcast %249 : vector<1x128xf32> to vector<32x128xf32>
    %253 = arith.addf %251, %252 : vector<32x128xf32>
    %cst_195 = arith.constant 0.000000e+00 : f32
    %254 = vector.broadcast %cst_195 : f32 to vector<32x128xf32>
    %255 = arith.maximumf %253, %254 : vector<32x128xf32>
    %c0_196 = arith.constant 0 : index
    %c0_197 = arith.constant 0 : index
    %256 = vector.load %arg18[%c0_196, %c0_197] : memref<32x128xf32, #tpu.memory_space<vmem>>, vector<32x128xf32>
    tpu.vector_store %arg18[%c0_196, %c0_197], %255 {strides = array<i32>} : memref<32x128xf32, #tpu.memory_space<vmem>>, vector<32x128xf32>,
    return
  }
}

</mosaic_0001>

<llo_original>
// kernel: forward.1
$region0: #{forward.1}
  #allocation0 [shape = 'u32[]', space=smem, size = 0x4, offset = 0x4, fixed_abs, tag = 'smem constant byte address 0x4 - core index']
  #allocation1 [shape = 'u32[144,128]{1,0:T(1,128)}', space=vmem, size = 0x12000, scoped, tag = 'internal scratch']
  #allocation2 [shape = 'f32[2,24,512]{2,1,0:T(8,128)}', space=vmem, size = 0x18000, scoped, tag = 'scratch operand']
  #allocation3 [shape = 'f32[2,18,256]{2,1,0:T(8,128)}', space=vmem, size = 0xc000, scoped, tag = 'scratch operand']
  #allocation4 [shape = 'f32[2,18,256]{2,1,0:T(8,128)}', space=vmem, size = 0xc000, scoped, tag = 'scratch operand']
  %s0 = inlined_call_operand.vmem [shape: f32[32,512], index: 0, kind: input, shape index: {}]
  %s1 = inlined_call_operand.vmem [shape: bf16[512,512], index: 1, kind: input, shape index: {}]
  %s2 = inlined_call_operand.hbm [shape: f32[1,32], index: 2, kind: input, shape index: {}]
  %s3 = inlined_call_operand.hbm [shape: f32[1,32], index: 3, kind: input, shape index: {}]
  %s4 = inlined_call_operand.vmem [shape: f32[512,32], index: 4, kind: input, shape index: {}]
  %s5 = inlined_call_operand.hbm [shape: bf16[5,512,256], index: 5, kind: input, shape index: {}]
  %s6 = inlined_call_operand.hbm [shape: bf16[3,256,128], index: 6, kind: input, shape index: {}]
  %s7 = inlined_call_operand.hbm [shape: f32[1,16], index: 7, kind: input, shape index: {}]
  %s8 = inlined_call_operand.hbm [shape: f32[1,16], index: 8, kind: input, shape index: {}]
  %s9 = inlined_call_operand.vmem [shape: f32[256,16], index: 9, kind: input, shape index: {}]
  %s10 = inlined_call_operand.hbm [shape: bf16[5,512,256], index: 10, kind: input, shape index: {}]
  %s11 = inlined_call_operand.hbm [shape: bf16[3,256,128], index: 11, kind: input, shape index: {}]
  %s12 = inlined_call_operand.hbm [shape: f32[1,16], index: 12, kind: input, shape index: {}]
  %s13 = inlined_call_operand.hbm [shape: f32[1,16], index: 13, kind: input, shape index: {}]
  %s14 = inlined_call_operand.vmem [shape: f32[256,16], index: 14, kind: input, shape index: {}]
  %s15 = inlined_call_operand.hbm [shape: f32[1,8], index: 15, kind: input, shape index: {}]
  %s16 = inlined_call_operand.hbm [shape: f32[1,8], index: 16, kind: input, shape index: {}]
  %s17 = inlined_call_operand.vmem [shape: f32[128,8], index: 17, kind: input, shape index: {}]
  %s18 = inlined_call_operand.vmem [shape: f32[32,128], index: 18, kind: output, shape index: {}]
  %s19 = sld [smem:[#allocation0]]
  $region130: #{forward.1} parent=0
    _
  %s21 = ssub.s32 1, %s19
  %s22 = scalar_select 0, %s21, %s19
  $region1: #{forward.1} parent=0
    #allocation5 [shape = 'u8[512]{0}', space=vmem, size = 0x400, scoped, tag = 'input window, operand 2, single buffered']
    #allocation6 [shape = 's32[1]{0}', space=sflag, size = 0x4, scoped, tag = 'scoped memory for forward.1']
    #allocation7 [shape = 'u8[512]{0}', space=vmem, size = 0x400, scoped, tag = 'input window, operand 3, single buffered']
    #allocation8 [shape = 's32[1]{0}', space=sflag, size = 0x4, scoped, tag = 'scoped memory for forward.1']
    #allocation9 [shape = 'u8[1310720]{0}', space=vmem, size = 0x140000, scoped, tag = 'input window, operand 5, single buffered']
    #allocation10 [shape = 'u8[196608]{0}', space=vmem, size = 0x30000, scoped, tag = 'input window, operand 6, single buffered']
    #allocation11 [shape = 's32[1]{0}', space=sflag, size = 0x4, scoped, tag = 'scoped memory for forward.1']
    #allocation12 [shape = 'u8[512]{0}', space=vmem, size = 0x400, scoped, tag = 'input window, operand 7, single buffered']
    #allocation13 [shape = 'u8[512]{0}', space=vmem, size = 0x400, scoped, tag = 'input window, operand 8, single buffered']
    #allocation14 [shape = 's32[1]{0}', space=sflag, size = 0x4, scoped, tag = 'scoped memory for forward.1']
    #allocation15 [shape = 'u8[1310720]{0}', space=vmem, size = 0x140000, scoped, tag = 'input window, operand 10, single buffered']
    #allocation16 [shape = 'u8[196608]{0}', space=vmem, size = 0x30000, scoped, tag = 'input window, operand 11, single buffered']
    #allocation17 [shape = 's32[1]{0}', space=sflag, size = 0x4, scoped, tag = 'scoped memory for forward.1']
    #allocation18 [shape = 'u8[512]{0}', space=vmem, size = 0x400, scoped, tag = 'input window, operand 12, single buffered']
    #allocation19 [shape = 'u8[512]{0}', space=vmem, size = 0x400, scoped, tag = 'input window, operand 13, single buffered']
    #allocation20 [shape = 's32[1]{0}', space=sflag, size = 0x4, scoped, tag = 'scoped memory for forward.1']
    #allocation21 [shape = 'u8[512]{0}', space=vmem, size = 0x400, scoped, tag = 'input window, operand 15, single buffered']
    #allocation22 [shape = 'u8[512]{0}', space=vmem, size = 0x400, scoped, tag = 'input window, operand 16, single buffered']
    #allocation23 [shape = 's32[1]{0}', space=sflag, size = 0x4, scoped, tag = 'scoped memory for forward.1']
    %23 = vsyncpa [#allocation6], 0
    %24 = vsyncpa [#allocation8], 0
    %25 = vsyncpa [#allocation11], 0
    %26 = vsyncpa [#allocation14], 0
    %27 = vsyncpa [#allocation17], 0
    %28 = vsyncpa [#allocation20], 0
    %29 = vsyncpa [#allocation23], 0
    // Predicated region
    $region2: #{forward.1} parent=1 // pred_check
      _
    $region3: #{forward.1} parent=1 // pred_check_branch
      %31 = sbr.rel (0) target = $region5
    $region4: #{forward.1} parent=1 // pred_region
      _
    $region5: #{forward.1} parent=1 // pred_fallthru
      _
    // Predicated region
    $region6: #{forward.1} parent=1 // pred_check
      _
    $region7: #{forward.1} parent=1 // pred_check_branch
      %33 = sbr.rel (0) target = $region9
    $region8: #{forward.1} parent=1 // pred_region
      _
    $region9: #{forward.1} parent=1 // pred_fallthru
      _
    // Predicated region
    $region10: #{forward.1} parent=1 // pred_check
      _
    $region11: #{forward.1} parent=1 // pred_check_branch
      %35 = sbr.rel (0) target = $region13
    $region12: #{forward.1} parent=1 // pred_region
      %s37 = ssub.s32 16, 16
      %38 = vsyncadd [#allocation6], %s37
      %s40 = sshll.u32 [#allocation5], 4
      %s41 = int_to_ptr.vmem [resolvable:$true] %s40
      %43 = dma.hbm_to_vmem [thread:$0]  %s2, 16, %s41, [#allocation6]
    $region13: #{forward.1} parent=1 // pred_fallthru
      _
    // Predicated region
    $region14: #{forward.1} parent=1 // pred_check
      _
    $region15: #{forward.1} parent=1 // pred_check_branch
      %45 = sbr.rel (0) target = $region17
    $region16: #{forward.1} parent=1 // pred_region
      %s47 = ssub.s32 16, 16
      %48 = vsyncadd [#allocation8], %s47
      %s50 = sshll.u32 [#allocation7], 4
      %s51 = int_to_ptr.vmem [resolvable:$true] %s50
      %53 = dma.hbm_to_vmem [thread:$0]  %s3, 16, %s51, [#allocation8]
    $region17: #{forward.1} parent=1 // pred_fallthru
      _
    // Predicated region
    $region18: #{forward.1} parent=1 // pred_check
      _
    $region19: #{forward.1} parent=1 // pred_check_branch
      %55 = sbr.rel (0) target = $region21
    $region20: #{forward.1} parent=1 // pred_region
      _
    $region21: #{forward.1} parent=1 // pred_fallthru
      _
    // Predicated region
    $region22: #{forward.1} parent=1 // pred_check
      _
    $region23: #{forward.1} parent=1 // pred_check_branch
      %57 = sbr.rel (0) target = $region25
    $region24: #{forward.1} parent=1 // pred_region
      %s59 = ssub.s32 40960, 40960
      %60 = vsyncadd [#allocation8], %s59
      %s61 = sshll.u32 [#allocation9], 4
      %s62 = int_to_ptr.vmem [resolvable:$true] %s61
      %67 = dma.hbm_to_vmem [thread:$0]  %s5, 40960, %s62, [#allocation8], 128, 128, 8
    $region25: #{forward.1} parent=1 // pred_fallthru
      _
    // Predicated region
    $region26: #{forward.1} parent=1 // pred_check
      _
    $region27: #{forward.1} parent=1 // pred_check_branch
      %69 = sbr.rel (0) target = $region29
    $region28: #{forward.1} parent=1 // pred_region
      %s71 = ssub.s32 6144, 6144
      %72 = vsyncadd [#allocation11], %s71
      %s73 = sshll.u32 [#allocation10], 4
      %s74 = int_to_ptr.vmem [resolvable:$true] %s73
      %79 = dma.hbm_to_vmem [thread:$0]  %s6, 6144, %s74, [#allocation11], 64, 64, 4
    $region29: #{forward.1} parent=1 // pred_fallthru
      _
    // Predicated region
    $region30: #{forward.1} parent=1 // pred_check
      _
    $region31: #{forward.1} parent=1 // pred_check_branch
      %81 = sbr.rel (0) target = $region33
    $region32: #{forward.1} parent=1 // pred_region
      %s83 = ssub.s32 16, 16
      %84 = vsyncadd [#allocation11], %s83
      %s86 = sshll.u32 [#allocation12], 4
      %s87 = int_to_ptr.vmem [resolvable:$true] %s86
      %89 = dma.hbm_to_vmem [thread:$0]  %s7, 16, %s87, [#allocation11]
    $region33: #{forward.1} parent=1 // pred_fallthru
      _
    // Predicated region
    $region34: #{forward.1} parent=1 // pred_check
      _
    $region35: #{forward.1} parent=1 // pred_check_branch
      %91 = sbr.rel (0) target = $region37
    $region36: #{forward.1} parent=1 // pred_region
      %s93 = ssub.s32 16, 16
      %94 = vsyncadd [#allocation14], %s93
      %s96 = sshll.u32 [#allocation13], 4
      %s97 = int_to_ptr.vmem [resolvable:$true] %s96
      %99 = dma.hbm_to_vmem [thread:$0]  %s8, 16, %s97, [#allocation14]
    $region37: #{forward.1} parent=1 // pred_fallthru
      _
    // Predicated region
    $region38: #{forward.1} parent=1 // pred_check
      _
    $region39: #{forward.1} parent=1 // pred_check_branch
      %101 = sbr.rel (0) target = $region41
    $region40: #{forward.1} parent=1 // pred_region
      _
    $region41: #{forward.1} parent=1 // pred_fallthru
      _
    // Predicated region
    $region42: #{forward.1} parent=1 // pred_check
      _
    $region43: #{forward.1} parent=1 // pred_check_branch
      %103 = sbr.rel (0) target = $region45
    $region44: #{forward.1} parent=1 // pred_region
      %s105 = ssub.s32 40960, 40960
      %106 = vsyncadd [#allocation14], %s105
      %s107 = sshll.u32 [#allocation15], 4
      %s108 = int_to_ptr.vmem [resolvable:$true] %s107
      %113 = dma.hbm_to_vmem [thread:$0]  %s10, 40960, %s108, [#allocation14], 128, 128, 8
    $region45: #{forward.1} parent=1 // pred_fallthru
      _
    // Predicated region
    $region46: #{forward.1} parent=1 // pred_check
      _
    $region47: #{forward.1} parent=1 // pred_check_branch
      %115 = sbr.rel (0) target = $region49
    $region48: #{forward.1} parent=1 // pred_region
      %s117 = ssub.s32 6144, 6144
      %118 = vsyncadd [#allocation17], %s117
      %s119 = sshll.u32 [#allocation16], 4
      %s120 = int_to_ptr.vmem [resolvable:$true] %s119
      %125 = dma.hbm_to_vmem [thread:$0]  %s11, 6144, %s120, [#allocation17], 64, 64, 4
    $region49: #{forward.1} parent=1 // pred_fallthru
      _
    // Predicated region
    $region50: #{forward.1} parent=1 // pred_check
      _
    $region51: #{forward.1} parent=1 // pred_check_branch
      %127 = sbr.rel (0) target = $region53
    $region52: #{forward.1} parent=1 // pred_region
      %s129 = ssub.s32 16, 16
      %130 = vsyncadd [#allocation17], %s129
      %s132 = sshll.u32 [#allocation18], 4
      %s133 = int_to_ptr.vmem [resolvable:$true] %s132
      %135 = dma.hbm_to_vmem [thread:$0]  %s12, 16, %s133, [#allocation17]
    $region53: #{forward.1} parent=1 // pred_fallthru
      _
    // Predicated region
    $region54: #{forward.1} parent=1 // pred_check
      _
    $region55: #{forward.1} parent=1 // pred_check_branch
      %137 = sbr.rel (0) target = $region57
    $region56: #{forward.1} parent=1 // pred_region
      %s139 = ssub.s32 16, 16
      %140 = vsyncadd [#allocation20], %s139
      %s142 = sshll.u32 [#allocation19], 4
      %s143 = int_to_ptr.vmem [resolvable:$true] %s142
      %145 = dma.hbm_to_vmem [thread:$0]  %s13, 16, %s143, [#allocation20]
    $region57: #{forward.1} parent=1 // pred_fallthru
      _
    // Predicated region
    $region58: #{forward.1} parent=1 // pred_check
      _
    $region59: #{forward.1} parent=1 // pred_check_branch
      %147 = sbr.rel (0) target = $region61
    $region60: #{forward.1} parent=1 // pred_region
      _
    $region61: #{forward.1} parent=1 // pred_fallthru
      _
    // Predicated region
    $region62: #{forward.1} parent=1 // pred_check
      _
    $region63: #{forward.1} parent=1 // pred_check_branch
      %149 = sbr.rel (0) target = $region65
    $region64: #{forward.1} parent=1 // pred_region
      %s151 = ssub.s32 16, 16
      %152 = vsyncadd [#allocation20], %s151
      %s154 = sshll.u32 [#allocation21], 4
      %s155 = int_to_ptr.vmem [resolvable:$true] %s154
      %157 = dma.hbm_to_vmem [thread:$0]  %s15, 16, %s155, [#allocation20]
    $region65: #{forward.1} parent=1 // pred_fallthru
      _
    // Predicated region
    $region66: #{forward.1} parent=1 // pred_check
      _
    $region67: #{forward.1} parent=1 // pred_check_branch
      %159 = sbr.rel (0) target = $region69
    $region68: #{forward.1} parent=1 // pred_region
      %s161 = ssub.s32 16, 16
      %162 = vsyncadd [#allocation23], %s161
      %s164 = sshll.u32 [#allocation22], 4
      %s165 = int_to_ptr.vmem [resolvable:$true] %s164
      %167 = dma.hbm_to_vmem [thread:$0]  %s16, 16, %s165, [#allocation23]
    $region69: #{forward.1} parent=1 // pred_fallthru
      _
    // Predicated region
    $region70: #{forward.1} parent=1 // pred_check
      _
    $region71: #{forward.1} parent=1 // pred_check_branch
      %169 = sbr.rel (0) target = $region73
    $region72: #{forward.1} parent=1 // pred_region
      _
    $region73: #{forward.1} parent=1 // pred_fallthru
      _
    // Predicated region
    $region74: #{forward.1} parent=1 // pred_check
      _
    $region75: #{forward.1} parent=1 // pred_check_branch
      %171 = sbr.rel (0) target = $region77
    $region76: #{forward.1} parent=1 // pred_region
      %172 = dma.done [#allocation6], 16
    $region77: #{forward.1} parent=1 // pred_fallthru
      _
    // Predicated region
    $region78: #{forward.1} parent=1 // pred_check
      _
    $region79: #{forward.1} parent=1 // pred_check_branch
      %174 = sbr.rel (0) target = $region81
    $region80: #{forward.1} parent=1 // pred_region
      %175 = dma.done [#allocation8], 16
    $region81: #{forward.1} parent=1 // pred_fallthru
      _
    // Predicated region
    $region82: #{forward.1} parent=1 // pred_check
      _
    $region83: #{forward.1} parent=1 // pred_check_branch
      %177 = sbr.rel (0) target = $region85
    $region84: #{forward.1} parent=1 // pred_region
      %178 = dma.done [#allocation8], 40960
    $region85: #{forward.1} parent=1 // pred_fallthru
      _
    // Predicated region
    $region86: #{forward.1} parent=1 // pred_check
      _
    $region87: #{forward.1} parent=1 // pred_check_branch
      %180 = sbr.rel (0) target = $region89
    $region88: #{forward.1} parent=1 // pred_region
      %181 = dma.done [#allocation11], 6144
    $region89: #{forward.1} parent=1 // pred_fallthru
      _
    // Predicated region
    $region90: #{forward.1} parent=1 // pred_check
      _
    $region91: #{forward.1} parent=1 // pred_check_branch
      %183 = sbr.rel (0) target = $region93
    $region92: #{forward.1} parent=1 // pred_region
      %184 = dma.done [#allocation11], 16
    $region93: #{forward.1} parent=1 // pred_fallthru
      _
    // Predicated region
    $region94: #{forward.1} parent=1 // pred_check
      _
    $region95: #{forward.1} parent=1 // pred_check_branch
      %186 = sbr.rel (0) target = $region97
    $region96: #{forward.1} parent=1 // pred_region
      %187 = dma.done [#allocation14], 16
    $region97: #{forward.1} parent=1 // pred_fallthru
      _
    // Predicated region
    $region98: #{forward.1} parent=1 // pred_check
      _
    $region99: #{forward.1} parent=1 // pred_check_branch
      %189 = sbr.rel (0) target = $region101
    $region100: #{forward.1} parent=1 // pred_region
      %190 = dma.done [#allocation14], 40960
    $region101: #{forward.1} parent=1 // pred_fallthru
      _
    // Predicated region
    $region102: #{forward.1} parent=1 // pred_check
      _
    $region103: #{forward.1} parent=1 // pred_check_branch
      %192 = sbr.rel (0) target = $region105
    $region104: #{forward.1} parent=1 // pred_region
      %193 = dma.done [#allocation17], 6144
    $region105: #{forward.1} parent=1 // pred_fallthru
      _
    // Predicated region
    $region106: #{forward.1} parent=1 // pred_check
      _
    $region107: #{forward.1} parent=1 // pred_check_branch
      %195 = sbr.rel (0) target = $region109
    $region108: #{forward.1} parent=1 // pred_region
      %196 = dma.done [#allocation17], 16
    $region109: #{forward.1} parent=1 // pred_fallthru
      _
    // Predicated region
    $region110: #{forward.1} parent=1 // pred_check
      _
    $region111: #{forward.1} parent=1 // pred_check_branch
      %198 = sbr.rel (0) target = $region113
    $region112: #{forward.1} parent=1 // pred_region
      %199 = dma.done [#allocation20], 16
    $region113: #{forward.1} parent=1 // pred_fallthru
      _
    // Predicated region
    $region114: #{forward.1} parent=1 // pred_check
      _
    $region115: #{forward.1} parent=1 // pred_check_branch
      %201 = sbr.rel (0) target = $region117
    $region116: #{forward.1} parent=1 // pred_region
      %202 = dma.done [#allocation20], 16
    $region117: #{forward.1} parent=1 // pred_fallthru
      _
    // Predicated region
    $region118: #{forward.1} parent=1 // pred_check
      _
    $region119: #{forward.1} parent=1 // pred_check_branch
      %204 = sbr.rel (0) target = $region121
    $region120: #{forward.1} parent=1 // pred_region
      %205 = dma.done [#allocation23], 16
    $region121: #{forward.1} parent=1 // pred_fallthru
      _
    %v207 = vld [vmem:[%s0] sm:$0xff]
    %v208 = vld [vmem:[%s0 + $0x8] sm:$0xff]
    %v209 = vld [vmem:[%s0 + $0x10] sm:$0xff]
    %v210 = vld [vmem:[%s0 + $0x18] sm:$0xff]
    %v211 = vld [vmem:[%s0 + $0x20] sm:$0xff]
    %v212 = vld [vmem:[%s0 + $0x28] sm:$0xff]
    %v213 = vld [vmem:[%s0 + $0x30] sm:$0xff]
    %v214 = vld [vmem:[%s0 + $0x38] sm:$0xff]
    %v215 = vld [vmem:[%s0 + $0x40] sm:$0xff]
    %v216 = vld [vmem:[%s0 + $0x48] sm:$0xff]
    %v217 = vld [vmem:[%s0 + $0x50] sm:$0xff]
    %v218 = vld [vmem:[%s0 + $0x58] sm:$0xff]
    %v219 = vld [vmem:[%s0 + $0x60] sm:$0xff]
    %v220 = vld [vmem:[%s0 + $0x68] sm:$0xff]
    %v221 = vld [vmem:[%s0 + $0x70] sm:$0xff]
    %v222 = vld [vmem:[%s0 + $0x78] sm:$0xff]
    %v223 = vpack.c.bf16 %v211, %v207
    %v224 = vpack.c.bf16 %v212, %v208
    %v225 = vpack.c.bf16 %v213, %v209
    %v226 = vpack.c.bf16 %v214, %v210
    %v227 = vpack.c.bf16 %v219, %v215
    %v228 = vpack.c.bf16 %v220, %v216
    %v229 = vpack.c.bf16 %v221, %v217
    %v230 = vpack.c.bf16 %v222, %v218
    %v231 = vld [vmem:[%s1] sm:$0xff]
    %v232 = vld [vmem:[%s1 + $0x8] sm:$0xff]
    %v233 = vld [vmem:[%s1 + $0x10] sm:$0xff]
    %v234 = vld [vmem:[%s1 + $0x18] sm:$0xff]
    %v235 = vld [vmem:[%s1 + $0x20] sm:$0xff]
    %v236 = vld [vmem:[%s1 + $0x28] sm:$0xff]
    %v237 = vld [vmem:[%s1 + $0x30] sm:$0xff]
    %v238 = vld [vmem:[%s1 + $0x38] sm:$0xff]
    %v239 = vld [vmem:[%s1 + $0x40] sm:$0xff]
    %v240 = vld [vmem:[%s1 + $0x48] sm:$0xff]
    %v241 = vld [vmem:[%s1 + $0x50] sm:$0xff]
    %v242 = vld [vmem:[%s1 + $0x58] sm:$0xff]
    %v243 = vld [vmem:[%s1 + $0x60] sm:$0xff]
    %v244 = vld [vmem:[%s1 + $0x68] sm:$0xff]
    %v245 = vld [vmem:[%s1 + $0x70] sm:$0xff]
    %v246 = vld [vmem:[%s1 + $0x78] sm:$0xff]
    %v247 = vld [vmem:[%s1 + $0x80] sm:$0xff]
    %v248 = vld [vmem:[%s1 + $0x88] sm:$0xff]
    %v249 = vld [vmem:[%s1 + $0x90] sm:$0xff]
    %v250 = vld [vmem:[%s1 + $0x98] sm:$0xff]
    %v251 = vld [vmem:[%s1 + $0xa0] sm:$0xff]
    %v252 = vld [vmem:[%s1 + $0xa8] sm:$0xff]
    %v253 = vld [vmem:[%s1 + $0xb0] sm:$0xff]
    %v254 = vld [vmem:[%s1 + $0xb8] sm:$0xff]
    %v255 = vld [vmem:[%s1 + $0xc0] sm:$0xff]
    %v256 = vld [vmem:[%s1 + $0xc8] sm:$0xff]
    %v257 = vld [vmem:[%s1 + $0xd0] sm:$0xff]
    %v258 = vld [vmem:[%s1 + $0xd8] sm:$0xff]
    %v259 = vld [vmem:[%s1 + $0xe0] sm:$0xff]
    %v260 = vld [vmem:[%s1 + $0xe8] sm:$0xff]
    %v261 = vld [vmem:[%s1 + $0xf0] sm:$0xff]
    %v262 = vld [vmem:[%s1 + $0xf8] sm:$0xff]
    %v263 = vld [vmem:[%s1 + $0x100] sm:$0xff]
    %v264 = vld [vmem:[%s1 + $0x108] sm:$0xff]
    %v265 = vld [vmem:[%s1 + $0x110] sm:$0xff]
    %v266 = vld [vmem:[%s1 + $0x118] sm:$0xff]
    %v267 = vld [vmem:[%s1 + $0x120] sm:$0xff]
    %v268 = vld [vmem:[%s1 + $0x128] sm:$0xff]
    %v269 = vld [vmem:[%s1 + $0x130] sm:$0xff]
    %v270 = vld [vmem:[%s1 + $0x138] sm:$0xff]
    %v271 = vld [vmem:[%s1 + $0x140] sm:$0xff]
    %v272 = vld [vmem:[%s1 + $0x148] sm:$0xff]
    %v273 = vld [vmem:[%s1 + $0x150] sm:$0xff]
    %v274 = vld [vmem:[%s1 + $0x158] sm:$0xff]
    %v275 = vld [vmem:[%s1 + $0x160] sm:$0xff]
    %v276 = vld [vmem:[%s1 + $0x168] sm:$0xff]
    %v277 = vld [vmem:[%s1 + $0x170] sm:$0xff]
    %v278 = vld [vmem:[%s1 + $0x178] sm:$0xff]
    %v279 = vld [vmem:[%s1 + $0x180] sm:$0xff]
    %v280 = vld [vmem:[%s1 + $0x188] sm:$0xff]
    %v281 = vld [vmem:[%s1 + $0x190] sm:$0xff]
    %v282 = vld [vmem:[%s1 + $0x198] sm:$0xff]
    %v283 = vld [vmem:[%s1 + $0x1a0] sm:$0xff]
    %v284 = vld [vmem:[%s1 + $0x1a8] sm:$0xff]
    %v285 = vld [vmem:[%s1 + $0x1b0] sm:$0xff]
    %v286 = vld [vmem:[%s1 + $0x1b8] sm:$0xff]
    %v287 = vld [vmem:[%s1 + $0x1c0] sm:$0xff]
    %v288 = vld [vmem:[%s1 + $0x1c8] sm:$0xff]
    %v289 = vld [vmem:[%s1 + $0x1d0] sm:$0xff]
    %v290 = vld [vmem:[%s1 + $0x1d8] sm:$0xff]
    %v291 = vld [vmem:[%s1 + $0x1e0] sm:$0xff]
    %v292 = vld [vmem:[%s1 + $0x1e8] sm:$0xff]
    %v293 = vld [vmem:[%s1 + $0x1f0] sm:$0xff]
    %v294 = vld [vmem:[%s1 + $0x1f8] sm:$0xff]
    %v295 = vld [vmem:[%s1 + $0x200] sm:$0xff]
    %v296 = vld [vmem:[%s1 + $0x208] sm:$0xff]
    %v297 = vld [vmem:[%s1 + $0x210] sm:$0xff]
    %v298 = vld [vmem:[%s1 + $0x218] sm:$0xff]
    %v299 = vld [vmem:[%s1 + $0x220] sm:$0xff]
    %v300 = vld [vmem:[%s1 + $0x228] sm:$0xff]
    %v301 = vld [vmem:[%s1 + $0x230] sm:$0xff]
    %v302 = vld [vmem:[%s1 + $0x238] sm:$0xff]
    %v303 = vld [vmem:[%s1 + $0x240] sm:$0xff]
    %v304 = vld [vmem:[%s1 + $0x248] sm:$0xff]
    %v305 = vld [vmem:[%s1 + $0x250] sm:$0xff]
    %v306 = vld [vmem:[%s1 + $0x258] sm:$0xff]
    %v307 = vld [vmem:[%s1 + $0x260] sm:$0xff]
    %v308 = vld [vmem:[%s1 + $0x268] sm:$0xff]
    %v309 = vld [vmem:[%s1 + $0x270] sm:$0xff]
    %v310 = vld [vmem:[%s1 + $0x278] sm:$0xff]
    %v311 = vld [vmem:[%s1 + $0x280] sm:$0xff]
    %v312 = vld [vmem:[%s1 + $0x288] sm:$0xff]
    %v313 = vld [vmem:[%s1 + $0x290] sm:$0xff]
    %v314 = vld [vmem:[%s1 + $0x298] sm:$0xff]
    %v315 = vld [vmem:[%s1 + $0x2a0] sm:$0xff]
    %v316 = vld [vmem:[%s1 + $0x2a8] sm:$0xff]
    %v317 = vld [vmem:[%s1 + $0x2b0] sm:$0xff]
    %v318 = vld [vmem:[%s1 + $0x2b8] sm:$0xff]
    %v319 = vld [vmem:[%s1 + $0x2c0] sm:$0xff]
    %v320 = vld [vmem:[%s1 + $0x2c8] sm:$0xff]
    %v321 = vld [vmem:[%s1 + $0x2d0] sm:$0xff]
    %v322 = vld [vmem:[%s1 + $0x2d8] sm:$0xff]
    %v323 = vld [vmem:[%s1 + $0x2e0] sm:$0xff]
    %v324 = vld [vmem:[%s1 + $0x2e8] sm:$0xff]
    %v325 = vld [vmem:[%s1 + $0x2f0] sm:$0xff]
    %v326 = vld [vmem:[%s1 + $0x2f8] sm:$0xff]
    %v327 = vld [vmem:[%s1 + $0x300] sm:$0xff]
    %v328 = vld [vmem:[%s1 + $0x308] sm:$0xff]
    %v329 = vld [vmem:[%s1 + $0x310] sm:$0xff]
    %v330 = vld [vmem:[%s1 + $0x318] sm:$0xff]
    %v331 = vld [vmem:[%s1 + $0x320] sm:$0xff]
    %v332 = vld [vmem:[%s1 + $0x328] sm:$0xff]
    %v333 = vld [vmem:[%s1 + $0x330] sm:$0xff]
    %v334 = vld [vmem:[%s1 + $0x338] sm:$0xff]
    %v335 = vld [vmem:[%s1 + $0x340] sm:$0xff]
    %v336 = vld [vmem:[%s1 + $0x348] sm:$0xff]
    %v337 = vld [vmem:[%s1 + $0x350] sm:$0xff]
    %v338 = vld [vmem:[%s1 + $0x358] sm:$0xff]
    %v339 = vld [vmem:[%s1 + $0x360] sm:$0xff]
    %v340 = vld [vmem:[%s1 + $0x368] sm:$0xff]
    %v341 = vld [vmem:[%s1 + $0x370] sm:$0xff]
    %v342 = vld [vmem:[%s1 + $0x378] sm:$0xff]
    %v343 = vld [vmem:[%s1 + $0x380] sm:$0xff]
    %v344 = vld [vmem:[%s1 + $0x388] sm:$0xff]
    %v345 = vld [vmem:[%s1 + $0x390] sm:$0xff]
    %v346 = vld [vmem:[%s1 + $0x398] sm:$0xff]
    %v347 = vld [vmem:[%s1 + $0x3a0] sm:$0xff]
    %v348 = vld [vmem:[%s1 + $0x3a8] sm:$0xff]
    %v349 = vld [vmem:[%s1 + $0x3b0] sm:$0xff]
    %v350 = vld [vmem:[%s1 + $0x3b8] sm:$0xff]
    %v351 = vld [vmem:[%s1 + $0x3c0] sm:$0xff]
    %v352 = vld [vmem:[%s1 + $0x3c8] sm:$0xff]
    %v353 = vld [vmem:[%s1 + $0x3d0] sm:$0xff]
    %v354 = vld [vmem:[%s1 + $0x3d8] sm:$0xff]
    %v355 = vld [vmem:[%s1 + $0x3e0] sm:$0xff]
    %v356 = vld [vmem:[%s1 + $0x3e8] sm:$0xff]
    %v357 = vld [vmem:[%s1 + $0x3f0] sm:$0xff]
    %v358 = vld [vmem:[%s1 + $0x3f8] sm:$0xff]
    %v487 = vunpack.c.l.b16 %v231
    %v488 = vunpack.c.h.b16 %v231
    %v489 = vunpack.c.l.b16 %v232
    %v490 = vunpack.c.h.b16 %v232
    %v491 = vunpack.c.l.b16 %v233
    %v492 = vunpack.c.h.b16 %v233
    %v493 = vunpack.c.l.b16 %v234
    %v494 = vunpack.c.h.b16 %v234
    %v495 = vunpack.c.l.b16 %v235
    %v496 = vunpack.c.h.b16 %v235
    %v497 = vunpack.c.l.b16 %v236
    %v498 = vunpack.c.h.b16 %v236
    %v499 = vunpack.c.l.b16 %v237
    %v500 = vunpack.c.h.b16 %v237
    %v501 = vunpack.c.l.b16 %v238
    %v502 = vunpack.c.h.b16 %v238
    %v503 = vunpack.c.l.b16 %v239
    %v504 = vunpack.c.h.b16 %v239
    %v505 = vunpack.c.l.b16 %v240
    %v506 = vunpack.c.h.b16 %v240
    %v507 = vunpack.c.l.b16 %v241
    %v508 = vunpack.c.h.b16 %v241
    %v509 = vunpack.c.l.b16 %v242
    %v510 = vunpack.c.h.b16 %v242
    %v511 = vunpack.c.l.b16 %v243
    %v512 = vunpack.c.h.b16 %v243
    %v513 = vunpack.c.l.b16 %v244
    %v514 = vunpack.c.h.b16 %v244
    %v515 = vunpack.c.l.b16 %v245
    %v516 = vunpack.c.h.b16 %v245
    %v517 = vunpack.c.l.b16 %v246
    %v518 = vunpack.c.h.b16 %v246
    %v519 = vunpack.c.l.b16 %v247
    %v520 = vunpack.c.h.b16 %v247
    %v521 = vunpack.c.l.b16 %v248
    %v522 = vunpack.c.h.b16 %v248
    %v523 = vunpack.c.l.b16 %v249
    %v524 = vunpack.c.h.b16 %v249
    %v525 = vunpack.c.l.b16 %v250
    %v526 = vunpack.c.h.b16 %v250
    %v527 = vunpack.c.l.b16 %v251
    %v528 = vunpack.c.h.b16 %v251
    %v529 = vunpack.c.l.b16 %v252
    %v530 = vunpack.c.h.b16 %v252
    %v531 = vunpack.c.l.b16 %v253
    %v532 = vunpack.c.h.b16 %v253
    %v533 = vunpack.c.l.b16 %v254
    %v534 = vunpack.c.h.b16 %v254
    %v535 = vunpack.c.l.b16 %v255
    %v536 = vunpack.c.h.b16 %v255
    %v537 = vunpack.c.l.b16 %v256
    %v538 = vunpack.c.h.b16 %v256
    %v539 = vunpack.c.l.b16 %v257
    %v540 = vunpack.c.h.b16 %v257
    %v541 = vunpack.c.l.b16 %v258
    %v542 = vunpack.c.h.b16 %v258
    %v543 = vunpack.c.l.b16 %v259
    %v544 = vunpack.c.h.b16 %v259
    %v545 = vunpack.c.l.b16 %v260
    %v546 = vunpack.c.h.b16 %v260
    %v547 = vunpack.c.l.b16 %v261
    %v548 = vunpack.c.h.b16 %v261
    %v549 = vunpack.c.l.b16 %v262
    %v550 = vunpack.c.h.b16 %v262
    %v551 = vunpack.c.l.b16 %v263
    %v552 = vunpack.c.h.b16 %v263
    %v553 = vunpack.c.l.b16 %v264
    %v554 = vunpack.c.h.b16 %v264
    %v555 = vunpack.c.l.b16 %v265
    %v556 = vunpack.c.h.b16 %v265
    %v557 = vunpack.c.l.b16 %v266
    %v558 = vunpack.c.h.b16 %v266
    %v559 = vunpack.c.l.b16 %v267
    %v560 = vunpack.c.h.b16 %v267
    %v561 = vunpack.c.l.b16 %v268
    %v562 = vunpack.c.h.b16 %v268
    %v563 = vunpack.c.l.b16 %v269
    %v564 = vunpack.c.h.b16 %v269
    %v565 = vunpack.c.l.b16 %v270
    %v566 = vunpack.c.h.b16 %v270
    %v567 = vunpack.c.l.b16 %v271
    %v568 = vunpack.c.h.b16 %v271
    %v569 = vunpack.c.l.b16 %v272
    %v570 = vunpack.c.h.b16 %v272
    %v571 = vunpack.c.l.b16 %v273
    %v572 = vunpack.c.h.b16 %v273
    %v573 = vunpack.c.l.b16 %v274
    %v574 = vunpack.c.h.b16 %v274
    %v575 = vunpack.c.l.b16 %v275
    %v576 = vunpack.c.h.b16 %v275
    %v577 = vunpack.c.l.b16 %v276
    %v578 = vunpack.c.h.b16 %v276
    %v579 = vunpack.c.l.b16 %v277
    %v580 = vunpack.c.h.b16 %v277
    %v581 = vunpack.c.l.b16 %v278
    %v582 = vunpack.c.h.b16 %v278
    %v583 = vunpack.c.l.b16 %v279
    %v584 = vunpack.c.h.b16 %v279
    %v585 = vunpack.c.l.b16 %v280
    %v586 = vunpack.c.h.b16 %v280
    %v587 = vunpack.c.l.b16 %v281
    %v588 = vunpack.c.h.b16 %v281
    %v589 = vunpack.c.l.b16 %v282
    %v590 = vunpack.c.h.b16 %v282
    %v591 = vunpack.c.l.b16 %v283
    %v592 = vunpack.c.h.b16 %v283
    %v593 = vunpack.c.l.b16 %v284
    %v594 = vunpack.c.h.b16 %v284
    %v595 = vunpack.c.l.b16 %v285
    %v596 = vunpack.c.h.b16 %v285
    %v597 = vunpack.c.l.b16 %v286
    %v598 = vunpack.c.h.b16 %v286
    %v599 = vunpack.c.l.b16 %v287
    %v600 = vunpack.c.h.b16 %v287
    %v601 = vunpack.c.l.b16 %v288
    %v602 = vunpack.c.h.b16 %v288
    %v603 = vunpack.c.l.b16 %v289
    %v604 = vunpack.c.h.b16 %v289
    %v605 = vunpack.c.l.b16 %v290
    %v606 = vunpack.c.h.b16 %v290
    %v607 = vunpack.c.l.b16 %v291
    %v608 = vunpack.c.h.b16 %v291
    %v609 = vunpack.c.l.b16 %v292
    %v610 = vunpack.c.h.b16 %v292
    %v611 = vunpack.c.l.b16 %v293
    %v612 = vunpack.c.h.b16 %v293
    %v613 = vunpack.c.l.b16 %v294
    %v614 = vunpack.c.h.b16 %v294
    %v615 = vunpack.c.l.b16 %v295
    %v616 = vunpack.c.h.b16 %v295
    %v617 = vunpack.c.l.b16 %v296
    %v618 = vunpack.c.h.b16 %v296
    %v619 = vunpack.c.l.b16 %v297
    %v620 = vunpack.c.h.b16 %v297
    %v621 = vunpack.c.l.b16 %v298
    %v622 = vunpack.c.h.b16 %v298
    %v623 = vunpack.c.l.b16 %v299
    %v624 = vunpack.c.h.b16 %v299
    %v625 = vunpack.c.l.b16 %v300
    %v626 = vunpack.c.h.b16 %v300
    %v627 = vunpack.c.l.b16 %v301
    %v628 = vunpack.c.h.b16 %v301
    %v629 = vunpack.c.l.b16 %v302
    %v630 = vunpack.c.h.b16 %v302
    %v631 = vunpack.c.l.b16 %v303
    %v632 = vunpack.c.h.b16 %v303
    %v633 = vunpack.c.l.b16 %v304
    %v634 = vunpack.c.h.b16 %v304
    %v635 = vunpack.c.l.b16 %v305
    %v636 = vunpack.c.h.b16 %v305
    %v637 = vunpack.c.l.b16 %v306
    %v638 = vunpack.c.h.b16 %v306
    %v639 = vunpack.c.l.b16 %v307
    %v640 = vunpack.c.h.b16 %v307
    %v641 = vunpack.c.l.b16 %v308
    %v642 = vunpack.c.h.b16 %v308
    %v643 = vunpack.c.l.b16 %v309
    %v644 = vunpack.c.h.b16 %v309
    %v645 = vunpack.c.l.b16 %v310
    %v646 = vunpack.c.h.b16 %v310
    %v647 = vunpack.c.l.b16 %v311
    %v648 = vunpack.c.h.b16 %v311
    %v649 = vunpack.c.l.b16 %v312
    %v650 = vunpack.c.h.b16 %v312
    %v651 = vunpack.c.l.b16 %v313
    %v652 = vunpack.c.h.b16 %v313
    %v653 = vunpack.c.l.b16 %v314
    %v654 = vunpack.c.h.b16 %v314
    %v655 = vunpack.c.l.b16 %v315
    %v656 = vunpack.c.h.b16 %v315
    %v657 = vunpack.c.l.b16 %v316
    %v658 = vunpack.c.h.b16 %v316
    %v659 = vunpack.c.l.b16 %v317
    %v660 = vunpack.c.h.b16 %v317
    %v661 = vunpack.c.l.b16 %v318
    %v662 = vunpack.c.h.b16 %v318
    %v663 = vunpack.c.l.b16 %v319
    %v664 = vunpack.c.h.b16 %v319
    %v665 = vunpack.c.l.b16 %v320
    %v666 = vunpack.c.h.b16 %v320
    %v667 = vunpack.c.l.b16 %v321
    %v668 = vunpack.c.h.b16 %v321
    %v669 = vunpack.c.l.b16 %v322
    %v670 = vunpack.c.h.b16 %v322
    %v671 = vunpack.c.l.b16 %v323
    %v672 = vunpack.c.h.b16 %v323
    %v673 = vunpack.c.l.b16 %v324
    %v674 = vunpack.c.h.b16 %v324
    %v675 = vunpack.c.l.b16 %v325
    %v676 = vunpack.c.h.b16 %v325
    %v677 = vunpack.c.l.b16 %v326
    %v678 = vunpack.c.h.b16 %v326
    %v679 = vunpack.c.l.b16 %v327
    %v680 = vunpack.c.h.b16 %v327
    %v681 = vunpack.c.l.b16 %v328
    %v682 = vunpack.c.h.b16 %v328
    %v683 = vunpack.c.l.b16 %v329
    %v684 = vunpack.c.h.b16 %v329
    %v685 = vunpack.c.l.b16 %v330
    %v686 = vunpack.c.h.b16 %v330
    %v687 = vunpack.c.l.b16 %v331
    %v688 = vunpack.c.h.b16 %v331
    %v689 = vunpack.c.l.b16 %v332
    %v690 = vunpack.c.h.b16 %v332
    %v691 = vunpack.c.l.b16 %v333
    %v692 = vunpack.c.h.b16 %v333
    %v693 = vunpack.c.l.b16 %v334
    %v694 = vunpack.c.h.b16 %v334
    %v695 = vunpack.c.l.b16 %v335
    %v696 = vunpack.c.h.b16 %v335
    %v697 = vunpack.c.l.b16 %v336
    %v698 = vunpack.c.h.b16 %v336
    %v699 = vunpack.c.l.b16 %v337
    %v700 = vunpack.c.h.b16 %v337
    %v701 = vunpack.c.l.b16 %v338
    %v702 = vunpack.c.h.b16 %v338
    %v703 = vunpack.c.l.b16 %v339
    %v704 = vunpack.c.h.b16 %v339
    %v705 = vunpack.c.l.b16 %v340
    %v706 = vunpack.c.h.b16 %v340
    %v707 = vunpack.c.l.b16 %v341
    %v708 = vunpack.c.h.b16 %v341
    %v709 = vunpack.c.l.b16 %v342
    %v710 = vunpack.c.h.b16 %v342
    %v711 = vunpack.c.l.b16 %v343
    %v712 = vunpack.c.h.b16 %v343
    %v713 = vunpack.c.l.b16 %v344
    %v714 = vunpack.c.h.b16 %v344
    %v715 = vunpack.c.l.b16 %v345
    %v716 = vunpack.c.h.b16 %v345
    %v717 = vunpack.c.l.b16 %v346
    %v718 = vunpack.c.h.b16 %v346
    %v719 = vunpack.c.l.b16 %v347
    %v720 = vunpack.c.h.b16 %v347
    %v721 = vunpack.c.l.b16 %v348
    %v722 = vunpack.c.h.b16 %v348
    %v723 = vunpack.c.l.b16 %v349
    %v724 = vunpack.c.h.b16 %v349
    %v725 = vunpack.c.l.b16 %v350
    %v726 = vunpack.c.h.b16 %v350
    %v727 = vunpack.c.l.b16 %v351
    %v728 = vunpack.c.h.b16 %v351
    %v729 = vunpack.c.l.b16 %v352
    %v730 = vunpack.c.h.b16 %v352
    %v731 = vunpack.c.l.b16 %v353
    %v732 = vunpack.c.h.b16 %v353
    %v733 = vunpack.c.l.b16 %v354
    %v734 = vunpack.c.h.b16 %v354
    %v735 = vunpack.c.l.b16 %v355
    %v736 = vunpack.c.h.b16 %v355
    %v737 = vunpack.c.l.b16 %v356
    %v738 = vunpack.c.h.b16 %v356
    %v739 = vunpack.c.l.b16 %v357
    %v740 = vunpack.c.h.b16 %v357
    %v741 = vunpack.c.l.b16 %v358
    %v742 = vunpack.c.h.b16 %v358
    %v743 = vpack.c.b16 %v491, %v487
    %v744 = vpack.c.b16 %v492, %v488
    %v745 = vpack.c.b16 %v493, %v489
    %v746 = vpack.c.b16 %v494, %v490
    %v747 = vpack.c.b16 %v499, %v495
    %v748 = vpack.c.b16 %v500, %v496
    %v749 = vpack.c.b16 %v501, %v497
    %v750 = vpack.c.b16 %v502, %v498
    %v751 = vpack.c.b16 %v507, %v503
    %v752 = vpack.c.b16 %v508, %v504
    %v753 = vpack.c.b16 %v509, %v505
    %v754 = vpack.c.b16 %v510, %v506
    %v755 = vpack.c.b16 %v515, %v511
    %v756 = vpack.c.b16 %v516, %v512
    %v757 = vpack.c.b16 %v517, %v513
    %v758 = vpack.c.b16 %v518, %v514
    %v759 = vpack.c.b16 %v523, %v519
    %v760 = vpack.c.b16 %v524, %v520
    %v761 = vpack.c.b16 %v525, %v521
    %v762 = vpack.c.b16 %v526, %v522
    %v763 = vpack.c.b16 %v531, %v527
    %v764 = vpack.c.b16 %v532, %v528
    %v765 = vpack.c.b16 %v533, %v529
    %v766 = vpack.c.b16 %v534, %v530
    %v767 = vpack.c.b16 %v539, %v535
    %v768 = vpack.c.b16 %v540, %v536
    %v769 = vpack.c.b16 %v541, %v537
    %v770 = vpack.c.b16 %v542, %v538
    %v771 = vpack.c.b16 %v547, %v543
    %v772 = vpack.c.b16 %v548, %v544
    %v773 = vpack.c.b16 %v549, %v545
    %v774 = vpack.c.b16 %v550, %v546
    %v775 = vpack.c.b16 %v555, %v551
    %v776 = vpack.c.b16 %v556, %v552
    %v777 = vpack.c.b16 %v557, %v553
    %v778 = vpack.c.b16 %v558, %v554
    %v779 = vpack.c.b16 %v563, %v559
    %v780 = vpack.c.b16 %v564, %v560
    %v781 = vpack.c.b16 %v565, %v561
    %v782 = vpack.c.b16 %v566, %v562
    %v783 = vpack.c.b16 %v571, %v567
    %v784 = vpack.c.b16 %v572, %v568
    %v785 = vpack.c.b16 %v573, %v569
    %v786 = vpack.c.b16 %v574, %v570
    %v787 = vpack.c.b16 %v579, %v575
    %v788 = vpack.c.b16 %v580, %v576
    %v789 = vpack.c.b16 %v581, %v577
    %v790 = vpack.c.b16 %v582, %v578
    %v791 = vpack.c.b16 %v587, %v583
    %v792 = vpack.c.b16 %v588, %v584
    %v793 = vpack.c.b16 %v589, %v585
    %v794 = vpack.c.b16 %v590, %v586
    %v795 = vpack.c.b16 %v595, %v591
    %v796 = vpack.c.b16 %v596, %v592
    %v797 = vpack.c.b16 %v597, %v593
    %v798 = vpack.c.b16 %v598, %v594
    %v799 = vpack.c.b16 %v603, %v599
    %v800 = vpack.c.b16 %v604, %v600
    %v801 = vpack.c.b16 %v605, %v601
    %v802 = vpack.c.b16 %v606, %v602
    %v803 = vpack.c.b16 %v611, %v607
    %v804 = vpack.c.b16 %v612, %v608
    %v805 = vpack.c.b16 %v613, %v609
    %v806 = vpack.c.b16 %v614, %v610
    %v807 = vpack.c.b16 %v619, %v615
    %v808 = vpack.c.b16 %v620, %v616
    %v809 = vpack.c.b16 %v621, %v617
    %v810 = vpack.c.b16 %v622, %v618
    %v811 = vpack.c.b16 %v627, %v623
    %v812 = vpack.c.b16 %v628, %v624
    %v813 = vpack.c.b16 %v629, %v625
    %v814 = vpack.c.b16 %v630, %v626
    %v815 = vpack.c.b16 %v635, %v631
    %v816 = vpack.c.b16 %v636, %v632
    %v817 = vpack.c.b16 %v637, %v633
    %v818 = vpack.c.b16 %v638, %v634
    %v819 = vpack.c.b16 %v643, %v639
    %v820 = vpack.c.b16 %v644, %v640
    %v821 = vpack.c.b16 %v645, %v641
    %v822 = vpack.c.b16 %v646, %v642
    %v823 = vpack.c.b16 %v651, %v647
    %v824 = vpack.c.b16 %v652, %v648
    %v825 = vpack.c.b16 %v653, %v649
    %v826 = vpack.c.b16 %v654, %v650
    %v827 = vpack.c.b16 %v659, %v655
    %v828 = vpack.c.b16 %v660, %v656
    %v829 = vpack.c.b16 %v661, %v657
    %v830 = vpack.c.b16 %v662, %v658
    %v831 = vpack.c.b16 %v667, %v663
    %v832 = vpack.c.b16 %v668, %v664
    %v833 = vpack.c.b16 %v669, %v665
    %v834 = vpack.c.b16 %v670, %v666
    %v835 = vpack.c.b16 %v675, %v671
    %v836 = vpack.c.b16 %v676, %v672
    %v837 = vpack.c.b16 %v677, %v673
    %v838 = vpack.c.b16 %v678, %v674
    %v839 = vpack.c.b16 %v683, %v679
    %v840 = vpack.c.b16 %v684, %v680
    %v841 = vpack.c.b16 %v685, %v681
    %v842 = vpack.c.b16 %v686, %v682
    %v843 = vpack.c.b16 %v691, %v687
    %v844 = vpack.c.b16 %v692, %v688
    %v845 = vpack.c.b16 %v693, %v689
    %v846 = vpack.c.b16 %v694, %v690
    %v847 = vpack.c.b16 %v699, %v695
    %v848 = vpack.c.b16 %v700, %v696
    %v849 = vpack.c.b16 %v701, %v697
    %v850 = vpack.c.b16 %v702, %v698
    %v851 = vpack.c.b16 %v707, %v703
    %v852 = vpack.c.b16 %v708, %v704
    %v853 = vpack.c.b16 %v709, %v705
    %v854 = vpack.c.b16 %v710, %v706
    %v855 = vpack.c.b16 %v715, %v711
    %v856 = vpack.c.b16 %v716, %v712
    %v857 = vpack.c.b16 %v717, %v713
    %v858 = vpack.c.b16 %v718, %v714
    %v859 = vpack.c.b16 %v723, %v719
    %v860 = vpack.c.b16 %v724, %v720
    %v861 = vpack.c.b16 %v725, %v721
    %v862 = vpack.c.b16 %v726, %v722
    %v863 = vpack.c.b16 %v731, %v727
    %v864 = vpack.c.b16 %v732, %v728
    %v865 = vpack.c.b16 %v733, %v729
    %v866 = vpack.c.b16 %v734, %v730
    %v867 = vpack.c.b16 %v739, %v735
    %v868 = vpack.c.b16 %v740, %v736
    %v869 = vpack.c.b16 %v741, %v737
    %v870 = vpack.c.b16 %v742, %v738
    %999 = vmatprep.subr.bf16.mxu0 %v772
    %1000 = vmatpush1.bf16.msra.mxu0 %v771
    %1001 = vmatprep.subr.bf16.mxu0 %v768
    %1002 = vmatpush1.bf16.msra.mxu0 %v767
    %1003 = vmatprep.subr.bf16.mxu0 %v764
    %1004 = vmatpush1.bf16.msra.mxu0 %v763
    %1005 = vmatprep.subr.bf16.mxu0 %v760
    %1006 = vmatpush1.bf16.msra.mxu0 %v759
    %1007 = vmatprep.subr.bf16.mxu0 %v756
    %1008 = vmatpush1.bf16.msra.mxu0 %v755
    %1009 = vmatprep.subr.bf16.mxu0 %v752
    %1010 = vmatpush1.bf16.msra.mxu0 %v751
    %1011 = vmatprep.subr.bf16.mxu0 %v748
    %1012 = vmatpush1.bf16.msra.mxu0 %v747
    %1013 = vmatprep.subr.bf16.mxu0 %v744
    %1014 = vmatpush1.bf16.msra.mxu0 %v743
    %1015 = vmatprep.subr.bf16.mxu0 %v804
    %1016 = vmatpush2.bf16.msra.mxu0 %v803
    %1017 = vmatprep.subr.bf16.mxu0 %v800
    %1018 = vmatpush2.bf16.msra.mxu0 %v799
    %1019 = vmatprep.subr.bf16.mxu0 %v796
    %1020 = vmatpush2.bf16.msra.mxu0 %v795
    %1021 = vmatprep.subr.bf16.mxu0 %v792
    %1022 = vmatpush2.bf16.msra.mxu0 %v791
    %1023 = vmatprep.subr.bf16.mxu0 %v788
    %1024 = vmatpush2.bf16.msra.mxu0 %v787
    %1025 = vmatprep.subr.bf16.mxu0 %v784
    %1026 = vmatpush2.bf16.msra.mxu0 %v783
    %1027 = vmatprep.subr.bf16.mxu0 %v780
    %1028 = vmatpush2.bf16.msra.mxu0 %v779
    %1029 = vmatprep.subr.bf16.mxu0 %v776
    %1030 = vmatpush2.bf16.msra.mxu0 %v775
    %1031 = vmatprep.mubr.bf16.mxu0 %v224
    %1032 = vmatmul.mubr.bf16.gmra.mxu0 %v223
    %v1033 = vpop.f32.mrf.mxu0
    %v1034 = vadd.f32 0.0, %v1033
    %v1035 = vpop.f32.mrf.mxu0
    %v1036 = vadd.f32 0.0, %v1035
    %v1037 = vpop.f32.mrf.mxu0
    %v1038 = vadd.f32 0.0, %v1037
    %v1039 = vpop.f32.mrf.mxu0
    %v1040 = vadd.f32 0.0, %v1039
    %1041 = vmatprep.mubr.bf16.mxu0 %v228
    %1042 = vmatmul.mubr.bf16.gmra.mxu0 %v227
    %v1043 = vpop.f32.mrf.mxu0
    %v1044 = vadd.f32 0.0, %v1043
    %v1045 = vpop.f32.mrf.mxu0
    %v1046 = vadd.f32 0.0, %v1045
    %v1047 = vpop.f32.mrf.mxu0
    %v1048 = vadd.f32 0.0, %v1047
    %v1049 = vpop.f32.mrf.mxu0
    %v1050 = vadd.f32 0.0, %v1049
    %1051 = vdwg.mxu0
    %1052 = vmatprep.subr.bf16.mxu0 %v836
    %1053 = vmatpush1.bf16.msra.mxu0 %v835
    %1054 = vmatprep.subr.bf16.mxu0 %v832
    %1055 = vmatpush1.bf16.msra.mxu0 %v831
    %1056 = vmatprep.subr.bf16.mxu0 %v828
    %1057 = vmatpush1.bf16.msra.mxu0 %v827
    %1058 = vmatprep.subr.bf16.mxu0 %v824
    %1059 = vmatpush1.bf16.msra.mxu0 %v823
    %1060 = vmatprep.subr.bf16.mxu0 %v820
    %1061 = vmatpush1.bf16.msra.mxu0 %v819
    %1062 = vmatprep.subr.bf16.mxu0 %v816
    %1063 = vmatpush1.bf16.msra.mxu0 %v815
    %1064 = vmatprep.subr.bf16.mxu0 %v812
    %1065 = vmatpush1.bf16.msra.mxu0 %v811
    %1066 = vmatprep.subr.bf16.mxu0 %v808
    %1067 = vmatpush1.bf16.msra.mxu0 %v807
    %1068 = vmatprep.subr.bf16.mxu0 %v868
    %1069 = vmatpush2.bf16.msra.mxu0 %v867
    %1070 = vmatprep.subr.bf16.mxu0 %v864
    %1071 = vmatpush2.bf16.msra.mxu0 %v863
    %1072 = vmatprep.subr.bf16.mxu0 %v860
    %1073 = vmatpush2.bf16.msra.mxu0 %v859
    %1074 = vmatprep.subr.bf16.mxu0 %v856
    %1075 = vmatpush2.bf16.msra.mxu0 %v855
    %1076 = vmatprep.subr.bf16.mxu0 %v852
    %1077 = vmatpush2.bf16.msra.mxu0 %v851
    %1078 = vmatprep.subr.bf16.mxu0 %v848
    %1079 = vmatpush2.bf16.msra.mxu0 %v847
    %1080 = vmatprep.subr.bf16.mxu0 %v844
    %1081 = vmatpush2.bf16.msra.mxu0 %v843
    %1082 = vmatprep.subr.bf16.mxu0 %v840
    %1083 = vmatpush2.bf16.msra.mxu0 %v839
    %1084 = vmatprep.mubr.bf16.mxu0 %v226
    %1085 = vmatmul.mubr.bf16.gmra.mxu0 %v225
    %v1086 = vpop.f32.mrf.mxu0
    %v1087 = vadd.f32 %v1034, %v1086
    %v1088 = vpop.f32.mrf.mxu0
    %v1089 = vadd.f32 %v1036, %v1088
    %v1090 = vpop.f32.mrf.mxu0
    %v1091 = vadd.f32 %v1038, %v1090
    %v1092 = vpop.f32.mrf.mxu0
    %v1093 = vadd.f32 %v1040, %v1092
    %1094 = vmatprep.mubr.bf16.mxu0 %v230
    %1095 = vmatmul.mubr.bf16.gmra.mxu0 %v229
    %v1096 = vpop.f32.mrf.mxu0
    %v1097 = vadd.f32 %v1044, %v1096
    %v1098 = vpop.f32.mrf.mxu0
    %v1099 = vadd.f32 %v1046, %v1098
    %v1100 = vpop.f32.mrf.mxu0
    %v1101 = vadd.f32 %v1048, %v1100
    %v1102 = vpop.f32.mrf.mxu0
    %v1103 = vadd.f32 %v1050, %v1102
    %1104 = vdwg.mxu0
    %1105 = vmatprep.subr.bf16.mxu0 %v774
    %1106 = vmatpush1.bf16.msra.mxu0 %v773
    %1107 = vmatprep.subr.bf16.mxu0 %v770
    %1108 = vmatpush1.bf16.msra.mxu0 %v769
    %1109 = vmatprep.subr.bf16.mxu0 %v766
    %1110 = vmatpush1.bf16.msra.mxu0 %v765
    %1111 = vmatprep.subr.bf16.mxu0 %v762
    %1112 = vmatpush1.bf16.msra.mxu0 %v761
    %1113 = vmatprep.subr.bf16.mxu0 %v758
    %1114 = vmatpush1.bf16.msra.mxu0 %v757
    %1115 = vmatprep.subr.bf16.mxu0 %v754
    %1116 = vmatpush1.bf16.msra.mxu0 %v753
    %1117 = vmatprep.subr.bf16.mxu0 %v750
    %1118 = vmatpush1.bf16.msra.mxu0 %v749
    %1119 = vmatprep.subr.bf16.mxu0 %v746
    %1120 = vmatpush1.bf16.msra.mxu0 %v745
    %1121 = vmatprep.subr.bf16.mxu0 %v806
    %1122 = vmatpush2.bf16.msra.mxu0 %v805
    %1123 = vmatprep.subr.bf16.mxu0 %v802
    %1124 = vmatpush2.bf16.msra.mxu0 %v801
    %1125 = vmatprep.subr.bf16.mxu0 %v798
    %1126 = vmatpush2.bf16.msra.mxu0 %v797
    %1127 = vmatprep.subr.bf16.mxu0 %v794
    %1128 = vmatpush2.bf16.msra.mxu0 %v793
    %1129 = vmatprep.subr.bf16.mxu0 %v790
    %1130 = vmatpush2.bf16.msra.mxu0 %v789
    %1131 = vmatprep.subr.bf16.mxu0 %v786
    %1132 = vmatpush2.bf16.msra.mxu0 %v785
    %1133 = vmatprep.subr.bf16.mxu0 %v782
    %1134 = vmatpush2.bf16.msra.mxu0 %v781
    %1135 = vmatprep.subr.bf16.mxu0 %v778
    %1136 = vmatpush2.bf16.msra.mxu0 %v777
    %1137 = vmatprep.mubr.bf16.mxu0 %v224
    %1138 = vmatmul.mubr.bf16.gmra.mxu0 %v223
    %v1139 = vpop.f32.mrf.mxu0
    %v1140 = vadd.f32 0.0, %v1139
    %v1141 = vpop.f32.mrf.mxu0
    %v1142 = vadd.f32 0.0, %v1141
    %v1143 = vpop.f32.mrf.mxu0
    %v1144 = vadd.f32 0.0, %v1143
    %v1145 = vpop.f32.mrf.mxu0
    %v1146 = vadd.f32 0.0, %v1145
    %1147 = vmatprep.mubr.bf16.mxu0 %v228
    %1148 = vmatmul.mubr.bf16.gmra.mxu0 %v227
    %v1149 = vpop.f32.mrf.mxu0
    %v1150 = vadd.f32 0.0, %v1149
    %v1151 = vpop.f32.mrf.mxu0
    %v1152 = vadd.f32 0.0, %v1151
    %v1153 = vpop.f32.mrf.mxu0
    %v1154 = vadd.f32 0.0, %v1153
    %v1155 = vpop.f32.mrf.mxu0
    %v1156 = vadd.f32 0.0, %v1155
    %1157 = vdwg.mxu0
    %1158 = vmatprep.subr.bf16.mxu0 %v838
    %1159 = vmatpush1.bf16.msra.mxu0 %v837
    %1160 = vmatprep.subr.bf16.mxu0 %v834
    %1161 = vmatpush1.bf16.msra.mxu0 %v833
    %1162 = vmatprep.subr.bf16.mxu0 %v830
    %1163 = vmatpush1.bf16.msra.mxu0 %v829
    %1164 = vmatprep.subr.bf16.mxu0 %v826
    %1165 = vmatpush1.bf16.msra.mxu0 %v825
    %1166 = vmatprep.subr.bf16.mxu0 %v822
    %1167 = vmatpush1.bf16.msra.mxu0 %v821
    %1168 = vmatprep.subr.bf16.mxu0 %v818
    %1169 = vmatpush1.bf16.msra.mxu0 %v817
    %1170 = vmatprep.subr.bf16.mxu0 %v814
    %1171 = vmatpush1.bf16.msra.mxu0 %v813
    %1172 = vmatprep.subr.bf16.mxu0 %v810
    %1173 = vmatpush1.bf16.msra.mxu0 %v809
    %1174 = vmatprep.subr.bf16.mxu0 %v870
    %1175 = vmatpush2.bf16.msra.mxu0 %v869
    %1176 = vmatprep.subr.bf16.mxu0 %v866
    %1177 = vmatpush2.bf16.msra.mxu0 %v865
    %1178 = vmatprep.subr.bf16.mxu0 %v862
    %1179 = vmatpush2.bf16.msra.mxu0 %v861
    %1180 = vmatprep.subr.bf16.mxu0 %v858
    %1181 = vmatpush2.bf16.msra.mxu0 %v857
    %1182 = vmatprep.subr.bf16.mxu0 %v854
    %1183 = vmatpush2.bf16.msra.mxu0 %v853
    %1184 = vmatprep.subr.bf16.mxu0 %v850
    %1185 = vmatpush2.bf16.msra.mxu0 %v849
    %1186 = vmatprep.subr.bf16.mxu0 %v846
    %1187 = vmatpush2.bf16.msra.mxu0 %v845
    %1188 = vmatprep.subr.bf16.mxu0 %v842
    %1189 = vmatpush2.bf16.msra.mxu0 %v841
    %1190 = vmatprep.mubr.bf16.mxu0 %v226
    %1191 = vmatmul.mubr.bf16.gmra.mxu0 %v225
    %v1192 = vpop.f32.mrf.mxu0
    %v1193 = vadd.f32 %v1140, %v1192
    %v1194 = vpop.f32.mrf.mxu0
    %v1195 = vadd.f32 %v1142, %v1194
    %v1196 = vpop.f32.mrf.mxu0
    %v1197 = vadd.f32 %v1144, %v1196
    %v1198 = vpop.f32.mrf.mxu0
    %v1199 = vadd.f32 %v1146, %v1198
    %1200 = vmatprep.mubr.bf16.mxu0 %v230
    %1201 = vmatmul.mubr.bf16.gmra.mxu0 %v229
    %v1202 = vpop.f32.mrf.mxu0
    %v1203 = vadd.f32 %v1150, %v1202
    %v1204 = vpop.f32.mrf.mxu0
    %v1205 = vadd.f32 %v1152, %v1204
    %v1206 = vpop.f32.mrf.mxu0
    %v1207 = vadd.f32 %v1154, %v1206
    %v1208 = vpop.f32.mrf.mxu0
    %v1209 = vadd.f32 %v1156, %v1208
    %1210 = vdwg.mxu0
    %v1211 = vld [vmem:[%s4] sm:$0xff]
    %v1212 = vld [vmem:[%s4 + $0x8] sm:$0xff]
    %v1213 = vld [vmem:[%s4 + $0x10] sm:$0xff]
    %v1214 = vld [vmem:[%s4 + $0x18] sm:$0xff]
    %v1215 = vld [vmem:[%s4 + $0x20] sm:$0xff]
    %v1216 = vld [vmem:[%s4 + $0x28] sm:$0xff]
    %v1217 = vld [vmem:[%s4 + $0x30] sm:$0xff]
    %v1218 = vld [vmem:[%s4 + $0x38] sm:$0xff]
    %v1219 = vld [vmem:[%s4 + $0x40] sm:$0xff]
    %v1220 = vld [vmem:[%s4 + $0x48] sm:$0xff]
    %v1221 = vld [vmem:[%s4 + $0x50] sm:$0xff]
    %v1222 = vld [vmem:[%s4 + $0x58] sm:$0xff]
    %v1223 = vld [vmem:[%s4 + $0x60] sm:$0xff]
    %v1224 = vld [vmem:[%s4 + $0x68] sm:$0xff]
    %v1225 = vld [vmem:[%s4 + $0x70] sm:$0xff]
    %v1226 = vld [vmem:[%s4 + $0x78] sm:$0xff]
    %v1227 = vld [vmem:[%s4 + $0x80] sm:$0xff]
    %v1228 = vld [vmem:[%s4 + $0x88] sm:$0xff]
    %v1229 = vld [vmem:[%s4 + $0x90] sm:$0xff]
    %v1230 = vld [vmem:[%s4 + $0x98] sm:$0xff]
    %v1231 = vld [vmem:[%s4 + $0xa0] sm:$0xff]
    %v1232 = vld [vmem:[%s4 + $0xa8] sm:$0xff]
    %v1233 = vld [vmem:[%s4 + $0xb0] sm:$0xff]
    %v1234 = vld [vmem:[%s4 + $0xb8] sm:$0xff]
    %v1235 = vld [vmem:[%s4 + $0xc0] sm:$0xff]
    %v1236 = vld [vmem:[%s4 + $0xc8] sm:$0xff]
    %v1237 = vld [vmem:[%s4 + $0xd0] sm:$0xff]
    %v1238 = vld [vmem:[%s4 + $0xd8] sm:$0xff]
    %v1239 = vld [vmem:[%s4 + $0xe0] sm:$0xff]
    %v1240 = vld [vmem:[%s4 + $0xe8] sm:$0xff]
    %v1241 = vld [vmem:[%s4 + $0xf0] sm:$0xff]
    %v1242 = vld [vmem:[%s4 + $0xf8] sm:$0xff]
    %v1243 = vld [vmem:[%s4 + $0x100] sm:$0xff]
    %v1244 = vld [vmem:[%s4 + $0x108] sm:$0xff]
    %v1245 = vld [vmem:[%s4 + $0x110] sm:$0xff]
    %v1246 = vld [vmem:[%s4 + $0x118] sm:$0xff]
    %v1247 = vld [vmem:[%s4 + $0x120] sm:$0xff]
    %v1248 = vld [vmem:[%s4 + $0x128] sm:$0xff]
    %v1249 = vld [vmem:[%s4 + $0x130] sm:$0xff]
    %v1250 = vld [vmem:[%s4 + $0x138] sm:$0xff]
    %v1251 = vld [vmem:[%s4 + $0x140] sm:$0xff]
    %v1252 = vld [vmem:[%s4 + $0x148] sm:$0xff]
    %v1253 = vld [vmem:[%s4 + $0x150] sm:$0xff]
    %v1254 = vld [vmem:[%s4 + $0x158] sm:$0xff]
    %v1255 = vld [vmem:[%s4 + $0x160] sm:$0xff]
    %v1256 = vld [vmem:[%s4 + $0x168] sm:$0xff]
    %v1257 = vld [vmem:[%s4 + $0x170] sm:$0xff]
    %v1258 = vld [vmem:[%s4 + $0x178] sm:$0xff]
    %v1259 = vld [vmem:[%s4 + $0x180] sm:$0xff]
    %v1260 = vld [vmem:[%s4 + $0x188] sm:$0xff]
    %v1261 = vld [vmem:[%s4 + $0x190] sm:$0xff]
    %v1262 = vld [vmem:[%s4 + $0x198] sm:$0xff]
    %v1263 = vld [vmem:[%s4 + $0x1a0] sm:$0xff]
    %v1264 = vld [vmem:[%s4 + $0x1a8] sm:$0xff]
    %v1265 = vld [vmem:[%s4 + $0x1b0] sm:$0xff]
    %v1266 = vld [vmem:[%s4 + $0x1b8] sm:$0xff]
    %v1267 = vld [vmem:[%s4 + $0x1c0] sm:$0xff]
    %v1268 = vld [vmem:[%s4 + $0x1c8] sm:$0xff]
    %v1269 = vld [vmem:[%s4 + $0x1d0] sm:$0xff]
    %v1270 = vld [vmem:[%s4 + $0x1d8] sm:$0xff]
    %v1271 = vld [vmem:[%s4 + $0x1e0] sm:$0xff]
    %v1272 = vld [vmem:[%s4 + $0x1e8] sm:$0xff]
    %v1273 = vld [vmem:[%s4 + $0x1f0] sm:$0xff]
    %v1274 = vld [vmem:[%s4 + $0x1f8] sm:$0xff]
    %1275 = vmatprep.subr.mxu0 0.0
    %1276 = vmatpush1.msra.mxu0 %v1226
    %1277 = vmatprep.subr.mxu0 0.0
    %1278 = vmatpush1.msra.mxu0 %v1225
    %1279 = vmatprep.subr.mxu0 0.0
    %1280 = vmatpush1.msra.mxu0 %v1224
    %1281 = vmatprep.subr.mxu0 0.0
    %1282 = vmatpush1.msra.mxu0 %v1223
    %1283 = vmatprep.subr.mxu0 0.0
    %1284 = vmatpush1.msra.mxu0 %v1222
    %1285 = vmatprep.subr.mxu0 0.0
    %1286 = vmatpush1.msra.mxu0 %v1221
    %1287 = vmatprep.subr.mxu0 0.0
    %1288 = vmatpush1.msra.mxu0 %v1220
    %1289 = vmatprep.subr.mxu0 0.0
    %1290 = vmatpush1.msra.mxu0 %v1219
    %1291 = vmatprep.subr.mxu0 0.0
    %1292 = vmatpush1.msra.mxu0 %v1218
    %1293 = vmatprep.subr.mxu0 0.0
    %1294 = vmatpush1.msra.mxu0 %v1217
    %1295 = vmatprep.subr.mxu0 0.0
    %1296 = vmatpush1.msra.mxu0 %v1216
    %1297 = vmatprep.subr.mxu0 0.0
    %1298 = vmatpush1.msra.mxu0 %v1215
    %1299 = vmatprep.subr.mxu0 0.0
    %1300 = vmatpush1.msra.mxu0 %v1214
    %1301 = vmatprep.subr.mxu0 0.0
    %1302 = vmatpush1.msra.mxu0 %v1213
    %1303 = vmatprep.subr.mxu0 0.0
    %1304 = vmatpush1.msra.mxu0 %v1212
    %1305 = vmatprep.subr.mxu0 0.0
    %1306 = vmatpush1.msra.mxu0 %v1211
    %1307 = vmatprep.subr.mxu0 0.0
    %1308 = vmatpush2.msra.mxu0 %v1242
    %1309 = vmatprep.subr.mxu0 0.0
    %1310 = vmatpush2.msra.mxu0 %v1241
    %1311 = vmatprep.subr.mxu0 0.0
    %1312 = vmatpush2.msra.mxu0 %v1240
    %1313 = vmatprep.subr.mxu0 0.0
    %1314 = vmatpush2.msra.mxu0 %v1239
    %1315 = vmatprep.subr.mxu0 0.0
    %1316 = vmatpush2.msra.mxu0 %v1238
    %1317 = vmatprep.subr.mxu0 0.0
    %1318 = vmatpush2.msra.mxu0 %v1237
    %1319 = vmatprep.subr.mxu0 0.0
    %1320 = vmatpush2.msra.mxu0 %v1236
    %1321 = vmatprep.subr.mxu0 0.0
    %1322 = vmatpush2.msra.mxu0 %v1235
    %1323 = vmatprep.subr.mxu0 0.0
    %1324 = vmatpush2.msra.mxu0 %v1234
    %1325 = vmatprep.subr.mxu0 0.0
    %1326 = vmatpush2.msra.mxu0 %v1233
    %1327 = vmatprep.subr.mxu0 0.0
    %1328 = vmatpush2.msra.mxu0 %v1232
    %1329 = vmatprep.subr.mxu0 0.0
    %1330 = vmatpush2.msra.mxu0 %v1231
    %1331 = vmatprep.subr.mxu0 0.0
    %1332 = vmatpush2.msra.mxu0 %v1230
    %1333 = vmatprep.subr.mxu0 0.0
    %1334 = vmatpush2.msra.mxu0 %v1229
    %1335 = vmatprep.subr.mxu0 0.0
    %1336 = vmatpush2.msra.mxu0 %v1228
    %1337 = vmatprep.subr.mxu0 0.0
    %1338 = vmatpush2.msra.mxu0 %v1227
    %1339 = vmatprep.mubr.f32.mxu0 %v1089
    %1340 = vmatmul.mubr.f32.gmra.mxu0 %v1087
    %v1341 = vpop.f32.mrf.mxu0
    %v1342 = vadd.f32 0.0, %v1341
    %v1343 = vpop.f32.mrf.mxu0
    %1344 = vmatprep.mubr.f32.mxu0 %v1093
    %1345 = vmatmul.mubr.f32.gmra.mxu0 %v1091
    %v1346 = vpop.f32.mrf.mxu0
    %v1347 = vadd.f32 0.0, %v1346
    %v1348 = vpop.f32.mrf.mxu0
    %1349 = vmatprep.mubr.f32.mxu0 %v1099
    %1350 = vmatmul.mubr.f32.gmra.mxu0 %v1097
    %v1351 = vpop.f32.mrf.mxu0
    %v1352 = vadd.f32 0.0, %v1351
    %v1353 = vpop.f32.mrf.mxu0
    %1354 = vmatprep.mubr.f32.mxu0 %v1103
    %1355 = vmatmul.mubr.f32.gmra.mxu0 %v1101
    %v1356 = vpop.f32.mrf.mxu0
    %v1357 = vadd.f32 0.0, %v1356
    %v1358 = vpop.f32.mrf.mxu0
    %1359 = vdwg.mxu0
    %1360 = vmatprep.subr.mxu0 0.0
    %1361 = vmatpush1.msra.mxu0 %v1258
    %1362 = vmatprep.subr.mxu0 0.0
    %1363 = vmatpush1.msra.mxu0 %v1257
    %1364 = vmatprep.subr.mxu0 0.0
    %1365 = vmatpush1.msra.mxu0 %v1256
    %1366 = vmatprep.subr.mxu0 0.0
    %1367 = vmatpush1.msra.mxu0 %v1255
    %1368 = vmatprep.subr.mxu0 0.0
    %1369 = vmatpush1.msra.mxu0 %v1254
    %1370 = vmatprep.subr.mxu0 0.0
    %1371 = vmatpush1.msra.mxu0 %v1253
    %1372 = vmatprep.subr.mxu0 0.0
    %1373 = vmatpush1.msra.mxu0 %v1252
    %1374 = vmatprep.subr.mxu0 0.0
    %1375 = vmatpush1.msra.mxu0 %v1251
    %1376 = vmatprep.subr.mxu0 0.0
    %1377 = vmatpush1.msra.mxu0 %v1250
    %1378 = vmatprep.subr.mxu0 0.0
    %1379 = vmatpush1.msra.mxu0 %v1249
    %1380 = vmatprep.subr.mxu0 0.0
    %1381 = vmatpush1.msra.mxu0 %v1248
    %1382 = vmatprep.subr.mxu0 0.0
    %1383 = vmatpush1.msra.mxu0 %v1247
    %1384 = vmatprep.subr.mxu0 0.0
    %1385 = vmatpush1.msra.mxu0 %v1246
    %1386 = vmatprep.subr.mxu0 0.0
    %1387 = vmatpush1.msra.mxu0 %v1245
    %1388 = vmatprep.subr.mxu0 0.0
    %1389 = vmatpush1.msra.mxu0 %v1244
    %1390 = vmatprep.subr.mxu0 0.0
    %1391 = vmatpush1.msra.mxu0 %v1243
    %1392 = vmatprep.subr.mxu0 0.0
    %1393 = vmatpush2.msra.mxu0 %v1274
    %1394 = vmatprep.subr.mxu0 0.0
    %1395 = vmatpush2.msra.mxu0 %v1273
    %1396 = vmatprep.subr.mxu0 0.0
    %1397 = vmatpush2.msra.mxu0 %v1272
    %1398 = vmatprep.subr.mxu0 0.0
    %1399 = vmatpush2.msra.mxu0 %v1271
    %1400 = vmatprep.subr.mxu0 0.0
    %1401 = vmatpush2.msra.mxu0 %v1270
    %1402 = vmatprep.subr.mxu0 0.0
    %1403 = vmatpush2.msra.mxu0 %v1269
    %1404 = vmatprep.subr.mxu0 0.0
    %1405 = vmatpush2.msra.mxu0 %v1268
    %1406 = vmatprep.subr.mxu0 0.0
    %1407 = vmatpush2.msra.mxu0 %v1267
    %1408 = vmatprep.subr.mxu0 0.0
    %1409 = vmatpush2.msra.mxu0 %v1266
    %1410 = vmatprep.subr.mxu0 0.0
    %1411 = vmatpush2.msra.mxu0 %v1265
    %1412 = vmatprep.subr.mxu0 0.0
    %1413 = vmatpush2.msra.mxu0 %v1264
    %1414 = vmatprep.subr.mxu0 0.0
    %1415 = vmatpush2.msra.mxu0 %v1263
    %1416 = vmatprep.subr.mxu0 0.0
    %1417 = vmatpush2.msra.mxu0 %v1262
    %1418 = vmatprep.subr.mxu0 0.0
    %1419 = vmatpush2.msra.mxu0 %v1261
    %1420 = vmatprep.subr.mxu0 0.0
    %1421 = vmatpush2.msra.mxu0 %v1260
    %1422 = vmatprep.subr.mxu0 0.0
    %1423 = vmatpush2.msra.mxu0 %v1259
    %1424 = vmatprep.mubr.f32.mxu0 %v1195
    %1425 = vmatmul.mubr.f32.gmra.mxu0 %v1193
    %v1426 = vpop.f32.mrf.mxu0
    %v1427 = vadd.f32 %v1342, %v1426
    %v1428 = vpop.f32.mrf.mxu0
    %1429 = vmatprep.mubr.f32.mxu0 %v1199
    %1430 = vmatmul.mubr.f32.gmra.mxu0 %v1197
    %v1431 = vpop.f32.mrf.mxu0
    %v1432 = vadd.f32 %v1347, %v1431
    %v1433 = vpop.f32.mrf.mxu0
    %1434 = vmatprep.mubr.f32.mxu0 %v1205
    %1435 = vmatmul.mubr.f32.gmra.mxu0 %v1203
    %v1436 = vpop.f32.mrf.mxu0
    %v1437 = vadd.f32 %v1352, %v1436
    %v1438 = vpop.f32.mrf.mxu0
    %1439 = vmatprep.mubr.f32.mxu0 %v1209
    %1440 = vmatmul.mubr.f32.gmra.mxu0 %v1207
    %v1441 = vpop.f32.mrf.mxu0
    %v1442 = vadd.f32 %v1357, %v1441
    %v1443 = vpop.f32.mrf.mxu0
    %1444 = vdwg.mxu0
    %v1445 = vmul.f32 %v1087, %v1087
    %v1446 = vmul.f32 %v1089, %v1089
    %v1447 = vmul.f32 %v1193, %v1193
    %v1448 = vmul.f32 %v1195, %v1195
    %v1449 = vmul.f32 %v1091, %v1091
    %v1450 = vmul.f32 %v1093, %v1093
    %v1451 = vmul.f32 %v1197, %v1197
    %v1452 = vmul.f32 %v1199, %v1199
    %v1453 = vmul.f32 %v1097, %v1097
    %v1454 = vmul.f32 %v1099, %v1099
    %v1455 = vmul.f32 %v1203, %v1203
    %v1456 = vmul.f32 %v1205, %v1205
    %v1457 = vmul.f32 %v1101, %v1101
    %v1458 = vmul.f32 %v1103, %v1103
    %v1459 = vmul.f32 %v1207, %v1207
    %v1460 = vmul.f32 %v1209, %v1209
    %1461 = vmatprep.subr.mxu0 0.0
    %1462 = vmatpush1.msra.mxu0 %v1226
    %1463 = vmatprep.subr.mxu0 0.0
    %1464 = vmatpush1.msra.mxu0 %v1225
    %1465 = vmatprep.subr.mxu0 0.0
    %1466 = vmatpush1.msra.mxu0 %v1224
    %1467 = vmatprep.subr.mxu0 0.0
    %1468 = vmatpush1.msra.mxu0 %v1223
    %1469 = vmatprep.subr.mxu0 0.0
    %1470 = vmatpush1.msra.mxu0 %v1222
    %1471 = vmatprep.subr.mxu0 0.0
    %1472 = vmatpush1.msra.mxu0 %v1221
    %1473 = vmatprep.subr.mxu0 0.0
    %1474 = vmatpush1.msra.mxu0 %v1220
    %1475 = vmatprep.subr.mxu0 0.0
    %1476 = vmatpush1.msra.mxu0 %v1219
    %1477 = vmatprep.subr.mxu0 0.0
    %1478 = vmatpush1.msra.mxu0 %v1218
    %1479 = vmatprep.subr.mxu0 0.0
    %1480 = vmatpush1.msra.mxu0 %v1217
    %1481 = vmatprep.subr.mxu0 0.0
    %1482 = vmatpush1.msra.mxu0 %v1216
    %1483 = vmatprep.subr.mxu0 0.0
    %1484 = vmatpush1.msra.mxu0 %v1215
    %1485 = vmatprep.subr.mxu0 0.0
    %1486 = vmatpush1.msra.mxu0 %v1214
    %1487 = vmatprep.subr.mxu0 0.0
    %1488 = vmatpush1.msra.mxu0 %v1213
    %1489 = vmatprep.subr.mxu0 0.0
    %1490 = vmatpush1.msra.mxu0 %v1212
    %1491 = vmatprep.subr.mxu0 0.0
    %1492 = vmatpush1.msra.mxu0 %v1211
    %1493 = vmatprep.subr.mxu0 0.0
    %1494 = vmatpush2.msra.mxu0 %v1242
    %1495 = vmatprep.subr.mxu0 0.0
    %1496 = vmatpush2.msra.mxu0 %v1241
    %1497 = vmatprep.subr.mxu0 0.0
    %1498 = vmatpush2.msra.mxu0 %v1240
    %1499 = vmatprep.subr.mxu0 0.0
    %1500 = vmatpush2.msra.mxu0 %v1239
    %1501 = vmatprep.subr.mxu0 0.0
    %1502 = vmatpush2.msra.mxu0 %v1238
    %1503 = vmatprep.subr.mxu0 0.0
    %1504 = vmatpush2.msra.mxu0 %v1237
    %1505 = vmatprep.subr.mxu0 0.0
    %1506 = vmatpush2.msra.mxu0 %v1236
    %1507 = vmatprep.subr.mxu0 0.0
    %1508 = vmatpush2.msra.mxu0 %v1235
    %1509 = vmatprep.subr.mxu0 0.0
    %1510 = vmatpush2.msra.mxu0 %v1234
    %1511 = vmatprep.subr.mxu0 0.0
    %1512 = vmatpush2.msra.mxu0 %v1233
    %1513 = vmatprep.subr.mxu0 0.0
    %1514 = vmatpush2.msra.mxu0 %v1232
    %1515 = vmatprep.subr.mxu0 0.0
    %1516 = vmatpush2.msra.mxu0 %v1231
    %1517 = vmatprep.subr.mxu0 0.0
    %1518 = vmatpush2.msra.mxu0 %v1230
    %1519 = vmatprep.subr.mxu0 0.0
    %1520 = vmatpush2.msra.mxu0 %v1229
    %1521 = vmatprep.subr.mxu0 0.0
    %1522 = vmatpush2.msra.mxu0 %v1228
    %1523 = vmatprep.subr.mxu0 0.0
    %1524 = vmatpush2.msra.mxu0 %v1227
    %1525 = vmatprep.mubr.f32.mxu0 %v1446
    %1526 = vmatmul.mubr.f32.gmra.mxu0 %v1445
    %v1527 = vpop.f32.mrf.mxu0
    %v1528 = vadd.f32 0.0, %v1527
    %v1529 = vpop.f32.mrf.mxu0
    %1530 = vmatprep.mubr.f32.mxu0 %v1450
    %1531 = vmatmul.mubr.f32.gmra.mxu0 %v1449
    %v1532 = vpop.f32.mrf.mxu0
    %v1533 = vadd.f32 0.0, %v1532
    %v1534 = vpop.f32.mrf.mxu0
    %1535 = vmatprep.mubr.f32.mxu0 %v1454
    %1536 = vmatmul.mubr.f32.gmra.mxu0 %v1453
    %v1537 = vpop.f32.mrf.mxu0
    %v1538 = vadd.f32 0.0, %v1537
    %v1539 = vpop.f32.mrf.mxu0
    %1540 = vmatprep.mubr.f32.mxu0 %v1458
    %1541 = vmatmul.mubr.f32.gmra.mxu0 %v1457
    %v1542 = vpop.f32.mrf.mxu0
    %v1543 = vadd.f32 0.0, %v1542
    %v1544 = vpop.f32.mrf.mxu0
    %1545 = vdwg.mxu0
    %1546 = vmatprep.subr.mxu0 0.0
    %1547 = vmatpush1.msra.mxu0 %v1258
    %1548 = vmatprep.subr.mxu0 0.0
    %1549 = vmatpush1.msra.mxu0 %v1257
    %1550 = vmatprep.subr.mxu0 0.0
    %1551 = vmatpush1.msra.mxu0 %v1256
    %1552 = vmatprep.subr.mxu0 0.0
    %1553 = vmatpush1.msra.mxu0 %v1255
    %1554 = vmatprep.subr.mxu0 0.0
    %1555 = vmatpush1.msra.mxu0 %v1254
    %1556 = vmatprep.subr.mxu0 0.0
    %1557 = vmatpush1.msra.mxu0 %v1253
    %1558 = vmatprep.subr.mxu0 0.0
    %1559 = vmatpush1.msra.mxu0 %v1252
    %1560 = vmatprep.subr.mxu0 0.0
    %1561 = vmatpush1.msra.mxu0 %v1251
    %1562 = vmatprep.subr.mxu0 0.0
    %1563 = vmatpush1.msra.mxu0 %v1250
    %1564 = vmatprep.subr.mxu0 0.0
    %1565 = vmatpush1.msra.mxu0 %v1249
    %1566 = vmatprep.subr.mxu0 0.0
    %1567 = vmatpush1.msra.mxu0 %v1248
    %1568 = vmatprep.subr.mxu0 0.0
    %1569 = vmatpush1.msra.mxu0 %v1247
    %1570 = vmatprep.subr.mxu0 0.0
    %1571 = vmatpush1.msra.mxu0 %v1246
    %1572 = vmatprep.subr.mxu0 0.0
    %1573 = vmatpush1.msra.mxu0 %v1245
    %1574 = vmatprep.subr.mxu0 0.0
    %1575 = vmatpush1.msra.mxu0 %v1244
    %1576 = vmatprep.subr.mxu0 0.0
    %1577 = vmatpush1.msra.mxu0 %v1243
    %1578 = vmatprep.subr.mxu0 0.0
    %1579 = vmatpush2.msra.mxu0 %v1274
    %1580 = vmatprep.subr.mxu0 0.0
    %1581 = vmatpush2.msra.mxu0 %v1273
    %1582 = vmatprep.subr.mxu0 0.0
    %1583 = vmatpush2.msra.mxu0 %v1272
    %1584 = vmatprep.subr.mxu0 0.0
    %1585 = vmatpush2.msra.mxu0 %v1271
    %1586 = vmatprep.subr.mxu0 0.0
    %1587 = vmatpush2.msra.mxu0 %v1270
    %1588 = vmatprep.subr.mxu0 0.0
    %1589 = vmatpush2.msra.mxu0 %v1269
    %1590 = vmatprep.subr.mxu0 0.0
    %1591 = vmatpush2.msra.mxu0 %v1268
    %1592 = vmatprep.subr.mxu0 0.0
    %1593 = vmatpush2.msra.mxu0 %v1267
    %1594 = vmatprep.subr.mxu0 0.0
    %1595 = vmatpush2.msra.mxu0 %v1266
    %1596 = vmatprep.subr.mxu0 0.0
    %1597 = vmatpush2.msra.mxu0 %v1265
    %1598 = vmatprep.subr.mxu0 0.0
    %1599 = vmatpush2.msra.mxu0 %v1264
    %1600 = vmatprep.subr.mxu0 0.0
    %1601 = vmatpush2.msra.mxu0 %v1263
    %1602 = vmatprep.subr.mxu0 0.0
    %1603 = vmatpush2.msra.mxu0 %v1262
    %1604 = vmatprep.subr.mxu0 0.0
    %1605 = vmatpush2.msra.mxu0 %v1261
    %1606 = vmatprep.subr.mxu0 0.0
    %1607 = vmatpush2.msra.mxu0 %v1260
    %1608 = vmatprep.subr.mxu0 0.0
    %1609 = vmatpush2.msra.mxu0 %v1259
    %1610 = vmatprep.mubr.f32.mxu0 %v1448
    %1611 = vmatmul.mubr.f32.gmra.mxu0 %v1447
    %v1612 = vpop.f32.mrf.mxu0
    %v1613 = vadd.f32 %v1528, %v1612
    %v1614 = vpop.f32.mrf.mxu0
    %1615 = vmatprep.mubr.f32.mxu0 %v1452
    %1616 = vmatmul.mubr.f32.gmra.mxu0 %v1451
    %v1617 = vpop.f32.mrf.mxu0
    %v1618 = vadd.f32 %v1533, %v1617
    %v1619 = vpop.f32.mrf.mxu0
    %1620 = vmatprep.mubr.f32.mxu0 %v1456
    %1621 = vmatmul.mubr.f32.gmra.mxu0 %v1455
    %v1622 = vpop.f32.mrf.mxu0
    %v1623 = vadd.f32 %v1538, %v1622
    %v1624 = vpop.f32.mrf.mxu0
    %1625 = vmatprep.mubr.f32.mxu0 %v1460
    %1626 = vmatmul.mubr.f32.gmra.mxu0 %v1459
    %v1627 = vpop.f32.mrf.mxu0
    %v1628 = vadd.f32 %v1543, %v1627
    %v1629 = vpop.f32.mrf.mxu0
    %1630 = vdwg.mxu0
    %vm1631 = vcmask 261120
    %v1632 = vsel %vm1631, %v1427, 0.0
    %v1633 = vsel %vm1631, %v1432, 0.0
    %v1634 = vadd.f32 %v1632, %v1633
    %v1635 = vsel %vm1631, %v1437, 0.0
    %v1636 = vadd.f32 %v1634, %v1635
    %v1637 = vsel %vm1631, %v1442, 0.0
    %v1638 = vadd.f32 %v1636, %v1637
    %v1639 = vrot.slane %v1638, 4
    %v1640 = vadd.f32 %v1638, %v1639
    %v1641 = vrot.slane %v1640, 2
    %v1642 = vadd.f32 %v1640, %v1641
    %v1643 = vrot.slane %v1642, 1
    %v1644 = vadd.f32 %v1642, %v1643
    %v1645 = vmul.f32 %v1644, 0.001953125
    %v1646 = vsel %vm1631, %v1613, 0.0
    %v1647 = vsel %vm1631, %v1618, 0.0
    %v1648 = vadd.f32 %v1646, %v1647
    %v1649 = vsel %vm1631, %v1623, 0.0
    %v1650 = vadd.f32 %v1648, %v1649
    %v1651 = vsel %vm1631, %v1628, 0.0
    %v1652 = vadd.f32 %v1650, %v1651
    %v1653 = vrot.slane %v1652, 4
    %v1654 = vadd.f32 %v1652, %v1653
    %v1655 = vrot.slane %v1654, 2
    %v1656 = vadd.f32 %v1654, %v1655
    %v1657 = vrot.slane %v1656, 1
    %v1658 = vadd.f32 %v1656, %v1657
    %v1659 = vmul.f32 %v1658, 0.001953125
    %v1660 = vmul.f32 %v1645, %v1645
    %v1661 = vsub.f32 %v1659, %v1660
    %v1662 = vmax.f32 %v1661, 0.0
    %v1663 = vadd.f32 %v1662, 1.001e-05
    %v1664 = vrsqrt.pop %v1663
    %v1665 = vld [vmem:[#allocation5] sm:$0x1]
    %v1666 = vmul.f32 %v1665, %v1664
    %v1667 = vld [vmem:[#allocation7] sm:$0x1]
    %v1668 = vmul.f32 %v1645, %v1666
    %v1669 = vsub.f32 %v1667, %v1668
    %v1671 = vlaneseq
    %v1672 = vshrl.u32 %v1671, 7
    %v1673 = vsub.s32 0, %v1672
    %v1674 = vrot.slane %v1666, %v1673
    %1675 = vrot.lane.b32.xlu0 %v1674, 32
    %v1676 = vpop.permute.xlu0 %1675
    %1678 = vrot.lane.b32.xlu0 %v1674, 64
    %v1679 = vpop.permute.xlu0 %1678
    %1681 = vrot.lane.b32.xlu0 %v1674, 96
    %v1682 = vpop.permute.xlu0 %1681
    %v1684 = vsel %vm1631, %v1666, %v1676
    %vm1685 = vcmask 523264
    %v1686 = vsel %vm1685, %v1684, %v1679
    %vm1687 = vcmask 785408
    %v1688 = vsel %vm1687, %v1686, %v1682
    %v1690 = vlaneseq
    %v1691 = vshrl.u32 %v1690, 7
    %v1692 = vsub.s32 0, %v1691
    %v1693 = vrot.slane %v1669, %v1692
    %1694 = vrot.lane.b32.xlu0 %v1693, 32
    %v1695 = vpop.permute.xlu0 %1694
    %1697 = vrot.lane.b32.xlu0 %v1693, 64
    %v1698 = vpop.permute.xlu0 %1697
    %1700 = vrot.lane.b32.xlu0 %v1693, 96
    %v1701 = vpop.permute.xlu0 %1700
    %v1703 = vsel %vm1631, %v1669, %v1695
    %v1704 = vsel %vm1685, %v1703, %v1698
    %v1705 = vsel %vm1687, %v1704, %v1701
    %v1706 = vlaneseq
    %v1707 = vshrl.u32 %v1706, 7
    %v1708 = vsub.s32 0, %v1707
    %v1709 = vrot.slane %v1688, %v1708
    %v1710 = vmul.f32 %v1087, %v1709
    %v1711 = vmul.f32 %v1089, %v1709
    %v1712 = vmul.f32 %v1193, %v1709
    %v1713 = vmul.f32 %v1195, %v1709
    %v1714 = vmul.f32 %v1091, %v1709
    %v1715 = vmul.f32 %v1093, %v1709
    %v1716 = vmul.f32 %v1197, %v1709
    %v1717 = vmul.f32 %v1199, %v1709
    %v1718 = vmul.f32 %v1097, %v1709
    %v1719 = vmul.f32 %v1099, %v1709
    %v1720 = vmul.f32 %v1203, %v1709
    %v1721 = vmul.f32 %v1205, %v1709
    %v1722 = vmul.f32 %v1101, %v1709
    %v1723 = vmul.f32 %v1103, %v1709
    %v1724 = vmul.f32 %v1207, %v1709
    %v1725 = vmul.f32 %v1209, %v1709
    %v1726 = vlaneseq
    %v1727 = vshrl.u32 %v1726, 7
    %v1728 = vsub.s32 0, %v1727
    %v1729 = vrot.slane %v1705, %v1728
    %v1730 = vadd.f32 %v1710, %v1729
    %v1731 = vadd.f32 %v1711, %v1729
    %v1732 = vadd.f32 %v1712, %v1729
    %v1733 = vadd.f32 %v1713, %v1729
    %v1734 = vadd.f32 %v1714, %v1729
    %v1735 = vadd.f32 %v1715, %v1729
    %v1736 = vadd.f32 %v1716, %v1729
    %v1737 = vadd.f32 %v1717, %v1729
    %v1738 = vadd.f32 %v1718, %v1729
    %v1739 = vadd.f32 %v1719, %v1729
    %v1740 = vadd.f32 %v1720, %v1729
    %v1741 = vadd.f32 %v1721, %v1729
    %v1742 = vadd.f32 %v1722, %v1729
    %v1743 = vadd.f32 %v1723, %v1729
    %v1744 = vadd.f32 %v1724, %v1729
    %v1745 = vadd.f32 %v1725, %v1729
    %v1746 = vmax.f32 %v1730, 0.0
    %v1747 = vmax.f32 %v1731, 0.0
    %v1748 = vmax.f32 %v1732, 0.0
    %v1749 = vmax.f32 %v1733, 0.0
    %v1750 = vmax.f32 %v1734, 0.0
    %v1751 = vmax.f32 %v1735, 0.0
    %v1752 = vmax.f32 %v1736, 0.0
    %v1753 = vmax.f32 %v1737, 0.0
    %v1754 = vmax.f32 %v1738, 0.0
    %v1755 = vmax.f32 %v1739, 0.0
    %v1756 = vmax.f32 %v1740, 0.0
    %v1757 = vmax.f32 %v1741, 0.0
    %v1758 = vmax.f32 %v1742, 0.0
    %v1759 = vmax.f32 %v1743, 0.0
    %v1760 = vmax.f32 %v1744, 0.0
    %v1761 = vmax.f32 %v1745, 0.0
    %1762 = vst [vmem:[#allocation2] sm:$0xf] 0.0
    %1763 = vst [vmem:[#allocation2 + $0x8] sm:$0xf] 0.0
    %1764 = vst [vmem:[#allocation2 + $0x10] sm:$0xf] 0.0
    %1765 = vst [vmem:[#allocation2 + $0x18] sm:$0xf] 0.0
    %1766 = vst [vmem:[#allocation2 + $0x60] sm:$0xf] 0.0
    %1767 = vst [vmem:[#allocation2 + $0x68] sm:$0xf] 0.0
    %1768 = vst [vmem:[#allocation2 + $0x70] sm:$0xf] 0.0
    %1769 = vst [vmem:[#allocation2 + $0x78] sm:$0xf] 0.0
    %1770 = vst [vmem:[#allocation2 + $0x40] sm:$0xf0] 0.0
    %1771 = vst [vmem:[#allocation2 + $0x48] sm:$0xf0] 0.0
    %1772 = vst [vmem:[#allocation2 + $0x50] sm:$0xf0] 0.0
    %1773 = vst [vmem:[#allocation2 + $0x58] sm:$0xf0] 0.0
    %1774 = vst [vmem:[#allocation2 + $0xa0] sm:$0xf0] 0.0
    %1775 = vst [vmem:[#allocation2 + $0xa8] sm:$0xf0] 0.0
    %1776 = vst [vmem:[#allocation2 + $0xb0] sm:$0xf0] 0.0
    %1777 = vst [vmem:[#allocation2 + $0xb8] sm:$0xf0] 0.0
    %vm1794 = vcmask 1043456
    %v1795 = vrot.slane %v1746, 4
    %v1796 = vrot.slane %v1747, 4
    %v1797 = vrot.slane %v1748, 4
    %v1798 = vrot.slane %v1749, 4
    %v1799 = vrot.slane %v1750, 4
    %v1800 = vsel %vm1794, %v1795, %v1799
    %v1801 = vrot.slane %v1751, 4
    %v1802 = vsel %vm1794, %v1796, %v1801
    %v1803 = vrot.slane %v1752, 4
    %v1804 = vsel %vm1794, %v1797, %v1803
    %v1805 = vrot.slane %v1753, 4
    %v1806 = vsel %vm1794, %v1798, %v1805
    %v1807 = vrot.slane %v1754, 4
    %v1808 = vrot.slane %v1755, 4
    %v1809 = vrot.slane %v1756, 4
    %v1810 = vrot.slane %v1757, 4
    %v1811 = vrot.slane %v1758, 4
    %v1812 = vsel %vm1794, %v1807, %v1811
    %v1813 = vrot.slane %v1759, 4
    %v1814 = vsel %vm1794, %v1808, %v1813
    %v1815 = vrot.slane %v1760, 4
    %v1816 = vsel %vm1794, %v1809, %v1815
    %v1817 = vrot.slane %v1761, 4
    %v1818 = vsel %vm1794, %v1810, %v1817
    %1843 = vst [vmem:[#allocation2] sm:$0xf0] %v1795
    %1844 = vst [vmem:[#allocation2 + $0x8] sm:$0xf0] %v1796
    %1845 = vst [vmem:[#allocation2 + $0x10] sm:$0xf0] %v1797
    %1846 = vst [vmem:[#allocation2 + $0x18] sm:$0xf0] %v1798
    %1847 = vst [vmem:[#allocation2 + $0x20] sm:$0xff] %v1800
    %1848 = vst [vmem:[#allocation2 + $0x28] sm:$0xff] %v1802
    %1849 = vst [vmem:[#allocation2 + $0x30] sm:$0xff] %v1804
    %1850 = vst [vmem:[#allocation2 + $0x38] sm:$0xff] %v1806
    %1851 = vst [vmem:[#allocation2 + $0x40] sm:$0xf] %v1799
    %1852 = vst [vmem:[#allocation2 + $0x48] sm:$0xf] %v1801
    %1853 = vst [vmem:[#allocation2 + $0x50] sm:$0xf] %v1803
    %1854 = vst [vmem:[#allocation2 + $0x58] sm:$0xf] %v1805
    %1855 = vst [vmem:[#allocation2 + $0x60] sm:$0xf0] %v1807
    %1856 = vst [vmem:[#allocation2 + $0x68] sm:$0xf0] %v1808
    %1857 = vst [vmem:[#allocation2 + $0x70] sm:$0xf0] %v1809
    %1858 = vst [vmem:[#allocation2 + $0x78] sm:$0xf0] %v1810
    %1859 = vst [vmem:[#allocation2 + $0x80] sm:$0xff] %v1812
    %1860 = vst [vmem:[#allocation2 + $0x88] sm:$0xff] %v1814
    %1861 = vst [vmem:[#allocation2 + $0x90] sm:$0xff] %v1816
    %1862 = vst [vmem:[#allocation2 + $0x98] sm:$0xff] %v1818
    %1863 = vst [vmem:[#allocation2 + $0xa0] sm:$0xf] %v1811
    %1864 = vst [vmem:[#allocation2 + $0xa8] sm:$0xf] %v1813
    %1865 = vst [vmem:[#allocation2 + $0xb0] sm:$0xf] %v1815
    %1866 = vst [vmem:[#allocation2 + $0xb8] sm:$0xf] %v1817
    %v1867 = vld [vmem:[#allocation2] sm:$0xfc]
    %v1868 = vld [vmem:[#allocation2 + $0x8] sm:$0xfc]
    %v1869 = vld [vmem:[#allocation2 + $0x10] sm:$0xfc]
    %v1870 = vld [vmem:[#allocation2 + $0x18] sm:$0xfc]
    %v1871 = vld [vmem:[#allocation2 + $0x20] sm:$0xff]
    %v1872 = vld [vmem:[#allocation2 + $0x28] sm:$0xff]
    %v1873 = vld [vmem:[#allocation2 + $0x30] sm:$0xff]
    %v1874 = vld [vmem:[#allocation2 + $0x38] sm:$0xff]
    %v1875 = vld [vmem:[#allocation2 + $0x40] sm:$0x3]
    %v1876 = vld [vmem:[#allocation2 + $0x48] sm:$0x3]
    %v1877 = vld [vmem:[#allocation2 + $0x50] sm:$0x3]
    %v1878 = vld [vmem:[#allocation2 + $0x58] sm:$0x3]
    %v1879 = vld [vmem:[#allocation2 + $0x60] sm:$0xfc]
    %v1880 = vld [vmem:[#allocation2 + $0x68] sm:$0xfc]
    %v1881 = vld [vmem:[#allocation2 + $0x70] sm:$0xfc]
    %v1882 = vld [vmem:[#allocation2 + $0x78] sm:$0xfc]
    %v1883 = vld [vmem:[#allocation2 + $0x80] sm:$0xff]
    %v1884 = vld [vmem:[#allocation2 + $0x88] sm:$0xff]
    %v1885 = vld [vmem:[#allocation2 + $0x90] sm:$0xff]
    %v1886 = vld [vmem:[#allocation2 + $0x98] sm:$0xff]
    %v1887 = vld [vmem:[#allocation2 + $0xa0] sm:$0x3]
    %v1888 = vld [vmem:[#allocation2 + $0xa8] sm:$0x3]
    %v1889 = vld [vmem:[#allocation2 + $0xb0] sm:$0x3]
    %v1890 = vld [vmem:[#allocation2 + $0xb8] sm:$0x3]
    %vm1915 = vcmask 1045504
    %v1916 = vrot.slane %v1867, 2
    %v1917 = vrot.slane %v1871, 2
    %v1918 = vsel %vm1915, %v1916, %v1917
    %v1919 = vrot.slane %v1868, 2
    %v1920 = vrot.slane %v1872, 2
    %v1921 = vsel %vm1915, %v1919, %v1920
    %v1922 = vrot.slane %v1869, 2
    %v1923 = vrot.slane %v1873, 2
    %v1924 = vsel %vm1915, %v1922, %v1923
    %v1925 = vrot.slane %v1870, 2
    %v1926 = vrot.slane %v1874, 2
    %v1927 = vsel %vm1915, %v1925, %v1926
    %v1928 = vrot.slane %v1875, 2
    %v1929 = vsel %vm1915, %v1917, %v1928
    %v1930 = vrot.slane %v1876, 2
    %v1931 = vsel %vm1915, %v1920, %v1930
    %v1932 = vrot.slane %v1877, 2
    %v1933 = vsel %vm1915, %v1923, %v1932
    %v1934 = vrot.slane %v1878, 2
    %v1935 = vsel %vm1915, %v1926, %v1934
    %v1936 = vrot.slane %v1879, 2
    %v1937 = vrot.slane %v1883, 2
    %v1938 = vsel %vm1915, %v1936, %v1937
    %v1939 = vrot.slane %v1880, 2
    %v1940 = vrot.slane %v1884, 2
    %v1941 = vsel %vm1915, %v1939, %v1940
    %v1942 = vrot.slane %v1881, 2
    %v1943 = vrot.slane %v1885, 2
    %v1944 = vsel %vm1915, %v1942, %v1943
    %v1945 = vrot.slane %v1882, 2
    %v1946 = vrot.slane %v1886, 2
    %v1947 = vsel %vm1915, %v1945, %v1946
    %v1948 = vrot.slane %v1887, 2
    %v1949 = vsel %vm1915, %v1937, %v1948
    %v1950 = vrot.slane %v1888, 2
    %v1951 = vsel %vm1915, %v1940, %v1950
    %v1952 = vrot.slane %v1889, 2
    %v1953 = vsel %vm1915, %v1943, %v1952
    %v1954 = vrot.slane %v1890, 2
    %v1955 = vsel %vm1915, %v1946, %v1954
    %v1972 = vpack.c.bf16 %v1929, %v1918
    %v1973 = vpack.c.bf16 %v1931, %v1921
    %v1974 = vpack.c.bf16 %v1933, %v1924
    %v1975 = vpack.c.bf16 %v1935, %v1927
    %v1976 = vpack.c.bf16 %v1949, %v1938
    %v1977 = vpack.c.bf16 %v1951, %v1941
    %v1978 = vpack.c.bf16 %v1953, %v1944
    %v1979 = vpack.c.bf16 %v1955, %v1947
    %v1980 = vld [vmem:[#allocation9] sm:$0xff]
    %v1981 = vld [vmem:[#allocation9 + $0x8] sm:$0xff]
    %v1982 = vld [vmem:[#allocation9 + $0x10] sm:$0xff]
    %v1983 = vld [vmem:[#allocation9 + $0x18] sm:$0xff]
    %v1984 = vld [vmem:[#allocation9 + $0x20] sm:$0xff]
    %v1985 = vld [vmem:[#allocation9 + $0x28] sm:$0xff]
    %v1986 = vld [vmem:[#allocation9 + $0x30] sm:$0xff]
    %v1987 = vld [vmem:[#allocation9 + $0x38] sm:$0xff]
    %v1988 = vld [vmem:[#allocation9 + $0x40] sm:$0xff]
    %v1989 = vld [vmem:[#allocation9 + $0x48] sm:$0xff]
    %v1990 = vld [vmem:[#allocation9 + $0x50] sm:$0xff]
    %v1991 = vld [vmem:[#allocation9 + $0x58] sm:$0xff]
    %v1992 = vld [vmem:[#allocation9 + $0x60] sm:$0xff]
    %v1993 = vld [vmem:[#allocation9 + $0x68] sm:$0xff]
    %v1994 = vld [vmem:[#allocation9 + $0x70] sm:$0xff]
    %v1995 = vld [vmem:[#allocation9 + $0x78] sm:$0xff]
    %v1996 = vld [vmem:[#allocation9 + $0x80] sm:$0xff]
    %v1997 = vld [vmem:[#allocation9 + $0x88] sm:$0xff]
    %v1998 = vld [vmem:[#allocation9 + $0x90] sm:$0xff]
    %v1999 = vld [vmem:[#allocation9 + $0x98] sm:$0xff]
    %v2000 = vld [vmem:[#allocation9 + $0xa0] sm:$0xff]
    %v2001 = vld [vmem:[#allocation9 + $0xa8] sm:$0xff]
    %v2002 = vld [vmem:[#allocation9 + $0xb0] sm:$0xff]
    %v2003 = vld [vmem:[#allocation9 + $0xb8] sm:$0xff]
    %v2004 = vld [vmem:[#allocation9 + $0xc0] sm:$0xff]
    %v2005 = vld [vmem:[#allocation9 + $0xc8] sm:$0xff]
    %v2006 = vld [vmem:[#allocation9 + $0xd0] sm:$0xff]
    %v2007 = vld [vmem:[#allocation9 + $0xd8] sm:$0xff]
    %v2008 = vld [vmem:[#allocation9 + $0xe0] sm:$0xff]
    %v2009 = vld [vmem:[#allocation9 + $0xe8] sm:$0xff]
    %v2010 = vld [vmem:[#allocation9 + $0xf0] sm:$0xff]
    %v2011 = vld [vmem:[#allocation9 + $0xf8] sm:$0xff]
    %v2012 = vld [vmem:[#allocation9 + $0x100] sm:$0xff]
    %v2013 = vld [vmem:[#allocation9 + $0x108] sm:$0xff]
    %v2014 = vld [vmem:[#allocation9 + $0x110] sm:$0xff]
    %v2015 = vld [vmem:[#allocation9 + $0x118] sm:$0xff]
    %v2016 = vld [vmem:[#allocation9 + $0x120] sm:$0xff]
    %v2017 = vld [vmem:[#allocation9 + $0x128] sm:$0xff]
    %v2018 = vld [vmem:[#allocation9 + $0x130] sm:$0xff]
    %v2019 = vld [vmem:[#allocation9 + $0x138] sm:$0xff]
    %v2020 = vld [vmem:[#allocation9 + $0x140] sm:$0xff]
    %v2021 = vld [vmem:[#allocation9 + $0x148] sm:$0xff]
    %v2022 = vld [vmem:[#allocation9 + $0x150] sm:$0xff]
    %v2023 = vld [vmem:[#allocation9 + $0x158] sm:$0xff]
    %v2024 = vld [vmem:[#allocation9 + $0x160] sm:$0xff]
    %v2025 = vld [vmem:[#allocation9 + $0x168] sm:$0xff]
    %v2026 = vld [vmem:[#allocation9 + $0x170] sm:$0xff]
    %v2027 = vld [vmem:[#allocation9 + $0x178] sm:$0xff]
    %v2028 = vld [vmem:[#allocation9 + $0x180] sm:$0xff]
    %v2029 = vld [vmem:[#allocation9 + $0x188] sm:$0xff]
    %v2030 = vld [vmem:[#allocation9 + $0x190] sm:$0xff]
    %v2031 = vld [vmem:[#allocation9 + $0x198] sm:$0xff]
    %v2032 = vld [vmem:[#allocation9 + $0x1a0] sm:$0xff]
    %v2033 = vld [vmem:[#allocation9 + $0x1a8] sm:$0xff]
    %v2034 = vld [vmem:[#allocation9 + $0x1b0] sm:$0xff]
    %v2035 = vld [vmem:[#allocation9 + $0x1b8] sm:$0xff]
    %v2036 = vld [vmem:[#allocation9 + $0x1c0] sm:$0xff]
    %v2037 = vld [vmem:[#allocation9 + $0x1c8] sm:$0xff]
    %v2038 = vld [vmem:[#allocation9 + $0x1d0] sm:$0xff]
    %v2039 = vld [vmem:[#allocation9 + $0x1d8] sm:$0xff]
    %v2040 = vld [vmem:[#allocation9 + $0x1e0] sm:$0xff]
    %v2041 = vld [vmem:[#allocation9 + $0x1e8] sm:$0xff]
    %v2042 = vld [vmem:[#allocation9 + $0x1f0] sm:$0xff]
    %v2043 = vld [vmem:[#allocation9 + $0x1f8] sm:$0xff]
    %v2044 = vld [vmem:[#allocation2] sm:$0xf8]
    %v2045 = vld [vmem:[#allocation2 + $0x8] sm:$0xf8]
    %v2046 = vld [vmem:[#allocation2 + $0x10] sm:$0xf8]
    %v2047 = vld [vmem:[#allocation2 + $0x18] sm:$0xf8]
    %v2048 = vld [vmem:[#allocation2 + $0x40] sm:$0x7]
    %v2049 = vld [vmem:[#allocation2 + $0x48] sm:$0x7]
    %v2050 = vld [vmem:[#allocation2 + $0x50] sm:$0x7]
    %v2051 = vld [vmem:[#allocation2 + $0x58] sm:$0x7]
    %v2052 = vld [vmem:[#allocation2 + $0x60] sm:$0xf8]
    %v2053 = vld [vmem:[#allocation2 + $0x68] sm:$0xf8]
    %v2054 = vld [vmem:[#allocation2 + $0x70] sm:$0xf8]
    %v2055 = vld [vmem:[#allocation2 + $0x78] sm:$0xf8]
    %v2056 = vld [vmem:[#allocation2 + $0xa0] sm:$0x7]
    %v2057 = vld [vmem:[#allocation2 + $0xa8] sm:$0x7]
    %v2058 = vld [vmem:[#allocation2 + $0xb0] sm:$0x7]
    %v2059 = vld [vmem:[#allocation2 + $0xb8] sm:$0x7]
    %vm2076 = vcmask 1044480
    %v2077 = vrot.slane %v2044, 3
    %v2078 = vrot.slane %v1871, 3
    %v2079 = vsel %vm2076, %v2077, %v2078
    %v2080 = vrot.slane %v2045, 3
    %v2081 = vrot.slane %v1872, 3
    %v2082 = vsel %vm2076, %v2080, %v2081
    %v2083 = vrot.slane %v2046, 3
    %v2084 = vrot.slane %v1873, 3
    %v2085 = vsel %vm2076, %v2083, %v2084
    %v2086 = vrot.slane %v2047, 3
    %v2087 = vrot.slane %v1874, 3
    %v2088 = vsel %vm2076, %v2086, %v2087
    %v2089 = vrot.slane %v2048, 3
    %v2090 = vsel %vm2076, %v2078, %v2089
    %v2091 = vrot.slane %v2049, 3
    %v2092 = vsel %vm2076, %v2081, %v2091
    %v2093 = vrot.slane %v2050, 3
    %v2094 = vsel %vm2076, %v2084, %v2093
    %v2095 = vrot.slane %v2051, 3
    %v2096 = vsel %vm2076, %v2087, %v2095
    %v2097 = vrot.slane %v2052, 3
    %v2098 = vrot.slane %v1883, 3
    %v2099 = vsel %vm2076, %v2097, %v2098
    %v2100 = vrot.slane %v2053, 3
    %v2101 = vrot.slane %v1884, 3
    %v2102 = vsel %vm2076, %v2100, %v2101
    %v2103 = vrot.slane %v2054, 3
    %v2104 = vrot.slane %v1885, 3
    %v2105 = vsel %vm2076, %v2103, %v2104
    %v2106 = vrot.slane %v2055, 3
    %v2107 = vrot.slane %v1886, 3
    %v2108 = vsel %vm2076, %v2106, %v2107
    %v2109 = vrot.slane %v2056, 3
    %v2110 = vsel %vm2076, %v2098, %v2109
    %v2111 = vrot.slane %v2057, 3
    %v2112 = vsel %vm2076, %v2101, %v2111
    %v2113 = vrot.slane %v2058, 3
    %v2114 = vsel %vm2076, %v2104, %v2113
    %v2115 = vrot.slane %v2059, 3
    %v2116 = vsel %vm2076, %v2107, %v2115
    %v2133 = vpack.c.bf16 %v2090, %v2079
    %v2134 = vpack.c.bf16 %v2092, %v2082
    %v2135 = vpack.c.bf16 %v2094, %v2085
    %v2136 = vpack.c.bf16 %v2096, %v2088
    %v2137 = vpack.c.bf16 %v2110, %v2099
    %v2138 = vpack.c.bf16 %v2112, %v2102
    %v2139 = vpack.c.bf16 %v2114, %v2105
    %v2140 = vpack.c.bf16 %v2116, %v2108
    %s2141 = scalar_lea.vmem [#allocation9], 512
    %v2142 = vld [vmem:[%s2141] sm:$0xff]
    %v2143 = vld [vmem:[%s2141 + $0x8] sm:$0xff]
    %v2144 = vld [vmem:[%s2141 + $0x10] sm:$0xff]
    %v2145 = vld [vmem:[%s2141 + $0x18] sm:$0xff]
    %v2146 = vld [vmem:[%s2141 + $0x20] sm:$0xff]
    %v2147 = vld [vmem:[%s2141 + $0x28] sm:$0xff]
    %v2148 = vld [vmem:[%s2141 + $0x30] sm:$0xff]
    %v2149 = vld [vmem:[%s2141 + $0x38] sm:$0xff]
    %v2150 = vld [vmem:[%s2141 + $0x40] sm:$0xff]
    %v2151 = vld [vmem:[%s2141 + $0x48] sm:$0xff]
    %v2152 = vld [vmem:[%s2141 + $0x50] sm:$0xff]
    %v2153 = vld [vmem:[%s2141 + $0x58] sm:$0xff]
    %v2154 = vld [vmem:[%s2141 + $0x60] sm:$0xff]
    %v2155 = vld [vmem:[%s2141 + $0x68] sm:$0xff]
    %v2156 = vld [vmem:[%s2141 + $0x70] sm:$0xff]
    %v2157 = vld [vmem:[%s2141 + $0x78] sm:$0xff]
    %v2158 = vld [vmem:[%s2141 + $0x80] sm:$0xff]
    %v2159 = vld [vmem:[%s2141 + $0x88] sm:$0xff]
    %v2160 = vld [vmem:[%s2141 + $0x90] sm:$0xff]
    %v2161 = vld [vmem:[%s2141 + $0x98] sm:$0xff]
    %v2162 = vld [vmem:[%s2141 + $0xa0] sm:$0xff]
    %v2163 = vld [vmem:[%s2141 + $0xa8] sm:$0xff]
    %v2164 = vld [vmem:[%s2141 + $0xb0] sm:$0xff]
    %v2165 = vld [vmem:[%s2141 + $0xb8] sm:$0xff]
    %v2166 = vld [vmem:[%s2141 + $0xc0] sm:$0xff]
    %v2167 = vld [vmem:[%s2141 + $0xc8] sm:$0xff]
    %v2168 = vld [vmem:[%s2141 + $0xd0] sm:$0xff]
    %v2169 = vld [vmem:[%s2141 + $0xd8] sm:$0xff]
    %v2170 = vld [vmem:[%s2141 + $0xe0] sm:$0xff]
    %v2171 = vld [vmem:[%s2141 + $0xe8] sm:$0xff]
    %v2172 = vld [vmem:[%s2141 + $0xf0] sm:$0xff]
    %v2173 = vld [vmem:[%s2141 + $0xf8] sm:$0xff]
    %v2174 = vld [vmem:[%s2141 + $0x100] sm:$0xff]
    %v2175 = vld [vmem:[%s2141 + $0x108] sm:$0xff]
    %v2176 = vld [vmem:[%s2141 + $0x110] sm:$0xff]
    %v2177 = vld [vmem:[%s2141 + $0x118] sm:$0xff]
    %v2178 = vld [vmem:[%s2141 + $0x120] sm:$0xff]
    %v2179 = vld [vmem:[%s2141 + $0x128] sm:$0xff]
    %v2180 = vld [vmem:[%s2141 + $0x130] sm:$0xff]
    %v2181 = vld [vmem:[%s2141 + $0x138] sm:$0xff]
    %v2182 = vld [vmem:[%s2141 + $0x140] sm:$0xff]
    %v2183 = vld [vmem:[%s2141 + $0x148] sm:$0xff]
    %v2184 = vld [vmem:[%s2141 + $0x150] sm:$0xff]
    %v2185 = vld [vmem:[%s2141 + $0x158] sm:$0xff]
    %v2186 = vld [vmem:[%s2141 + $0x160] sm:$0xff]
    %v2187 = vld [vmem:[%s2141 + $0x168] sm:$0xff]
    %v2188 = vld [vmem:[%s2141 + $0x170] sm:$0xff]
    %v2189 = vld [vmem:[%s2141 + $0x178] sm:$0xff]
    %v2190 = vld [vmem:[%s2141 + $0x180] sm:$0xff]
    %v2191 = vld [vmem:[%s2141 + $0x188] sm:$0xff]
    %v2192 = vld [vmem:[%s2141 + $0x190] sm:$0xff]
    %v2193 = vld [vmem:[%s2141 + $0x198] sm:$0xff]
    %v2194 = vld [vmem:[%s2141 + $0x1a0] sm:$0xff]
    %v2195 = vld [vmem:[%s2141 + $0x1a8] sm:$0xff]
    %v2196 = vld [vmem:[%s2141 + $0x1b0] sm:$0xff]
    %v2197 = vld [vmem:[%s2141 + $0x1b8] sm:$0xff]
    %v2198 = vld [vmem:[%s2141 + $0x1c0] sm:$0xff]
    %v2199 = vld [vmem:[%s2141 + $0x1c8] sm:$0xff]
    %v2200 = vld [vmem:[%s2141 + $0x1d0] sm:$0xff]
    %v2201 = vld [vmem:[%s2141 + $0x1d8] sm:$0xff]
    %v2202 = vld [vmem:[%s2141 + $0x1e0] sm:$0xff]
    %v2203 = vld [vmem:[%s2141 + $0x1e8] sm:$0xff]
    %v2204 = vld [vmem:[%s2141 + $0x1f0] sm:$0xff]
    %v2205 = vld [vmem:[%s2141 + $0x1f8] sm:$0xff]
    %v2270 = vunpack.c.l.b16 %v2142
    %v2271 = vunpack.c.h.b16 %v2142
    %v2272 = vunpack.c.l.b16 %v2143
    %v2273 = vunpack.c.h.b16 %v2143
    %v2274 = vunpack.c.l.b16 %v2144
    %v2275 = vunpack.c.h.b16 %v2144
    %v2276 = vunpack.c.l.b16 %v2145
    %v2277 = vunpack.c.h.b16 %v2145
    %v2278 = vunpack.c.l.b16 %v2146
    %v2279 = vunpack.c.h.b16 %v2146
    %v2280 = vunpack.c.l.b16 %v2147
    %v2281 = vunpack.c.h.b16 %v2147
    %v2282 = vunpack.c.l.b16 %v2148
    %v2283 = vunpack.c.h.b16 %v2148
    %v2284 = vunpack.c.l.b16 %v2149
    %v2285 = vunpack.c.h.b16 %v2149
    %v2286 = vunpack.c.l.b16 %v2150
    %v2287 = vunpack.c.h.b16 %v2150
    %v2288 = vunpack.c.l.b16 %v2151
    %v2289 = vunpack.c.h.b16 %v2151
    %v2290 = vunpack.c.l.b16 %v2152
    %v2291 = vunpack.c.h.b16 %v2152
    %v2292 = vunpack.c.l.b16 %v2153
    %v2293 = vunpack.c.h.b16 %v2153
    %v2294 = vunpack.c.l.b16 %v2154
    %v2295 = vunpack.c.h.b16 %v2154
    %v2296 = vunpack.c.l.b16 %v2155
    %v2297 = vunpack.c.h.b16 %v2155
    %v2298 = vunpack.c.l.b16 %v2156
    %v2299 = vunpack.c.h.b16 %v2156
    %v2300 = vunpack.c.l.b16 %v2157
    %v2301 = vunpack.c.h.b16 %v2157
    %v2302 = vunpack.c.l.b16 %v2158
    %v2303 = vunpack.c.h.b16 %v2158
    %v2304 = vunpack.c.l.b16 %v2159
    %v2305 = vunpack.c.h.b16 %v2159
    %v2306 = vunpack.c.l.b16 %v2160
    %v2307 = vunpack.c.h.b16 %v2160
    %v2308 = vunpack.c.l.b16 %v2161
    %v2309 = vunpack.c.h.b16 %v2161
    %v2310 = vunpack.c.l.b16 %v2162
    %v2311 = vunpack.c.h.b16 %v2162
    %v2312 = vunpack.c.l.b16 %v2163
    %v2313 = vunpack.c.h.b16 %v2163
    %v2314 = vunpack.c.l.b16 %v2164
    %v2315 = vunpack.c.h.b16 %v2164
    %v2316 = vunpack.c.l.b16 %v2165
    %v2317 = vunpack.c.h.b16 %v2165
    %v2318 = vunpack.c.l.b16 %v2166
    %v2319 = vunpack.c.h.b16 %v2166
    %v2320 = vunpack.c.l.b16 %v2167
    %v2321 = vunpack.c.h.b16 %v2167
    %v2322 = vunpack.c.l.b16 %v2168
    %v2323 = vunpack.c.h.b16 %v2168
    %v2324 = vunpack.c.l.b16 %v2169
    %v2325 = vunpack.c.h.b16 %v2169
    %v2326 = vunpack.c.l.b16 %v2170
    %v2327 = vunpack.c.h.b16 %v2170
    %v2328 = vunpack.c.l.b16 %v2171
    %v2329 = vunpack.c.h.b16 %v2171
    %v2330 = vunpack.c.l.b16 %v2172
    %v2331 = vunpack.c.h.b16 %v2172
    %v2332 = vunpack.c.l.b16 %v2173
    %v2333 = vunpack.c.h.b16 %v2173
    %v2334 = vunpack.c.l.b16 %v2174
    %v2335 = vunpack.c.h.b16 %v2174
    %v2336 = vunpack.c.l.b16 %v2175
    %v2337 = vunpack.c.h.b16 %v2175
    %v2338 = vunpack.c.l.b16 %v2176
    %v2339 = vunpack.c.h.b16 %v2176
    %v2340 = vunpack.c.l.b16 %v2177
    %v2341 = vunpack.c.h.b16 %v2177
    %v2342 = vunpack.c.l.b16 %v2178
    %v2343 = vunpack.c.h.b16 %v2178
    %v2344 = vunpack.c.l.b16 %v2179
    %v2345 = vunpack.c.h.b16 %v2179
    %v2346 = vunpack.c.l.b16 %v2180
    %v2347 = vunpack.c.h.b16 %v2180
    %v2348 = vunpack.c.l.b16 %v2181
    %v2349 = vunpack.c.h.b16 %v2181
    %v2350 = vunpack.c.l.b16 %v2182
    %v2351 = vunpack.c.h.b16 %v2182
    %v2352 = vunpack.c.l.b16 %v2183
    %v2353 = vunpack.c.h.b16 %v2183
    %v2354 = vunpack.c.l.b16 %v2184
    %v2355 = vunpack.c.h.b16 %v2184
    %v2356 = vunpack.c.l.b16 %v2185
    %v2357 = vunpack.c.h.b16 %v2185
    %v2358 = vunpack.c.l.b16 %v2186
    %v2359 = vunpack.c.h.b16 %v2186
    %v2360 = vunpack.c.l.b16 %v2187
    %v2361 = vunpack.c.h.b16 %v2187
    %v2362 = vunpack.c.l.b16 %v2188
    %v2363 = vunpack.c.h.b16 %v2188
    %v2364 = vunpack.c.l.b16 %v2189
    %v2365 = vunpack.c.h.b16 %v2189
    %v2366 = vunpack.c.l.b16 %v2190
    %v2367 = vunpack.c.h.b16 %v2190
    %v2368 = vunpack.c.l.b16 %v2191
    %v2369 = vunpack.c.h.b16 %v2191
    %v2370 = vunpack.c.l.b16 %v2192
    %v2371 = vunpack.c.h.b16 %v2192
    %v2372 = vunpack.c.l.b16 %v2193
    %v2373 = vunpack.c.h.b16 %v2193
    %v2374 = vunpack.c.l.b16 %v2194
    %v2375 = vunpack.c.h.b16 %v2194
    %v2376 = vunpack.c.l.b16 %v2195
    %v2377 = vunpack.c.h.b16 %v2195
    %v2378 = vunpack.c.l.b16 %v2196
    %v2379 = vunpack.c.h.b16 %v2196
    %v2380 = vunpack.c.l.b16 %v2197
    %v2381 = vunpack.c.h.b16 %v2197
    %v2382 = vunpack.c.l.b16 %v2198
    %v2383 = vunpack.c.h.b16 %v2198
    %v2384 = vunpack.c.l.b16 %v2199
    %v2385 = vunpack.c.h.b16 %v2199
    %v2386 = vunpack.c.l.b16 %v2200
    %v2387 = vunpack.c.h.b16 %v2200
    %v2388 = vunpack.c.l.b16 %v2201
    %v2389 = vunpack.c.h.b16 %v2201
    %v2390 = vunpack.c.l.b16 %v2202
    %v2391 = vunpack.c.h.b16 %v2202
    %v2392 = vunpack.c.l.b16 %v2203
    %v2393 = vunpack.c.h.b16 %v2203
    %v2394 = vunpack.c.l.b16 %v2204
    %v2395 = vunpack.c.h.b16 %v2204
    %v2396 = vunpack.c.l.b16 %v2205
    %v2397 = vunpack.c.h.b16 %v2205
    %v2398 = vpack.c.b16 %v2272, %v2270
    %v2399 = vpack.c.b16 %v2273, %v2271
    %v2400 = vpack.c.b16 %v2276, %v2274
    %v2401 = vpack.c.b16 %v2277, %v2275
    %v2402 = vpack.c.b16 %v2280, %v2278
    %v2403 = vpack.c.b16 %v2281, %v2279
    %v2404 = vpack.c.b16 %v2284, %v2282
    %v2405 = vpack.c.b16 %v2285, %v2283
    %v2406 = vpack.c.b16 %v2288, %v2286
    %v2407 = vpack.c.b16 %v2289, %v2287
    %v2408 = vpack.c.b16 %v2292, %v2290
    %v2409 = vpack.c.b16 %v2293, %v2291
    %v2410 = vpack.c.b16 %v2296, %v2294
    %v2411 = vpack.c.b16 %v2297, %v2295
    %v2412 = vpack.c.b16 %v2300, %v2298
    %v2413 = vpack.c.b16 %v2301, %v2299
    %v2414 = vpack.c.b16 %v2304, %v2302
    %v2415 = vpack.c.b16 %v2305, %v2303
    %v2416 = vpack.c.b16 %v2308, %v2306
    %v2417 = vpack.c.b16 %v2309, %v2307
    %v2418 = vpack.c.b16 %v2312, %v2310
    %v2419 = vpack.c.b16 %v2313, %v2311
    %v2420 = vpack.c.b16 %v2316, %v2314
    %v2421 = vpack.c.b16 %v2317, %v2315
    %v2422 = vpack.c.b16 %v2320, %v2318
    %v2423 = vpack.c.b16 %v2321, %v2319
    %v2424 = vpack.c.b16 %v2324, %v2322
    %v2425 = vpack.c.b16 %v2325, %v2323
    %v2426 = vpack.c.b16 %v2328, %v2326
    %v2427 = vpack.c.b16 %v2329, %v2327
    %v2428 = vpack.c.b16 %v2332, %v2330
    %v2429 = vpack.c.b16 %v2333, %v2331
    %v2430 = vpack.c.b16 %v2336, %v2334
    %v2431 = vpack.c.b16 %v2337, %v2335
    %v2432 = vpack.c.b16 %v2340, %v2338
    %v2433 = vpack.c.b16 %v2341, %v2339
    %v2434 = vpack.c.b16 %v2344, %v2342
    %v2435 = vpack.c.b16 %v2345, %v2343
    %v2436 = vpack.c.b16 %v2348, %v2346
    %v2437 = vpack.c.b16 %v2349, %v2347
    %v2438 = vpack.c.b16 %v2352, %v2350
    %v2439 = vpack.c.b16 %v2353, %v2351
    %v2440 = vpack.c.b16 %v2356, %v2354
    %v2441 = vpack.c.b16 %v2357, %v2355
    %v2442 = vpack.c.b16 %v2360, %v2358
    %v2443 = vpack.c.b16 %v2361, %v2359
    %v2444 = vpack.c.b16 %v2364, %v2362
    %v2445 = vpack.c.b16 %v2365, %v2363
    %v2446 = vpack.c.b16 %v2368, %v2366
    %v2447 = vpack.c.b16 %v2369, %v2367
    %v2448 = vpack.c.b16 %v2372, %v2370
    %v2449 = vpack.c.b16 %v2373, %v2371
    %v2450 = vpack.c.b16 %v2376, %v2374
    %v2451 = vpack.c.b16 %v2377, %v2375
    %v2452 = vpack.c.b16 %v2380, %v2378
    %v2453 = vpack.c.b16 %v2381, %v2379
    %v2454 = vpack.c.b16 %v2384, %v2382
    %v2455 = vpack.c.b16 %v2385, %v2383
    %v2456 = vpack.c.b16 %v2388, %v2386
    %v2457 = vpack.c.b16 %v2389, %v2387
    %v2458 = vpack.c.b16 %v2392, %v2390
    %v2459 = vpack.c.b16 %v2393, %v2391
    %v2460 = vpack.c.b16 %v2396, %v2394
    %v2461 = vpack.c.b16 %v2397, %v2395
    %2526 = vmatprep.subr.bf16.mxu0 %v2413
    %2527 = vmatpush1.bf16.msra.mxu0 %v2412
    %2528 = vmatprep.subr.bf16.mxu0 %v2411
    %2529 = vmatpush1.bf16.msra.mxu0 %v2410
    %2530 = vmatprep.subr.bf16.mxu0 %v2409
    %2531 = vmatpush1.bf16.msra.mxu0 %v2408
    %2532 = vmatprep.subr.bf16.mxu0 %v2407
    %2533 = vmatpush1.bf16.msra.mxu0 %v2406
    %2534 = vmatprep.subr.bf16.mxu0 %v2405
    %2535 = vmatpush1.bf16.msra.mxu0 %v2404
    %2536 = vmatprep.subr.bf16.mxu0 %v2403
    %2537 = vmatpush1.bf16.msra.mxu0 %v2402
    %2538 = vmatprep.subr.bf16.mxu0 %v2401
    %2539 = vmatpush1.bf16.msra.mxu0 %v2400
    %2540 = vmatprep.subr.bf16.mxu0 %v2399
    %2541 = vmatpush1.bf16.msra.mxu0 %v2398
    %2542 = vmatprep.subr.bf16.mxu0 %v2429
    %2543 = vmatpush2.bf16.msra.mxu0 %v2428
    %2544 = vmatprep.subr.bf16.mxu0 %v2427
    %2545 = vmatpush2.bf16.msra.mxu0 %v2426
    %2546 = vmatprep.subr.bf16.mxu0 %v2425
    %2547 = vmatpush2.bf16.msra.mxu0 %v2424
    %2548 = vmatprep.subr.bf16.mxu0 %v2423
    %2549 = vmatpush2.bf16.msra.mxu0 %v2422
    %2550 = vmatprep.subr.bf16.mxu0 %v2421
    %2551 = vmatpush2.bf16.msra.mxu0 %v2420
    %2552 = vmatprep.subr.bf16.mxu0 %v2419
    %2553 = vmatpush2.bf16.msra.mxu0 %v2418
    %2554 = vmatprep.subr.bf16.mxu0 %v2417
    %2555 = vmatpush2.bf16.msra.mxu0 %v2416
    %2556 = vmatprep.subr.bf16.mxu0 %v2415
    %2557 = vmatpush2.bf16.msra.mxu0 %v2414
    %2558 = vmatprep.mubr.bf16.mxu0 %v2134
    %2559 = vmatmul.mubr.bf16.gmra.mxu0 %v2133
    %v2560 = vpop.f32.mrf.mxu0
    %v2561 = vadd.f32 0.0, %v2560
    %v2562 = vpop.f32.mrf.mxu0
    %v2563 = vadd.f32 0.0, %v2562
    %v2564 = vpop.f32.mrf.mxu0
    %v2565 = vadd.f32 0.0, %v2564
    %v2566 = vpop.f32.mrf.mxu0
    %v2567 = vadd.f32 0.0, %v2566
    %2568 = vmatprep.mubr.bf16.mxu0 %v2138
    %2569 = vmatmul.mubr.bf16.gmra.mxu0 %v2137
    %v2570 = vpop.f32.mrf.mxu0
    %v2571 = vadd.f32 0.0, %v2570
    %v2572 = vpop.f32.mrf.mxu0
    %v2573 = vadd.f32 0.0, %v2572
    %v2574 = vpop.f32.mrf.mxu0
    %v2575 = vadd.f32 0.0, %v2574
    %v2576 = vpop.f32.mrf.mxu0
    %v2577 = vadd.f32 0.0, %v2576
    %2578 = vdwg.mxu0
    %2579 = vmatprep.subr.bf16.mxu0 %v2445
    %2580 = vmatpush1.bf16.msra.mxu0 %v2444
    %2581 = vmatprep.subr.bf16.mxu0 %v2443
    %2582 = vmatpush1.bf16.msra.mxu0 %v2442
    %2583 = vmatprep.subr.bf16.mxu0 %v2441
    %2584 = vmatpush1.bf16.msra.mxu0 %v2440
    %2585 = vmatprep.subr.bf16.mxu0 %v2439
    %2586 = vmatpush1.bf16.msra.mxu0 %v2438
    %2587 = vmatprep.subr.bf16.mxu0 %v2437
    %2588 = vmatpush1.bf16.msra.mxu0 %v2436
    %2589 = vmatprep.subr.bf16.mxu0 %v2435
    %2590 = vmatpush1.bf16.msra.mxu0 %v2434
    %2591 = vmatprep.subr.bf16.mxu0 %v2433
    %2592 = vmatpush1.bf16.msra.mxu0 %v2432
    %2593 = vmatprep.subr.bf16.mxu0 %v2431
    %2594 = vmatpush1.bf16.msra.mxu0 %v2430
    %2595 = vmatprep.subr.bf16.mxu0 %v2461
    %2596 = vmatpush2.bf16.msra.mxu0 %v2460
    %2597 = vmatprep.subr.bf16.mxu0 %v2459
    %2598 = vmatpush2.bf16.msra.mxu0 %v2458
    %2599 = vmatprep.subr.bf16.mxu0 %v2457
    %2600 = vmatpush2.bf16.msra.mxu0 %v2456
    %2601 = vmatprep.subr.bf16.mxu0 %v2455
    %2602 = vmatpush2.bf16.msra.mxu0 %v2454
    %2603 = vmatprep.subr.bf16.mxu0 %v2453
    %2604 = vmatpush2.bf16.msra.mxu0 %v2452
    %2605 = vmatprep.subr.bf16.mxu0 %v2451
    %2606 = vmatpush2.bf16.msra.mxu0 %v2450
    %2607 = vmatprep.subr.bf16.mxu0 %v2449
    %2608 = vmatpush2.bf16.msra.mxu0 %v2448
    %2609 = vmatprep.subr.bf16.mxu0 %v2447
    %2610 = vmatpush2.bf16.msra.mxu0 %v2446
    %2611 = vmatprep.mubr.bf16.mxu0 %v2136
    %2612 = vmatmul.mubr.bf16.gmra.mxu0 %v2135
    %v2613 = vpop.f32.mrf.mxu0
    %v2614 = vadd.f32 %v2561, %v2613
    %v2615 = vpop.f32.mrf.mxu0
    %v2616 = vadd.f32 %v2563, %v2615
    %v2617 = vpop.f32.mrf.mxu0
    %v2618 = vadd.f32 %v2565, %v2617
    %v2619 = vpop.f32.mrf.mxu0
    %v2620 = vadd.f32 %v2567, %v2619
    %2621 = vmatprep.mubr.bf16.mxu0 %v2140
    %2622 = vmatmul.mubr.bf16.gmra.mxu0 %v2139
    %v2623 = vpop.f32.mrf.mxu0
    %v2624 = vadd.f32 %v2571, %v2623
    %v2625 = vpop.f32.mrf.mxu0
    %v2626 = vadd.f32 %v2573, %v2625
    %v2627 = vpop.f32.mrf.mxu0
    %v2628 = vadd.f32 %v2575, %v2627
    %v2629 = vpop.f32.mrf.mxu0
    %v2630 = vadd.f32 %v2577, %v2629
    %2631 = vdwg.mxu0
    %v2696 = vunpack.c.l.b16 %v1980
    %v2697 = vunpack.c.h.b16 %v1980
    %v2698 = vunpack.c.l.b16 %v1981
    %v2699 = vunpack.c.h.b16 %v1981
    %v2700 = vunpack.c.l.b16 %v1982
    %v2701 = vunpack.c.h.b16 %v1982
    %v2702 = vunpack.c.l.b16 %v1983
    %v2703 = vunpack.c.h.b16 %v1983
    %v2704 = vunpack.c.l.b16 %v1984
    %v2705 = vunpack.c.h.b16 %v1984
    %v2706 = vunpack.c.l.b16 %v1985
    %v2707 = vunpack.c.h.b16 %v1985
    %v2708 = vunpack.c.l.b16 %v1986
    %v2709 = vunpack.c.h.b16 %v1986
    %v2710 = vunpack.c.l.b16 %v1987
    %v2711 = vunpack.c.h.b16 %v1987
    %v2712 = vunpack.c.l.b16 %v1988
    %v2713 = vunpack.c.h.b16 %v1988
    %v2714 = vunpack.c.l.b16 %v1989
    %v2715 = vunpack.c.h.b16 %v1989
    %v2716 = vunpack.c.l.b16 %v1990
    %v2717 = vunpack.c.h.b16 %v1990
    %v2718 = vunpack.c.l.b16 %v1991
    %v2719 = vunpack.c.h.b16 %v1991
    %v2720 = vunpack.c.l.b16 %v1992
    %v2721 = vunpack.c.h.b16 %v1992
    %v2722 = vunpack.c.l.b16 %v1993
    %v2723 = vunpack.c.h.b16 %v1993
    %v2724 = vunpack.c.l.b16 %v1994
    %v2725 = vunpack.c.h.b16 %v1994
    %v2726 = vunpack.c.l.b16 %v1995
    %v2727 = vunpack.c.h.b16 %v1995
    %v2728 = vunpack.c.l.b16 %v1996
    %v2729 = vunpack.c.h.b16 %v1996
    %v2730 = vunpack.c.l.b16 %v1997
    %v2731 = vunpack.c.h.b16 %v1997
    %v2732 = vunpack.c.l.b16 %v1998
    %v2733 = vunpack.c.h.b16 %v1998
    %v2734 = vunpack.c.l.b16 %v1999
    %v2735 = vunpack.c.h.b16 %v1999
    %v2736 = vunpack.c.l.b16 %v2000
    %v2737 = vunpack.c.h.b16 %v2000
    %v2738 = vunpack.c.l.b16 %v2001
    %v2739 = vunpack.c.h.b16 %v2001
    %v2740 = vunpack.c.l.b16 %v2002
    %v2741 = vunpack.c.h.b16 %v2002
    %v2742 = vunpack.c.l.b16 %v2003
    %v2743 = vunpack.c.h.b16 %v2003
    %v2744 = vunpack.c.l.b16 %v2004
    %v2745 = vunpack.c.h.b16 %v2004
    %v2746 = vunpack.c.l.b16 %v2005
    %v2747 = vunpack.c.h.b16 %v2005
    %v2748 = vunpack.c.l.b16 %v2006
    %v2749 = vunpack.c.h.b16 %v2006
    %v2750 = vunpack.c.l.b16 %v2007
    %v2751 = vunpack.c.h.b16 %v2007
    %v2752 = vunpack.c.l.b16 %v2008
    %v2753 = vunpack.c.h.b16 %v2008
    %v2754 = vunpack.c.l.b16 %v2009
    %v2755 = vunpack.c.h.b16 %v2009
    %v2756 = vunpack.c.l.b16 %v2010
    %v2757 = vunpack.c.h.b16 %v2010
    %v2758 = vunpack.c.l.b16 %v2011
    %v2759 = vunpack.c.h.b16 %v2011
    %v2760 = vunpack.c.l.b16 %v2012
    %v2761 = vunpack.c.h.b16 %v2012
    %v2762 = vunpack.c.l.b16 %v2013
    %v2763 = vunpack.c.h.b16 %v2013
    %v2764 = vunpack.c.l.b16 %v2014
    %v2765 = vunpack.c.h.b16 %v2014
    %v2766 = vunpack.c.l.b16 %v2015
    %v2767 = vunpack.c.h.b16 %v2015
    %v2768 = vunpack.c.l.b16 %v2016
    %v2769 = vunpack.c.h.b16 %v2016
    %v2770 = vunpack.c.l.b16 %v2017
    %v2771 = vunpack.c.h.b16 %v2017
    %v2772 = vunpack.c.l.b16 %v2018
    %v2773 = vunpack.c.h.b16 %v2018
    %v2774 = vunpack.c.l.b16 %v2019
    %v2775 = vunpack.c.h.b16 %v2019
    %v2776 = vunpack.c.l.b16 %v2020
    %v2777 = vunpack.c.h.b16 %v2020
    %v2778 = vunpack.c.l.b16 %v2021
    %v2779 = vunpack.c.h.b16 %v2021
    %v2780 = vunpack.c.l.b16 %v2022
    %v2781 = vunpack.c.h.b16 %v2022
    %v2782 = vunpack.c.l.b16 %v2023
    %v2783 = vunpack.c.h.b16 %v2023
    %v2784 = vunpack.c.l.b16 %v2024
    %v2785 = vunpack.c.h.b16 %v2024
    %v2786 = vunpack.c.l.b16 %v2025
    %v2787 = vunpack.c.h.b16 %v2025
    %v2788 = vunpack.c.l.b16 %v2026
    %v2789 = vunpack.c.h.b16 %v2026
    %v2790 = vunpack.c.l.b16 %v2027
    %v2791 = vunpack.c.h.b16 %v2027
    %v2792 = vunpack.c.l.b16 %v2028
    %v2793 = vunpack.c.h.b16 %v2028
    %v2794 = vunpack.c.l.b16 %v2029
    %v2795 = vunpack.c.h.b16 %v2029
    %v2796 = vunpack.c.l.b16 %v2030
    %v2797 = vunpack.c.h.b16 %v2030
    %v2798 = vunpack.c.l.b16 %v2031
    %v2799 = vunpack.c.h.b16 %v2031
    %v2800 = vunpack.c.l.b16 %v2032
    %v2801 = vunpack.c.h.b16 %v2032
    %v2802 = vunpack.c.l.b16 %v2033
    %v2803 = vunpack.c.h.b16 %v2033
    %v2804 = vunpack.c.l.b16 %v2034
    %v2805 = vunpack.c.h.b16 %v2034
    %v2806 = vunpack.c.l.b16 %v2035
    %v2807 = vunpack.c.h.b16 %v2035
    %v2808 = vunpack.c.l.b16 %v2036
    %v2809 = vunpack.c.h.b16 %v2036
    %v2810 = vunpack.c.l.b16 %v2037
    %v2811 = vunpack.c.h.b16 %v2037
    %v2812 = vunpack.c.l.b16 %v2038
    %v2813 = vunpack.c.h.b16 %v2038
    %v2814 = vunpack.c.l.b16 %v2039
    %v2815 = vunpack.c.h.b16 %v2039
    %v2816 = vunpack.c.l.b16 %v2040
    %v2817 = vunpack.c.h.b16 %v2040
    %v2818 = vunpack.c.l.b16 %v2041
    %v2819 = vunpack.c.h.b16 %v2041
    %v2820 = vunpack.c.l.b16 %v2042
    %v2821 = vunpack.c.h.b16 %v2042
    %v2822 = vunpack.c.l.b16 %v2043
    %v2823 = vunpack.c.h.b16 %v2043
    %v2824 = vpack.c.b16 %v2698, %v2696
    %v2825 = vpack.c.b16 %v2699, %v2697
    %v2826 = vpack.c.b16 %v2702, %v2700
    %v2827 = vpack.c.b16 %v2703, %v2701
    %v2828 = vpack.c.b16 %v2706, %v2704
    %v2829 = vpack.c.b16 %v2707, %v2705
    %v2830 = vpack.c.b16 %v2710, %v2708
    %v2831 = vpack.c.b16 %v2711, %v2709
    %v2832 = vpack.c.b16 %v2714, %v2712
    %v2833 = vpack.c.b16 %v2715, %v2713
    %v2834 = vpack.c.b16 %v2718, %v2716
    %v2835 = vpack.c.b16 %v2719, %v2717
    %v2836 = vpack.c.b16 %v2722, %v2720
    %v2837 = vpack.c.b16 %v2723, %v2721
    %v2838 = vpack.c.b16 %v2726, %v2724
    %v2839 = vpack.c.b16 %v2727, %v2725
    %v2840 = vpack.c.b16 %v2730, %v2728
    %v2841 = vpack.c.b16 %v2731, %v2729
    %v2842 = vpack.c.b16 %v2734, %v2732
    %v2843 = vpack.c.b16 %v2735, %v2733
    %v2844 = vpack.c.b16 %v2738, %v2736
    %v2845 = vpack.c.b16 %v2739, %v2737
    %v2846 = vpack.c.b16 %v2742, %v2740
    %v2847 = vpack.c.b16 %v2743, %v2741
    %v2848 = vpack.c.b16 %v2746, %v2744
    %v2849 = vpack.c.b16 %v2747, %v2745
    %v2850 = vpack.c.b16 %v2750, %v2748
    %v2851 = vpack.c.b16 %v2751, %v2749
    %v2852 = vpack.c.b16 %v2754, %v2752
    %v2853 = vpack.c.b16 %v2755, %v2753
    %v2854 = vpack.c.b16 %v2758, %v2756
    %v2855 = vpack.c.b16 %v2759, %v2757
    %v2856 = vpack.c.b16 %v2762, %v2760
    %v2857 = vpack.c.b16 %v2763, %v2761
    %v2858 = vpack.c.b16 %v2766, %v2764
    %v2859 = vpack.c.b16 %v2767, %v2765
    %v2860 = vpack.c.b16 %v2770, %v2768
    %v2861 = vpack.c.b16 %v2771, %v2769
    %v2862 = vpack.c.b16 %v2774, %v2772
    %v2863 = vpack.c.b16 %v2775, %v2773
    %v2864 = vpack.c.b16 %v2778, %v2776
    %v2865 = vpack.c.b16 %v2779, %v2777
    %v2866 = vpack.c.b16 %v2782, %v2780
    %v2867 = vpack.c.b16 %v2783, %v2781
    %v2868 = vpack.c.b16 %v2786, %v2784
    %v2869 = vpack.c.b16 %v2787, %v2785
    %v2870 = vpack.c.b16 %v2790, %v2788
    %v2871 = vpack.c.b16 %v2791, %v2789
    %v2872 = vpack.c.b16 %v2794, %v2792
    %v2873 = vpack.c.b16 %v2795, %v2793
    %v2874 = vpack.c.b16 %v2798, %v2796
    %v2875 = vpack.c.b16 %v2799, %v2797
    %v2876 = vpack.c.b16 %v2802, %v2800
    %v2877 = vpack.c.b16 %v2803, %v2801
    %v2878 = vpack.c.b16 %v2806, %v2804
    %v2879 = vpack.c.b16 %v2807, %v2805
    %v2880 = vpack.c.b16 %v2810, %v2808
    %v2881 = vpack.c.b16 %v2811, %v2809
    %v2882 = vpack.c.b16 %v2814, %v2812
    %v2883 = vpack.c.b16 %v2815, %v2813
    %v2884 = vpack.c.b16 %v2818, %v2816
    %v2885 = vpack.c.b16 %v2819, %v2817
    %v2886 = vpack.c.b16 %v2822, %v2820
    %v2887 = vpack.c.b16 %v2823, %v2821
    %2952 = vmatprep.subr.bf16.mxu0 %v2839
    %2953 = vmatpush1.bf16.msra.mxu0 %v2838
    %2954 = vmatprep.subr.bf16.mxu0 %v2837
    %2955 = vmatpush1.bf16.msra.mxu0 %v2836
    %2956 = vmatprep.subr.bf16.mxu0 %v2835
    %2957 = vmatpush1.bf16.msra.mxu0 %v2834
    %2958 = vmatprep.subr.bf16.mxu0 %v2833
    %2959 = vmatpush1.bf16.msra.mxu0 %v2832
    %2960 = vmatprep.subr.bf16.mxu0 %v2831
    %2961 = vmatpush1.bf16.msra.mxu0 %v2830
    %2962 = vmatprep.subr.bf16.mxu0 %v2829
    %2963 = vmatpush1.bf16.msra.mxu0 %v2828
    %2964 = vmatprep.subr.bf16.mxu0 %v2827
    %2965 = vmatpush1.bf16.msra.mxu0 %v2826
    %2966 = vmatprep.subr.bf16.mxu0 %v2825
    %2967 = vmatpush1.bf16.msra.mxu0 %v2824
    %2968 = vmatprep.subr.bf16.mxu0 %v2855
    %2969 = vmatpush2.bf16.msra.mxu0 %v2854
    %2970 = vmatprep.subr.bf16.mxu0 %v2853
    %2971 = vmatpush2.bf16.msra.mxu0 %v2852
    %2972 = vmatprep.subr.bf16.mxu0 %v2851
    %2973 = vmatpush2.bf16.msra.mxu0 %v2850
    %2974 = vmatprep.subr.bf16.mxu0 %v2849
    %2975 = vmatpush2.bf16.msra.mxu0 %v2848
    %2976 = vmatprep.subr.bf16.mxu0 %v2847
    %2977 = vmatpush2.bf16.msra.mxu0 %v2846
    %2978 = vmatprep.subr.bf16.mxu0 %v2845
    %2979 = vmatpush2.bf16.msra.mxu0 %v2844
    %2980 = vmatprep.subr.bf16.mxu0 %v2843
    %2981 = vmatpush2.bf16.msra.mxu0 %v2842
    %2982 = vmatprep.subr.bf16.mxu0 %v2841
    %2983 = vmatpush2.bf16.msra.mxu0 %v2840
    %2984 = vmatprep.mubr.bf16.mxu0 %v1973
    %2985 = vmatmul.mubr.bf16.gmra.mxu0 %v1972
    %v2986 = vpop.f32.mrf.mxu0
    %v2987 = vadd.f32 %v2614, %v2986
    %v2988 = vpop.f32.mrf.mxu0
    %v2989 = vadd.f32 %v2616, %v2988
    %v2990 = vpop.f32.mrf.mxu0
    %v2991 = vadd.f32 %v2618, %v2990
    %v2992 = vpop.f32.mrf.mxu0
    %v2993 = vadd.f32 %v2620, %v2992
    %2994 = vmatprep.mubr.bf16.mxu0 %v1977
    %2995 = vmatmul.mubr.bf16.gmra.mxu0 %v1976
    %v2996 = vpop.f32.mrf.mxu0
    %v2997 = vadd.f32 %v2624, %v2996
    %v2998 = vpop.f32.mrf.mxu0
    %v2999 = vadd.f32 %v2626, %v2998
    %v3000 = vpop.f32.mrf.mxu0
    %v3001 = vadd.f32 %v2628, %v3000
    %v3002 = vpop.f32.mrf.mxu0
    %v3003 = vadd.f32 %v2630, %v3002
    %3004 = vdwg.mxu0
    %3005 = vmatprep.subr.bf16.mxu0 %v2871
    %3006 = vmatpush1.bf16.msra.mxu0 %v2870
    %3007 = vmatprep.subr.bf16.mxu0 %v2869
    %3008 = vmatpush1.bf16.msra.mxu0 %v2868
    %3009 = vmatprep.subr.bf16.mxu0 %v2867
    %3010 = vmatpush1.bf16.msra.mxu0 %v2866
    %3011 = vmatprep.subr.bf16.mxu0 %v2865
    %3012 = vmatpush1.bf16.msra.mxu0 %v2864
    %3013 = vmatprep.subr.bf16.mxu0 %v2863
    %3014 = vmatpush1.bf16.msra.mxu0 %v2862
    %3015 = vmatprep.subr.bf16.mxu0 %v2861
    %3016 = vmatpush1.bf16.msra.mxu0 %v2860
    %3017 = vmatprep.subr.bf16.mxu0 %v2859
    %3018 = vmatpush1.bf16.msra.mxu0 %v2858
    %3019 = vmatprep.subr.bf16.mxu0 %v2857
    %3020 = vmatpush1.bf16.msra.mxu0 %v2856
    %3021 = vmatprep.subr.bf16.mxu0 %v2887
    %3022 = vmatpush2.bf16.msra.mxu0 %v2886
    %3023 = vmatprep.subr.bf16.mxu0 %v2885
    %3024 = vmatpush2.bf16.msra.mxu0 %v2884
    %3025 = vmatprep.subr.bf16.mxu0 %v2883
    %3026 = vmatpush2.bf16.msra.mxu0 %v2882
    %3027 = vmatprep.subr.bf16.mxu0 %v2881
    %3028 = vmatpush2.bf16.msra.mxu0 %v2880
    %3029 = vmatprep.subr.bf16.mxu0 %v2879
    %3030 = vmatpush2.bf16.msra.mxu0 %v2878
    %3031 = vmatprep.subr.bf16.mxu0 %v2877
    %3032 = vmatpush2.bf16.msra.mxu0 %v2876
    %3033 = vmatprep.subr.bf16.mxu0 %v2875
    %3034 = vmatpush2.bf16.msra.mxu0 %v2874
    %3035 = vmatprep.subr.bf16.mxu0 %v2873
    %3036 = vmatpush2.bf16.msra.mxu0 %v2872
    %3037 = vmatprep.mubr.bf16.mxu0 %v1975
    %3038 = vmatmul.mubr.bf16.gmra.mxu0 %v1974
    %v3039 = vpop.f32.mrf.mxu0
    %v3040 = vadd.f32 %v2987, %v3039
    %v3041 = vpop.f32.mrf.mxu0
    %v3042 = vadd.f32 %v2989, %v3041
    %v3043 = vpop.f32.mrf.mxu0
    %v3044 = vadd.f32 %v2991, %v3043
    %v3045 = vpop.f32.mrf.mxu0
    %v3046 = vadd.f32 %v2993, %v3045
    %3047 = vmatprep.mubr.bf16.mxu0 %v1979
    %3048 = vmatmul.mubr.bf16.gmra.mxu0 %v1978
    %v3049 = vpop.f32.mrf.mxu0
    %v3050 = vadd.f32 %v2997, %v3049
    %v3051 = vpop.f32.mrf.mxu0
    %v3052 = vadd.f32 %v2999, %v3051
    %v3053 = vpop.f32.mrf.mxu0
    %v3054 = vadd.f32 %v3001, %v3053
    %v3055 = vpop.f32.mrf.mxu0
    %v3056 = vadd.f32 %v3003, %v3055
    %3057 = vdwg.mxu0
    %v3058 = vld [vmem:[#allocation2] sm:$0xf0]
    %v3059 = vld [vmem:[#allocation2 + $0x8] sm:$0xf0]
    %v3060 = vld [vmem:[#allocation2 + $0x10] sm:$0xf0]
    %v3061 = vld [vmem:[#allocation2 + $0x18] sm:$0xf0]
    %v3062 = vld [vmem:[#allocation2 + $0x40] sm:$0xf]
    %v3063 = vld [vmem:[#allocation2 + $0x48] sm:$0xf]
    %v3064 = vld [vmem:[#allocation2 + $0x50] sm:$0xf]
    %v3065 = vld [vmem:[#allocation2 + $0x58] sm:$0xf]
    %v3066 = vld [vmem:[#allocation2 + $0x60] sm:$0xf0]
    %v3067 = vld [vmem:[#allocation2 + $0x68] sm:$0xf0]
    %v3068 = vld [vmem:[#allocation2 + $0x70] sm:$0xf0]
    %v3069 = vld [vmem:[#allocation2 + $0x78] sm:$0xf0]
    %v3070 = vld [vmem:[#allocation2 + $0xa0] sm:$0xf]
    %v3071 = vld [vmem:[#allocation2 + $0xa8] sm:$0xf]
    %v3072 = vld [vmem:[#allocation2 + $0xb0] sm:$0xf]
    %v3073 = vld [vmem:[#allocation2 + $0xb8] sm:$0xf]
    %v3090 = vrot.slane %v3058, 4
    %v3091 = vrot.slane %v1871, 4
    %v3092 = vsel %vm1794, %v3090, %v3091
    %v3093 = vrot.slane %v3059, 4
    %v3094 = vrot.slane %v1872, 4
    %v3095 = vsel %vm1794, %v3093, %v3094
    %v3096 = vrot.slane %v3060, 4
    %v3097 = vrot.slane %v1873, 4
    %v3098 = vsel %vm1794, %v3096, %v3097
    %v3099 = vrot.slane %v3061, 4
    %v3100 = vrot.slane %v1874, 4
    %v3101 = vsel %vm1794, %v3099, %v3100
    %v3102 = vrot.slane %v3062, 4
    %v3103 = vsel %vm1794, %v3091, %v3102
    %v3104 = vrot.slane %v3063, 4
    %v3105 = vsel %vm1794, %v3094, %v3104
    %v3106 = vrot.slane %v3064, 4
    %v3107 = vsel %vm1794, %v3097, %v3106
    %v3108 = vrot.slane %v3065, 4
    %v3109 = vsel %vm1794, %v3100, %v3108
    %v3110 = vrot.slane %v3066, 4
    %v3111 = vrot.slane %v1883, 4
    %v3112 = vsel %vm1794, %v3110, %v3111
    %v3113 = vrot.slane %v3067, 4
    %v3114 = vrot.slane %v1884, 4
    %v3115 = vsel %vm1794, %v3113, %v3114
    %v3116 = vrot.slane %v3068, 4
    %v3117 = vrot.slane %v1885, 4
    %v3118 = vsel %vm1794, %v3116, %v3117
    %v3119 = vrot.slane %v3069, 4
    %v3120 = vrot.slane %v1886, 4
    %v3121 = vsel %vm1794, %v3119, %v3120
    %v3122 = vrot.slane %v3070, 4
    %v3123 = vsel %vm1794, %v3111, %v3122
    %v3124 = vrot.slane %v3071, 4
    %v3125 = vsel %vm1794, %v3114, %v3124
    %v3126 = vrot.slane %v3072, 4
    %v3127 = vsel %vm1794, %v3117, %v3126
    %v3128 = vrot.slane %v3073, 4
    %v3129 = vsel %vm1794, %v3120, %v3128
    %v3146 = vpack.c.bf16 %v3103, %v3092
    %v3147 = vpack.c.bf16 %v3105, %v3095
    %v3148 = vpack.c.bf16 %v3107, %v3098
    %v3149 = vpack.c.bf16 %v3109, %v3101
    %v3150 = vpack.c.bf16 %v3123, %v3112
    %v3151 = vpack.c.bf16 %v3125, %v3115
    %v3152 = vpack.c.bf16 %v3127, %v3118
    %v3153 = vpack.c.bf16 %v3129, %v3121
    %s3154 = scalar_lea.vmem [#allocation9], 1024
    %v3155 = vld [vmem:[%s3154] sm:$0xff]
    %v3156 = vld [vmem:[%s3154 + $0x8] sm:$0xff]
    %v3157 = vld [vmem:[%s3154 + $0x10] sm:$0xff]
    %v3158 = vld [vmem:[%s3154 + $0x18] sm:$0xff]
    %v3159 = vld [vmem:[%s3154 + $0x20] sm:$0xff]
    %v3160 = vld [vmem:[%s3154 + $0x28] sm:$0xff]
    %v3161 = vld [vmem:[%s3154 + $0x30] sm:$0xff]
    %v3162 = vld [vmem:[%s3154 + $0x38] sm:$0xff]
    %v3163 = vld [vmem:[%s3154 + $0x40] sm:$0xff]
    %v3164 = vld [vmem:[%s3154 + $0x48] sm:$0xff]
    %v3165 = vld [vmem:[%s3154 + $0x50] sm:$0xff]
    %v3166 = vld [vmem:[%s3154 + $0x58] sm:$0xff]
    %v3167 = vld [vmem:[%s3154 + $0x60] sm:$0xff]
    %v3168 = vld [vmem:[%s3154 + $0x68] sm:$0xff]
    %v3169 = vld [vmem:[%s3154 + $0x70] sm:$0xff]
    %v3170 = vld [vmem:[%s3154 + $0x78] sm:$0xff]
    %v3171 = vld [vmem:[%s3154 + $0x80] sm:$0xff]
    %v3172 = vld [vmem:[%s3154 + $0x88] sm:$0xff]
    %v3173 = vld [vmem:[%s3154 + $0x90] sm:$0xff]
    %v3174 = vld [vmem:[%s3154 + $0x98] sm:$0xff]
    %v3175 = vld [vmem:[%s3154 + $0xa0] sm:$0xff]
    %v3176 = vld [vmem:[%s3154 + $0xa8] sm:$0xff]
    %v3177 = vld [vmem:[%s3154 + $0xb0] sm:$0xff]
    %v3178 = vld [vmem:[%s3154 + $0xb8] sm:$0xff]
    %v3179 = vld [vmem:[%s3154 + $0xc0] sm:$0xff]
    %v3180 = vld [vmem:[%s3154 + $0xc8] sm:$0xff]
    %v3181 = vld [vmem:[%s3154 + $0xd0] sm:$0xff]
    %v3182 = vld [vmem:[%s3154 + $0xd8] sm:$0xff]
    %v3183 = vld [vmem:[%s3154 + $0xe0] sm:$0xff]
    %v3184 = vld [vmem:[%s3154 + $0xe8] sm:$0xff]
    %v3185 = vld [vmem:[%s3154 + $0xf0] sm:$0xff]
    %v3186 = vld [vmem:[%s3154 + $0xf8] sm:$0xff]
    %v3187 = vld [vmem:[%s3154 + $0x100] sm:$0xff]
    %v3188 = vld [vmem:[%s3154 + $0x108] sm:$0xff]
    %v3189 = vld [vmem:[%s3154 + $0x110] sm:$0xff]
    %v3190 = vld [vmem:[%s3154 + $0x118] sm:$0xff]
    %v3191 = vld [vmem:[%s3154 + $0x120] sm:$0xff]
    %v3192 = vld [vmem:[%s3154 + $0x128] sm:$0xff]
    %v3193 = vld [vmem:[%s3154 + $0x130] sm:$0xff]
    %v3194 = vld [vmem:[%s3154 + $0x138] sm:$0xff]
    %v3195 = vld [vmem:[%s3154 + $0x140] sm:$0xff]
    %v3196 = vld [vmem:[%s3154 + $0x148] sm:$0xff]
    %v3197 = vld [vmem:[%s3154 + $0x150] sm:$0xff]
    %v3198 = vld [vmem:[%s3154 + $0x158] sm:$0xff]
    %v3199 = vld [vmem:[%s3154 + $0x160] sm:$0xff]
    %v3200 = vld [vmem:[%s3154 + $0x168] sm:$0xff]
    %v3201 = vld [vmem:[%s3154 + $0x170] sm:$0xff]
    %v3202 = vld [vmem:[%s3154 + $0x178] sm:$0xff]
    %v3203 = vld [vmem:[%s3154 + $0x180] sm:$0xff]
    %v3204 = vld [vmem:[%s3154 + $0x188] sm:$0xff]
    %v3205 = vld [vmem:[%s3154 + $0x190] sm:$0xff]
    %v3206 = vld [vmem:[%s3154 + $0x198] sm:$0xff]
    %v3207 = vld [vmem:[%s3154 + $0x1a0] sm:$0xff]
    %v3208 = vld [vmem:[%s3154 + $0x1a8] sm:$0xff]
    %v3209 = vld [vmem:[%s3154 + $0x1b0] sm:$0xff]
    %v3210 = vld [vmem:[%s3154 + $0x1b8] sm:$0xff]
    %v3211 = vld [vmem:[%s3154 + $0x1c0] sm:$0xff]
    %v3212 = vld [vmem:[%s3154 + $0x1c8] sm:$0xff]
    %v3213 = vld [vmem:[%s3154 + $0x1d0] sm:$0xff]
    %v3214 = vld [vmem:[%s3154 + $0x1d8] sm:$0xff]
    %v3215 = vld [vmem:[%s3154 + $0x1e0] sm:$0xff]
    %v3216 = vld [vmem:[%s3154 + $0x1e8] sm:$0xff]
    %v3217 = vld [vmem:[%s3154 + $0x1f0] sm:$0xff]
    %v3218 = vld [vmem:[%s3154 + $0x1f8] sm:$0xff]
    %v3283 = vunpack.c.l.b16 %v3155
    %v3284 = vunpack.c.h.b16 %v3155
    %v3285 = vunpack.c.l.b16 %v3156
    %v3286 = vunpack.c.h.b16 %v3156
    %v3287 = vunpack.c.l.b16 %v3157
    %v3288 = vunpack.c.h.b16 %v3157
    %v3289 = vunpack.c.l.b16 %v3158
    %v3290 = vunpack.c.h.b16 %v3158
    %v3291 = vunpack.c.l.b16 %v3159
    %v3292 = vunpack.c.h.b16 %v3159
    %v3293 = vunpack.c.l.b16 %v3160
    %v3294 = vunpack.c.h.b16 %v3160
    %v3295 = vunpack.c.l.b16 %v3161
    %v3296 = vunpack.c.h.b16 %v3161
    %v3297 = vunpack.c.l.b16 %v3162
    %v3298 = vunpack.c.h.b16 %v3162
    %v3299 = vunpack.c.l.b16 %v3163
    %v3300 = vunpack.c.h.b16 %v3163
    %v3301 = vunpack.c.l.b16 %v3164
    %v3302 = vunpack.c.h.b16 %v3164
    %v3303 = vunpack.c.l.b16 %v3165
    %v3304 = vunpack.c.h.b16 %v3165
    %v3305 = vunpack.c.l.b16 %v3166
    %v3306 = vunpack.c.h.b16 %v3166
    %v3307 = vunpack.c.l.b16 %v3167
    %v3308 = vunpack.c.h.b16 %v3167
    %v3309 = vunpack.c.l.b16 %v3168
    %v3310 = vunpack.c.h.b16 %v3168
    %v3311 = vunpack.c.l.b16 %v3169
    %v3312 = vunpack.c.h.b16 %v3169
    %v3313 = vunpack.c.l.b16 %v3170
    %v3314 = vunpack.c.h.b16 %v3170
    %v3315 = vunpack.c.l.b16 %v3171
    %v3316 = vunpack.c.h.b16 %v3171
    %v3317 = vunpack.c.l.b16 %v3172
    %v3318 = vunpack.c.h.b16 %v3172
    %v3319 = vunpack.c.l.b16 %v3173
    %v3320 = vunpack.c.h.b16 %v3173
    %v3321 = vunpack.c.l.b16 %v3174
    %v3322 = vunpack.c.h.b16 %v3174
    %v3323 = vunpack.c.l.b16 %v3175
    %v3324 = vunpack.c.h.b16 %v3175
    %v3325 = vunpack.c.l.b16 %v3176
    %v3326 = vunpack.c.h.b16 %v3176
    %v3327 = vunpack.c.l.b16 %v3177
    %v3328 = vunpack.c.h.b16 %v3177
    %v3329 = vunpack.c.l.b16 %v3178
    %v3330 = vunpack.c.h.b16 %v3178
    %v3331 = vunpack.c.l.b16 %v3179
    %v3332 = vunpack.c.h.b16 %v3179
    %v3333 = vunpack.c.l.b16 %v3180
    %v3334 = vunpack.c.h.b16 %v3180
    %v3335 = vunpack.c.l.b16 %v3181
    %v3336 = vunpack.c.h.b16 %v3181
    %v3337 = vunpack.c.l.b16 %v3182
    %v3338 = vunpack.c.h.b16 %v3182
    %v3339 = vunpack.c.l.b16 %v3183
    %v3340 = vunpack.c.h.b16 %v3183
    %v3341 = vunpack.c.l.b16 %v3184
    %v3342 = vunpack.c.h.b16 %v3184
    %v3343 = vunpack.c.l.b16 %v3185
    %v3344 = vunpack.c.h.b16 %v3185
    %v3345 = vunpack.c.l.b16 %v3186
    %v3346 = vunpack.c.h.b16 %v3186
    %v3347 = vunpack.c.l.b16 %v3187
    %v3348 = vunpack.c.h.b16 %v3187
    %v3349 = vunpack.c.l.b16 %v3188
    %v3350 = vunpack.c.h.b16 %v3188
    %v3351 = vunpack.c.l.b16 %v3189
    %v3352 = vunpack.c.h.b16 %v3189
    %v3353 = vunpack.c.l.b16 %v3190
    %v3354 = vunpack.c.h.b16 %v3190
    %v3355 = vunpack.c.l.b16 %v3191
    %v3356 = vunpack.c.h.b16 %v3191
    %v3357 = vunpack.c.l.b16 %v3192
    %v3358 = vunpack.c.h.b16 %v3192
    %v3359 = vunpack.c.l.b16 %v3193
    %v3360 = vunpack.c.h.b16 %v3193
    %v3361 = vunpack.c.l.b16 %v3194
    %v3362 = vunpack.c.h.b16 %v3194
    %v3363 = vunpack.c.l.b16 %v3195
    %v3364 = vunpack.c.h.b16 %v3195
    %v3365 = vunpack.c.l.b16 %v3196
    %v3366 = vunpack.c.h.b16 %v3196
    %v3367 = vunpack.c.l.b16 %v3197
    %v3368 = vunpack.c.h.b16 %v3197
    %v3369 = vunpack.c.l.b16 %v3198
    %v3370 = vunpack.c.h.b16 %v3198
    %v3371 = vunpack.c.l.b16 %v3199
    %v3372 = vunpack.c.h.b16 %v3199
    %v3373 = vunpack.c.l.b16 %v3200
    %v3374 = vunpack.c.h.b16 %v3200
    %v3375 = vunpack.c.l.b16 %v3201
    %v3376 = vunpack.c.h.b16 %v3201
    %v3377 = vunpack.c.l.b16 %v3202
    %v3378 = vunpack.c.h.b16 %v3202
    %v3379 = vunpack.c.l.b16 %v3203
    %v3380 = vunpack.c.h.b16 %v3203
    %v3381 = vunpack.c.l.b16 %v3204
    %v3382 = vunpack.c.h.b16 %v3204
    %v3383 = vunpack.c.l.b16 %v3205
    %v3384 = vunpack.c.h.b16 %v3205
    %v3385 = vunpack.c.l.b16 %v3206
    %v3386 = vunpack.c.h.b16 %v3206
    %v3387 = vunpack.c.l.b16 %v3207
    %v3388 = vunpack.c.h.b16 %v3207
    %v3389 = vunpack.c.l.b16 %v3208
    %v3390 = vunpack.c.h.b16 %v3208
    %v3391 = vunpack.c.l.b16 %v3209
    %v3392 = vunpack.c.h.b16 %v3209
    %v3393 = vunpack.c.l.b16 %v3210
    %v3394 = vunpack.c.h.b16 %v3210
    %v3395 = vunpack.c.l.b16 %v3211
    %v3396 = vunpack.c.h.b16 %v3211
    %v3397 = vunpack.c.l.b16 %v3212
    %v3398 = vunpack.c.h.b16 %v3212
    %v3399 = vunpack.c.l.b16 %v3213
    %v3400 = vunpack.c.h.b16 %v3213
    %v3401 = vunpack.c.l.b16 %v3214
    %v3402 = vunpack.c.h.b16 %v3214
    %v3403 = vunpack.c.l.b16 %v3215
    %v3404 = vunpack.c.h.b16 %v3215
    %v3405 = vunpack.c.l.b16 %v3216
    %v3406 = vunpack.c.h.b16 %v3216
    %v3407 = vunpack.c.l.b16 %v3217
    %v3408 = vunpack.c.h.b16 %v3217
    %v3409 = vunpack.c.l.b16 %v3218
    %v3410 = vunpack.c.h.b16 %v3218
    %v3411 = vpack.c.b16 %v3285, %v3283
    %v3412 = vpack.c.b16 %v3286, %v3284
    %v3413 = vpack.c.b16 %v3289, %v3287
    %v3414 = vpack.c.b16 %v3290, %v3288
    %v3415 = vpack.c.b16 %v3293, %v3291
    %v3416 = vpack.c.b16 %v3294, %v3292
    %v3417 = vpack.c.b16 %v3297, %v3295
    %v3418 = vpack.c.b16 %v3298, %v3296
    %v3419 = vpack.c.b16 %v3301, %v3299
    %v3420 = vpack.c.b16 %v3302, %v3300
    %v3421 = vpack.c.b16 %v3305, %v3303
    %v3422 = vpack.c.b16 %v3306, %v3304
    %v3423 = vpack.c.b16 %v3309, %v3307
    %v3424 = vpack.c.b16 %v3310, %v3308
    %v3425 = vpack.c.b16 %v3313, %v3311
    %v3426 = vpack.c.b16 %v3314, %v3312
    %v3427 = vpack.c.b16 %v3317, %v3315
    %v3428 = vpack.c.b16 %v3318, %v3316
    %v3429 = vpack.c.b16 %v3321, %v3319
    %v3430 = vpack.c.b16 %v3322, %v3320
    %v3431 = vpack.c.b16 %v3325, %v3323
    %v3432 = vpack.c.b16 %v3326, %v3324
    %v3433 = vpack.c.b16 %v3329, %v3327
    %v3434 = vpack.c.b16 %v3330, %v3328
    %v3435 = vpack.c.b16 %v3333, %v3331
    %v3436 = vpack.c.b16 %v3334, %v3332
    %v3437 = vpack.c.b16 %v3337, %v3335
    %v3438 = vpack.c.b16 %v3338, %v3336
    %v3439 = vpack.c.b16 %v3341, %v3339
    %v3440 = vpack.c.b16 %v3342, %v3340
    %v3441 = vpack.c.b16 %v3345, %v3343
    %v3442 = vpack.c.b16 %v3346, %v3344
    %v3443 = vpack.c.b16 %v3349, %v3347
    %v3444 = vpack.c.b16 %v3350, %v3348
    %v3445 = vpack.c.b16 %v3353, %v3351
    %v3446 = vpack.c.b16 %v3354, %v3352
    %v3447 = vpack.c.b16 %v3357, %v3355
    %v3448 = vpack.c.b16 %v3358, %v3356
    %v3449 = vpack.c.b16 %v3361, %v3359
    %v3450 = vpack.c.b16 %v3362, %v3360
    %v3451 = vpack.c.b16 %v3365, %v3363
    %v3452 = vpack.c.b16 %v3366, %v3364
    %v3453 = vpack.c.b16 %v3369, %v3367
    %v3454 = vpack.c.b16 %v3370, %v3368
    %v3455 = vpack.c.b16 %v3373, %v3371
    %v3456 = vpack.c.b16 %v3374, %v3372
    %v3457 = vpack.c.b16 %v3377, %v3375
    %v3458 = vpack.c.b16 %v3378, %v3376
    %v3459 = vpack.c.b16 %v3381, %v3379
    %v3460 = vpack.c.b16 %v3382, %v3380
    %v3461 = vpack.c.b16 %v3385, %v3383
    %v3462 = vpack.c.b16 %v3386, %v3384
    %v3463 = vpack.c.b16 %v3389, %v3387
    %v3464 = vpack.c.b16 %v3390, %v3388
    %v3465 = vpack.c.b16 %v3393, %v3391
    %v3466 = vpack.c.b16 %v3394, %v3392
    %v3467 = vpack.c.b16 %v3397, %v3395
    %v3468 = vpack.c.b16 %v3398, %v3396
    %v3469 = vpack.c.b16 %v3401, %v3399
    %v3470 = vpack.c.b16 %v3402, %v3400
    %v3471 = vpack.c.b16 %v3405, %v3403
    %v3472 = vpack.c.b16 %v3406, %v3404
    %v3473 = vpack.c.b16 %v3409, %v3407
    %v3474 = vpack.c.b16 %v3410, %v3408
    %3539 = vmatprep.subr.bf16.mxu0 %v3426
    %3540 = vmatpush1.bf16.msra.mxu0 %v3425
    %3541 = vmatprep.subr.bf16.mxu0 %v3424
    %3542 = vmatpush1.bf16.msra.mxu0 %v3423
    %3543 = vmatprep.subr.bf16.mxu0 %v3422
    %3544 = vmatpush1.bf16.msra.mxu0 %v3421
    %3545 = vmatprep.subr.bf16.mxu0 %v3420
    %3546 = vmatpush1.bf16.msra.mxu0 %v3419
    %3547 = vmatprep.subr.bf16.mxu0 %v3418
    %3548 = vmatpush1.bf16.msra.mxu0 %v3417
    %3549 = vmatprep.subr.bf16.mxu0 %v3416
    %3550 = vmatpush1.bf16.msra.mxu0 %v3415
    %3551 = vmatprep.subr.bf16.mxu0 %v3414
    %3552 = vmatpush1.bf16.msra.mxu0 %v3413
    %3553 = vmatprep.subr.bf16.mxu0 %v3412
    %3554 = vmatpush1.bf16.msra.mxu0 %v3411
    %3555 = vmatprep.subr.bf16.mxu0 %v3442
    %3556 = vmatpush2.bf16.msra.mxu0 %v3441
    %3557 = vmatprep.subr.bf16.mxu0 %v3440
    %3558 = vmatpush2.bf16.msra.mxu0 %v3439
    %3559 = vmatprep.subr.bf16.mxu0 %v3438
    %3560 = vmatpush2.bf16.msra.mxu0 %v3437
    %3561 = vmatprep.subr.bf16.mxu0 %v3436
    %3562 = vmatpush2.bf16.msra.mxu0 %v3435
    %3563 = vmatprep.subr.bf16.mxu0 %v3434
    %3564 = vmatpush2.bf16.msra.mxu0 %v3433
    %3565 = vmatprep.subr.bf16.mxu0 %v3432
    %3566 = vmatpush2.bf16.msra.mxu0 %v3431
    %3567 = vmatprep.subr.bf16.mxu0 %v3430
    %3568 = vmatpush2.bf16.msra.mxu0 %v3429
    %3569 = vmatprep.subr.bf16.mxu0 %v3428
    %3570 = vmatpush2.bf16.msra.mxu0 %v3427
    %3571 = vmatprep.mubr.bf16.mxu0 %v3147
    %3572 = vmatmul.mubr.bf16.gmra.mxu0 %v3146
    %v3573 = vpop.f32.mrf.mxu0
    %v3574 = vadd.f32 0.0, %v3573
    %v3575 = vpop.f32.mrf.mxu0
    %v3576 = vadd.f32 0.0, %v3575
    %v3577 = vpop.f32.mrf.mxu0
    %v3578 = vadd.f32 0.0, %v3577
    %v3579 = vpop.f32.mrf.mxu0
    %v3580 = vadd.f32 0.0, %v3579
    %3581 = vmatprep.mubr.bf16.mxu0 %v3151
    %3582 = vmatmul.mubr.bf16.gmra.mxu0 %v3150
    %v3583 = vpop.f32.mrf.mxu0
    %v3584 = vadd.f32 0.0, %v3583
    %v3585 = vpop.f32.mrf.mxu0
    %v3586 = vadd.f32 0.0, %v3585
    %v3587 = vpop.f32.mrf.mxu0
    %v3588 = vadd.f32 0.0, %v3587
    %v3589 = vpop.f32.mrf.mxu0
    %v3590 = vadd.f32 0.0, %v3589
    %3591 = vdwg.mxu0
    %3592 = vmatprep.subr.bf16.mxu0 %v3458
    %3593 = vmatpush1.bf16.msra.mxu0 %v3457
    %3594 = vmatprep.subr.bf16.mxu0 %v3456
    %3595 = vmatpush1.bf16.msra.mxu0 %v3455
    %3596 = vmatprep.subr.bf16.mxu0 %v3454
    %3597 = vmatpush1.bf16.msra.mxu0 %v3453
    %3598 = vmatprep.subr.bf16.mxu0 %v3452
    %3599 = vmatpush1.bf16.msra.mxu0 %v3451
    %3600 = vmatprep.subr.bf16.mxu0 %v3450
    %3601 = vmatpush1.bf16.msra.mxu0 %v3449
    %3602 = vmatprep.subr.bf16.mxu0 %v3448
    %3603 = vmatpush1.bf16.msra.mxu0 %v3447
    %3604 = vmatprep.subr.bf16.mxu0 %v3446
    %3605 = vmatpush1.bf16.msra.mxu0 %v3445
    %3606 = vmatprep.subr.bf16.mxu0 %v3444
    %3607 = vmatpush1.bf16.msra.mxu0 %v3443
    %3608 = vmatprep.subr.bf16.mxu0 %v3474
    %3609 = vmatpush2.bf16.msra.mxu0 %v3473
    %3610 = vmatprep.subr.bf16.mxu0 %v3472
    %3611 = vmatpush2.bf16.msra.mxu0 %v3471
    %3612 = vmatprep.subr.bf16.mxu0 %v3470
    %3613 = vmatpush2.bf16.msra.mxu0 %v3469
    %3614 = vmatprep.subr.bf16.mxu0 %v3468
    %3615 = vmatpush2.bf16.msra.mxu0 %v3467
    %3616 = vmatprep.subr.bf16.mxu0 %v3466
    %3617 = vmatpush2.bf16.msra.mxu0 %v3465
    %3618 = vmatprep.subr.bf16.mxu0 %v3464
    %3619 = vmatpush2.bf16.msra.mxu0 %v3463
    %3620 = vmatprep.subr.bf16.mxu0 %v3462
    %3621 = vmatpush2.bf16.msra.mxu0 %v3461
    %3622 = vmatprep.subr.bf16.mxu0 %v3460
    %3623 = vmatpush2.bf16.msra.mxu0 %v3459
    %3624 = vmatprep.mubr.bf16.mxu0 %v3149
    %3625 = vmatmul.mubr.bf16.gmra.mxu0 %v3148
    %v3626 = vpop.f32.mrf.mxu0
    %v3627 = vadd.f32 %v3574, %v3626
    %v3628 = vpop.f32.mrf.mxu0
    %v3629 = vadd.f32 %v3576, %v3628
    %v3630 = vpop.f32.mrf.mxu0
    %v3631 = vadd.f32 %v3578, %v3630
    %v3632 = vpop.f32.mrf.mxu0
    %v3633 = vadd.f32 %v3580, %v3632
    %3634 = vmatprep.mubr.bf16.mxu0 %v3153
    %3635 = vmatmul.mubr.bf16.gmra.mxu0 %v3152
    %v3636 = vpop.f32.mrf.mxu0
    %v3637 = vadd.f32 %v3584, %v3636
    %v3638 = vpop.f32.mrf.mxu0
    %v3639 = vadd.f32 %v3586, %v3638
    %v3640 = vpop.f32.mrf.mxu0
    %v3641 = vadd.f32 %v3588, %v3640
    %v3642 = vpop.f32.mrf.mxu0
    %v3643 = vadd.f32 %v3590, %v3642
    %3644 = vdwg.mxu0
    %v3645 = vadd.f32 %v3040, %v3627
    %v3646 = vadd.f32 %v3042, %v3629
    %v3647 = vadd.f32 %v3044, %v3631
    %v3648 = vadd.f32 %v3046, %v3633
    %v3649 = vadd.f32 %v3050, %v3637
    %v3650 = vadd.f32 %v3052, %v3639
    %v3651 = vadd.f32 %v3054, %v3641
    %v3652 = vadd.f32 %v3056, %v3643
    %v3653 = vld [vmem:[#allocation2] sm:$0xe0]
    %v3654 = vld [vmem:[#allocation2 + $0x8] sm:$0xe0]
    %v3655 = vld [vmem:[#allocation2 + $0x10] sm:$0xe0]
    %v3656 = vld [vmem:[#allocation2 + $0x18] sm:$0xe0]
    %v3657 = vld [vmem:[#allocation2 + $0x40] sm:$0x1f]
    %v3658 = vld [vmem:[#allocation2 + $0x48] sm:$0x1f]
    %v3659 = vld [vmem:[#allocation2 + $0x50] sm:$0x1f]
    %v3660 = vld [vmem:[#allocation2 + $0x58] sm:$0x1f]
    %v3661 = vld [vmem:[#allocation2 + $0x60] sm:$0xe0]
    %v3662 = vld [vmem:[#allocation2 + $0x68] sm:$0xe0]
    %v3663 = vld [vmem:[#allocation2 + $0x70] sm:$0xe0]
    %v3664 = vld [vmem:[#allocation2 + $0x78] sm:$0xe0]
    %v3665 = vld [vmem:[#allocation2 + $0xa0] sm:$0x1f]
    %v3666 = vld [vmem:[#allocation2 + $0xa8] sm:$0x1f]
    %v3667 = vld [vmem:[#allocation2 + $0xb0] sm:$0x1f]
    %v3668 = vld [vmem:[#allocation2 + $0xb8] sm:$0x1f]
    %vm3685 = vcmask 1042432
    %v3686 = vrot.slane %v3653, 5
    %v3687 = vrot.slane %v1871, 5
    %v3688 = vsel %vm3685, %v3686, %v3687
    %v3689 = vrot.slane %v3654, 5
    %v3690 = vrot.slane %v1872, 5
    %v3691 = vsel %vm3685, %v3689, %v3690
    %v3692 = vrot.slane %v3655, 5
    %v3693 = vrot.slane %v1873, 5
    %v3694 = vsel %vm3685, %v3692, %v3693
    %v3695 = vrot.slane %v3656, 5
    %v3696 = vrot.slane %v1874, 5
    %v3697 = vsel %vm3685, %v3695, %v3696
    %v3698 = vrot.slane %v3657, 5
    %v3699 = vsel %vm3685, %v3687, %v3698
    %v3700 = vrot.slane %v3658, 5
    %v3701 = vsel %vm3685, %v3690, %v3700
    %v3702 = vrot.slane %v3659, 5
    %v3703 = vsel %vm3685, %v3693, %v3702
    %v3704 = vrot.slane %v3660, 5
    %v3705 = vsel %vm3685, %v3696, %v3704
    %v3706 = vrot.slane %v3661, 5
    %v3707 = vrot.slane %v1883, 5
    %v3708 = vsel %vm3685, %v3706, %v3707
    %v3709 = vrot.slane %v3662, 5
    %v3710 = vrot.slane %v1884, 5
    %v3711 = vsel %vm3685, %v3709, %v3710
    %v3712 = vrot.slane %v3663, 5
    %v3713 = vrot.slane %v1885, 5
    %v3714 = vsel %vm3685, %v3712, %v3713
    %v3715 = vrot.slane %v3664, 5
    %v3716 = vrot.slane %v1886, 5
    %v3717 = vsel %vm3685, %v3715, %v3716
    %v3718 = vrot.slane %v3665, 5
    %v3719 = vsel %vm3685, %v3707, %v3718
    %v3720 = vrot.slane %v3666, 5
    %v3721 = vsel %vm3685, %v3710, %v3720
    %v3722 = vrot.slane %v3667, 5
    %v3723 = vsel %vm3685, %v3713, %v3722
    %v3724 = vrot.slane %v3668, 5
    %v3725 = vsel %vm3685, %v3716, %v3724
    %v3742 = vpack.c.bf16 %v3699, %v3688
    %v3743 = vpack.c.bf16 %v3701, %v3691
    %v3744 = vpack.c.bf16 %v3703, %v3694
    %v3745 = vpack.c.bf16 %v3705, %v3697
    %v3746 = vpack.c.bf16 %v3719, %v3708
    %v3747 = vpack.c.bf16 %v3721, %v3711
    %v3748 = vpack.c.bf16 %v3723, %v3714
    %v3749 = vpack.c.bf16 %v3725, %v3717
    %s3750 = scalar_lea.vmem [#allocation9], 1536
    %v3751 = vld [vmem:[%s3750] sm:$0xff]
    %v3752 = vld [vmem:[%s3750 + $0x8] sm:$0xff]
    %v3753 = vld [vmem:[%s3750 + $0x10] sm:$0xff]
    %v3754 = vld [vmem:[%s3750 + $0x18] sm:$0xff]
    %v3755 = vld [vmem:[%s3750 + $0x20] sm:$0xff]
    %v3756 = vld [vmem:[%s3750 + $0x28] sm:$0xff]
    %v3757 = vld [vmem:[%s3750 + $0x30] sm:$0xff]
    %v3758 = vld [vmem:[%s3750 + $0x38] sm:$0xff]
    %v3759 = vld [vmem:[%s3750 + $0x40] sm:$0xff]
    %v3760 = vld [vmem:[%s3750 + $0x48] sm:$0xff]
    %v3761 = vld [vmem:[%s3750 + $0x50] sm:$0xff]
    %v3762 = vld [vmem:[%s3750 + $0x58] sm:$0xff]
    %v3763 = vld [vmem:[%s3750 + $0x60] sm:$0xff]
    %v3764 = vld [vmem:[%s3750 + $0x68] sm:$0xff]
    %v3765 = vld [vmem:[%s3750 + $0x70] sm:$0xff]
    %v3766 = vld [vmem:[%s3750 + $0x78] sm:$0xff]
    %v3767 = vld [vmem:[%s3750 + $0x80] sm:$0xff]
    %v3768 = vld [vmem:[%s3750 + $0x88] sm:$0xff]
    %v3769 = vld [vmem:[%s3750 + $0x90] sm:$0xff]
    %v3770 = vld [vmem:[%s3750 + $0x98] sm:$0xff]
    %v3771 = vld [vmem:[%s3750 + $0xa0] sm:$0xff]
    %v3772 = vld [vmem:[%s3750 + $0xa8] sm:$0xff]
    %v3773 = vld [vmem:[%s3750 + $0xb0] sm:$0xff]
    %v3774 = vld [vmem:[%s3750 + $0xb8] sm:$0xff]
    %v3775 = vld [vmem:[%s3750 + $0xc0] sm:$0xff]
    %v3776 = vld [vmem:[%s3750 + $0xc8] sm:$0xff]
    %v3777 = vld [vmem:[%s3750 + $0xd0] sm:$0xff]
    %v3778 = vld [vmem:[%s3750 + $0xd8] sm:$0xff]
    %v3779 = vld [vmem:[%s3750 + $0xe0] sm:$0xff]
    %v3780 = vld [vmem:[%s3750 + $0xe8] sm:$0xff]
    %v3781 = vld [vmem:[%s3750 + $0xf0] sm:$0xff]
    %v3782 = vld [vmem:[%s3750 + $0xf8] sm:$0xff]
    %v3783 = vld [vmem:[%s3750 + $0x100] sm:$0xff]
    %v3784 = vld [vmem:[%s3750 + $0x108] sm:$0xff]
    %v3785 = vld [vmem:[%s3750 + $0x110] sm:$0xff]
    %v3786 = vld [vmem:[%s3750 + $0x118] sm:$0xff]
    %v3787 = vld [vmem:[%s3750 + $0x120] sm:$0xff]
    %v3788 = vld [vmem:[%s3750 + $0x128] sm:$0xff]
    %v3789 = vld [vmem:[%s3750 + $0x130] sm:$0xff]
    %v3790 = vld [vmem:[%s3750 + $0x138] sm:$0xff]
    %v3791 = vld [vmem:[%s3750 + $0x140] sm:$0xff]
    %v3792 = vld [vmem:[%s3750 + $0x148] sm:$0xff]
    %v3793 = vld [vmem:[%s3750 + $0x150] sm:$0xff]
    %v3794 = vld [vmem:[%s3750 + $0x158] sm:$0xff]
    %v3795 = vld [vmem:[%s3750 + $0x160] sm:$0xff]
    %v3796 = vld [vmem:[%s3750 + $0x168] sm:$0xff]
    %v3797 = vld [vmem:[%s3750 + $0x170] sm:$0xff]
    %v3798 = vld [vmem:[%s3750 + $0x178] sm:$0xff]
    %v3799 = vld [vmem:[%s3750 + $0x180] sm:$0xff]
    %v3800 = vld [vmem:[%s3750 + $0x188] sm:$0xff]
    %v3801 = vld [vmem:[%s3750 + $0x190] sm:$0xff]
    %v3802 = vld [vmem:[%s3750 + $0x198] sm:$0xff]
    %v3803 = vld [vmem:[%s3750 + $0x1a0] sm:$0xff]
    %v3804 = vld [vmem:[%s3750 + $0x1a8] sm:$0xff]
    %v3805 = vld [vmem:[%s3750 + $0x1b0] sm:$0xff]
    %v3806 = vld [vmem:[%s3750 + $0x1b8] sm:$0xff]
    %v3807 = vld [vmem:[%s3750 + $0x1c0] sm:$0xff]
    %v3808 = vld [vmem:[%s3750 + $0x1c8] sm:$0xff]
    %v3809 = vld [vmem:[%s3750 + $0x1d0] sm:$0xff]
    %v3810 = vld [vmem:[%s3750 + $0x1d8] sm:$0xff]
    %v3811 = vld [vmem:[%s3750 + $0x1e0] sm:$0xff]
    %v3812 = vld [vmem:[%s3750 + $0x1e8] sm:$0xff]
    %v3813 = vld [vmem:[%s3750 + $0x1f0] sm:$0xff]
    %v3814 = vld [vmem:[%s3750 + $0x1f8] sm:$0xff]
    %v3879 = vunpack.c.l.b16 %v3751
    %v3880 = vunpack.c.h.b16 %v3751
    %v3881 = vunpack.c.l.b16 %v3752
    %v3882 = vunpack.c.h.b16 %v3752
    %v3883 = vunpack.c.l.b16 %v3753
    %v3884 = vunpack.c.h.b16 %v3753
    %v3885 = vunpack.c.l.b16 %v3754
    %v3886 = vunpack.c.h.b16 %v3754
    %v3887 = vunpack.c.l.b16 %v3755
    %v3888 = vunpack.c.h.b16 %v3755
    %v3889 = vunpack.c.l.b16 %v3756
    %v3890 = vunpack.c.h.b16 %v3756
    %v3891 = vunpack.c.l.b16 %v3757
    %v3892 = vunpack.c.h.b16 %v3757
    %v3893 = vunpack.c.l.b16 %v3758
    %v3894 = vunpack.c.h.b16 %v3758
    %v3895 = vunpack.c.l.b16 %v3759
    %v3896 = vunpack.c.h.b16 %v3759
    %v3897 = vunpack.c.l.b16 %v3760
    %v3898 = vunpack.c.h.b16 %v3760
    %v3899 = vunpack.c.l.b16 %v3761
    %v3900 = vunpack.c.h.b16 %v3761
    %v3901 = vunpack.c.l.b16 %v3762
    %v3902 = vunpack.c.h.b16 %v3762
    %v3903 = vunpack.c.l.b16 %v3763
    %v3904 = vunpack.c.h.b16 %v3763
    %v3905 = vunpack.c.l.b16 %v3764
    %v3906 = vunpack.c.h.b16 %v3764
    %v3907 = vunpack.c.l.b16 %v3765
    %v3908 = vunpack.c.h.b16 %v3765
    %v3909 = vunpack.c.l.b16 %v3766
    %v3910 = vunpack.c.h.b16 %v3766
    %v3911 = vunpack.c.l.b16 %v3767
    %v3912 = vunpack.c.h.b16 %v3767
    %v3913 = vunpack.c.l.b16 %v3768
    %v3914 = vunpack.c.h.b16 %v3768
    %v3915 = vunpack.c.l.b16 %v3769
    %v3916 = vunpack.c.h.b16 %v3769
    %v3917 = vunpack.c.l.b16 %v3770
    %v3918 = vunpack.c.h.b16 %v3770
    %v3919 = vunpack.c.l.b16 %v3771
    %v3920 = vunpack.c.h.b16 %v3771
    %v3921 = vunpack.c.l.b16 %v3772
    %v3922 = vunpack.c.h.b16 %v3772
    %v3923 = vunpack.c.l.b16 %v3773
    %v3924 = vunpack.c.h.b16 %v3773
    %v3925 = vunpack.c.l.b16 %v3774
    %v3926 = vunpack.c.h.b16 %v3774
    %v3927 = vunpack.c.l.b16 %v3775
    %v3928 = vunpack.c.h.b16 %v3775
    %v3929 = vunpack.c.l.b16 %v3776
    %v3930 = vunpack.c.h.b16 %v3776
    %v3931 = vunpack.c.l.b16 %v3777
    %v3932 = vunpack.c.h.b16 %v3777
    %v3933 = vunpack.c.l.b16 %v3778
    %v3934 = vunpack.c.h.b16 %v3778
    %v3935 = vunpack.c.l.b16 %v3779
    %v3936 = vunpack.c.h.b16 %v3779
    %v3937 = vunpack.c.l.b16 %v3780
    %v3938 = vunpack.c.h.b16 %v3780
    %v3939 = vunpack.c.l.b16 %v3781
    %v3940 = vunpack.c.h.b16 %v3781
    %v3941 = vunpack.c.l.b16 %v3782
    %v3942 = vunpack.c.h.b16 %v3782
    %v3943 = vunpack.c.l.b16 %v3783
    %v3944 = vunpack.c.h.b16 %v3783
    %v3945 = vunpack.c.l.b16 %v3784
    %v3946 = vunpack.c.h.b16 %v3784
    %v3947 = vunpack.c.l.b16 %v3785
    %v3948 = vunpack.c.h.b16 %v3785
    %v3949 = vunpack.c.l.b16 %v3786
    %v3950 = vunpack.c.h.b16 %v3786
    %v3951 = vunpack.c.l.b16 %v3787
    %v3952 = vunpack.c.h.b16 %v3787
    %v3953 = vunpack.c.l.b16 %v3788
    %v3954 = vunpack.c.h.b16 %v3788
    %v3955 = vunpack.c.l.b16 %v3789
    %v3956 = vunpack.c.h.b16 %v3789
    %v3957 = vunpack.c.l.b16 %v3790
    %v3958 = vunpack.c.h.b16 %v3790
    %v3959 = vunpack.c.l.b16 %v3791
    %v3960 = vunpack.c.h.b16 %v3791
    %v3961 = vunpack.c.l.b16 %v3792
    %v3962 = vunpack.c.h.b16 %v3792
    %v3963 = vunpack.c.l.b16 %v3793
    %v3964 = vunpack.c.h.b16 %v3793
    %v3965 = vunpack.c.l.b16 %v3794
    %v3966 = vunpack.c.h.b16 %v3794
    %v3967 = vunpack.c.l.b16 %v3795
    %v3968 = vunpack.c.h.b16 %v3795
    %v3969 = vunpack.c.l.b16 %v3796
    %v3970 = vunpack.c.h.b16 %v3796
    %v3971 = vunpack.c.l.b16 %v3797
    %v3972 = vunpack.c.h.b16 %v3797
    %v3973 = vunpack.c.l.b16 %v3798
    %v3974 = vunpack.c.h.b16 %v3798
    %v3975 = vunpack.c.l.b16 %v3799
    %v3976 = vunpack.c.h.b16 %v3799
    %v3977 = vunpack.c.l.b16 %v3800
    %v3978 = vunpack.c.h.b16 %v3800
    %v3979 = vunpack.c.l.b16 %v3801
    %v3980 = vunpack.c.h.b16 %v3801
    %v3981 = vunpack.c.l.b16 %v3802
    %v3982 = vunpack.c.h.b16 %v3802
    %v3983 = vunpack.c.l.b16 %v3803
    %v3984 = vunpack.c.h.b16 %v3803
    %v3985 = vunpack.c.l.b16 %v3804
    %v3986 = vunpack.c.h.b16 %v3804
    %v3987 = vunpack.c.l.b16 %v3805
    %v3988 = vunpack.c.h.b16 %v3805
    %v3989 = vunpack.c.l.b16 %v3806
    %v3990 = vunpack.c.h.b16 %v3806
    %v3991 = vunpack.c.l.b16 %v3807
    %v3992 = vunpack.c.h.b16 %v3807
    %v3993 = vunpack.c.l.b16 %v3808
    %v3994 = vunpack.c.h.b16 %v3808
    %v3995 = vunpack.c.l.b16 %v3809
    %v3996 = vunpack.c.h.b16 %v3809
    %v3997 = vunpack.c.l.b16 %v3810
    %v3998 = vunpack.c.h.b16 %v3810
    %v3999 = vunpack.c.l.b16 %v3811
    %v4000 = vunpack.c.h.b16 %v3811
    %v4001 = vunpack.c.l.b16 %v3812
    %v4002 = vunpack.c.h.b16 %v3812
    %v4003 = vunpack.c.l.b16 %v3813
    %v4004 = vunpack.c.h.b16 %v3813
    %v4005 = vunpack.c.l.b16 %v3814
    %v4006 = vunpack.c.h.b16 %v3814
    %v4007 = vpack.c.b16 %v3881, %v3879
    %v4008 = vpack.c.b16 %v3882, %v3880
    %v4009 = vpack.c.b16 %v3885, %v3883
    %v4010 = vpack.c.b16 %v3886, %v3884
    %v4011 = vpack.c.b16 %v3889, %v3887
    %v4012 = vpack.c.b16 %v3890, %v3888
    %v4013 = vpack.c.b16 %v3893, %v3891
    %v4014 = vpack.c.b16 %v3894, %v3892
    %v4015 = vpack.c.b16 %v3897, %v3895
    %v4016 = vpack.c.b16 %v3898, %v3896
    %v4017 = vpack.c.b16 %v3901, %v3899
    %v4018 = vpack.c.b16 %v3902, %v3900
    %v4019 = vpack.c.b16 %v3905, %v3903
    %v4020 = vpack.c.b16 %v3906, %v3904
    %v4021 = vpack.c.b16 %v3909, %v3907
    %v4022 = vpack.c.b16 %v3910, %v3908
    %v4023 = vpack.c.b16 %v3913, %v3911
    %v4024 = vpack.c.b16 %v3914, %v3912
    %v4025 = vpack.c.b16 %v3917, %v3915
    %v4026 = vpack.c.b16 %v3918, %v3916
    %v4027 = vpack.c.b16 %v3921, %v3919
    %v4028 = vpack.c.b16 %v3922, %v3920
    %v4029 = vpack.c.b16 %v3925, %v3923
    %v4030 = vpack.c.b16 %v3926, %v3924
    %v4031 = vpack.c.b16 %v3929, %v3927
    %v4032 = vpack.c.b16 %v3930, %v3928
    %v4033 = vpack.c.b16 %v3933, %v3931
    %v4034 = vpack.c.b16 %v3934, %v3932
    %v4035 = vpack.c.b16 %v3937, %v3935
    %v4036 = vpack.c.b16 %v3938, %v3936
    %v4037 = vpack.c.b16 %v3941, %v3939
    %v4038 = vpack.c.b16 %v3942, %v3940
    %v4039 = vpack.c.b16 %v3945, %v3943
    %v4040 = vpack.c.b16 %v3946, %v3944
    %v4041 = vpack.c.b16 %v3949, %v3947
    %v4042 = vpack.c.b16 %v3950, %v3948
    %v4043 = vpack.c.b16 %v3953, %v3951
    %v4044 = vpack.c.b16 %v3954, %v3952
    %v4045 = vpack.c.b16 %v3957, %v3955
    %v4046 = vpack.c.b16 %v3958, %v3956
    %v4047 = vpack.c.b16 %v3961, %v3959
    %v4048 = vpack.c.b16 %v3962, %v3960
    %v4049 = vpack.c.b16 %v3965, %v3963
    %v4050 = vpack.c.b16 %v3966, %v3964
    %v4051 = vpack.c.b16 %v3969, %v3967
    %v4052 = vpack.c.b16 %v3970, %v3968
    %v4053 = vpack.c.b16 %v3973, %v3971
    %v4054 = vpack.c.b16 %v3974, %v3972
    %v4055 = vpack.c.b16 %v3977, %v3975
    %v4056 = vpack.c.b16 %v3978, %v3976
    %v4057 = vpack.c.b16 %v3981, %v3979
    %v4058 = vpack.c.b16 %v3982, %v3980
    %v4059 = vpack.c.b16 %v3985, %v3983
    %v4060 = vpack.c.b16 %v3986, %v3984
    %v4061 = vpack.c.b16 %v3989, %v3987
    %v4062 = vpack.c.b16 %v3990, %v3988
    %v4063 = vpack.c.b16 %v3993, %v3991
    %v4064 = vpack.c.b16 %v3994, %v3992
    %v4065 = vpack.c.b16 %v3997, %v3995
    %v4066 = vpack.c.b16 %v3998, %v3996
    %v4067 = vpack.c.b16 %v4001, %v3999
    %v4068 = vpack.c.b16 %v4002, %v4000
    %v4069 = vpack.c.b16 %v4005, %v4003
    %v4070 = vpack.c.b16 %v4006, %v4004
    %4135 = vmatprep.subr.bf16.mxu0 %v4022
    %4136 = vmatpush1.bf16.msra.mxu0 %v4021
    %4137 = vmatprep.subr.bf16.mxu0 %v4020
    %4138 = vmatpush1.bf16.msra.mxu0 %v4019
    %4139 = vmatprep.subr.bf16.mxu0 %v4018
    %4140 = vmatpush1.bf16.msra.mxu0 %v4017
    %4141 = vmatprep.subr.bf16.mxu0 %v4016
    %4142 = vmatpush1.bf16.msra.mxu0 %v4015
    %4143 = vmatprep.subr.bf16.mxu0 %v4014
    %4144 = vmatpush1.bf16.msra.mxu0 %v4013
    %4145 = vmatprep.subr.bf16.mxu0 %v4012
    %4146 = vmatpush1.bf16.msra.mxu0 %v4011
    %4147 = vmatprep.subr.bf16.mxu0 %v4010
    %4148 = vmatpush1.bf16.msra.mxu0 %v4009
    %4149 = vmatprep.subr.bf16.mxu0 %v4008
    %4150 = vmatpush1.bf16.msra.mxu0 %v4007
    %4151 = vmatprep.subr.bf16.mxu0 %v4038
    %4152 = vmatpush2.bf16.msra.mxu0 %v4037
    %4153 = vmatprep.subr.bf16.mxu0 %v4036
    %4154 = vmatpush2.bf16.msra.mxu0 %v4035
    %4155 = vmatprep.subr.bf16.mxu0 %v4034
    %4156 = vmatpush2.bf16.msra.mxu0 %v4033
    %4157 = vmatprep.subr.bf16.mxu0 %v4032
    %4158 = vmatpush2.bf16.msra.mxu0 %v4031
    %4159 = vmatprep.subr.bf16.mxu0 %v4030
    %4160 = vmatpush2.bf16.msra.mxu0 %v4029
    %4161 = vmatprep.subr.bf16.mxu0 %v4028
    %4162 = vmatpush2.bf16.msra.mxu0 %v4027
    %4163 = vmatprep.subr.bf16.mxu0 %v4026
    %4164 = vmatpush2.bf16.msra.mxu0 %v4025
    %4165 = vmatprep.subr.bf16.mxu0 %v4024
    %4166 = vmatpush2.bf16.msra.mxu0 %v4023
    %4167 = vmatprep.mubr.bf16.mxu0 %v3743
    %4168 = vmatmul.mubr.bf16.gmra.mxu0 %v3742
    %v4169 = vpop.f32.mrf.mxu0
    %v4170 = vadd.f32 0.0, %v4169
    %v4171 = vpop.f32.mrf.mxu0
    %v4172 = vadd.f32 0.0, %v4171
    %v4173 = vpop.f32.mrf.mxu0
    %v4174 = vadd.f32 0.0, %v4173
    %v4175 = vpop.f32.mrf.mxu0
    %v4176 = vadd.f32 0.0, %v4175
    %4177 = vmatprep.mubr.bf16.mxu0 %v3747
    %4178 = vmatmul.mubr.bf16.gmra.mxu0 %v3746
    %v4179 = vpop.f32.mrf.mxu0
    %v4180 = vadd.f32 0.0, %v4179
    %v4181 = vpop.f32.mrf.mxu0
    %v4182 = vadd.f32 0.0, %v4181
    %v4183 = vpop.f32.mrf.mxu0
    %v4184 = vadd.f32 0.0, %v4183
    %v4185 = vpop.f32.mrf.mxu0
    %v4186 = vadd.f32 0.0, %v4185
    %4187 = vdwg.mxu0
    %4188 = vmatprep.subr.bf16.mxu0 %v4054
    %4189 = vmatpush1.bf16.msra.mxu0 %v4053
    %4190 = vmatprep.subr.bf16.mxu0 %v4052
    %4191 = vmatpush1.bf16.msra.mxu0 %v4051
    %4192 = vmatprep.subr.bf16.mxu0 %v4050
    %4193 = vmatpush1.bf16.msra.mxu0 %v4049
    %4194 = vmatprep.subr.bf16.mxu0 %v4048
    %4195 = vmatpush1.bf16.msra.mxu0 %v4047
    %4196 = vmatprep.subr.bf16.mxu0 %v4046
    %4197 = vmatpush1.bf16.msra.mxu0 %v4045
    %4198 = vmatprep.subr.bf16.mxu0 %v4044
    %4199 = vmatpush1.bf16.msra.mxu0 %v4043
    %4200 = vmatprep.subr.bf16.mxu0 %v4042
    %4201 = vmatpush1.bf16.msra.mxu0 %v4041
    %4202 = vmatprep.subr.bf16.mxu0 %v4040
    %4203 = vmatpush1.bf16.msra.mxu0 %v4039
    %4204 = vmatprep.subr.bf16.mxu0 %v4070
    %4205 = vmatpush2.bf16.msra.mxu0 %v4069
    %4206 = vmatprep.subr.bf16.mxu0 %v4068
    %4207 = vmatpush2.bf16.msra.mxu0 %v4067
    %4208 = vmatprep.subr.bf16.mxu0 %v4066
    %4209 = vmatpush2.bf16.msra.mxu0 %v4065
    %4210 = vmatprep.subr.bf16.mxu0 %v4064
    %4211 = vmatpush2.bf16.msra.mxu0 %v4063
    %4212 = vmatprep.subr.bf16.mxu0 %v4062
    %4213 = vmatpush2.bf16.msra.mxu0 %v4061
    %4214 = vmatprep.subr.bf16.mxu0 %v4060
    %4215 = vmatpush2.bf16.msra.mxu0 %v4059
    %4216 = vmatprep.subr.bf16.mxu0 %v4058
    %4217 = vmatpush2.bf16.msra.mxu0 %v4057
    %4218 = vmatprep.subr.bf16.mxu0 %v4056
    %4219 = vmatpush2.bf16.msra.mxu0 %v4055
    %4220 = vmatprep.mubr.bf16.mxu0 %v3745
    %4221 = vmatmul.mubr.bf16.gmra.mxu0 %v3744
    %v4222 = vpop.f32.mrf.mxu0
    %v4223 = vadd.f32 %v4170, %v4222
    %v4224 = vpop.f32.mrf.mxu0
    %v4225 = vadd.f32 %v4172, %v4224
    %v4226 = vpop.f32.mrf.mxu0
    %v4227 = vadd.f32 %v4174, %v4226
    %v4228 = vpop.f32.mrf.mxu0
    %v4229 = vadd.f32 %v4176, %v4228
    %4230 = vmatprep.mubr.bf16.mxu0 %v3749
    %4231 = vmatmul.mubr.bf16.gmra.mxu0 %v3748
    %v4232 = vpop.f32.mrf.mxu0
    %v4233 = vadd.f32 %v4180, %v4232
    %v4234 = vpop.f32.mrf.mxu0
    %v4235 = vadd.f32 %v4182, %v4234
    %v4236 = vpop.f32.mrf.mxu0
    %v4237 = vadd.f32 %v4184, %v4236
    %v4238 = vpop.f32.mrf.mxu0
    %v4239 = vadd.f32 %v4186, %v4238
    %4240 = vdwg.mxu0
    %v4241 = vadd.f32 %v3645, %v4223
    %v4242 = vadd.f32 %v3646, %v4225
    %v4243 = vadd.f32 %v3647, %v4227
    %v4244 = vadd.f32 %v3648, %v4229
    %v4245 = vadd.f32 %v3649, %v4233
    %v4246 = vadd.f32 %v3650, %v4235
    %v4247 = vadd.f32 %v3651, %v4237
    %v4248 = vadd.f32 %v3652, %v4239
    %v4249 = vld [vmem:[#allocation2] sm:$0xc0]
    %v4250 = vld [vmem:[#allocation2 + $0x8] sm:$0xc0]
    %v4251 = vld [vmem:[#allocation2 + $0x10] sm:$0xc0]
    %v4252 = vld [vmem:[#allocation2 + $0x18] sm:$0xc0]
    %v4253 = vld [vmem:[#allocation2 + $0x40] sm:$0x3f]
    %v4254 = vld [vmem:[#allocation2 + $0x48] sm:$0x3f]
    %v4255 = vld [vmem:[#allocation2 + $0x50] sm:$0x3f]
    %v4256 = vld [vmem:[#allocation2 + $0x58] sm:$0x3f]
    %v4257 = vld [vmem:[#allocation2 + $0x60] sm:$0xc0]
    %v4258 = vld [vmem:[#allocation2 + $0x68] sm:$0xc0]
    %v4259 = vld [vmem:[#allocation2 + $0x70] sm:$0xc0]
    %v4260 = vld [vmem:[#allocation2 + $0x78] sm:$0xc0]
    %v4261 = vld [vmem:[#allocation2 + $0xa0] sm:$0x3f]
    %v4262 = vld [vmem:[#allocation2 + $0xa8] sm:$0x3f]
    %v4263 = vld [vmem:[#allocation2 + $0xb0] sm:$0x3f]
    %v4264 = vld [vmem:[#allocation2 + $0xb8] sm:$0x3f]
    %vm4281 = vcmask 1041408
    %v4282 = vrot.slane %v4249, 6
    %v4283 = vrot.slane %v1871, 6
    %v4284 = vsel %vm4281, %v4282, %v4283
    %v4285 = vrot.slane %v4250, 6
    %v4286 = vrot.slane %v1872, 6
    %v4287 = vsel %vm4281, %v4285, %v4286
    %v4288 = vrot.slane %v4251, 6
    %v4289 = vrot.slane %v1873, 6
    %v4290 = vsel %vm4281, %v4288, %v4289
    %v4291 = vrot.slane %v4252, 6
    %v4292 = vrot.slane %v1874, 6
    %v4293 = vsel %vm4281, %v4291, %v4292
    %v4294 = vrot.slane %v4253, 6
    %v4295 = vsel %vm4281, %v4283, %v4294
    %v4296 = vrot.slane %v4254, 6
    %v4297 = vsel %vm4281, %v4286, %v4296
    %v4298 = vrot.slane %v4255, 6
    %v4299 = vsel %vm4281, %v4289, %v4298
    %v4300 = vrot.slane %v4256, 6
    %v4301 = vsel %vm4281, %v4292, %v4300
    %v4302 = vrot.slane %v4257, 6
    %v4303 = vrot.slane %v1883, 6
    %v4304 = vsel %vm4281, %v4302, %v4303
    %v4305 = vrot.slane %v4258, 6
    %v4306 = vrot.slane %v1884, 6
    %v4307 = vsel %vm4281, %v4305, %v4306
    %v4308 = vrot.slane %v4259, 6
    %v4309 = vrot.slane %v1885, 6
    %v4310 = vsel %vm4281, %v4308, %v4309
    %v4311 = vrot.slane %v4260, 6
    %v4312 = vrot.slane %v1886, 6
    %v4313 = vsel %vm4281, %v4311, %v4312
    %v4314 = vrot.slane %v4261, 6
    %v4315 = vsel %vm4281, %v4303, %v4314
    %v4316 = vrot.slane %v4262, 6
    %v4317 = vsel %vm4281, %v4306, %v4316
    %v4318 = vrot.slane %v4263, 6
    %v4319 = vsel %vm4281, %v4309, %v4318
    %v4320 = vrot.slane %v4264, 6
    %v4321 = vsel %vm4281, %v4312, %v4320
    %v4338 = vpack.c.bf16 %v4295, %v4284
    %v4339 = vpack.c.bf16 %v4297, %v4287
    %v4340 = vpack.c.bf16 %v4299, %v4290
    %v4341 = vpack.c.bf16 %v4301, %v4293
    %v4342 = vpack.c.bf16 %v4315, %v4304
    %v4343 = vpack.c.bf16 %v4317, %v4307
    %v4344 = vpack.c.bf16 %v4319, %v4310
    %v4345 = vpack.c.bf16 %v4321, %v4313
    %s4346 = scalar_lea.vmem [#allocation9], 2048
    %v4347 = vld [vmem:[%s4346] sm:$0xff]
    %v4348 = vld [vmem:[%s4346 + $0x8] sm:$0xff]
    %v4349 = vld [vmem:[%s4346 + $0x10] sm:$0xff]
    %v4350 = vld [vmem:[%s4346 + $0x18] sm:$0xff]
    %v4351 = vld [vmem:[%s4346 + $0x20] sm:$0xff]
    %v4352 = vld [vmem:[%s4346 + $0x28] sm:$0xff]
    %v4353 = vld [vmem:[%s4346 + $0x30] sm:$0xff]
    %v4354 = vld [vmem:[%s4346 + $0x38] sm:$0xff]
    %v4355 = vld [vmem:[%s4346 + $0x40] sm:$0xff]
    %v4356 = vld [vmem:[%s4346 + $0x48] sm:$0xff]
    %v4357 = vld [vmem:[%s4346 + $0x50] sm:$0xff]
    %v4358 = vld [vmem:[%s4346 + $0x58] sm:$0xff]
    %v4359 = vld [vmem:[%s4346 + $0x60] sm:$0xff]
    %v4360 = vld [vmem:[%s4346 + $0x68] sm:$0xff]
    %v4361 = vld [vmem:[%s4346 + $0x70] sm:$0xff]
    %v4362 = vld [vmem:[%s4346 + $0x78] sm:$0xff]
    %v4363 = vld [vmem:[%s4346 + $0x80] sm:$0xff]
    %v4364 = vld [vmem:[%s4346 + $0x88] sm:$0xff]
    %v4365 = vld [vmem:[%s4346 + $0x90] sm:$0xff]
    %v4366 = vld [vmem:[%s4346 + $0x98] sm:$0xff]
    %v4367 = vld [vmem:[%s4346 + $0xa0] sm:$0xff]
    %v4368 = vld [vmem:[%s4346 + $0xa8] sm:$0xff]
    %v4369 = vld [vmem:[%s4346 + $0xb0] sm:$0xff]
    %v4370 = vld [vmem:[%s4346 + $0xb8] sm:$0xff]
    %v4371 = vld [vmem:[%s4346 + $0xc0] sm:$0xff]
    %v4372 = vld [vmem:[%s4346 + $0xc8] sm:$0xff]
    %v4373 = vld [vmem:[%s4346 + $0xd0] sm:$0xff]
    %v4374 = vld [vmem:[%s4346 + $0xd8] sm:$0xff]
    %v4375 = vld [vmem:[%s4346 + $0xe0] sm:$0xff]
    %v4376 = vld [vmem:[%s4346 + $0xe8] sm:$0xff]
    %v4377 = vld [vmem:[%s4346 + $0xf0] sm:$0xff]
    %v4378 = vld [vmem:[%s4346 + $0xf8] sm:$0xff]
    %v4379 = vld [vmem:[%s4346 + $0x100] sm:$0xff]
    %v4380 = vld [vmem:[%s4346 + $0x108] sm:$0xff]
    %v4381 = vld [vmem:[%s4346 + $0x110] sm:$0xff]
    %v4382 = vld [vmem:[%s4346 + $0x118] sm:$0xff]
    %v4383 = vld [vmem:[%s4346 + $0x120] sm:$0xff]
    %v4384 = vld [vmem:[%s4346 + $0x128] sm:$0xff]
    %v4385 = vld [vmem:[%s4346 + $0x130] sm:$0xff]
    %v4386 = vld [vmem:[%s4346 + $0x138] sm:$0xff]
    %v4387 = vld [vmem:[%s4346 + $0x140] sm:$0xff]
    %v4388 = vld [vmem:[%s4346 + $0x148] sm:$0xff]
    %v4389 = vld [vmem:[%s4346 + $0x150] sm:$0xff]
    %v4390 = vld [vmem:[%s4346 + $0x158] sm:$0xff]
    %v4391 = vld [vmem:[%s4346 + $0x160] sm:$0xff]
    %v4392 = vld [vmem:[%s4346 + $0x168] sm:$0xff]
    %v4393 = vld [vmem:[%s4346 + $0x170] sm:$0xff]
    %v4394 = vld [vmem:[%s4346 + $0x178] sm:$0xff]
    %v4395 = vld [vmem:[%s4346 + $0x180] sm:$0xff]
    %v4396 = vld [vmem:[%s4346 + $0x188] sm:$0xff]
    %v4397 = vld [vmem:[%s4346 + $0x190] sm:$0xff]
    %v4398 = vld [vmem:[%s4346 + $0x198] sm:$0xff]
    %v4399 = vld [vmem:[%s4346 + $0x1a0] sm:$0xff]
    %v4400 = vld [vmem:[%s4346 + $0x1a8] sm:$0xff]
    %v4401 = vld [vmem:[%s4346 + $0x1b0] sm:$0xff]
    %v4402 = vld [vmem:[%s4346 + $0x1b8] sm:$0xff]
    %v4403 = vld [vmem:[%s4346 + $0x1c0] sm:$0xff]
    %v4404 = vld [vmem:[%s4346 + $0x1c8] sm:$0xff]
    %v4405 = vld [vmem:[%s4346 + $0x1d0] sm:$0xff]
    %v4406 = vld [vmem:[%s4346 + $0x1d8] sm:$0xff]
    %v4407 = vld [vmem:[%s4346 + $0x1e0] sm:$0xff]
    %v4408 = vld [vmem:[%s4346 + $0x1e8] sm:$0xff]
    %v4409 = vld [vmem:[%s4346 + $0x1f0] sm:$0xff]
    %v4410 = vld [vmem:[%s4346 + $0x1f8] sm:$0xff]
    %v4475 = vunpack.c.l.b16 %v4347
    %v4476 = vunpack.c.h.b16 %v4347
    %v4477 = vunpack.c.l.b16 %v4348
    %v4478 = vunpack.c.h.b16 %v4348
    %v4479 = vunpack.c.l.b16 %v4349
    %v4480 = vunpack.c.h.b16 %v4349
    %v4481 = vunpack.c.l.b16 %v4350
    %v4482 = vunpack.c.h.b16 %v4350
    %v4483 = vunpack.c.l.b16 %v4351
    %v4484 = vunpack.c.h.b16 %v4351
    %v4485 = vunpack.c.l.b16 %v4352
    %v4486 = vunpack.c.h.b16 %v4352
    %v4487 = vunpack.c.l.b16 %v4353
    %v4488 = vunpack.c.h.b16 %v4353
    %v4489 = vunpack.c.l.b16 %v4354
    %v4490 = vunpack.c.h.b16 %v4354
    %v4491 = vunpack.c.l.b16 %v4355
    %v4492 = vunpack.c.h.b16 %v4355
    %v4493 = vunpack.c.l.b16 %v4356
    %v4494 = vunpack.c.h.b16 %v4356
    %v4495 = vunpack.c.l.b16 %v4357
    %v4496 = vunpack.c.h.b16 %v4357
    %v4497 = vunpack.c.l.b16 %v4358
    %v4498 = vunpack.c.h.b16 %v4358
    %v4499 = vunpack.c.l.b16 %v4359
    %v4500 = vunpack.c.h.b16 %v4359
    %v4501 = vunpack.c.l.b16 %v4360
    %v4502 = vunpack.c.h.b16 %v4360
    %v4503 = vunpack.c.l.b16 %v4361
    %v4504 = vunpack.c.h.b16 %v4361
    %v4505 = vunpack.c.l.b16 %v4362
    %v4506 = vunpack.c.h.b16 %v4362
    %v4507 = vunpack.c.l.b16 %v4363
    %v4508 = vunpack.c.h.b16 %v4363
    %v4509 = vunpack.c.l.b16 %v4364
    %v4510 = vunpack.c.h.b16 %v4364
    %v4511 = vunpack.c.l.b16 %v4365
    %v4512 = vunpack.c.h.b16 %v4365
    %v4513 = vunpack.c.l.b16 %v4366
    %v4514 = vunpack.c.h.b16 %v4366
    %v4515 = vunpack.c.l.b16 %v4367
    %v4516 = vunpack.c.h.b16 %v4367
    %v4517 = vunpack.c.l.b16 %v4368
    %v4518 = vunpack.c.h.b16 %v4368
    %v4519 = vunpack.c.l.b16 %v4369
    %v4520 = vunpack.c.h.b16 %v4369
    %v4521 = vunpack.c.l.b16 %v4370
    %v4522 = vunpack.c.h.b16 %v4370
    %v4523 = vunpack.c.l.b16 %v4371
    %v4524 = vunpack.c.h.b16 %v4371
    %v4525 = vunpack.c.l.b16 %v4372
    %v4526 = vunpack.c.h.b16 %v4372
    %v4527 = vunpack.c.l.b16 %v4373
    %v4528 = vunpack.c.h.b16 %v4373
    %v4529 = vunpack.c.l.b16 %v4374
    %v4530 = vunpack.c.h.b16 %v4374
    %v4531 = vunpack.c.l.b16 %v4375
    %v4532 = vunpack.c.h.b16 %v4375
    %v4533 = vunpack.c.l.b16 %v4376
    %v4534 = vunpack.c.h.b16 %v4376
    %v4535 = vunpack.c.l.b16 %v4377
    %v4536 = vunpack.c.h.b16 %v4377
    %v4537 = vunpack.c.l.b16 %v4378
    %v4538 = vunpack.c.h.b16 %v4378
    %v4539 = vunpack.c.l.b16 %v4379
    %v4540 = vunpack.c.h.b16 %v4379
    %v4541 = vunpack.c.l.b16 %v4380
    %v4542 = vunpack.c.h.b16 %v4380
    %v4543 = vunpack.c.l.b16 %v4381
    %v4544 = vunpack.c.h.b16 %v4381
    %v4545 = vunpack.c.l.b16 %v4382
    %v4546 = vunpack.c.h.b16 %v4382
    %v4547 = vunpack.c.l.b16 %v4383
    %v4548 = vunpack.c.h.b16 %v4383
    %v4549 = vunpack.c.l.b16 %v4384
    %v4550 = vunpack.c.h.b16 %v4384
    %v4551 = vunpack.c.l.b16 %v4385
    %v4552 = vunpack.c.h.b16 %v4385
    %v4553 = vunpack.c.l.b16 %v4386
    %v4554 = vunpack.c.h.b16 %v4386
    %v4555 = vunpack.c.l.b16 %v4387
    %v4556 = vunpack.c.h.b16 %v4387
    %v4557 = vunpack.c.l.b16 %v4388
    %v4558 = vunpack.c.h.b16 %v4388
    %v4559 = vunpack.c.l.b16 %v4389
    %v4560 = vunpack.c.h.b16 %v4389
    %v4561 = vunpack.c.l.b16 %v4390
    %v4562 = vunpack.c.h.b16 %v4390
    %v4563 = vunpack.c.l.b16 %v4391
    %v4564 = vunpack.c.h.b16 %v4391
    %v4565 = vunpack.c.l.b16 %v4392
    %v4566 = vunpack.c.h.b16 %v4392
    %v4567 = vunpack.c.l.b16 %v4393
    %v4568 = vunpack.c.h.b16 %v4393
    %v4569 = vunpack.c.l.b16 %v4394
    %v4570 = vunpack.c.h.b16 %v4394
    %v4571 = vunpack.c.l.b16 %v4395
    %v4572 = vunpack.c.h.b16 %v4395
    %v4573 = vunpack.c.l.b16 %v4396
    %v4574 = vunpack.c.h.b16 %v4396
    %v4575 = vunpack.c.l.b16 %v4397
    %v4576 = vunpack.c.h.b16 %v4397
    %v4577 = vunpack.c.l.b16 %v4398
    %v4578 = vunpack.c.h.b16 %v4398
    %v4579 = vunpack.c.l.b16 %v4399
    %v4580 = vunpack.c.h.b16 %v4399
    %v4581 = vunpack.c.l.b16 %v4400
    %v4582 = vunpack.c.h.b16 %v4400
    %v4583 = vunpack.c.l.b16 %v4401
    %v4584 = vunpack.c.h.b16 %v4401
    %v4585 = vunpack.c.l.b16 %v4402
    %v4586 = vunpack.c.h.b16 %v4402
    %v4587 = vunpack.c.l.b16 %v4403
    %v4588 = vunpack.c.h.b16 %v4403
    %v4589 = vunpack.c.l.b16 %v4404
    %v4590 = vunpack.c.h.b16 %v4404
    %v4591 = vunpack.c.l.b16 %v4405
    %v4592 = vunpack.c.h.b16 %v4405
    %v4593 = vunpack.c.l.b16 %v4406
    %v4594 = vunpack.c.h.b16 %v4406
    %v4595 = vunpack.c.l.b16 %v4407
    %v4596 = vunpack.c.h.b16 %v4407
    %v4597 = vunpack.c.l.b16 %v4408
    %v4598 = vunpack.c.h.b16 %v4408
    %v4599 = vunpack.c.l.b16 %v4409
    %v4600 = vunpack.c.h.b16 %v4409
    %v4601 = vunpack.c.l.b16 %v4410
    %v4602 = vunpack.c.h.b16 %v4410
    %v4603 = vpack.c.b16 %v4477, %v4475
    %v4604 = vpack.c.b16 %v4478, %v4476
    %v4605 = vpack.c.b16 %v4481, %v4479
    %v4606 = vpack.c.b16 %v4482, %v4480
    %v4607 = vpack.c.b16 %v4485, %v4483
    %v4608 = vpack.c.b16 %v4486, %v4484
    %v4609 = vpack.c.b16 %v4489, %v4487
    %v4610 = vpack.c.b16 %v4490, %v4488
    %v4611 = vpack.c.b16 %v4493, %v4491
    %v4612 = vpack.c.b16 %v4494, %v4492
    %v4613 = vpack.c.b16 %v4497, %v4495
    %v4614 = vpack.c.b16 %v4498, %v4496
    %v4615 = vpack.c.b16 %v4501, %v4499
    %v4616 = vpack.c.b16 %v4502, %v4500
    %v4617 = vpack.c.b16 %v4505, %v4503
    %v4618 = vpack.c.b16 %v4506, %v4504
    %v4619 = vpack.c.b16 %v4509, %v4507
    %v4620 = vpack.c.b16 %v4510, %v4508
    %v4621 = vpack.c.b16 %v4513, %v4511
    %v4622 = vpack.c.b16 %v4514, %v4512
    %v4623 = vpack.c.b16 %v4517, %v4515
    %v4624 = vpack.c.b16 %v4518, %v4516
    %v4625 = vpack.c.b16 %v4521, %v4519
    %v4626 = vpack.c.b16 %v4522, %v4520
    %v4627 = vpack.c.b16 %v4525, %v4523
    %v4628 = vpack.c.b16 %v4526, %v4524
    %v4629 = vpack.c.b16 %v4529, %v4527
    %v4630 = vpack.c.b16 %v4530, %v4528
    %v4631 = vpack.c.b16 %v4533, %v4531
    %v4632 = vpack.c.b16 %v4534, %v4532
    %v4633 = vpack.c.b16 %v4537, %v4535
    %v4634 = vpack.c.b16 %v4538, %v4536
    %v4635 = vpack.c.b16 %v4541, %v4539
    %v4636 = vpack.c.b16 %v4542, %v4540
    %v4637 = vpack.c.b16 %v4545, %v4543
    %v4638 = vpack.c.b16 %v4546, %v4544
    %v4639 = vpack.c.b16 %v4549, %v4547
    %v4640 = vpack.c.b16 %v4550, %v4548
    %v4641 = vpack.c.b16 %v4553, %v4551
    %v4642 = vpack.c.b16 %v4554, %v4552
    %v4643 = vpack.c.b16 %v4557, %v4555
    %v4644 = vpack.c.b16 %v4558, %v4556
    %v4645 = vpack.c.b16 %v4561, %v4559
    %v4646 = vpack.c.b16 %v4562, %v4560
    %v4647 = vpack.c.b16 %v4565, %v4563
    %v4648 = vpack.c.b16 %v4566, %v4564
    %v4649 = vpack.c.b16 %v4569, %v4567
    %v4650 = vpack.c.b16 %v4570, %v4568
    %v4651 = vpack.c.b16 %v4573, %v4571
    %v4652 = vpack.c.b16 %v4574, %v4572
    %v4653 = vpack.c.b16 %v4577, %v4575
    %v4654 = vpack.c.b16 %v4578, %v4576
    %v4655 = vpack.c.b16 %v4581, %v4579
    %v4656 = vpack.c.b16 %v4582, %v4580
    %v4657 = vpack.c.b16 %v4585, %v4583
    %v4658 = vpack.c.b16 %v4586, %v4584
    %v4659 = vpack.c.b16 %v4589, %v4587
    %v4660 = vpack.c.b16 %v4590, %v4588
    %v4661 = vpack.c.b16 %v4593, %v4591
    %v4662 = vpack.c.b16 %v4594, %v4592
    %v4663 = vpack.c.b16 %v4597, %v4595
    %v4664 = vpack.c.b16 %v4598, %v4596
    %v4665 = vpack.c.b16 %v4601, %v4599
    %v4666 = vpack.c.b16 %v4602, %v4600
    %4731 = vmatprep.subr.bf16.mxu0 %v4618
    %4732 = vmatpush1.bf16.msra.mxu0 %v4617
    %4733 = vmatprep.subr.bf16.mxu0 %v4616
    %4734 = vmatpush1.bf16.msra.mxu0 %v4615
    %4735 = vmatprep.subr.bf16.mxu0 %v4614
    %4736 = vmatpush1.bf16.msra.mxu0 %v4613
    %4737 = vmatprep.subr.bf16.mxu0 %v4612
    %4738 = vmatpush1.bf16.msra.mxu0 %v4611
    %4739 = vmatprep.subr.bf16.mxu0 %v4610
    %4740 = vmatpush1.bf16.msra.mxu0 %v4609
    %4741 = vmatprep.subr.bf16.mxu0 %v4608
    %4742 = vmatpush1.bf16.msra.mxu0 %v4607
    %4743 = vmatprep.subr.bf16.mxu0 %v4606
    %4744 = vmatpush1.bf16.msra.mxu0 %v4605
    %4745 = vmatprep.subr.bf16.mxu0 %v4604
    %4746 = vmatpush1.bf16.msra.mxu0 %v4603
    %4747 = vmatprep.subr.bf16.mxu0 %v4634
    %4748 = vmatpush2.bf16.msra.mxu0 %v4633
    %4749 = vmatprep.subr.bf16.mxu0 %v4632
    %4750 = vmatpush2.bf16.msra.mxu0 %v4631
    %4751 = vmatprep.subr.bf16.mxu0 %v4630
    %4752 = vmatpush2.bf16.msra.mxu0 %v4629
    %4753 = vmatprep.subr.bf16.mxu0 %v4628
    %4754 = vmatpush2.bf16.msra.mxu0 %v4627
    %4755 = vmatprep.subr.bf16.mxu0 %v4626
    %4756 = vmatpush2.bf16.msra.mxu0 %v4625
    %4757 = vmatprep.subr.bf16.mxu0 %v4624
    %4758 = vmatpush2.bf16.msra.mxu0 %v4623
    %4759 = vmatprep.subr.bf16.mxu0 %v4622
    %4760 = vmatpush2.bf16.msra.mxu0 %v4621
    %4761 = vmatprep.subr.bf16.mxu0 %v4620
    %4762 = vmatpush2.bf16.msra.mxu0 %v4619
    %4763 = vmatprep.mubr.bf16.mxu0 %v4339
    %4764 = vmatmul.mubr.bf16.gmra.mxu0 %v4338
    %v4765 = vpop.f32.mrf.mxu0
    %v4766 = vadd.f32 0.0, %v4765
    %v4767 = vpop.f32.mrf.mxu0
    %v4768 = vadd.f32 0.0, %v4767
    %v4769 = vpop.f32.mrf.mxu0
    %v4770 = vadd.f32 0.0, %v4769
    %v4771 = vpop.f32.mrf.mxu0
    %v4772 = vadd.f32 0.0, %v4771
    %4773 = vmatprep.mubr.bf16.mxu0 %v4343
    %4774 = vmatmul.mubr.bf16.gmra.mxu0 %v4342
    %v4775 = vpop.f32.mrf.mxu0
    %v4776 = vadd.f32 0.0, %v4775
    %v4777 = vpop.f32.mrf.mxu0
    %v4778 = vadd.f32 0.0, %v4777
    %v4779 = vpop.f32.mrf.mxu0
    %v4780 = vadd.f32 0.0, %v4779
    %v4781 = vpop.f32.mrf.mxu0
    %v4782 = vadd.f32 0.0, %v4781
    %4783 = vdwg.mxu0
    %4784 = vmatprep.subr.bf16.mxu0 %v4650
    %4785 = vmatpush1.bf16.msra.mxu0 %v4649
    %4786 = vmatprep.subr.bf16.mxu0 %v4648
    %4787 = vmatpush1.bf16.msra.mxu0 %v4647
    %4788 = vmatprep.subr.bf16.mxu0 %v4646
    %4789 = vmatpush1.bf16.msra.mxu0 %v4645
    %4790 = vmatprep.subr.bf16.mxu0 %v4644
    %4791 = vmatpush1.bf16.msra.mxu0 %v4643
    %4792 = vmatprep.subr.bf16.mxu0 %v4642
    %4793 = vmatpush1.bf16.msra.mxu0 %v4641
    %4794 = vmatprep.subr.bf16.mxu0 %v4640
    %4795 = vmatpush1.bf16.msra.mxu0 %v4639
    %4796 = vmatprep.subr.bf16.mxu0 %v4638
    %4797 = vmatpush1.bf16.msra.mxu0 %v4637
    %4798 = vmatprep.subr.bf16.mxu0 %v4636
    %4799 = vmatpush1.bf16.msra.mxu0 %v4635
    %4800 = vmatprep.subr.bf16.mxu0 %v4666
    %4801 = vmatpush2.bf16.msra.mxu0 %v4665
    %4802 = vmatprep.subr.bf16.mxu0 %v4664
    %4803 = vmatpush2.bf16.msra.mxu0 %v4663
    %4804 = vmatprep.subr.bf16.mxu0 %v4662
    %4805 = vmatpush2.bf16.msra.mxu0 %v4661
    %4806 = vmatprep.subr.bf16.mxu0 %v4660
    %4807 = vmatpush2.bf16.msra.mxu0 %v4659
    %4808 = vmatprep.subr.bf16.mxu0 %v4658
    %4809 = vmatpush2.bf16.msra.mxu0 %v4657
    %4810 = vmatprep.subr.bf16.mxu0 %v4656
    %4811 = vmatpush2.bf16.msra.mxu0 %v4655
    %4812 = vmatprep.subr.bf16.mxu0 %v4654
    %4813 = vmatpush2.bf16.msra.mxu0 %v4653
    %4814 = vmatprep.subr.bf16.mxu0 %v4652
    %4815 = vmatpush2.bf16.msra.mxu0 %v4651
    %4816 = vmatprep.mubr.bf16.mxu0 %v4341
    %4817 = vmatmul.mubr.bf16.gmra.mxu0 %v4340
    %v4818 = vpop.f32.mrf.mxu0
    %v4819 = vadd.f32 %v4766, %v4818
    %v4820 = vpop.f32.mrf.mxu0
    %v4821 = vadd.f32 %v4768, %v4820
    %v4822 = vpop.f32.mrf.mxu0
    %v4823 = vadd.f32 %v4770, %v4822
    %v4824 = vpop.f32.mrf.mxu0
    %v4825 = vadd.f32 %v4772, %v4824
    %4826 = vmatprep.mubr.bf16.mxu0 %v4345
    %4827 = vmatmul.mubr.bf16.gmra.mxu0 %v4344
    %v4828 = vpop.f32.mrf.mxu0
    %v4829 = vadd.f32 %v4776, %v4828
    %v4830 = vpop.f32.mrf.mxu0
    %v4831 = vadd.f32 %v4778, %v4830
    %v4832 = vpop.f32.mrf.mxu0
    %v4833 = vadd.f32 %v4780, %v4832
    %v4834 = vpop.f32.mrf.mxu0
    %v4835 = vadd.f32 %v4782, %v4834
    %4836 = vdwg.mxu0
    %v4837 = vadd.f32 %v4241, %v4819
    %v4838 = vadd.f32 %v4242, %v4821
    %v4839 = vadd.f32 %v4243, %v4823
    %v4840 = vadd.f32 %v4244, %v4825
    %v4841 = vadd.f32 %v4245, %v4829
    %v4842 = vadd.f32 %v4246, %v4831
    %v4843 = vadd.f32 %v4247, %v4833
    %v4844 = vadd.f32 %v4248, %v4835
    %v4845 = vld [vmem:[%s9] sm:$0xff]
    %v4846 = vld [vmem:[%s9 + $0x8] sm:$0xff]
    %v4847 = vld [vmem:[%s9 + $0x10] sm:$0xff]
    %v4848 = vld [vmem:[%s9 + $0x18] sm:$0xff]
    %v4849 = vld [vmem:[%s9 + $0x20] sm:$0xff]
    %v4850 = vld [vmem:[%s9 + $0x28] sm:$0xff]
    %v4851 = vld [vmem:[%s9 + $0x30] sm:$0xff]
    %v4852 = vld [vmem:[%s9 + $0x38] sm:$0xff]
    %v4853 = vld [vmem:[%s9 + $0x40] sm:$0xff]
    %v4854 = vld [vmem:[%s9 + $0x48] sm:$0xff]
    %v4855 = vld [vmem:[%s9 + $0x50] sm:$0xff]
    %v4856 = vld [vmem:[%s9 + $0x58] sm:$0xff]
    %v4857 = vld [vmem:[%s9 + $0x60] sm:$0xff]
    %v4858 = vld [vmem:[%s9 + $0x68] sm:$0xff]
    %v4859 = vld [vmem:[%s9 + $0x70] sm:$0xff]
    %v4860 = vld [vmem:[%s9 + $0x78] sm:$0xff]
    %v4861 = vld [vmem:[%s9 + $0x80] sm:$0xff]
    %v4862 = vld [vmem:[%s9 + $0x88] sm:$0xff]
    %v4863 = vld [vmem:[%s9 + $0x90] sm:$0xff]
    %v4864 = vld [vmem:[%s9 + $0x98] sm:$0xff]
    %v4865 = vld [vmem:[%s9 + $0xa0] sm:$0xff]
    %v4866 = vld [vmem:[%s9 + $0xa8] sm:$0xff]
    %v4867 = vld [vmem:[%s9 + $0xb0] sm:$0xff]
    %v4868 = vld [vmem:[%s9 + $0xb8] sm:$0xff]
    %v4869 = vld [vmem:[%s9 + $0xc0] sm:$0xff]
    %v4870 = vld [vmem:[%s9 + $0xc8] sm:$0xff]
    %v4871 = vld [vmem:[%s9 + $0xd0] sm:$0xff]
    %v4872 = vld [vmem:[%s9 + $0xd8] sm:$0xff]
    %v4873 = vld [vmem:[%s9 + $0xe0] sm:$0xff]
    %v4874 = vld [vmem:[%s9 + $0xe8] sm:$0xff]
    %v4875 = vld [vmem:[%s9 + $0xf0] sm:$0xff]
    %v4876 = vld [vmem:[%s9 + $0xf8] sm:$0xff]
    %4877 = vmatprep.subr.mxu0 0.0
    %4878 = vmatpush1.msra.mxu0 %v4860
    %4879 = vmatprep.subr.mxu0 0.0
    %4880 = vmatpush1.msra.mxu0 %v4859
    %4881 = vmatprep.subr.mxu0 0.0
    %4882 = vmatpush1.msra.mxu0 %v4858
    %4883 = vmatprep.subr.mxu0 0.0
    %4884 = vmatpush1.msra.mxu0 %v4857
    %4885 = vmatprep.subr.mxu0 0.0
    %4886 = vmatpush1.msra.mxu0 %v4856
    %4887 = vmatprep.subr.mxu0 0.0
    %4888 = vmatpush1.msra.mxu0 %v4855
    %4889 = vmatprep.subr.mxu0 0.0
    %4890 = vmatpush1.msra.mxu0 %v4854
    %4891 = vmatprep.subr.mxu0 0.0
    %4892 = vmatpush1.msra.mxu0 %v4853
    %4893 = vmatprep.subr.mxu0 0.0
    %4894 = vmatpush1.msra.mxu0 %v4852
    %4895 = vmatprep.subr.mxu0 0.0
    %4896 = vmatpush1.msra.mxu0 %v4851
    %4897 = vmatprep.subr.mxu0 0.0
    %4898 = vmatpush1.msra.mxu0 %v4850
    %4899 = vmatprep.subr.mxu0 0.0
    %4900 = vmatpush1.msra.mxu0 %v4849
    %4901 = vmatprep.subr.mxu0 0.0
    %4902 = vmatpush1.msra.mxu0 %v4848
    %4903 = vmatprep.subr.mxu0 0.0
    %4904 = vmatpush1.msra.mxu0 %v4847
    %4905 = vmatprep.subr.mxu0 0.0
    %4906 = vmatpush1.msra.mxu0 %v4846
    %4907 = vmatprep.subr.mxu0 0.0
    %4908 = vmatpush1.msra.mxu0 %v4845
    %4909 = vmatprep.subr.mxu0 0.0
    %4910 = vmatpush2.msra.mxu0 %v4876
    %4911 = vmatprep.subr.mxu0 0.0
    %4912 = vmatpush2.msra.mxu0 %v4875
    %4913 = vmatprep.subr.mxu0 0.0
    %4914 = vmatpush2.msra.mxu0 %v4874
    %4915 = vmatprep.subr.mxu0 0.0
    %4916 = vmatpush2.msra.mxu0 %v4873
    %4917 = vmatprep.subr.mxu0 0.0
    %4918 = vmatpush2.msra.mxu0 %v4872
    %4919 = vmatprep.subr.mxu0 0.0
    %4920 = vmatpush2.msra.mxu0 %v4871
    %4921 = vmatprep.subr.mxu0 0.0
    %4922 = vmatpush2.msra.mxu0 %v4870
    %4923 = vmatprep.subr.mxu0 0.0
    %4924 = vmatpush2.msra.mxu0 %v4869
    %4925 = vmatprep.subr.mxu0 0.0
    %4926 = vmatpush2.msra.mxu0 %v4868
    %4927 = vmatprep.subr.mxu0 0.0
    %4928 = vmatpush2.msra.mxu0 %v4867
    %4929 = vmatprep.subr.mxu0 0.0
    %4930 = vmatpush2.msra.mxu0 %v4866
    %4931 = vmatprep.subr.mxu0 0.0
    %4932 = vmatpush2.msra.mxu0 %v4865
    %4933 = vmatprep.subr.mxu0 0.0
    %4934 = vmatpush2.msra.mxu0 %v4864
    %4935 = vmatprep.subr.mxu0 0.0
    %4936 = vmatpush2.msra.mxu0 %v4863
    %4937 = vmatprep.subr.mxu0 0.0
    %4938 = vmatpush2.msra.mxu0 %v4862
    %4939 = vmatprep.subr.mxu0 0.0
    %4940 = vmatpush2.msra.mxu0 %v4861
    %4941 = vmatprep.mubr.f32.mxu0 %v4838
    %4942 = vmatmul.mubr.f32.gmra.mxu0 %v4837
    %v4943 = vpop.f32.mrf.mxu0
    %v4944 = vadd.f32 0.0, %v4943
    %v4945 = vpop.f32.mrf.mxu0
    %4946 = vmatprep.mubr.f32.mxu0 %v4840
    %4947 = vmatmul.mubr.f32.gmra.mxu0 %v4839
    %v4948 = vpop.f32.mrf.mxu0
    %v4949 = vadd.f32 0.0, %v4948
    %v4950 = vpop.f32.mrf.mxu0
    %4951 = vmatprep.mubr.f32.mxu0 %v4842
    %4952 = vmatmul.mubr.f32.gmra.mxu0 %v4841
    %v4953 = vpop.f32.mrf.mxu0
    %v4954 = vadd.f32 0.0, %v4953
    %v4955 = vpop.f32.mrf.mxu0
    %4956 = vmatprep.mubr.f32.mxu0 %v4844
    %4957 = vmatmul.mubr.f32.gmra.mxu0 %v4843
    %v4958 = vpop.f32.mrf.mxu0
    %v4959 = vadd.f32 0.0, %v4958
    %v4960 = vpop.f32.mrf.mxu0
    %4961 = vdwg.mxu0
    %v4962 = vmul.f32 %v4837, %v4837
    %v4963 = vmul.f32 %v4838, %v4838
    %v4964 = vmul.f32 %v4839, %v4839
    %v4965 = vmul.f32 %v4840, %v4840
    %v4966 = vmul.f32 %v4841, %v4841
    %v4967 = vmul.f32 %v4842, %v4842
    %v4968 = vmul.f32 %v4843, %v4843
    %v4969 = vmul.f32 %v4844, %v4844
    %4970 = vmatprep.subr.mxu0 0.0
    %4971 = vmatpush1.msra.mxu0 %v4860
    %4972 = vmatprep.subr.mxu0 0.0
    %4973 = vmatpush1.msra.mxu0 %v4859
    %4974 = vmatprep.subr.mxu0 0.0
    %4975 = vmatpush1.msra.mxu0 %v4858
    %4976 = vmatprep.subr.mxu0 0.0
    %4977 = vmatpush1.msra.mxu0 %v4857
    %4978 = vmatprep.subr.mxu0 0.0
    %4979 = vmatpush1.msra.mxu0 %v4856
    %4980 = vmatprep.subr.mxu0 0.0
    %4981 = vmatpush1.msra.mxu0 %v4855
    %4982 = vmatprep.subr.mxu0 0.0
    %4983 = vmatpush1.msra.mxu0 %v4854
    %4984 = vmatprep.subr.mxu0 0.0
    %4985 = vmatpush1.msra.mxu0 %v4853
    %4986 = vmatprep.subr.mxu0 0.0
    %4987 = vmatpush1.msra.mxu0 %v4852
    %4988 = vmatprep.subr.mxu0 0.0
    %4989 = vmatpush1.msra.mxu0 %v4851
    %4990 = vmatprep.subr.mxu0 0.0
    %4991 = vmatpush1.msra.mxu0 %v4850
    %4992 = vmatprep.subr.mxu0 0.0
    %4993 = vmatpush1.msra.mxu0 %v4849
    %4994 = vmatprep.subr.mxu0 0.0
    %4995 = vmatpush1.msra.mxu0 %v4848
    %4996 = vmatprep.subr.mxu0 0.0
    %4997 = vmatpush1.msra.mxu0 %v4847
    %4998 = vmatprep.subr.mxu0 0.0
    %4999 = vmatpush1.msra.mxu0 %v4846
    %5000 = vmatprep.subr.mxu0 0.0
    %5001 = vmatpush1.msra.mxu0 %v4845
    %5002 = vmatprep.subr.mxu0 0.0
    %5003 = vmatpush2.msra.mxu0 %v4876
    %5004 = vmatprep.subr.mxu0 0.0
    %5005 = vmatpush2.msra.mxu0 %v4875
    %5006 = vmatprep.subr.mxu0 0.0
    %5007 = vmatpush2.msra.mxu0 %v4874
    %5008 = vmatprep.subr.mxu0 0.0
    %5009 = vmatpush2.msra.mxu0 %v4873
    %5010 = vmatprep.subr.mxu0 0.0
    %5011 = vmatpush2.msra.mxu0 %v4872
    %5012 = vmatprep.subr.mxu0 0.0
    %5013 = vmatpush2.msra.mxu0 %v4871
    %5014 = vmatprep.subr.mxu0 0.0
    %5015 = vmatpush2.msra.mxu0 %v4870
    %5016 = vmatprep.subr.mxu0 0.0
    %5017 = vmatpush2.msra.mxu0 %v4869
    %5018 = vmatprep.subr.mxu0 0.0
    %5019 = vmatpush2.msra.mxu0 %v4868
    %5020 = vmatprep.subr.mxu0 0.0
    %5021 = vmatpush2.msra.mxu0 %v4867
    %5022 = vmatprep.subr.mxu0 0.0
    %5023 = vmatpush2.msra.mxu0 %v4866
    %5024 = vmatprep.subr.mxu0 0.0
    %5025 = vmatpush2.msra.mxu0 %v4865
    %5026 = vmatprep.subr.mxu0 0.0
    %5027 = vmatpush2.msra.mxu0 %v4864
    %5028 = vmatprep.subr.mxu0 0.0
    %5029 = vmatpush2.msra.mxu0 %v4863
    %5030 = vmatprep.subr.mxu0 0.0
    %5031 = vmatpush2.msra.mxu0 %v4862
    %5032 = vmatprep.subr.mxu0 0.0
    %5033 = vmatpush2.msra.mxu0 %v4861
    %5034 = vmatprep.mubr.f32.mxu0 %v4963
    %5035 = vmatmul.mubr.f32.gmra.mxu0 %v4962
    %v5036 = vpop.f32.mrf.mxu0
    %v5037 = vadd.f32 0.0, %v5036
    %v5038 = vpop.f32.mrf.mxu0
    %5039 = vmatprep.mubr.f32.mxu0 %v4965
    %5040 = vmatmul.mubr.f32.gmra.mxu0 %v4964
    %v5041 = vpop.f32.mrf.mxu0
    %v5042 = vadd.f32 0.0, %v5041
    %v5043 = vpop.f32.mrf.mxu0
    %5044 = vmatprep.mubr.f32.mxu0 %v4967
    %5045 = vmatmul.mubr.f32.gmra.mxu0 %v4966
    %v5046 = vpop.f32.mrf.mxu0
    %v5047 = vadd.f32 0.0, %v5046
    %v5048 = vpop.f32.mrf.mxu0
    %5049 = vmatprep.mubr.f32.mxu0 %v4969
    %5050 = vmatmul.mubr.f32.gmra.mxu0 %v4968
    %v5051 = vpop.f32.mrf.mxu0
    %v5052 = vadd.f32 0.0, %v5051
    %v5053 = vpop.f32.mrf.mxu0
    %5054 = vdwg.mxu0
    %vm5055 = vcmask 130048
    %v5056 = vsel %vm5055, %v4944, 0.0
    %v5057 = vsel %vm5055, %v4949, 0.0
    %v5058 = vadd.f32 %v5056, %v5057
    %v5059 = vsel %vm5055, %v4954, 0.0
    %v5060 = vadd.f32 %v5058, %v5059
    %v5061 = vsel %vm5055, %v4959, 0.0
    %v5062 = vadd.f32 %v5060, %v5061
    %v5063 = vrot.slane %v5062, 4
    %v5064 = vadd.f32 %v5062, %v5063
    %v5065 = vrot.slane %v5064, 2
    %v5066 = vadd.f32 %v5064, %v5065
    %v5067 = vrot.slane %v5066, 1
    %v5068 = vadd.f32 %v5066, %v5067
    %v5069 = vmul.f32 %v5068, 0.001953125
    %v5070 = vsel %vm5055, %v5037, 0.0
    %v5071 = vsel %vm5055, %v5042, 0.0
    %v5072 = vadd.f32 %v5070, %v5071
    %v5073 = vsel %vm5055, %v5047, 0.0
    %v5074 = vadd.f32 %v5072, %v5073
    %v5075 = vsel %vm5055, %v5052, 0.0
    %v5076 = vadd.f32 %v5074, %v5075
    %v5077 = vrot.slane %v5076, 4
    %v5078 = vadd.f32 %v5076, %v5077
    %v5079 = vrot.slane %v5078, 2
    %v5080 = vadd.f32 %v5078, %v5079
    %v5081 = vrot.slane %v5080, 1
    %v5082 = vadd.f32 %v5080, %v5081
    %v5083 = vmul.f32 %v5082, 0.001953125
    %v5084 = vmul.f32 %v5069, %v5069
    %v5085 = vsub.f32 %v5083, %v5084
    %v5086 = vmax.f32 %v5085, 0.0
    %v5087 = vadd.f32 %v5086, 1.001e-05
    %v5088 = vrsqrt.pop %v5087
    %v5089 = vld [vmem:[#allocation12] sm:$0x1]
    %v5090 = vmul.f32 %v5089, %v5088
    %v5091 = vld [vmem:[#allocation13] sm:$0x1]
    %v5092 = vmul.f32 %v5069, %v5090
    %v5093 = vsub.f32 %v5091, %v5092
    %v5095 = vlaneseq
    %v5096 = vshrl.u32 %v5095, 7
    %v5097 = vsub.s32 0, %v5096
    %v5098 = vrot.slane %v5090, %v5097
    %5099 = vrot.lane.b32.xlu0 %v5098, 16
    %v5100 = vpop.permute.xlu0 %5099
    %5102 = vrot.lane.b32.xlu0 %v5098, 32
    %v5103 = vpop.permute.xlu0 %5102
    %5105 = vrot.lane.b32.xlu0 %v5098, 48
    %v5106 = vpop.permute.xlu0 %5105
    %5108 = vrot.lane.b32.xlu0 %v5098, 64
    %v5109 = vpop.permute.xlu0 %5108
    %5111 = vrot.lane.b32.xlu0 %v5098, 80
    %v5112 = vpop.permute.xlu0 %5111
    %5114 = vrot.lane.b32.xlu0 %v5098, 96
    %v5115 = vpop.permute.xlu0 %5114
    %5117 = vrot.lane.b32.xlu0 %v5098, 112
    %v5118 = vpop.permute.xlu0 %5117
    %v5120 = vsel %vm5055, %v5090, %v5100
    %v5121 = vsel %vm1631, %v5120, %v5103
    %vm5122 = vcmask 392192
    %v5123 = vsel %vm5122, %v5121, %v5106
    %v5124 = vsel %vm1685, %v5123, %v5109
    %vm5125 = vcmask 654336
    %v5126 = vsel %vm5125, %v5124, %v5112
    %v5127 = vsel %vm1687, %v5126, %v5115
    %vm5128 = vcmask 916480
    %v5129 = vsel %vm5128, %v5127, %v5118
    %v5131 = vlaneseq
    %v5132 = vshrl.u32 %v5131, 7
    %v5133 = vsub.s32 0, %v5132
    %v5134 = vrot.slane %v5093, %v5133
    %5135 = vrot.lane.b32.xlu0 %v5134, 16
    %v5136 = vpop.permute.xlu0 %5135
    %5138 = vrot.lane.b32.xlu0 %v5134, 32
    %v5139 = vpop.permute.xlu0 %5138
    %5141 = vrot.lane.b32.xlu0 %v5134, 48
    %v5142 = vpop.permute.xlu0 %5141
    %5144 = vrot.lane.b32.xlu0 %v5134, 64
    %v5145 = vpop.permute.xlu0 %5144
    %5147 = vrot.lane.b32.xlu0 %v5134, 80
    %v5148 = vpop.permute.xlu0 %5147
    %5150 = vrot.lane.b32.xlu0 %v5134, 96
    %v5151 = vpop.permute.xlu0 %5150
    %5153 = vrot.lane.b32.xlu0 %v5134, 112
    %v5154 = vpop.permute.xlu0 %5153
    %v5156 = vsel %vm5055, %v5093, %v5136
    %v5157 = vsel %vm1631, %v5156, %v5139
    %v5158 = vsel %vm5122, %v5157, %v5142
    %v5159 = vsel %vm1685, %v5158, %v5145
    %v5160 = vsel %vm5125, %v5159, %v5148
    %v5161 = vsel %vm1687, %v5160, %v5151
    %v5162 = vsel %vm5128, %v5161, %v5154
    %v5163 = vlaneseq
    %v5164 = vshrl.u32 %v5163, 7
    %v5165 = vsub.s32 0, %v5164
    %v5166 = vrot.slane %v5129, %v5165
    %v5167 = vmul.f32 %v4837, %v5166
    %v5168 = vmul.f32 %v4838, %v5166
    %v5169 = vmul.f32 %v4839, %v5166
    %v5170 = vmul.f32 %v4840, %v5166
    %v5171 = vmul.f32 %v4841, %v5166
    %v5172 = vmul.f32 %v4842, %v5166
    %v5173 = vmul.f32 %v4843, %v5166
    %v5174 = vmul.f32 %v4844, %v5166
    %v5175 = vlaneseq
    %v5176 = vshrl.u32 %v5175, 7
    %v5177 = vsub.s32 0, %v5176
    %v5178 = vrot.slane %v5162, %v5177
    %v5179 = vadd.f32 %v5167, %v5178
    %v5180 = vadd.f32 %v5168, %v5178
    %v5181 = vadd.f32 %v5169, %v5178
    %v5182 = vadd.f32 %v5170, %v5178
    %v5183 = vadd.f32 %v5171, %v5178
    %v5184 = vadd.f32 %v5172, %v5178
    %v5185 = vadd.f32 %v5173, %v5178
    %v5186 = vadd.f32 %v5174, %v5178
    %v5187 = vmax.f32 %v5179, 0.0
    %v5188 = vmax.f32 %v5180, 0.0
    %v5189 = vmax.f32 %v5181, 0.0
    %v5190 = vmax.f32 %v5182, 0.0
    %v5191 = vmax.f32 %v5183, 0.0
    %v5192 = vmax.f32 %v5184, 0.0
    %v5193 = vmax.f32 %v5185, 0.0
    %v5194 = vmax.f32 %v5186, 0.0
    %v5195 = vlaneseq
    %vm5196 = vcmp.ge.s32.totalorder %v5195, 0
    %vm5197 = vcmp.lt.s32.totalorder %v5195, 256
    %vm5198 = vmand %vm5196, %vm5197
    %5199 = vst.msk [vmem:[#allocation3] ss:$8 sm:$0x3] %vm5198, 0.0
    %5200 = vst.msk [vmem:[#allocation3] ss:$8 sm:$0x0] %vm5198, 0.0
    %s5201 = scalar_lea.vmem [#allocation3], 48
    %5202 = vst.msk [vmem:[%s5201] ss:$8 sm:$0x3] %vm5198, 0.0
    %5203 = vst.msk [vmem:[%s5201] ss:$8 sm:$0x0] %vm5198, 0.0
    %s5204 = scalar_lea.vmem [#allocation3], 33
    %5205 = vst.msk [vmem:[%s5204] ss:$8 sm:$0x3] %vm5198, 0.0
    %5206 = vst.msk [vmem:[%s5204] ss:$8 sm:$0x0] %vm5198, 0.0
    %s5207 = scalar_lea.vmem [#allocation3], 81
    %5208 = vst.msk [vmem:[%s5207] ss:$8 sm:$0x3] %vm5198, 0.0
    %5209 = vst.msk [vmem:[%s5207] ss:$8 sm:$0x0] %vm5198, 0.0
    %vm5218 = vcmask 1040384
    %v5219 = vrot.slane %v5187, 7
    %v5220 = vrot.slane %v5188, 7
    %v5221 = vrot.slane %v5189, 7
    %v5222 = vsel %vm5218, %v5219, %v5221
    %v5223 = vrot.slane %v5190, 7
    %v5224 = vsel %vm5218, %v5220, %v5223
    %v5225 = vrot.slane %v5191, 7
    %v5226 = vrot.slane %v5192, 7
    %v5227 = vrot.slane %v5193, 7
    %v5228 = vsel %vm5218, %v5225, %v5227
    %v5229 = vrot.slane %v5194, 7
    %v5230 = vsel %vm5218, %v5226, %v5229
    %5243 = vst [vmem:[#allocation3] sm:$0xfe] %v5219
    %5244 = vst [vmem:[#allocation3 + $0x8] sm:$0xfe] %v5220
    %5245 = vst [vmem:[#allocation3 + $0x10] sm:$0xff] %v5222
    %5246 = vst [vmem:[#allocation3 + $0x18] sm:$0xff] %v5224
    %5247 = vst [vmem:[#allocation3 + $0x20] sm:$0x1] %v5221
    %5248 = vst [vmem:[#allocation3 + $0x28] sm:$0x1] %v5223
    %5249 = vst [vmem:[#allocation3 + $0x30] sm:$0xfe] %v5225
    %5250 = vst [vmem:[#allocation3 + $0x38] sm:$0xfe] %v5226
    %5251 = vst [vmem:[#allocation3 + $0x40] sm:$0xff] %v5228
    %5252 = vst [vmem:[#allocation3 + $0x48] sm:$0xff] %v5230
    %5253 = vst [vmem:[#allocation3 + $0x50] sm:$0x1] %v5227
    %5254 = vst [vmem:[#allocation3 + $0x58] sm:$0x1] %v5229
    %v5255 = vld [vmem:[#allocation2] sm:$0xff]
    %v5256 = vld [vmem:[#allocation2 + $0x8] sm:$0xff]
    %v5257 = vld [vmem:[#allocation2 + $0x10] sm:$0xff]
    %v5258 = vld [vmem:[#allocation2 + $0x18] sm:$0xff]
    %v5259 = vld [vmem:[#allocation2 + $0x20] sm:$0xff]
    %v5260 = vld [vmem:[#allocation2 + $0x28] sm:$0xff]
    %v5261 = vld [vmem:[#allocation2 + $0x30] sm:$0xff]
    %v5262 = vld [vmem:[#allocation2 + $0x38] sm:$0xff]
    %v5263 = vld [vmem:[#allocation2 + $0x60] sm:$0xff]
    %v5264 = vld [vmem:[#allocation2 + $0x68] sm:$0xff]
    %v5265 = vld [vmem:[#allocation2 + $0x70] sm:$0xff]
    %v5266 = vld [vmem:[#allocation2 + $0x78] sm:$0xff]
    %v5267 = vld [vmem:[#allocation2 + $0x80] sm:$0xff]
    %v5268 = vld [vmem:[#allocation2 + $0x88] sm:$0xff]
    %v5269 = vld [vmem:[#allocation2 + $0x90] sm:$0xff]
    %v5270 = vld [vmem:[#allocation2 + $0x98] sm:$0xff]
    %v5271 = vpack.c.bf16 %v5259, %v5255
    %v5272 = vpack.c.bf16 %v5260, %v5256
    %v5273 = vpack.c.bf16 %v5261, %v5257
    %v5274 = vpack.c.bf16 %v5262, %v5258
    %v5275 = vpack.c.bf16 %v5267, %v5263
    %v5276 = vpack.c.bf16 %v5268, %v5264
    %v5277 = vpack.c.bf16 %v5269, %v5265
    %v5278 = vpack.c.bf16 %v5270, %v5266
    %v5279 = vld [vmem:[#allocation15] sm:$0xff]
    %v5280 = vld [vmem:[#allocation15 + $0x8] sm:$0xff]
    %v5281 = vld [vmem:[#allocation15 + $0x10] sm:$0xff]
    %v5282 = vld [vmem:[#allocation15 + $0x18] sm:$0xff]
    %v5283 = vld [vmem:[#allocation15 + $0x20] sm:$0xff]
    %v5284 = vld [vmem:[#allocation15 + $0x28] sm:$0xff]
    %v5285 = vld [vmem:[#allocation15 + $0x30] sm:$0xff]
    %v5286 = vld [vmem:[#allocation15 + $0x38] sm:$0xff]
    %v5287 = vld [vmem:[#allocation15 + $0x40] sm:$0xff]
    %v5288 = vld [vmem:[#allocation15 + $0x48] sm:$0xff]
    %v5289 = vld [vmem:[#allocation15 + $0x50] sm:$0xff]
    %v5290 = vld [vmem:[#allocation15 + $0x58] sm:$0xff]
    %v5291 = vld [vmem:[#allocation15 + $0x60] sm:$0xff]
    %v5292 = vld [vmem:[#allocation15 + $0x68] sm:$0xff]
    %v5293 = vld [vmem:[#allocation15 + $0x70] sm:$0xff]
    %v5294 = vld [vmem:[#allocation15 + $0x78] sm:$0xff]
    %v5295 = vld [vmem:[#allocation15 + $0x80] sm:$0xff]
    %v5296 = vld [vmem:[#allocation15 + $0x88] sm:$0xff]
    %v5297 = vld [vmem:[#allocation15 + $0x90] sm:$0xff]
    %v5298 = vld [vmem:[#allocation15 + $0x98] sm:$0xff]
    %v5299 = vld [vmem:[#allocation15 + $0xa0] sm:$0xff]
    %v5300 = vld [vmem:[#allocation15 + $0xa8] sm:$0xff]
    %v5301 = vld [vmem:[#allocation15 + $0xb0] sm:$0xff]
    %v5302 = vld [vmem:[#allocation15 + $0xb8] sm:$0xff]
    %v5303 = vld [vmem:[#allocation15 + $0xc0] sm:$0xff]
    %v5304 = vld [vmem:[#allocation15 + $0xc8] sm:$0xff]
    %v5305 = vld [vmem:[#allocation15 + $0xd0] sm:$0xff]
    %v5306 = vld [vmem:[#allocation15 + $0xd8] sm:$0xff]
    %v5307 = vld [vmem:[#allocation15 + $0xe0] sm:$0xff]
    %v5308 = vld [vmem:[#allocation15 + $0xe8] sm:$0xff]
    %v5309 = vld [vmem:[#allocation15 + $0xf0] sm:$0xff]
    %v5310 = vld [vmem:[#allocation15 + $0xf8] sm:$0xff]
    %v5311 = vld [vmem:[#allocation15 + $0x100] sm:$0xff]
    %v5312 = vld [vmem:[#allocation15 + $0x108] sm:$0xff]
    %v5313 = vld [vmem:[#allocation15 + $0x110] sm:$0xff]
    %v5314 = vld [vmem:[#allocation15 + $0x118] sm:$0xff]
    %v5315 = vld [vmem:[#allocation15 + $0x120] sm:$0xff]
    %v5316 = vld [vmem:[#allocation15 + $0x128] sm:$0xff]
    %v5317 = vld [vmem:[#allocation15 + $0x130] sm:$0xff]
    %v5318 = vld [vmem:[#allocation15 + $0x138] sm:$0xff]
    %v5319 = vld [vmem:[#allocation15 + $0x140] sm:$0xff]
    %v5320 = vld [vmem:[#allocation15 + $0x148] sm:$0xff]
    %v5321 = vld [vmem:[#allocation15 + $0x150] sm:$0xff]
    %v5322 = vld [vmem:[#allocation15 + $0x158] sm:$0xff]
    %v5323 = vld [vmem:[#allocation15 + $0x160] sm:$0xff]
    %v5324 = vld [vmem:[#allocation15 + $0x168] sm:$0xff]
    %v5325 = vld [vmem:[#allocation15 + $0x170] sm:$0xff]
    %v5326 = vld [vmem:[#allocation15 + $0x178] sm:$0xff]
    %v5327 = vld [vmem:[#allocation15 + $0x180] sm:$0xff]
    %v5328 = vld [vmem:[#allocation15 + $0x188] sm:$0xff]
    %v5329 = vld [vmem:[#allocation15 + $0x190] sm:$0xff]
    %v5330 = vld [vmem:[#allocation15 + $0x198] sm:$0xff]
    %v5331 = vld [vmem:[#allocation15 + $0x1a0] sm:$0xff]
    %v5332 = vld [vmem:[#allocation15 + $0x1a8] sm:$0xff]
    %v5333 = vld [vmem:[#allocation15 + $0x1b0] sm:$0xff]
    %v5334 = vld [vmem:[#allocation15 + $0x1b8] sm:$0xff]
    %v5335 = vld [vmem:[#allocation15 + $0x1c0] sm:$0xff]
    %v5336 = vld [vmem:[#allocation15 + $0x1c8] sm:$0xff]
    %v5337 = vld [vmem:[#allocation15 + $0x1d0] sm:$0xff]
    %v5338 = vld [vmem:[#allocation15 + $0x1d8] sm:$0xff]
    %v5339 = vld [vmem:[#allocation15 + $0x1e0] sm:$0xff]
    %v5340 = vld [vmem:[#allocation15 + $0x1e8] sm:$0xff]
    %v5341 = vld [vmem:[#allocation15 + $0x1f0] sm:$0xff]
    %v5342 = vld [vmem:[#allocation15 + $0x1f8] sm:$0xff]
    %v5343 = vld [vmem:[#allocation2] sm:$0xfc]
    %v5344 = vld [vmem:[#allocation2 + $0x8] sm:$0xfc]
    %v5345 = vld [vmem:[#allocation2 + $0x10] sm:$0xfc]
    %v5346 = vld [vmem:[#allocation2 + $0x18] sm:$0xfc]
    %v5347 = vld [vmem:[#allocation2 + $0x20] sm:$0xff]
    %v5348 = vld [vmem:[#allocation2 + $0x28] sm:$0xff]
    %v5349 = vld [vmem:[#allocation2 + $0x30] sm:$0xff]
    %v5350 = vld [vmem:[#allocation2 + $0x38] sm:$0xff]
    %v5351 = vld [vmem:[#allocation2 + $0x40] sm:$0x3]
    %v5352 = vld [vmem:[#allocation2 + $0x48] sm:$0x3]
    %v5353 = vld [vmem:[#allocation2 + $0x50] sm:$0x3]
    %v5354 = vld [vmem:[#allocation2 + $0x58] sm:$0x3]
    %v5355 = vld [vmem:[#allocation2 + $0x60] sm:$0xfc]
    %v5356 = vld [vmem:[#allocation2 + $0x68] sm:$0xfc]
    %v5357 = vld [vmem:[#allocation2 + $0x70] sm:$0xfc]
    %v5358 = vld [vmem:[#allocation2 + $0x78] sm:$0xfc]
    %v5359 = vld [vmem:[#allocation2 + $0x80] sm:$0xff]
    %v5360 = vld [vmem:[#allocation2 + $0x88] sm:$0xff]
    %v5361 = vld [vmem:[#allocation2 + $0x90] sm:$0xff]
    %v5362 = vld [vmem:[#allocation2 + $0x98] sm:$0xff]
    %v5363 = vld [vmem:[#allocation2 + $0xa0] sm:$0x3]
    %v5364 = vld [vmem:[#allocation2 + $0xa8] sm:$0x3]
    %v5365 = vld [vmem:[#allocation2 + $0xb0] sm:$0x3]
    %v5366 = vld [vmem:[#allocation2 + $0xb8] sm:$0x3]
    %v5391 = vrot.slane %v5343, 2
    %v5392 = vrot.slane %v5347, 2
    %v5393 = vsel %vm1915, %v5391, %v5392
    %v5394 = vrot.slane %v5344, 2
    %v5395 = vrot.slane %v5348, 2
    %v5396 = vsel %vm1915, %v5394, %v5395
    %v5397 = vrot.slane %v5345, 2
    %v5398 = vrot.slane %v5349, 2
    %v5399 = vsel %vm1915, %v5397, %v5398
    %v5400 = vrot.slane %v5346, 2
    %v5401 = vrot.slane %v5350, 2
    %v5402 = vsel %vm1915, %v5400, %v5401
    %v5403 = vrot.slane %v5351, 2
    %v5404 = vsel %vm1915, %v5392, %v5403
    %v5405 = vrot.slane %v5352, 2
    %v5406 = vsel %vm1915, %v5395, %v5405
    %v5407 = vrot.slane %v5353, 2
    %v5408 = vsel %vm1915, %v5398, %v5407
    %v5409 = vrot.slane %v5354, 2
    %v5410 = vsel %vm1915, %v5401, %v5409
    %v5411 = vrot.slane %v5355, 2
    %v5412 = vrot.slane %v5359, 2
    %v5413 = vsel %vm1915, %v5411, %v5412
    %v5414 = vrot.slane %v5356, 2
    %v5415 = vrot.slane %v5360, 2
    %v5416 = vsel %vm1915, %v5414, %v5415
    %v5417 = vrot.slane %v5357, 2
    %v5418 = vrot.slane %v5361, 2
    %v5419 = vsel %vm1915, %v5417, %v5418
    %v5420 = vrot.slane %v5358, 2
    %v5421 = vrot.slane %v5362, 2
    %v5422 = vsel %vm1915, %v5420, %v5421
    %v5423 = vrot.slane %v5363, 2
    %v5424 = vsel %vm1915, %v5412, %v5423
    %v5425 = vrot.slane %v5364, 2
    %v5426 = vsel %vm1915, %v5415, %v5425
    %v5427 = vrot.slane %v5365, 2
    %v5428 = vsel %vm1915, %v5418, %v5427
    %v5429 = vrot.slane %v5366, 2
    %v5430 = vsel %vm1915, %v5421, %v5429
    %v5447 = vpack.c.bf16 %v5404, %v5393
    %v5448 = vpack.c.bf16 %v5406, %v5396
    %v5449 = vpack.c.bf16 %v5408, %v5399
    %v5450 = vpack.c.bf16 %v5410, %v5402
    %v5451 = vpack.c.bf16 %v5424, %v5413
    %v5452 = vpack.c.bf16 %v5426, %v5416
    %v5453 = vpack.c.bf16 %v5428, %v5419
    %v5454 = vpack.c.bf16 %v5430, %v5422
    %s5455 = scalar_lea.vmem [#allocation15], 512
    %v5456 = vld [vmem:[%s5455] sm:$0xff]
    %v5457 = vld [vmem:[%s5455 + $0x8] sm:$0xff]
    %v5458 = vld [vmem:[%s5455 + $0x10] sm:$0xff]
    %v5459 = vld [vmem:[%s5455 + $0x18] sm:$0xff]
    %v5460 = vld [vmem:[%s5455 + $0x20] sm:$0xff]
    %v5461 = vld [vmem:[%s5455 + $0x28] sm:$0xff]
    %v5462 = vld [vmem:[%s5455 + $0x30] sm:$0xff]
    %v5463 = vld [vmem:[%s5455 + $0x38] sm:$0xff]
    %v5464 = vld [vmem:[%s5455 + $0x40] sm:$0xff]
    %v5465 = vld [vmem:[%s5455 + $0x48] sm:$0xff]
    %v5466 = vld [vmem:[%s5455 + $0x50] sm:$0xff]
    %v5467 = vld [vmem:[%s5455 + $0x58] sm:$0xff]
    %v5468 = vld [vmem:[%s5455 + $0x60] sm:$0xff]
    %v5469 = vld [vmem:[%s5455 + $0x68] sm:$0xff]
    %v5470 = vld [vmem:[%s5455 + $0x70] sm:$0xff]
    %v5471 = vld [vmem:[%s5455 + $0x78] sm:$0xff]
    %v5472 = vld [vmem:[%s5455 + $0x80] sm:$0xff]
    %v5473 = vld [vmem:[%s5455 + $0x88] sm:$0xff]
    %v5474 = vld [vmem:[%s5455 + $0x90] sm:$0xff]
    %v5475 = vld [vmem:[%s5455 + $0x98] sm:$0xff]
    %v5476 = vld [vmem:[%s5455 + $0xa0] sm:$0xff]
    %v5477 = vld [vmem:[%s5455 + $0xa8] sm:$0xff]
    %v5478 = vld [vmem:[%s5455 + $0xb0] sm:$0xff]
    %v5479 = vld [vmem:[%s5455 + $0xb8] sm:$0xff]
    %v5480 = vld [vmem:[%s5455 + $0xc0] sm:$0xff]
    %v5481 = vld [vmem:[%s5455 + $0xc8] sm:$0xff]
    %v5482 = vld [vmem:[%s5455 + $0xd0] sm:$0xff]
    %v5483 = vld [vmem:[%s5455 + $0xd8] sm:$0xff]
    %v5484 = vld [vmem:[%s5455 + $0xe0] sm:$0xff]
    %v5485 = vld [vmem:[%s5455 + $0xe8] sm:$0xff]
    %v5486 = vld [vmem:[%s5455 + $0xf0] sm:$0xff]
    %v5487 = vld [vmem:[%s5455 + $0xf8] sm:$0xff]
    %v5488 = vld [vmem:[%s5455 + $0x100] sm:$0xff]
    %v5489 = vld [vmem:[%s5455 + $0x108] sm:$0xff]
    %v5490 = vld [vmem:[%s5455 + $0x110] sm:$0xff]
    %v5491 = vld [vmem:[%s5455 + $0x118] sm:$0xff]
    %v5492 = vld [vmem:[%s5455 + $0x120] sm:$0xff]
    %v5493 = vld [vmem:[%s5455 + $0x128] sm:$0xff]
    %v5494 = vld [vmem:[%s5455 + $0x130] sm:$0xff]
    %v5495 = vld [vmem:[%s5455 + $0x138] sm:$0xff]
    %v5496 = vld [vmem:[%s5455 + $0x140] sm:$0xff]
    %v5497 = vld [vmem:[%s5455 + $0x148] sm:$0xff]
    %v5498 = vld [vmem:[%s5455 + $0x150] sm:$0xff]
    %v5499 = vld [vmem:[%s5455 + $0x158] sm:$0xff]
    %v5500 = vld [vmem:[%s5455 + $0x160] sm:$0xff]
    %v5501 = vld [vmem:[%s5455 + $0x168] sm:$0xff]
    %v5502 = vld [vmem:[%s5455 + $0x170] sm:$0xff]
    %v5503 = vld [vmem:[%s5455 + $0x178] sm:$0xff]
    %v5504 = vld [vmem:[%s5455 + $0x180] sm:$0xff]
    %v5505 = vld [vmem:[%s5455 + $0x188] sm:$0xff]
    %v5506 = vld [vmem:[%s5455 + $0x190] sm:$0xff]
    %v5507 = vld [vmem:[%s5455 + $0x198] sm:$0xff]
    %v5508 = vld [vmem:[%s5455 + $0x1a0] sm:$0xff]
    %v5509 = vld [vmem:[%s5455 + $0x1a8] sm:$0xff]
    %v5510 = vld [vmem:[%s5455 + $0x1b0] sm:$0xff]
    %v5511 = vld [vmem:[%s5455 + $0x1b8] sm:$0xff]
    %v5512 = vld [vmem:[%s5455 + $0x1c0] sm:$0xff]
    %v5513 = vld [vmem:[%s5455 + $0x1c8] sm:$0xff]
    %v5514 = vld [vmem:[%s5455 + $0x1d0] sm:$0xff]
    %v5515 = vld [vmem:[%s5455 + $0x1d8] sm:$0xff]
    %v5516 = vld [vmem:[%s5455 + $0x1e0] sm:$0xff]
    %v5517 = vld [vmem:[%s5455 + $0x1e8] sm:$0xff]
    %v5518 = vld [vmem:[%s5455 + $0x1f0] sm:$0xff]
    %v5519 = vld [vmem:[%s5455 + $0x1f8] sm:$0xff]
    %v5584 = vunpack.c.l.b16 %v5456
    %v5585 = vunpack.c.h.b16 %v5456
    %v5586 = vunpack.c.l.b16 %v5457
    %v5587 = vunpack.c.h.b16 %v5457
    %v5588 = vunpack.c.l.b16 %v5458
    %v5589 = vunpack.c.h.b16 %v5458
    %v5590 = vunpack.c.l.b16 %v5459
    %v5591 = vunpack.c.h.b16 %v5459
    %v5592 = vunpack.c.l.b16 %v5460
    %v5593 = vunpack.c.h.b16 %v5460
    %v5594 = vunpack.c.l.b16 %v5461
    %v5595 = vunpack.c.h.b16 %v5461
    %v5596 = vunpack.c.l.b16 %v5462
    %v5597 = vunpack.c.h.b16 %v5462
    %v5598 = vunpack.c.l.b16 %v5463
    %v5599 = vunpack.c.h.b16 %v5463
    %v5600 = vunpack.c.l.b16 %v5464
    %v5601 = vunpack.c.h.b16 %v5464
    %v5602 = vunpack.c.l.b16 %v5465
    %v5603 = vunpack.c.h.b16 %v5465
    %v5604 = vunpack.c.l.b16 %v5466
    %v5605 = vunpack.c.h.b16 %v5466
    %v5606 = vunpack.c.l.b16 %v5467
    %v5607 = vunpack.c.h.b16 %v5467
    %v5608 = vunpack.c.l.b16 %v5468
    %v5609 = vunpack.c.h.b16 %v5468
    %v5610 = vunpack.c.l.b16 %v5469
    %v5611 = vunpack.c.h.b16 %v5469
    %v5612 = vunpack.c.l.b16 %v5470
    %v5613 = vunpack.c.h.b16 %v5470
    %v5614 = vunpack.c.l.b16 %v5471
    %v5615 = vunpack.c.h.b16 %v5471
    %v5616 = vunpack.c.l.b16 %v5472
    %v5617 = vunpack.c.h.b16 %v5472
    %v5618 = vunpack.c.l.b16 %v5473
    %v5619 = vunpack.c.h.b16 %v5473
    %v5620 = vunpack.c.l.b16 %v5474
    %v5621 = vunpack.c.h.b16 %v5474
    %v5622 = vunpack.c.l.b16 %v5475
    %v5623 = vunpack.c.h.b16 %v5475
    %v5624 = vunpack.c.l.b16 %v5476
    %v5625 = vunpack.c.h.b16 %v5476
    %v5626 = vunpack.c.l.b16 %v5477
    %v5627 = vunpack.c.h.b16 %v5477
    %v5628 = vunpack.c.l.b16 %v5478
    %v5629 = vunpack.c.h.b16 %v5478
    %v5630 = vunpack.c.l.b16 %v5479
    %v5631 = vunpack.c.h.b16 %v5479
    %v5632 = vunpack.c.l.b16 %v5480
    %v5633 = vunpack.c.h.b16 %v5480
    %v5634 = vunpack.c.l.b16 %v5481
    %v5635 = vunpack.c.h.b16 %v5481
    %v5636 = vunpack.c.l.b16 %v5482
    %v5637 = vunpack.c.h.b16 %v5482
    %v5638 = vunpack.c.l.b16 %v5483
    %v5639 = vunpack.c.h.b16 %v5483
    %v5640 = vunpack.c.l.b16 %v5484
    %v5641 = vunpack.c.h.b16 %v5484
    %v5642 = vunpack.c.l.b16 %v5485
    %v5643 = vunpack.c.h.b16 %v5485
    %v5644 = vunpack.c.l.b16 %v5486
    %v5645 = vunpack.c.h.b16 %v5486
    %v5646 = vunpack.c.l.b16 %v5487
    %v5647 = vunpack.c.h.b16 %v5487
    %v5648 = vunpack.c.l.b16 %v5488
    %v5649 = vunpack.c.h.b16 %v5488
    %v5650 = vunpack.c.l.b16 %v5489
    %v5651 = vunpack.c.h.b16 %v5489
    %v5652 = vunpack.c.l.b16 %v5490
    %v5653 = vunpack.c.h.b16 %v5490
    %v5654 = vunpack.c.l.b16 %v5491
    %v5655 = vunpack.c.h.b16 %v5491
    %v5656 = vunpack.c.l.b16 %v5492
    %v5657 = vunpack.c.h.b16 %v5492
    %v5658 = vunpack.c.l.b16 %v5493
    %v5659 = vunpack.c.h.b16 %v5493
    %v5660 = vunpack.c.l.b16 %v5494
    %v5661 = vunpack.c.h.b16 %v5494
    %v5662 = vunpack.c.l.b16 %v5495
    %v5663 = vunpack.c.h.b16 %v5495
    %v5664 = vunpack.c.l.b16 %v5496
    %v5665 = vunpack.c.h.b16 %v5496
    %v5666 = vunpack.c.l.b16 %v5497
    %v5667 = vunpack.c.h.b16 %v5497
    %v5668 = vunpack.c.l.b16 %v5498
    %v5669 = vunpack.c.h.b16 %v5498
    %v5670 = vunpack.c.l.b16 %v5499
    %v5671 = vunpack.c.h.b16 %v5499
    %v5672 = vunpack.c.l.b16 %v5500
    %v5673 = vunpack.c.h.b16 %v5500
    %v5674 = vunpack.c.l.b16 %v5501
    %v5675 = vunpack.c.h.b16 %v5501
    %v5676 = vunpack.c.l.b16 %v5502
    %v5677 = vunpack.c.h.b16 %v5502
    %v5678 = vunpack.c.l.b16 %v5503
    %v5679 = vunpack.c.h.b16 %v5503
    %v5680 = vunpack.c.l.b16 %v5504
    %v5681 = vunpack.c.h.b16 %v5504
    %v5682 = vunpack.c.l.b16 %v5505
    %v5683 = vunpack.c.h.b16 %v5505
    %v5684 = vunpack.c.l.b16 %v5506
    %v5685 = vunpack.c.h.b16 %v5506
    %v5686 = vunpack.c.l.b16 %v5507
    %v5687 = vunpack.c.h.b16 %v5507
    %v5688 = vunpack.c.l.b16 %v5508
    %v5689 = vunpack.c.h.b16 %v5508
    %v5690 = vunpack.c.l.b16 %v5509
    %v5691 = vunpack.c.h.b16 %v5509
    %v5692 = vunpack.c.l.b16 %v5510
    %v5693 = vunpack.c.h.b16 %v5510
    %v5694 = vunpack.c.l.b16 %v5511
    %v5695 = vunpack.c.h.b16 %v5511
    %v5696 = vunpack.c.l.b16 %v5512
    %v5697 = vunpack.c.h.b16 %v5512
    %v5698 = vunpack.c.l.b16 %v5513
    %v5699 = vunpack.c.h.b16 %v5513
    %v5700 = vunpack.c.l.b16 %v5514
    %v5701 = vunpack.c.h.b16 %v5514
    %v5702 = vunpack.c.l.b16 %v5515
    %v5703 = vunpack.c.h.b16 %v5515
    %v5704 = vunpack.c.l.b16 %v5516
    %v5705 = vunpack.c.h.b16 %v5516
    %v5706 = vunpack.c.l.b16 %v5517
    %v5707 = vunpack.c.h.b16 %v5517
    %v5708 = vunpack.c.l.b16 %v5518
    %v5709 = vunpack.c.h.b16 %v5518
    %v5710 = vunpack.c.l.b16 %v5519
    %v5711 = vunpack.c.h.b16 %v5519
    %v5712 = vpack.c.b16 %v5586, %v5584
    %v5713 = vpack.c.b16 %v5587, %v5585
    %v5714 = vpack.c.b16 %v5590, %v5588
    %v5715 = vpack.c.b16 %v5591, %v5589
    %v5716 = vpack.c.b16 %v5594, %v5592
    %v5717 = vpack.c.b16 %v5595, %v5593
    %v5718 = vpack.c.b16 %v5598, %v5596
    %v5719 = vpack.c.b16 %v5599, %v5597
    %v5720 = vpack.c.b16 %v5602, %v5600
    %v5721 = vpack.c.b16 %v5603, %v5601
    %v5722 = vpack.c.b16 %v5606, %v5604
    %v5723 = vpack.c.b16 %v5607, %v5605
    %v5724 = vpack.c.b16 %v5610, %v5608
    %v5725 = vpack.c.b16 %v5611, %v5609
    %v5726 = vpack.c.b16 %v5614, %v5612
    %v5727 = vpack.c.b16 %v5615, %v5613
    %v5728 = vpack.c.b16 %v5618, %v5616
    %v5729 = vpack.c.b16 %v5619, %v5617
    %v5730 = vpack.c.b16 %v5622, %v5620
    %v5731 = vpack.c.b16 %v5623, %v5621
    %v5732 = vpack.c.b16 %v5626, %v5624
    %v5733 = vpack.c.b16 %v5627, %v5625
    %v5734 = vpack.c.b16 %v5630, %v5628
    %v5735 = vpack.c.b16 %v5631, %v5629
    %v5736 = vpack.c.b16 %v5634, %v5632
    %v5737 = vpack.c.b16 %v5635, %v5633
    %v5738 = vpack.c.b16 %v5638, %v5636
    %v5739 = vpack.c.b16 %v5639, %v5637
    %v5740 = vpack.c.b16 %v5642, %v5640
    %v5741 = vpack.c.b16 %v5643, %v5641
    %v5742 = vpack.c.b16 %v5646, %v5644
    %v5743 = vpack.c.b16 %v5647, %v5645
    %v5744 = vpack.c.b16 %v5650, %v5648
    %v5745 = vpack.c.b16 %v5651, %v5649
    %v5746 = vpack.c.b16 %v5654, %v5652
    %v5747 = vpack.c.b16 %v5655, %v5653
    %v5748 = vpack.c.b16 %v5658, %v5656
    %v5749 = vpack.c.b16 %v5659, %v5657
    %v5750 = vpack.c.b16 %v5662, %v5660
    %v5751 = vpack.c.b16 %v5663, %v5661
    %v5752 = vpack.c.b16 %v5666, %v5664
    %v5753 = vpack.c.b16 %v5667, %v5665
    %v5754 = vpack.c.b16 %v5670, %v5668
    %v5755 = vpack.c.b16 %v5671, %v5669
    %v5756 = vpack.c.b16 %v5674, %v5672
    %v5757 = vpack.c.b16 %v5675, %v5673
    %v5758 = vpack.c.b16 %v5678, %v5676
    %v5759 = vpack.c.b16 %v5679, %v5677
    %v5760 = vpack.c.b16 %v5682, %v5680
    %v5761 = vpack.c.b16 %v5683, %v5681
    %v5762 = vpack.c.b16 %v5686, %v5684
    %v5763 = vpack.c.b16 %v5687, %v5685
    %v5764 = vpack.c.b16 %v5690, %v5688
    %v5765 = vpack.c.b16 %v5691, %v5689
    %v5766 = vpack.c.b16 %v5694, %v5692
    %v5767 = vpack.c.b16 %v5695, %v5693
    %v5768 = vpack.c.b16 %v5698, %v5696
    %v5769 = vpack.c.b16 %v5699, %v5697
    %v5770 = vpack.c.b16 %v5702, %v5700
    %v5771 = vpack.c.b16 %v5703, %v5701
    %v5772 = vpack.c.b16 %v5706, %v5704
    %v5773 = vpack.c.b16 %v5707, %v5705
    %v5774 = vpack.c.b16 %v5710, %v5708
    %v5775 = vpack.c.b16 %v5711, %v5709
    %5840 = vmatprep.subr.bf16.mxu0 %v5727
    %5841 = vmatpush1.bf16.msra.mxu0 %v5726
    %5842 = vmatprep.subr.bf16.mxu0 %v5725
    %5843 = vmatpush1.bf16.msra.mxu0 %v5724
    %5844 = vmatprep.subr.bf16.mxu0 %v5723
    %5845 = vmatpush1.bf16.msra.mxu0 %v5722
    %5846 = vmatprep.subr.bf16.mxu0 %v5721
    %5847 = vmatpush1.bf16.msra.mxu0 %v5720
    %5848 = vmatprep.subr.bf16.mxu0 %v5719
    %5849 = vmatpush1.bf16.msra.mxu0 %v5718
    %5850 = vmatprep.subr.bf16.mxu0 %v5717
    %5851 = vmatpush1.bf16.msra.mxu0 %v5716
    %5852 = vmatprep.subr.bf16.mxu0 %v5715
    %5853 = vmatpush1.bf16.msra.mxu0 %v5714
    %5854 = vmatprep.subr.bf16.mxu0 %v5713
    %5855 = vmatpush1.bf16.msra.mxu0 %v5712
    %5856 = vmatprep.subr.bf16.mxu0 %v5743
    %5857 = vmatpush2.bf16.msra.mxu0 %v5742
    %5858 = vmatprep.subr.bf16.mxu0 %v5741
    %5859 = vmatpush2.bf16.msra.mxu0 %v5740
    %5860 = vmatprep.subr.bf16.mxu0 %v5739
    %5861 = vmatpush2.bf16.msra.mxu0 %v5738
    %5862 = vmatprep.subr.bf16.mxu0 %v5737
    %5863 = vmatpush2.bf16.msra.mxu0 %v5736
    %5864 = vmatprep.subr.bf16.mxu0 %v5735
    %5865 = vmatpush2.bf16.msra.mxu0 %v5734
    %5866 = vmatprep.subr.bf16.mxu0 %v5733
    %5867 = vmatpush2.bf16.msra.mxu0 %v5732
    %5868 = vmatprep.subr.bf16.mxu0 %v5731
    %5869 = vmatpush2.bf16.msra.mxu0 %v5730
    %5870 = vmatprep.subr.bf16.mxu0 %v5729
    %5871 = vmatpush2.bf16.msra.mxu0 %v5728
    %5872 = vmatprep.mubr.bf16.mxu0 %v5448
    %5873 = vmatmul.mubr.bf16.gmra.mxu0 %v5447
    %v5874 = vpop.f32.mrf.mxu0
    %v5875 = vadd.f32 0.0, %v5874
    %v5876 = vpop.f32.mrf.mxu0
    %v5877 = vadd.f32 0.0, %v5876
    %v5878 = vpop.f32.mrf.mxu0
    %v5879 = vadd.f32 0.0, %v5878
    %v5880 = vpop.f32.mrf.mxu0
    %v5881 = vadd.f32 0.0, %v5880
    %5882 = vmatprep.mubr.bf16.mxu0 %v5452
    %5883 = vmatmul.mubr.bf16.gmra.mxu0 %v5451
    %v5884 = vpop.f32.mrf.mxu0
    %v5885 = vadd.f32 0.0, %v5884
    %v5886 = vpop.f32.mrf.mxu0
    %v5887 = vadd.f32 0.0, %v5886
    %v5888 = vpop.f32.mrf.mxu0
    %v5889 = vadd.f32 0.0, %v5888
    %v5890 = vpop.f32.mrf.mxu0
    %v5891 = vadd.f32 0.0, %v5890
    %5892 = vdwg.mxu0
    %5893 = vmatprep.subr.bf16.mxu0 %v5759
    %5894 = vmatpush1.bf16.msra.mxu0 %v5758
    %5895 = vmatprep.subr.bf16.mxu0 %v5757
    %5896 = vmatpush1.bf16.msra.mxu0 %v5756
    %5897 = vmatprep.subr.bf16.mxu0 %v5755
    %5898 = vmatpush1.bf16.msra.mxu0 %v5754
    %5899 = vmatprep.subr.bf16.mxu0 %v5753
    %5900 = vmatpush1.bf16.msra.mxu0 %v5752
    %5901 = vmatprep.subr.bf16.mxu0 %v5751
    %5902 = vmatpush1.bf16.msra.mxu0 %v5750
    %5903 = vmatprep.subr.bf16.mxu0 %v5749
    %5904 = vmatpush1.bf16.msra.mxu0 %v5748
    %5905 = vmatprep.subr.bf16.mxu0 %v5747
    %5906 = vmatpush1.bf16.msra.mxu0 %v5746
    %5907 = vmatprep.subr.bf16.mxu0 %v5745
    %5908 = vmatpush1.bf16.msra.mxu0 %v5744
    %5909 = vmatprep.subr.bf16.mxu0 %v5775
    %5910 = vmatpush2.bf16.msra.mxu0 %v5774
    %5911 = vmatprep.subr.bf16.mxu0 %v5773
    %5912 = vmatpush2.bf16.msra.mxu0 %v5772
    %5913 = vmatprep.subr.bf16.mxu0 %v5771
    %5914 = vmatpush2.bf16.msra.mxu0 %v5770
    %5915 = vmatprep.subr.bf16.mxu0 %v5769
    %5916 = vmatpush2.bf16.msra.mxu0 %v5768
    %5917 = vmatprep.subr.bf16.mxu0 %v5767
    %5918 = vmatpush2.bf16.msra.mxu0 %v5766
    %5919 = vmatprep.subr.bf16.mxu0 %v5765
    %5920 = vmatpush2.bf16.msra.mxu0 %v5764
    %5921 = vmatprep.subr.bf16.mxu0 %v5763
    %5922 = vmatpush2.bf16.msra.mxu0 %v5762
    %5923 = vmatprep.subr.bf16.mxu0 %v5761
    %5924 = vmatpush2.bf16.msra.mxu0 %v5760
    %5925 = vmatprep.mubr.bf16.mxu0 %v5450
    %5926 = vmatmul.mubr.bf16.gmra.mxu0 %v5449
    %v5927 = vpop.f32.mrf.mxu0
    %v5928 = vadd.f32 %v5875, %v5927
    %v5929 = vpop.f32.mrf.mxu0
    %v5930 = vadd.f32 %v5877, %v5929
    %v5931 = vpop.f32.mrf.mxu0
    %v5932 = vadd.f32 %v5879, %v5931
    %v5933 = vpop.f32.mrf.mxu0
    %v5934 = vadd.f32 %v5881, %v5933
    %5935 = vmatprep.mubr.bf16.mxu0 %v5454
    %5936 = vmatmul.mubr.bf16.gmra.mxu0 %v5453
    %v5937 = vpop.f32.mrf.mxu0
    %v5938 = vadd.f32 %v5885, %v5937
    %v5939 = vpop.f32.mrf.mxu0
    %v5940 = vadd.f32 %v5887, %v5939
    %v5941 = vpop.f32.mrf.mxu0
    %v5942 = vadd.f32 %v5889, %v5941
    %v5943 = vpop.f32.mrf.mxu0
    %v5944 = vadd.f32 %v5891, %v5943
    %5945 = vdwg.mxu0
    %v6010 = vunpack.c.l.b16 %v5279
    %v6011 = vunpack.c.h.b16 %v5279
    %v6012 = vunpack.c.l.b16 %v5280
    %v6013 = vunpack.c.h.b16 %v5280
    %v6014 = vunpack.c.l.b16 %v5281
    %v6015 = vunpack.c.h.b16 %v5281
    %v6016 = vunpack.c.l.b16 %v5282
    %v6017 = vunpack.c.h.b16 %v5282
    %v6018 = vunpack.c.l.b16 %v5283
    %v6019 = vunpack.c.h.b16 %v5283
    %v6020 = vunpack.c.l.b16 %v5284
    %v6021 = vunpack.c.h.b16 %v5284
    %v6022 = vunpack.c.l.b16 %v5285
    %v6023 = vunpack.c.h.b16 %v5285
    %v6024 = vunpack.c.l.b16 %v5286
    %v6025 = vunpack.c.h.b16 %v5286
    %v6026 = vunpack.c.l.b16 %v5287
    %v6027 = vunpack.c.h.b16 %v5287
    %v6028 = vunpack.c.l.b16 %v5288
    %v6029 = vunpack.c.h.b16 %v5288
    %v6030 = vunpack.c.l.b16 %v5289
    %v6031 = vunpack.c.h.b16 %v5289
    %v6032 = vunpack.c.l.b16 %v5290
    %v6033 = vunpack.c.h.b16 %v5290
    %v6034 = vunpack.c.l.b16 %v5291
    %v6035 = vunpack.c.h.b16 %v5291
    %v6036 = vunpack.c.l.b16 %v5292
    %v6037 = vunpack.c.h.b16 %v5292
    %v6038 = vunpack.c.l.b16 %v5293
    %v6039 = vunpack.c.h.b16 %v5293
    %v6040 = vunpack.c.l.b16 %v5294
    %v6041 = vunpack.c.h.b16 %v5294
    %v6042 = vunpack.c.l.b16 %v5295
    %v6043 = vunpack.c.h.b16 %v5295
    %v6044 = vunpack.c.l.b16 %v5296
    %v6045 = vunpack.c.h.b16 %v5296
    %v6046 = vunpack.c.l.b16 %v5297
    %v6047 = vunpack.c.h.b16 %v5297
    %v6048 = vunpack.c.l.b16 %v5298
    %v6049 = vunpack.c.h.b16 %v5298
    %v6050 = vunpack.c.l.b16 %v5299
    %v6051 = vunpack.c.h.b16 %v5299
    %v6052 = vunpack.c.l.b16 %v5300
    %v6053 = vunpack.c.h.b16 %v5300
    %v6054 = vunpack.c.l.b16 %v5301
    %v6055 = vunpack.c.h.b16 %v5301
    %v6056 = vunpack.c.l.b16 %v5302
    %v6057 = vunpack.c.h.b16 %v5302
    %v6058 = vunpack.c.l.b16 %v5303
    %v6059 = vunpack.c.h.b16 %v5303
    %v6060 = vunpack.c.l.b16 %v5304
    %v6061 = vunpack.c.h.b16 %v5304
    %v6062 = vunpack.c.l.b16 %v5305
    %v6063 = vunpack.c.h.b16 %v5305
    %v6064 = vunpack.c.l.b16 %v5306
    %v6065 = vunpack.c.h.b16 %v5306
    %v6066 = vunpack.c.l.b16 %v5307
    %v6067 = vunpack.c.h.b16 %v5307
    %v6068 = vunpack.c.l.b16 %v5308
    %v6069 = vunpack.c.h.b16 %v5308
    %v6070 = vunpack.c.l.b16 %v5309
    %v6071 = vunpack.c.h.b16 %v5309
    %v6072 = vunpack.c.l.b16 %v5310
    %v6073 = vunpack.c.h.b16 %v5310
    %v6074 = vunpack.c.l.b16 %v5311
    %v6075 = vunpack.c.h.b16 %v5311
    %v6076 = vunpack.c.l.b16 %v5312
    %v6077 = vunpack.c.h.b16 %v5312
    %v6078 = vunpack.c.l.b16 %v5313
    %v6079 = vunpack.c.h.b16 %v5313
    %v6080 = vunpack.c.l.b16 %v5314
    %v6081 = vunpack.c.h.b16 %v5314
    %v6082 = vunpack.c.l.b16 %v5315
    %v6083 = vunpack.c.h.b16 %v5315
    %v6084 = vunpack.c.l.b16 %v5316
    %v6085 = vunpack.c.h.b16 %v5316
    %v6086 = vunpack.c.l.b16 %v5317
    %v6087 = vunpack.c.h.b16 %v5317
    %v6088 = vunpack.c.l.b16 %v5318
    %v6089 = vunpack.c.h.b16 %v5318
    %v6090 = vunpack.c.l.b16 %v5319
    %v6091 = vunpack.c.h.b16 %v5319
    %v6092 = vunpack.c.l.b16 %v5320
    %v6093 = vunpack.c.h.b16 %v5320
    %v6094 = vunpack.c.l.b16 %v5321
    %v6095 = vunpack.c.h.b16 %v5321
    %v6096 = vunpack.c.l.b16 %v5322
    %v6097 = vunpack.c.h.b16 %v5322
    %v6098 = vunpack.c.l.b16 %v5323
    %v6099 = vunpack.c.h.b16 %v5323
    %v6100 = vunpack.c.l.b16 %v5324
    %v6101 = vunpack.c.h.b16 %v5324
    %v6102 = vunpack.c.l.b16 %v5325
    %v6103 = vunpack.c.h.b16 %v5325
    %v6104 = vunpack.c.l.b16 %v5326
    %v6105 = vunpack.c.h.b16 %v5326
    %v6106 = vunpack.c.l.b16 %v5327
    %v6107 = vunpack.c.h.b16 %v5327
    %v6108 = vunpack.c.l.b16 %v5328
    %v6109 = vunpack.c.h.b16 %v5328
    %v6110 = vunpack.c.l.b16 %v5329
    %v6111 = vunpack.c.h.b16 %v5329
    %v6112 = vunpack.c.l.b16 %v5330
    %v6113 = vunpack.c.h.b16 %v5330
    %v6114 = vunpack.c.l.b16 %v5331
    %v6115 = vunpack.c.h.b16 %v5331
    %v6116 = vunpack.c.l.b16 %v5332
    %v6117 = vunpack.c.h.b16 %v5332
    %v6118 = vunpack.c.l.b16 %v5333
    %v6119 = vunpack.c.h.b16 %v5333
    %v6120 = vunpack.c.l.b16 %v5334
    %v6121 = vunpack.c.h.b16 %v5334
    %v6122 = vunpack.c.l.b16 %v5335
    %v6123 = vunpack.c.h.b16 %v5335
    %v6124 = vunpack.c.l.b16 %v5336
    %v6125 = vunpack.c.h.b16 %v5336
    %v6126 = vunpack.c.l.b16 %v5337
    %v6127 = vunpack.c.h.b16 %v5337
    %v6128 = vunpack.c.l.b16 %v5338
    %v6129 = vunpack.c.h.b16 %v5338
    %v6130 = vunpack.c.l.b16 %v5339
    %v6131 = vunpack.c.h.b16 %v5339
    %v6132 = vunpack.c.l.b16 %v5340
    %v6133 = vunpack.c.h.b16 %v5340
    %v6134 = vunpack.c.l.b16 %v5341
    %v6135 = vunpack.c.h.b16 %v5341
    %v6136 = vunpack.c.l.b16 %v5342
    %v6137 = vunpack.c.h.b16 %v5342
    %v6138 = vpack.c.b16 %v6012, %v6010
    %v6139 = vpack.c.b16 %v6013, %v6011
    %v6140 = vpack.c.b16 %v6016, %v6014
    %v6141 = vpack.c.b16 %v6017, %v6015
    %v6142 = vpack.c.b16 %v6020, %v6018
    %v6143 = vpack.c.b16 %v6021, %v6019
    %v6144 = vpack.c.b16 %v6024, %v6022
    %v6145 = vpack.c.b16 %v6025, %v6023
    %v6146 = vpack.c.b16 %v6028, %v6026
    %v6147 = vpack.c.b16 %v6029, %v6027
    %v6148 = vpack.c.b16 %v6032, %v6030
    %v6149 = vpack.c.b16 %v6033, %v6031
    %v6150 = vpack.c.b16 %v6036, %v6034
    %v6151 = vpack.c.b16 %v6037, %v6035
    %v6152 = vpack.c.b16 %v6040, %v6038
    %v6153 = vpack.c.b16 %v6041, %v6039
    %v6154 = vpack.c.b16 %v6044, %v6042
    %v6155 = vpack.c.b16 %v6045, %v6043
    %v6156 = vpack.c.b16 %v6048, %v6046
    %v6157 = vpack.c.b16 %v6049, %v6047
    %v6158 = vpack.c.b16 %v6052, %v6050
    %v6159 = vpack.c.b16 %v6053, %v6051
    %v6160 = vpack.c.b16 %v6056, %v6054
    %v6161 = vpack.c.b16 %v6057, %v6055
    %v6162 = vpack.c.b16 %v6060, %v6058
    %v6163 = vpack.c.b16 %v6061, %v6059
    %v6164 = vpack.c.b16 %v6064, %v6062
    %v6165 = vpack.c.b16 %v6065, %v6063
    %v6166 = vpack.c.b16 %v6068, %v6066
    %v6167 = vpack.c.b16 %v6069, %v6067
    %v6168 = vpack.c.b16 %v6072, %v6070
    %v6169 = vpack.c.b16 %v6073, %v6071
    %v6170 = vpack.c.b16 %v6076, %v6074
    %v6171 = vpack.c.b16 %v6077, %v6075
    %v6172 = vpack.c.b16 %v6080, %v6078
    %v6173 = vpack.c.b16 %v6081, %v6079
    %v6174 = vpack.c.b16 %v6084, %v6082
    %v6175 = vpack.c.b16 %v6085, %v6083
    %v6176 = vpack.c.b16 %v6088, %v6086
    %v6177 = vpack.c.b16 %v6089, %v6087
    %v6178 = vpack.c.b16 %v6092, %v6090
    %v6179 = vpack.c.b16 %v6093, %v6091
    %v6180 = vpack.c.b16 %v6096, %v6094
    %v6181 = vpack.c.b16 %v6097, %v6095
    %v6182 = vpack.c.b16 %v6100, %v6098
    %v6183 = vpack.c.b16 %v6101, %v6099
    %v6184 = vpack.c.b16 %v6104, %v6102
    %v6185 = vpack.c.b16 %v6105, %v6103
    %v6186 = vpack.c.b16 %v6108, %v6106
    %v6187 = vpack.c.b16 %v6109, %v6107
    %v6188 = vpack.c.b16 %v6112, %v6110
    %v6189 = vpack.c.b16 %v6113, %v6111
    %v6190 = vpack.c.b16 %v6116, %v6114
    %v6191 = vpack.c.b16 %v6117, %v6115
    %v6192 = vpack.c.b16 %v6120, %v6118
    %v6193 = vpack.c.b16 %v6121, %v6119
    %v6194 = vpack.c.b16 %v6124, %v6122
    %v6195 = vpack.c.b16 %v6125, %v6123
    %v6196 = vpack.c.b16 %v6128, %v6126
    %v6197 = vpack.c.b16 %v6129, %v6127
    %v6198 = vpack.c.b16 %v6132, %v6130
    %v6199 = vpack.c.b16 %v6133, %v6131
    %v6200 = vpack.c.b16 %v6136, %v6134
    %v6201 = vpack.c.b16 %v6137, %v6135
    %6266 = vmatprep.subr.bf16.mxu0 %v6153
    %6267 = vmatpush1.bf16.msra.mxu0 %v6152
    %6268 = vmatprep.subr.bf16.mxu0 %v6151
    %6269 = vmatpush1.bf16.msra.mxu0 %v6150
    %6270 = vmatprep.subr.bf16.mxu0 %v6149
    %6271 = vmatpush1.bf16.msra.mxu0 %v6148
    %6272 = vmatprep.subr.bf16.mxu0 %v6147
    %6273 = vmatpush1.bf16.msra.mxu0 %v6146
    %6274 = vmatprep.subr.bf16.mxu0 %v6145
    %6275 = vmatpush1.bf16.msra.mxu0 %v6144
    %6276 = vmatprep.subr.bf16.mxu0 %v6143
    %6277 = vmatpush1.bf16.msra.mxu0 %v6142
    %6278 = vmatprep.subr.bf16.mxu0 %v6141
    %6279 = vmatpush1.bf16.msra.mxu0 %v6140
    %6280 = vmatprep.subr.bf16.mxu0 %v6139
    %6281 = vmatpush1.bf16.msra.mxu0 %v6138
    %6282 = vmatprep.subr.bf16.mxu0 %v6169
    %6283 = vmatpush2.bf16.msra.mxu0 %v6168
    %6284 = vmatprep.subr.bf16.mxu0 %v6167
    %6285 = vmatpush2.bf16.msra.mxu0 %v6166
    %6286 = vmatprep.subr.bf16.mxu0 %v6165
    %6287 = vmatpush2.bf16.msra.mxu0 %v6164
    %6288 = vmatprep.subr.bf16.mxu0 %v6163
    %6289 = vmatpush2.bf16.msra.mxu0 %v6162
    %6290 = vmatprep.subr.bf16.mxu0 %v6161
    %6291 = vmatpush2.bf16.msra.mxu0 %v6160
    %6292 = vmatprep.subr.bf16.mxu0 %v6159
    %6293 = vmatpush2.bf16.msra.mxu0 %v6158
    %6294 = vmatprep.subr.bf16.mxu0 %v6157
    %6295 = vmatpush2.bf16.msra.mxu0 %v6156
    %6296 = vmatprep.subr.bf16.mxu0 %v6155
    %6297 = vmatpush2.bf16.msra.mxu0 %v6154
    %6298 = vmatprep.mubr.bf16.mxu0 %v5272
    %6299 = vmatmul.mubr.bf16.gmra.mxu0 %v5271
    %v6300 = vpop.f32.mrf.mxu0
    %v6301 = vadd.f32 %v5928, %v6300
    %v6302 = vpop.f32.mrf.mxu0
    %v6303 = vadd.f32 %v5930, %v6302
    %v6304 = vpop.f32.mrf.mxu0
    %v6305 = vadd.f32 %v5932, %v6304
    %v6306 = vpop.f32.mrf.mxu0
    %v6307 = vadd.f32 %v5934, %v6306
    %6308 = vmatprep.mubr.bf16.mxu0 %v5276
    %6309 = vmatmul.mubr.bf16.gmra.mxu0 %v5275
    %v6310 = vpop.f32.mrf.mxu0
    %v6311 = vadd.f32 %v5938, %v6310
    %v6312 = vpop.f32.mrf.mxu0
    %v6313 = vadd.f32 %v5940, %v6312
    %v6314 = vpop.f32.mrf.mxu0
    %v6315 = vadd.f32 %v5942, %v6314
    %v6316 = vpop.f32.mrf.mxu0
    %v6317 = vadd.f32 %v5944, %v6316
    %6318 = vdwg.mxu0
    %6319 = vmatprep.subr.bf16.mxu0 %v6185
    %6320 = vmatpush1.bf16.msra.mxu0 %v6184
    %6321 = vmatprep.subr.bf16.mxu0 %v6183
    %6322 = vmatpush1.bf16.msra.mxu0 %v6182
    %6323 = vmatprep.subr.bf16.mxu0 %v6181
    %6324 = vmatpush1.bf16.msra.mxu0 %v6180
    %6325 = vmatprep.subr.bf16.mxu0 %v6179
    %6326 = vmatpush1.bf16.msra.mxu0 %v6178
    %6327 = vmatprep.subr.bf16.mxu0 %v6177
    %6328 = vmatpush1.bf16.msra.mxu0 %v6176
    %6329 = vmatprep.subr.bf16.mxu0 %v6175
    %6330 = vmatpush1.bf16.msra.mxu0 %v6174
    %6331 = vmatprep.subr.bf16.mxu0 %v6173
    %6332 = vmatpush1.bf16.msra.mxu0 %v6172
    %6333 = vmatprep.subr.bf16.mxu0 %v6171
    %6334 = vmatpush1.bf16.msra.mxu0 %v6170
    %6335 = vmatprep.subr.bf16.mxu0 %v6201
    %6336 = vmatpush2.bf16.msra.mxu0 %v6200
    %6337 = vmatprep.subr.bf16.mxu0 %v6199
    %6338 = vmatpush2.bf16.msra.mxu0 %v6198
    %6339 = vmatprep.subr.bf16.mxu0 %v6197
    %6340 = vmatpush2.bf16.msra.mxu0 %v6196
    %6341 = vmatprep.subr.bf16.mxu0 %v6195
    %6342 = vmatpush2.bf16.msra.mxu0 %v6194
    %6343 = vmatprep.subr.bf16.mxu0 %v6193
    %6344 = vmatpush2.bf16.msra.mxu0 %v6192
    %6345 = vmatprep.subr.bf16.mxu0 %v6191
    %6346 = vmatpush2.bf16.msra.mxu0 %v6190
    %6347 = vmatprep.subr.bf16.mxu0 %v6189
    %6348 = vmatpush2.bf16.msra.mxu0 %v6188
    %6349 = vmatprep.subr.bf16.mxu0 %v6187
    %6350 = vmatpush2.bf16.msra.mxu0 %v6186
    %6351 = vmatprep.mubr.bf16.mxu0 %v5274
    %6352 = vmatmul.mubr.bf16.gmra.mxu0 %v5273
    %v6353 = vpop.f32.mrf.mxu0
    %v6354 = vadd.f32 %v6301, %v6353
    %v6355 = vpop.f32.mrf.mxu0
    %v6356 = vadd.f32 %v6303, %v6355
    %v6357 = vpop.f32.mrf.mxu0
    %v6358 = vadd.f32 %v6305, %v6357
    %v6359 = vpop.f32.mrf.mxu0
    %v6360 = vadd.f32 %v6307, %v6359
    %6361 = vmatprep.mubr.bf16.mxu0 %v5278
    %6362 = vmatmul.mubr.bf16.gmra.mxu0 %v5277
    %v6363 = vpop.f32.mrf.mxu0
    %v6364 = vadd.f32 %v6311, %v6363
    %v6365 = vpop.f32.mrf.mxu0
    %v6366 = vadd.f32 %v6313, %v6365
    %v6367 = vpop.f32.mrf.mxu0
    %v6368 = vadd.f32 %v6315, %v6367
    %v6369 = vpop.f32.mrf.mxu0
    %v6370 = vadd.f32 %v6317, %v6369
    %6371 = vdwg.mxu0
    %v6372 = vld [vmem:[#allocation2] sm:$0xf0]
    %v6373 = vld [vmem:[#allocation2 + $0x8] sm:$0xf0]
    %v6374 = vld [vmem:[#allocation2 + $0x10] sm:$0xf0]
    %v6375 = vld [vmem:[#allocation2 + $0x18] sm:$0xf0]
    %v6376 = vld [vmem:[#allocation2 + $0x40] sm:$0xf]
    %v6377 = vld [vmem:[#allocation2 + $0x48] sm:$0xf]
    %v6378 = vld [vmem:[#allocation2 + $0x50] sm:$0xf]
    %v6379 = vld [vmem:[#allocation2 + $0x58] sm:$0xf]
    %v6380 = vld [vmem:[#allocation2 + $0x60] sm:$0xf0]
    %v6381 = vld [vmem:[#allocation2 + $0x68] sm:$0xf0]
    %v6382 = vld [vmem:[#allocation2 + $0x70] sm:$0xf0]
    %v6383 = vld [vmem:[#allocation2 + $0x78] sm:$0xf0]
    %v6384 = vld [vmem:[#allocation2 + $0xa0] sm:$0xf]
    %v6385 = vld [vmem:[#allocation2 + $0xa8] sm:$0xf]
    %v6386 = vld [vmem:[#allocation2 + $0xb0] sm:$0xf]
    %v6387 = vld [vmem:[#allocation2 + $0xb8] sm:$0xf]
    %v6404 = vrot.slane %v6372, 4
    %v6405 = vrot.slane %v5347, 4
    %v6406 = vsel %vm1794, %v6404, %v6405
    %v6407 = vrot.slane %v6373, 4
    %v6408 = vrot.slane %v5348, 4
    %v6409 = vsel %vm1794, %v6407, %v6408
    %v6410 = vrot.slane %v6374, 4
    %v6411 = vrot.slane %v5349, 4
    %v6412 = vsel %vm1794, %v6410, %v6411
    %v6413 = vrot.slane %v6375, 4
    %v6414 = vrot.slane %v5350, 4
    %v6415 = vsel %vm1794, %v6413, %v6414
    %v6416 = vrot.slane %v6376, 4
    %v6417 = vsel %vm1794, %v6405, %v6416
    %v6418 = vrot.slane %v6377, 4
    %v6419 = vsel %vm1794, %v6408, %v6418
    %v6420 = vrot.slane %v6378, 4
    %v6421 = vsel %vm1794, %v6411, %v6420
    %v6422 = vrot.slane %v6379, 4
    %v6423 = vsel %vm1794, %v6414, %v6422
    %v6424 = vrot.slane %v6380, 4
    %v6425 = vrot.slane %v5359, 4
    %v6426 = vsel %vm1794, %v6424, %v6425
    %v6427 = vrot.slane %v6381, 4
    %v6428 = vrot.slane %v5360, 4
    %v6429 = vsel %vm1794, %v6427, %v6428
    %v6430 = vrot.slane %v6382, 4
    %v6431 = vrot.slane %v5361, 4
    %v6432 = vsel %vm1794, %v6430, %v6431
    %v6433 = vrot.slane %v6383, 4
    %v6434 = vrot.slane %v5362, 4
    %v6435 = vsel %vm1794, %v6433, %v6434
    %v6436 = vrot.slane %v6384, 4
    %v6437 = vsel %vm1794, %v6425, %v6436
    %v6438 = vrot.slane %v6385, 4
    %v6439 = vsel %vm1794, %v6428, %v6438
    %v6440 = vrot.slane %v6386, 4
    %v6441 = vsel %vm1794, %v6431, %v6440
    %v6442 = vrot.slane %v6387, 4
    %v6443 = vsel %vm1794, %v6434, %v6442
    %v6460 = vpack.c.bf16 %v6417, %v6406
    %v6461 = vpack.c.bf16 %v6419, %v6409
    %v6462 = vpack.c.bf16 %v6421, %v6412
    %v6463 = vpack.c.bf16 %v6423, %v6415
    %v6464 = vpack.c.bf16 %v6437, %v6426
    %v6465 = vpack.c.bf16 %v6439, %v6429
    %v6466 = vpack.c.bf16 %v6441, %v6432
    %v6467 = vpack.c.bf16 %v6443, %v6435
    %s6468 = scalar_lea.vmem [#allocation15], 1024
    %v6469 = vld [vmem:[%s6468] sm:$0xff]
    %v6470 = vld [vmem:[%s6468 + $0x8] sm:$0xff]
    %v6471 = vld [vmem:[%s6468 + $0x10] sm:$0xff]
    %v6472 = vld [vmem:[%s6468 + $0x18] sm:$0xff]
    %v6473 = vld [vmem:[%s6468 + $0x20] sm:$0xff]
    %v6474 = vld [vmem:[%s6468 + $0x28] sm:$0xff]
    %v6475 = vld [vmem:[%s6468 + $0x30] sm:$0xff]
    %v6476 = vld [vmem:[%s6468 + $0x38] sm:$0xff]
    %v6477 = vld [vmem:[%s6468 + $0x40] sm:$0xff]
    %v6478 = vld [vmem:[%s6468 + $0x48] sm:$0xff]
    %v6479 = vld [vmem:[%s6468 + $0x50] sm:$0xff]
    %v6480 = vld [vmem:[%s6468 + $0x58] sm:$0xff]
    %v6481 = vld [vmem:[%s6468 + $0x60] sm:$0xff]
    %v6482 = vld [vmem:[%s6468 + $0x68] sm:$0xff]
    %v6483 = vld [vmem:[%s6468 + $0x70] sm:$0xff]
    %v6484 = vld [vmem:[%s6468 + $0x78] sm:$0xff]
    %v6485 = vld [vmem:[%s6468 + $0x80] sm:$0xff]
    %v6486 = vld [vmem:[%s6468 + $0x88] sm:$0xff]
    %v6487 = vld [vmem:[%s6468 + $0x90] sm:$0xff]
    %v6488 = vld [vmem:[%s6468 + $0x98] sm:$0xff]
    %v6489 = vld [vmem:[%s6468 + $0xa0] sm:$0xff]
    %v6490 = vld [vmem:[%s6468 + $0xa8] sm:$0xff]
    %v6491 = vld [vmem:[%s6468 + $0xb0] sm:$0xff]
    %v6492 = vld [vmem:[%s6468 + $0xb8] sm:$0xff]
    %v6493 = vld [vmem:[%s6468 + $0xc0] sm:$0xff]
    %v6494 = vld [vmem:[%s6468 + $0xc8] sm:$0xff]
    %v6495 = vld [vmem:[%s6468 + $0xd0] sm:$0xff]
    %v6496 = vld [vmem:[%s6468 + $0xd8] sm:$0xff]
    %v6497 = vld [vmem:[%s6468 + $0xe0] sm:$0xff]
    %v6498 = vld [vmem:[%s6468 + $0xe8] sm:$0xff]
    %v6499 = vld [vmem:[%s6468 + $0xf0] sm:$0xff]
    %v6500 = vld [vmem:[%s6468 + $0xf8] sm:$0xff]
    %v6501 = vld [vmem:[%s6468 + $0x100] sm:$0xff]
    %v6502 = vld [vmem:[%s6468 + $0x108] sm:$0xff]
    %v6503 = vld [vmem:[%s6468 + $0x110] sm:$0xff]
    %v6504 = vld [vmem:[%s6468 + $0x118] sm:$0xff]
    %v6505 = vld [vmem:[%s6468 + $0x120] sm:$0xff]
    %v6506 = vld [vmem:[%s6468 + $0x128] sm:$0xff]
    %v6507 = vld [vmem:[%s6468 + $0x130] sm:$0xff]
    %v6508 = vld [vmem:[%s6468 + $0x138] sm:$0xff]
    %v6509 = vld [vmem:[%s6468 + $0x140] sm:$0xff]
    %v6510 = vld [vmem:[%s6468 + $0x148] sm:$0xff]
    %v6511 = vld [vmem:[%s6468 + $0x150] sm:$0xff]
    %v6512 = vld [vmem:[%s6468 + $0x158] sm:$0xff]
    %v6513 = vld [vmem:[%s6468 + $0x160] sm:$0xff]
    %v6514 = vld [vmem:[%s6468 + $0x168] sm:$0xff]
    %v6515 = vld [vmem:[%s6468 + $0x170] sm:$0xff]
    %v6516 = vld [vmem:[%s6468 + $0x178] sm:$0xff]
    %v6517 = vld [vmem:[%s6468 + $0x180] sm:$0xff]
    %v6518 = vld [vmem:[%s6468 + $0x188] sm:$0xff]
    %v6519 = vld [vmem:[%s6468 + $0x190] sm:$0xff]
    %v6520 = vld [vmem:[%s6468 + $0x198] sm:$0xff]
    %v6521 = vld [vmem:[%s6468 + $0x1a0] sm:$0xff]
    %v6522 = vld [vmem:[%s6468 + $0x1a8] sm:$0xff]
    %v6523 = vld [vmem:[%s6468 + $0x1b0] sm:$0xff]
    %v6524 = vld [vmem:[%s6468 + $0x1b8] sm:$0xff]
    %v6525 = vld [vmem:[%s6468 + $0x1c0] sm:$0xff]
    %v6526 = vld [vmem:[%s6468 + $0x1c8] sm:$0xff]
    %v6527 = vld [vmem:[%s6468 + $0x1d0] sm:$0xff]
    %v6528 = vld [vmem:[%s6468 + $0x1d8] sm:$0xff]
    %v6529 = vld [vmem:[%s6468 + $0x1e0] sm:$0xff]
    %v6530 = vld [vmem:[%s6468 + $0x1e8] sm:$0xff]
    %v6531 = vld [vmem:[%s6468 + $0x1f0] sm:$0xff]
    %v6532 = vld [vmem:[%s6468 + $0x1f8] sm:$0xff]
    %v6597 = vunpack.c.l.b16 %v6469
    %v6598 = vunpack.c.h.b16 %v6469
    %v6599 = vunpack.c.l.b16 %v6470
    %v6600 = vunpack.c.h.b16 %v6470
    %v6601 = vunpack.c.l.b16 %v6471
    %v6602 = vunpack.c.h.b16 %v6471
    %v6603 = vunpack.c.l.b16 %v6472
    %v6604 = vunpack.c.h.b16 %v6472
    %v6605 = vunpack.c.l.b16 %v6473
    %v6606 = vunpack.c.h.b16 %v6473
    %v6607 = vunpack.c.l.b16 %v6474
    %v6608 = vunpack.c.h.b16 %v6474
    %v6609 = vunpack.c.l.b16 %v6475
    %v6610 = vunpack.c.h.b16 %v6475
    %v6611 = vunpack.c.l.b16 %v6476
    %v6612 = vunpack.c.h.b16 %v6476
    %v6613 = vunpack.c.l.b16 %v6477
    %v6614 = vunpack.c.h.b16 %v6477
    %v6615 = vunpack.c.l.b16 %v6478
    %v6616 = vunpack.c.h.b16 %v6478
    %v6617 = vunpack.c.l.b16 %v6479
    %v6618 = vunpack.c.h.b16 %v6479
    %v6619 = vunpack.c.l.b16 %v6480
    %v6620 = vunpack.c.h.b16 %v6480
    %v6621 = vunpack.c.l.b16 %v6481
    %v6622 = vunpack.c.h.b16 %v6481
    %v6623 = vunpack.c.l.b16 %v6482
    %v6624 = vunpack.c.h.b16 %v6482
    %v6625 = vunpack.c.l.b16 %v6483
    %v6626 = vunpack.c.h.b16 %v6483
    %v6627 = vunpack.c.l.b16 %v6484
    %v6628 = vunpack.c.h.b16 %v6484
    %v6629 = vunpack.c.l.b16 %v6485
    %v6630 = vunpack.c.h.b16 %v6485
    %v6631 = vunpack.c.l.b16 %v6486
    %v6632 = vunpack.c.h.b16 %v6486
    %v6633 = vunpack.c.l.b16 %v6487
    %v6634 = vunpack.c.h.b16 %v6487
    %v6635 = vunpack.c.l.b16 %v6488
    %v6636 = vunpack.c.h.b16 %v6488
    %v6637 = vunpack.c.l.b16 %v6489
    %v6638 = vunpack.c.h.b16 %v6489
    %v6639 = vunpack.c.l.b16 %v6490
    %v6640 = vunpack.c.h.b16 %v6490
    %v6641 = vunpack.c.l.b16 %v6491
    %v6642 = vunpack.c.h.b16 %v6491
    %v6643 = vunpack.c.l.b16 %v6492
    %v6644 = vunpack.c.h.b16 %v6492
    %v6645 = vunpack.c.l.b16 %v6493
    %v6646 = vunpack.c.h.b16 %v6493
    %v6647 = vunpack.c.l.b16 %v6494
    %v6648 = vunpack.c.h.b16 %v6494
    %v6649 = vunpack.c.l.b16 %v6495
    %v6650 = vunpack.c.h.b16 %v6495
    %v6651 = vunpack.c.l.b16 %v6496
    %v6652 = vunpack.c.h.b16 %v6496
    %v6653 = vunpack.c.l.b16 %v6497
    %v6654 = vunpack.c.h.b16 %v6497
    %v6655 = vunpack.c.l.b16 %v6498
    %v6656 = vunpack.c.h.b16 %v6498
    %v6657 = vunpack.c.l.b16 %v6499
    %v6658 = vunpack.c.h.b16 %v6499
    %v6659 = vunpack.c.l.b16 %v6500
    %v6660 = vunpack.c.h.b16 %v6500
    %v6661 = vunpack.c.l.b16 %v6501
    %v6662 = vunpack.c.h.b16 %v6501
    %v6663 = vunpack.c.l.b16 %v6502
    %v6664 = vunpack.c.h.b16 %v6502
    %v6665 = vunpack.c.l.b16 %v6503
    %v6666 = vunpack.c.h.b16 %v6503
    %v6667 = vunpack.c.l.b16 %v6504
    %v6668 = vunpack.c.h.b16 %v6504
    %v6669 = vunpack.c.l.b16 %v6505
    %v6670 = vunpack.c.h.b16 %v6505
    %v6671 = vunpack.c.l.b16 %v6506
    %v6672 = vunpack.c.h.b16 %v6506
    %v6673 = vunpack.c.l.b16 %v6507
    %v6674 = vunpack.c.h.b16 %v6507
    %v6675 = vunpack.c.l.b16 %v6508
    %v6676 = vunpack.c.h.b16 %v6508
    %v6677 = vunpack.c.l.b16 %v6509
    %v6678 = vunpack.c.h.b16 %v6509
    %v6679 = vunpack.c.l.b16 %v6510
    %v6680 = vunpack.c.h.b16 %v6510
    %v6681 = vunpack.c.l.b16 %v6511
    %v6682 = vunpack.c.h.b16 %v6511
    %v6683 = vunpack.c.l.b16 %v6512
    %v6684 = vunpack.c.h.b16 %v6512
    %v6685 = vunpack.c.l.b16 %v6513
    %v6686 = vunpack.c.h.b16 %v6513
    %v6687 = vunpack.c.l.b16 %v6514
    %v6688 = vunpack.c.h.b16 %v6514
    %v6689 = vunpack.c.l.b16 %v6515
    %v6690 = vunpack.c.h.b16 %v6515
    %v6691 = vunpack.c.l.b16 %v6516
    %v6692 = vunpack.c.h.b16 %v6516
    %v6693 = vunpack.c.l.b16 %v6517
    %v6694 = vunpack.c.h.b16 %v6517
    %v6695 = vunpack.c.l.b16 %v6518
    %v6696 = vunpack.c.h.b16 %v6518
    %v6697 = vunpack.c.l.b16 %v6519
    %v6698 = vunpack.c.h.b16 %v6519
    %v6699 = vunpack.c.l.b16 %v6520
    %v6700 = vunpack.c.h.b16 %v6520
    %v6701 = vunpack.c.l.b16 %v6521
    %v6702 = vunpack.c.h.b16 %v6521
    %v6703 = vunpack.c.l.b16 %v6522
    %v6704 = vunpack.c.h.b16 %v6522
    %v6705 = vunpack.c.l.b16 %v6523
    %v6706 = vunpack.c.h.b16 %v6523
    %v6707 = vunpack.c.l.b16 %v6524
    %v6708 = vunpack.c.h.b16 %v6524
    %v6709 = vunpack.c.l.b16 %v6525
    %v6710 = vunpack.c.h.b16 %v6525
    %v6711 = vunpack.c.l.b16 %v6526
    %v6712 = vunpack.c.h.b16 %v6526
    %v6713 = vunpack.c.l.b16 %v6527
    %v6714 = vunpack.c.h.b16 %v6527
    %v6715 = vunpack.c.l.b16 %v6528
    %v6716 = vunpack.c.h.b16 %v6528
    %v6717 = vunpack.c.l.b16 %v6529
    %v6718 = vunpack.c.h.b16 %v6529
    %v6719 = vunpack.c.l.b16 %v6530
    %v6720 = vunpack.c.h.b16 %v6530
    %v6721 = vunpack.c.l.b16 %v6531
    %v6722 = vunpack.c.h.b16 %v6531
    %v6723 = vunpack.c.l.b16 %v6532
    %v6724 = vunpack.c.h.b16 %v6532
    %v6725 = vpack.c.b16 %v6599, %v6597
    %v6726 = vpack.c.b16 %v6600, %v6598
    %v6727 = vpack.c.b16 %v6603, %v6601
    %v6728 = vpack.c.b16 %v6604, %v6602
    %v6729 = vpack.c.b16 %v6607, %v6605
    %v6730 = vpack.c.b16 %v6608, %v6606
    %v6731 = vpack.c.b16 %v6611, %v6609
    %v6732 = vpack.c.b16 %v6612, %v6610
    %v6733 = vpack.c.b16 %v6615, %v6613
    %v6734 = vpack.c.b16 %v6616, %v6614
    %v6735 = vpack.c.b16 %v6619, %v6617
    %v6736 = vpack.c.b16 %v6620, %v6618
    %v6737 = vpack.c.b16 %v6623, %v6621
    %v6738 = vpack.c.b16 %v6624, %v6622
    %v6739 = vpack.c.b16 %v6627, %v6625
    %v6740 = vpack.c.b16 %v6628, %v6626
    %v6741 = vpack.c.b16 %v6631, %v6629
    %v6742 = vpack.c.b16 %v6632, %v6630
    %v6743 = vpack.c.b16 %v6635, %v6633
    %v6744 = vpack.c.b16 %v6636, %v6634
    %v6745 = vpack.c.b16 %v6639, %v6637
    %v6746 = vpack.c.b16 %v6640, %v6638
    %v6747 = vpack.c.b16 %v6643, %v6641
    %v6748 = vpack.c.b16 %v6644, %v6642
    %v6749 = vpack.c.b16 %v6647, %v6645
    %v6750 = vpack.c.b16 %v6648, %v6646
    %v6751 = vpack.c.b16 %v6651, %v6649
    %v6752 = vpack.c.b16 %v6652, %v6650
    %v6753 = vpack.c.b16 %v6655, %v6653
    %v6754 = vpack.c.b16 %v6656, %v6654
    %v6755 = vpack.c.b16 %v6659, %v6657
    %v6756 = vpack.c.b16 %v6660, %v6658
    %v6757 = vpack.c.b16 %v6663, %v6661
    %v6758 = vpack.c.b16 %v6664, %v6662
    %v6759 = vpack.c.b16 %v6667, %v6665
    %v6760 = vpack.c.b16 %v6668, %v6666
    %v6761 = vpack.c.b16 %v6671, %v6669
    %v6762 = vpack.c.b16 %v6672, %v6670
    %v6763 = vpack.c.b16 %v6675, %v6673
    %v6764 = vpack.c.b16 %v6676, %v6674
    %v6765 = vpack.c.b16 %v6679, %v6677
    %v6766 = vpack.c.b16 %v6680, %v6678
    %v6767 = vpack.c.b16 %v6683, %v6681
    %v6768 = vpack.c.b16 %v6684, %v6682
    %v6769 = vpack.c.b16 %v6687, %v6685
    %v6770 = vpack.c.b16 %v6688, %v6686
    %v6771 = vpack.c.b16 %v6691, %v6689
    %v6772 = vpack.c.b16 %v6692, %v6690
    %v6773 = vpack.c.b16 %v6695, %v6693
    %v6774 = vpack.c.b16 %v6696, %v6694
    %v6775 = vpack.c.b16 %v6699, %v6697
    %v6776 = vpack.c.b16 %v6700, %v6698
    %v6777 = vpack.c.b16 %v6703, %v6701
    %v6778 = vpack.c.b16 %v6704, %v6702
    %v6779 = vpack.c.b16 %v6707, %v6705
    %v6780 = vpack.c.b16 %v6708, %v6706
    %v6781 = vpack.c.b16 %v6711, %v6709
    %v6782 = vpack.c.b16 %v6712, %v6710
    %v6783 = vpack.c.b16 %v6715, %v6713
    %v6784 = vpack.c.b16 %v6716, %v6714
    %v6785 = vpack.c.b16 %v6719, %v6717
    %v6786 = vpack.c.b16 %v6720, %v6718
    %v6787 = vpack.c.b16 %v6723, %v6721
    %v6788 = vpack.c.b16 %v6724, %v6722
    %6853 = vmatprep.subr.bf16.mxu0 %v6740
    %6854 = vmatpush1.bf16.msra.mxu0 %v6739
    %6855 = vmatprep.subr.bf16.mxu0 %v6738
    %6856 = vmatpush1.bf16.msra.mxu0 %v6737
    %6857 = vmatprep.subr.bf16.mxu0 %v6736
    %6858 = vmatpush1.bf16.msra.mxu0 %v6735
    %6859 = vmatprep.subr.bf16.mxu0 %v6734
    %6860 = vmatpush1.bf16.msra.mxu0 %v6733
    %6861 = vmatprep.subr.bf16.mxu0 %v6732
    %6862 = vmatpush1.bf16.msra.mxu0 %v6731
    %6863 = vmatprep.subr.bf16.mxu0 %v6730
    %6864 = vmatpush1.bf16.msra.mxu0 %v6729
    %6865 = vmatprep.subr.bf16.mxu0 %v6728
    %6866 = vmatpush1.bf16.msra.mxu0 %v6727
    %6867 = vmatprep.subr.bf16.mxu0 %v6726
    %6868 = vmatpush1.bf16.msra.mxu0 %v6725
    %6869 = vmatprep.subr.bf16.mxu0 %v6756
    %6870 = vmatpush2.bf16.msra.mxu0 %v6755
    %6871 = vmatprep.subr.bf16.mxu0 %v6754
    %6872 = vmatpush2.bf16.msra.mxu0 %v6753
    %6873 = vmatprep.subr.bf16.mxu0 %v6752
    %6874 = vmatpush2.bf16.msra.mxu0 %v6751
    %6875 = vmatprep.subr.bf16.mxu0 %v6750
    %6876 = vmatpush2.bf16.msra.mxu0 %v6749
    %6877 = vmatprep.subr.bf16.mxu0 %v6748
    %6878 = vmatpush2.bf16.msra.mxu0 %v6747
    %6879 = vmatprep.subr.bf16.mxu0 %v6746
    %6880 = vmatpush2.bf16.msra.mxu0 %v6745
    %6881 = vmatprep.subr.bf16.mxu0 %v6744
    %6882 = vmatpush2.bf16.msra.mxu0 %v6743
    %6883 = vmatprep.subr.bf16.mxu0 %v6742
    %6884 = vmatpush2.bf16.msra.mxu0 %v6741
    %6885 = vmatprep.mubr.bf16.mxu0 %v6461
    %6886 = vmatmul.mubr.bf16.gmra.mxu0 %v6460
    %v6887 = vpop.f32.mrf.mxu0
    %v6888 = vadd.f32 0.0, %v6887
    %v6889 = vpop.f32.mrf.mxu0
    %v6890 = vadd.f32 0.0, %v6889
    %v6891 = vpop.f32.mrf.mxu0
    %v6892 = vadd.f32 0.0, %v6891
    %v6893 = vpop.f32.mrf.mxu0
    %v6894 = vadd.f32 0.0, %v6893
    %6895 = vmatprep.mubr.bf16.mxu0 %v6465
    %6896 = vmatmul.mubr.bf16.gmra.mxu0 %v6464
    %v6897 = vpop.f32.mrf.mxu0
    %v6898 = vadd.f32 0.0, %v6897
    %v6899 = vpop.f32.mrf.mxu0
    %v6900 = vadd.f32 0.0, %v6899
    %v6901 = vpop.f32.mrf.mxu0
    %v6902 = vadd.f32 0.0, %v6901
    %v6903 = vpop.f32.mrf.mxu0
    %v6904 = vadd.f32 0.0, %v6903
    %6905 = vdwg.mxu0
    %6906 = vmatprep.subr.bf16.mxu0 %v6772
    %6907 = vmatpush1.bf16.msra.mxu0 %v6771
    %6908 = vmatprep.subr.bf16.mxu0 %v6770
    %6909 = vmatpush1.bf16.msra.mxu0 %v6769
    %6910 = vmatprep.subr.bf16.mxu0 %v6768
    %6911 = vmatpush1.bf16.msra.mxu0 %v6767
    %6912 = vmatprep.subr.bf16.mxu0 %v6766
    %6913 = vmatpush1.bf16.msra.mxu0 %v6765
    %6914 = vmatprep.subr.bf16.mxu0 %v6764
    %6915 = vmatpush1.bf16.msra.mxu0 %v6763
    %6916 = vmatprep.subr.bf16.mxu0 %v6762
    %6917 = vmatpush1.bf16.msra.mxu0 %v6761
    %6918 = vmatprep.subr.bf16.mxu0 %v6760
    %6919 = vmatpush1.bf16.msra.mxu0 %v6759
    %6920 = vmatprep.subr.bf16.mxu0 %v6758
    %6921 = vmatpush1.bf16.msra.mxu0 %v6757
    %6922 = vmatprep.subr.bf16.mxu0 %v6788
    %6923 = vmatpush2.bf16.msra.mxu0 %v6787
    %6924 = vmatprep.subr.bf16.mxu0 %v6786
    %6925 = vmatpush2.bf16.msra.mxu0 %v6785
    %6926 = vmatprep.subr.bf16.mxu0 %v6784
    %6927 = vmatpush2.bf16.msra.mxu0 %v6783
    %6928 = vmatprep.subr.bf16.mxu0 %v6782
    %6929 = vmatpush2.bf16.msra.mxu0 %v6781
    %6930 = vmatprep.subr.bf16.mxu0 %v6780
    %6931 = vmatpush2.bf16.msra.mxu0 %v6779
    %6932 = vmatprep.subr.bf16.mxu0 %v6778
    %6933 = vmatpush2.bf16.msra.mxu0 %v6777
    %6934 = vmatprep.subr.bf16.mxu0 %v6776
    %6935 = vmatpush2.bf16.msra.mxu0 %v6775
    %6936 = vmatprep.subr.bf16.mxu0 %v6774
    %6937 = vmatpush2.bf16.msra.mxu0 %v6773
    %6938 = vmatprep.mubr.bf16.mxu0 %v6463
    %6939 = vmatmul.mubr.bf16.gmra.mxu0 %v6462
    %v6940 = vpop.f32.mrf.mxu0
    %v6941 = vadd.f32 %v6888, %v6940
    %v6942 = vpop.f32.mrf.mxu0
    %v6943 = vadd.f32 %v6890, %v6942
    %v6944 = vpop.f32.mrf.mxu0
    %v6945 = vadd.f32 %v6892, %v6944
    %v6946 = vpop.f32.mrf.mxu0
    %v6947 = vadd.f32 %v6894, %v6946
    %6948 = vmatprep.mubr.bf16.mxu0 %v6467
    %6949 = vmatmul.mubr.bf16.gmra.mxu0 %v6466
    %v6950 = vpop.f32.mrf.mxu0
    %v6951 = vadd.f32 %v6898, %v6950
    %v6952 = vpop.f32.mrf.mxu0
    %v6953 = vadd.f32 %v6900, %v6952
    %v6954 = vpop.f32.mrf.mxu0
    %v6955 = vadd.f32 %v6902, %v6954
    %v6956 = vpop.f32.mrf.mxu0
    %v6957 = vadd.f32 %v6904, %v6956
    %6958 = vdwg.mxu0
    %v6959 = vadd.f32 %v6354, %v6941
    %v6960 = vadd.f32 %v6356, %v6943
    %v6961 = vadd.f32 %v6358, %v6945
    %v6962 = vadd.f32 %v6360, %v6947
    %v6963 = vadd.f32 %v6364, %v6951
    %v6964 = vadd.f32 %v6366, %v6953
    %v6965 = vadd.f32 %v6368, %v6955
    %v6966 = vadd.f32 %v6370, %v6957
    %v6967 = vld [vmem:[#allocation2] sm:$0xc0]
    %v6968 = vld [vmem:[#allocation2 + $0x8] sm:$0xc0]
    %v6969 = vld [vmem:[#allocation2 + $0x10] sm:$0xc0]
    %v6970 = vld [vmem:[#allocation2 + $0x18] sm:$0xc0]
    %v6971 = vld [vmem:[#allocation2 + $0x40] sm:$0x3f]
    %v6972 = vld [vmem:[#allocation2 + $0x48] sm:$0x3f]
    %v6973 = vld [vmem:[#allocation2 + $0x50] sm:$0x3f]
    %v6974 = vld [vmem:[#allocation2 + $0x58] sm:$0x3f]
    %v6975 = vld [vmem:[#allocation2 + $0x60] sm:$0xc0]
    %v6976 = vld [vmem:[#allocation2 + $0x68] sm:$0xc0]
    %v6977 = vld [vmem:[#allocation2 + $0x70] sm:$0xc0]
    %v6978 = vld [vmem:[#allocation2 + $0x78] sm:$0xc0]
    %v6979 = vld [vmem:[#allocation2 + $0xa0] sm:$0x3f]
    %v6980 = vld [vmem:[#allocation2 + $0xa8] sm:$0x3f]
    %v6981 = vld [vmem:[#allocation2 + $0xb0] sm:$0x3f]
    %v6982 = vld [vmem:[#allocation2 + $0xb8] sm:$0x3f]
    %v6999 = vrot.slane %v6967, 6
    %v7000 = vrot.slane %v5347, 6
    %v7001 = vsel %vm4281, %v6999, %v7000
    %v7002 = vrot.slane %v6968, 6
    %v7003 = vrot.slane %v5348, 6
    %v7004 = vsel %vm4281, %v7002, %v7003
    %v7005 = vrot.slane %v6969, 6
    %v7006 = vrot.slane %v5349, 6
    %v7007 = vsel %vm4281, %v7005, %v7006
    %v7008 = vrot.slane %v6970, 6
    %v7009 = vrot.slane %v5350, 6
    %v7010 = vsel %vm4281, %v7008, %v7009
    %v7011 = vrot.slane %v6971, 6
    %v7012 = vsel %vm4281, %v7000, %v7011
    %v7013 = vrot.slane %v6972, 6
    %v7014 = vsel %vm4281, %v7003, %v7013
    %v7015 = vrot.slane %v6973, 6
    %v7016 = vsel %vm4281, %v7006, %v7015
    %v7017 = vrot.slane %v6974, 6
    %v7018 = vsel %vm4281, %v7009, %v7017
    %v7019 = vrot.slane %v6975, 6
    %v7020 = vrot.slane %v5359, 6
    %v7021 = vsel %vm4281, %v7019, %v7020
    %v7022 = vrot.slane %v6976, 6
    %v7023 = vrot.slane %v5360, 6
    %v7024 = vsel %vm4281, %v7022, %v7023
    %v7025 = vrot.slane %v6977, 6
    %v7026 = vrot.slane %v5361, 6
    %v7027 = vsel %vm4281, %v7025, %v7026
    %v7028 = vrot.slane %v6978, 6
    %v7029 = vrot.slane %v5362, 6
    %v7030 = vsel %vm4281, %v7028, %v7029
    %v7031 = vrot.slane %v6979, 6
    %v7032 = vsel %vm4281, %v7020, %v7031
    %v7033 = vrot.slane %v6980, 6
    %v7034 = vsel %vm4281, %v7023, %v7033
    %v7035 = vrot.slane %v6981, 6
    %v7036 = vsel %vm4281, %v7026, %v7035
    %v7037 = vrot.slane %v6982, 6
    %v7038 = vsel %vm4281, %v7029, %v7037
    %v7055 = vpack.c.bf16 %v7012, %v7001
    %v7056 = vpack.c.bf16 %v7014, %v7004
    %v7057 = vpack.c.bf16 %v7016, %v7007
    %v7058 = vpack.c.bf16 %v7018, %v7010
    %v7059 = vpack.c.bf16 %v7032, %v7021
    %v7060 = vpack.c.bf16 %v7034, %v7024
    %v7061 = vpack.c.bf16 %v7036, %v7027
    %v7062 = vpack.c.bf16 %v7038, %v7030
    %s7063 = scalar_lea.vmem [#allocation15], 1536
    %v7064 = vld [vmem:[%s7063] sm:$0xff]
    %v7065 = vld [vmem:[%s7063 + $0x8] sm:$0xff]
    %v7066 = vld [vmem:[%s7063 + $0x10] sm:$0xff]
    %v7067 = vld [vmem:[%s7063 + $0x18] sm:$0xff]
    %v7068 = vld [vmem:[%s7063 + $0x20] sm:$0xff]
    %v7069 = vld [vmem:[%s7063 + $0x28] sm:$0xff]
    %v7070 = vld [vmem:[%s7063 + $0x30] sm:$0xff]
    %v7071 = vld [vmem:[%s7063 + $0x38] sm:$0xff]
    %v7072 = vld [vmem:[%s7063 + $0x40] sm:$0xff]
    %v7073 = vld [vmem:[%s7063 + $0x48] sm:$0xff]
    %v7074 = vld [vmem:[%s7063 + $0x50] sm:$0xff]
    %v7075 = vld [vmem:[%s7063 + $0x58] sm:$0xff]
    %v7076 = vld [vmem:[%s7063 + $0x60] sm:$0xff]
    %v7077 = vld [vmem:[%s7063 + $0x68] sm:$0xff]
    %v7078 = vld [vmem:[%s7063 + $0x70] sm:$0xff]
    %v7079 = vld [vmem:[%s7063 + $0x78] sm:$0xff]
    %v7080 = vld [vmem:[%s7063 + $0x80] sm:$0xff]
    %v7081 = vld [vmem:[%s7063 + $0x88] sm:$0xff]
    %v7082 = vld [vmem:[%s7063 + $0x90] sm:$0xff]
    %v7083 = vld [vmem:[%s7063 + $0x98] sm:$0xff]
    %v7084 = vld [vmem:[%s7063 + $0xa0] sm:$0xff]
    %v7085 = vld [vmem:[%s7063 + $0xa8] sm:$0xff]
    %v7086 = vld [vmem:[%s7063 + $0xb0] sm:$0xff]
    %v7087 = vld [vmem:[%s7063 + $0xb8] sm:$0xff]
    %v7088 = vld [vmem:[%s7063 + $0xc0] sm:$0xff]
    %v7089 = vld [vmem:[%s7063 + $0xc8] sm:$0xff]
    %v7090 = vld [vmem:[%s7063 + $0xd0] sm:$0xff]
    %v7091 = vld [vmem:[%s7063 + $0xd8] sm:$0xff]
    %v7092 = vld [vmem:[%s7063 + $0xe0] sm:$0xff]
    %v7093 = vld [vmem:[%s7063 + $0xe8] sm:$0xff]
    %v7094 = vld [vmem:[%s7063 + $0xf0] sm:$0xff]
    %v7095 = vld [vmem:[%s7063 + $0xf8] sm:$0xff]
    %v7096 = vld [vmem:[%s7063 + $0x100] sm:$0xff]
    %v7097 = vld [vmem:[%s7063 + $0x108] sm:$0xff]
    %v7098 = vld [vmem:[%s7063 + $0x110] sm:$0xff]
    %v7099 = vld [vmem:[%s7063 + $0x118] sm:$0xff]
    %v7100 = vld [vmem:[%s7063 + $0x120] sm:$0xff]
    %v7101 = vld [vmem:[%s7063 + $0x128] sm:$0xff]
    %v7102 = vld [vmem:[%s7063 + $0x130] sm:$0xff]
    %v7103 = vld [vmem:[%s7063 + $0x138] sm:$0xff]
    %v7104 = vld [vmem:[%s7063 + $0x140] sm:$0xff]
    %v7105 = vld [vmem:[%s7063 + $0x148] sm:$0xff]
    %v7106 = vld [vmem:[%s7063 + $0x150] sm:$0xff]
    %v7107 = vld [vmem:[%s7063 + $0x158] sm:$0xff]
    %v7108 = vld [vmem:[%s7063 + $0x160] sm:$0xff]
    %v7109 = vld [vmem:[%s7063 + $0x168] sm:$0xff]
    %v7110 = vld [vmem:[%s7063 + $0x170] sm:$0xff]
    %v7111 = vld [vmem:[%s7063 + $0x178] sm:$0xff]
    %v7112 = vld [vmem:[%s7063 + $0x180] sm:$0xff]
    %v7113 = vld [vmem:[%s7063 + $0x188] sm:$0xff]
    %v7114 = vld [vmem:[%s7063 + $0x190] sm:$0xff]
    %v7115 = vld [vmem:[%s7063 + $0x198] sm:$0xff]
    %v7116 = vld [vmem:[%s7063 + $0x1a0] sm:$0xff]
    %v7117 = vld [vmem:[%s7063 + $0x1a8] sm:$0xff]
    %v7118 = vld [vmem:[%s7063 + $0x1b0] sm:$0xff]
    %v7119 = vld [vmem:[%s7063 + $0x1b8] sm:$0xff]
    %v7120 = vld [vmem:[%s7063 + $0x1c0] sm:$0xff]
    %v7121 = vld [vmem:[%s7063 + $0x1c8] sm:$0xff]
    %v7122 = vld [vmem:[%s7063 + $0x1d0] sm:$0xff]
    %v7123 = vld [vmem:[%s7063 + $0x1d8] sm:$0xff]
    %v7124 = vld [vmem:[%s7063 + $0x1e0] sm:$0xff]
    %v7125 = vld [vmem:[%s7063 + $0x1e8] sm:$0xff]
    %v7126 = vld [vmem:[%s7063 + $0x1f0] sm:$0xff]
    %v7127 = vld [vmem:[%s7063 + $0x1f8] sm:$0xff]
    %v7192 = vunpack.c.l.b16 %v7064
    %v7193 = vunpack.c.h.b16 %v7064
    %v7194 = vunpack.c.l.b16 %v7065
    %v7195 = vunpack.c.h.b16 %v7065
    %v7196 = vunpack.c.l.b16 %v7066
    %v7197 = vunpack.c.h.b16 %v7066
    %v7198 = vunpack.c.l.b16 %v7067
    %v7199 = vunpack.c.h.b16 %v7067
    %v7200 = vunpack.c.l.b16 %v7068
    %v7201 = vunpack.c.h.b16 %v7068
    %v7202 = vunpack.c.l.b16 %v7069
    %v7203 = vunpack.c.h.b16 %v7069
    %v7204 = vunpack.c.l.b16 %v7070
    %v7205 = vunpack.c.h.b16 %v7070
    %v7206 = vunpack.c.l.b16 %v7071
    %v7207 = vunpack.c.h.b16 %v7071
    %v7208 = vunpack.c.l.b16 %v7072
    %v7209 = vunpack.c.h.b16 %v7072
    %v7210 = vunpack.c.l.b16 %v7073
    %v7211 = vunpack.c.h.b16 %v7073
    %v7212 = vunpack.c.l.b16 %v7074
    %v7213 = vunpack.c.h.b16 %v7074
    %v7214 = vunpack.c.l.b16 %v7075
    %v7215 = vunpack.c.h.b16 %v7075
    %v7216 = vunpack.c.l.b16 %v7076
    %v7217 = vunpack.c.h.b16 %v7076
    %v7218 = vunpack.c.l.b16 %v7077
    %v7219 = vunpack.c.h.b16 %v7077
    %v7220 = vunpack.c.l.b16 %v7078
    %v7221 = vunpack.c.h.b16 %v7078
    %v7222 = vunpack.c.l.b16 %v7079
    %v7223 = vunpack.c.h.b16 %v7079
    %v7224 = vunpack.c.l.b16 %v7080
    %v7225 = vunpack.c.h.b16 %v7080
    %v7226 = vunpack.c.l.b16 %v7081
    %v7227 = vunpack.c.h.b16 %v7081
    %v7228 = vunpack.c.l.b16 %v7082
    %v7229 = vunpack.c.h.b16 %v7082
    %v7230 = vunpack.c.l.b16 %v7083
    %v7231 = vunpack.c.h.b16 %v7083
    %v7232 = vunpack.c.l.b16 %v7084
    %v7233 = vunpack.c.h.b16 %v7084
    %v7234 = vunpack.c.l.b16 %v7085
    %v7235 = vunpack.c.h.b16 %v7085
    %v7236 = vunpack.c.l.b16 %v7086
    %v7237 = vunpack.c.h.b16 %v7086
    %v7238 = vunpack.c.l.b16 %v7087
    %v7239 = vunpack.c.h.b16 %v7087
    %v7240 = vunpack.c.l.b16 %v7088
    %v7241 = vunpack.c.h.b16 %v7088
    %v7242 = vunpack.c.l.b16 %v7089
    %v7243 = vunpack.c.h.b16 %v7089
    %v7244 = vunpack.c.l.b16 %v7090
    %v7245 = vunpack.c.h.b16 %v7090
    %v7246 = vunpack.c.l.b16 %v7091
    %v7247 = vunpack.c.h.b16 %v7091
    %v7248 = vunpack.c.l.b16 %v7092
    %v7249 = vunpack.c.h.b16 %v7092
    %v7250 = vunpack.c.l.b16 %v7093
    %v7251 = vunpack.c.h.b16 %v7093
    %v7252 = vunpack.c.l.b16 %v7094
    %v7253 = vunpack.c.h.b16 %v7094
    %v7254 = vunpack.c.l.b16 %v7095
    %v7255 = vunpack.c.h.b16 %v7095
    %v7256 = vunpack.c.l.b16 %v7096
    %v7257 = vunpack.c.h.b16 %v7096
    %v7258 = vunpack.c.l.b16 %v7097
    %v7259 = vunpack.c.h.b16 %v7097
    %v7260 = vunpack.c.l.b16 %v7098
    %v7261 = vunpack.c.h.b16 %v7098
    %v7262 = vunpack.c.l.b16 %v7099
    %v7263 = vunpack.c.h.b16 %v7099
    %v7264 = vunpack.c.l.b16 %v7100
    %v7265 = vunpack.c.h.b16 %v7100
    %v7266 = vunpack.c.l.b16 %v7101
    %v7267 = vunpack.c.h.b16 %v7101
    %v7268 = vunpack.c.l.b16 %v7102
    %v7269 = vunpack.c.h.b16 %v7102
    %v7270 = vunpack.c.l.b16 %v7103
    %v7271 = vunpack.c.h.b16 %v7103
    %v7272 = vunpack.c.l.b16 %v7104
    %v7273 = vunpack.c.h.b16 %v7104
    %v7274 = vunpack.c.l.b16 %v7105
    %v7275 = vunpack.c.h.b16 %v7105
    %v7276 = vunpack.c.l.b16 %v7106
    %v7277 = vunpack.c.h.b16 %v7106
    %v7278 = vunpack.c.l.b16 %v7107
    %v7279 = vunpack.c.h.b16 %v7107
    %v7280 = vunpack.c.l.b16 %v7108
    %v7281 = vunpack.c.h.b16 %v7108
    %v7282 = vunpack.c.l.b16 %v7109
    %v7283 = vunpack.c.h.b16 %v7109
    %v7284 = vunpack.c.l.b16 %v7110
    %v7285 = vunpack.c.h.b16 %v7110
    %v7286 = vunpack.c.l.b16 %v7111
    %v7287 = vunpack.c.h.b16 %v7111
    %v7288 = vunpack.c.l.b16 %v7112
    %v7289 = vunpack.c.h.b16 %v7112
    %v7290 = vunpack.c.l.b16 %v7113
    %v7291 = vunpack.c.h.b16 %v7113
    %v7292 = vunpack.c.l.b16 %v7114
    %v7293 = vunpack.c.h.b16 %v7114
    %v7294 = vunpack.c.l.b16 %v7115
    %v7295 = vunpack.c.h.b16 %v7115
    %v7296 = vunpack.c.l.b16 %v7116
    %v7297 = vunpack.c.h.b16 %v7116
    %v7298 = vunpack.c.l.b16 %v7117
    %v7299 = vunpack.c.h.b16 %v7117
    %v7300 = vunpack.c.l.b16 %v7118
    %v7301 = vunpack.c.h.b16 %v7118
    %v7302 = vunpack.c.l.b16 %v7119
    %v7303 = vunpack.c.h.b16 %v7119
    %v7304 = vunpack.c.l.b16 %v7120
    %v7305 = vunpack.c.h.b16 %v7120
    %v7306 = vunpack.c.l.b16 %v7121
    %v7307 = vunpack.c.h.b16 %v7121
    %v7308 = vunpack.c.l.b16 %v7122
    %v7309 = vunpack.c.h.b16 %v7122
    %v7310 = vunpack.c.l.b16 %v7123
    %v7311 = vunpack.c.h.b16 %v7123
    %v7312 = vunpack.c.l.b16 %v7124
    %v7313 = vunpack.c.h.b16 %v7124
    %v7314 = vunpack.c.l.b16 %v7125
    %v7315 = vunpack.c.h.b16 %v7125
    %v7316 = vunpack.c.l.b16 %v7126
    %v7317 = vunpack.c.h.b16 %v7126
    %v7318 = vunpack.c.l.b16 %v7127
    %v7319 = vunpack.c.h.b16 %v7127
    %v7320 = vpack.c.b16 %v7194, %v7192
    %v7321 = vpack.c.b16 %v7195, %v7193
    %v7322 = vpack.c.b16 %v7198, %v7196
    %v7323 = vpack.c.b16 %v7199, %v7197
    %v7324 = vpack.c.b16 %v7202, %v7200
    %v7325 = vpack.c.b16 %v7203, %v7201
    %v7326 = vpack.c.b16 %v7206, %v7204
    %v7327 = vpack.c.b16 %v7207, %v7205
    %v7328 = vpack.c.b16 %v7210, %v7208
    %v7329 = vpack.c.b16 %v7211, %v7209
    %v7330 = vpack.c.b16 %v7214, %v7212
    %v7331 = vpack.c.b16 %v7215, %v7213
    %v7332 = vpack.c.b16 %v7218, %v7216
    %v7333 = vpack.c.b16 %v7219, %v7217
    %v7334 = vpack.c.b16 %v7222, %v7220
    %v7335 = vpack.c.b16 %v7223, %v7221
    %v7336 = vpack.c.b16 %v7226, %v7224
    %v7337 = vpack.c.b16 %v7227, %v7225
    %v7338 = vpack.c.b16 %v7230, %v7228
    %v7339 = vpack.c.b16 %v7231, %v7229
    %v7340 = vpack.c.b16 %v7234, %v7232
    %v7341 = vpack.c.b16 %v7235, %v7233
    %v7342 = vpack.c.b16 %v7238, %v7236
    %v7343 = vpack.c.b16 %v7239, %v7237
    %v7344 = vpack.c.b16 %v7242, %v7240
    %v7345 = vpack.c.b16 %v7243, %v7241
    %v7346 = vpack.c.b16 %v7246, %v7244
    %v7347 = vpack.c.b16 %v7247, %v7245
    %v7348 = vpack.c.b16 %v7250, %v7248
    %v7349 = vpack.c.b16 %v7251, %v7249
    %v7350 = vpack.c.b16 %v7254, %v7252
    %v7351 = vpack.c.b16 %v7255, %v7253
    %v7352 = vpack.c.b16 %v7258, %v7256
    %v7353 = vpack.c.b16 %v7259, %v7257
    %v7354 = vpack.c.b16 %v7262, %v7260
    %v7355 = vpack.c.b16 %v7263, %v7261
    %v7356 = vpack.c.b16 %v7266, %v7264
    %v7357 = vpack.c.b16 %v7267, %v7265
    %v7358 = vpack.c.b16 %v7270, %v7268
    %v7359 = vpack.c.b16 %v7271, %v7269
    %v7360 = vpack.c.b16 %v7274, %v7272
    %v7361 = vpack.c.b16 %v7275, %v7273
    %v7362 = vpack.c.b16 %v7278, %v7276
    %v7363 = vpack.c.b16 %v7279, %v7277
    %v7364 = vpack.c.b16 %v7282, %v7280
    %v7365 = vpack.c.b16 %v7283, %v7281
    %v7366 = vpack.c.b16 %v7286, %v7284
    %v7367 = vpack.c.b16 %v7287, %v7285
    %v7368 = vpack.c.b16 %v7290, %v7288
    %v7369 = vpack.c.b16 %v7291, %v7289
    %v7370 = vpack.c.b16 %v7294, %v7292
    %v7371 = vpack.c.b16 %v7295, %v7293
    %v7372 = vpack.c.b16 %v7298, %v7296
    %v7373 = vpack.c.b16 %v7299, %v7297
    %v7374 = vpack.c.b16 %v7302, %v7300
    %v7375 = vpack.c.b16 %v7303, %v7301
    %v7376 = vpack.c.b16 %v7306, %v7304
    %v7377 = vpack.c.b16 %v7307, %v7305
    %v7378 = vpack.c.b16 %v7310, %v7308
    %v7379 = vpack.c.b16 %v7311, %v7309
    %v7380 = vpack.c.b16 %v7314, %v7312
    %v7381 = vpack.c.b16 %v7315, %v7313
    %v7382 = vpack.c.b16 %v7318, %v7316
    %v7383 = vpack.c.b16 %v7319, %v7317
    %7448 = vmatprep.subr.bf16.mxu0 %v7335
    %7449 = vmatpush1.bf16.msra.mxu0 %v7334
    %7450 = vmatprep.subr.bf16.mxu0 %v7333
    %7451 = vmatpush1.bf16.msra.mxu0 %v7332
    %7452 = vmatprep.subr.bf16.mxu0 %v7331
    %7453 = vmatpush1.bf16.msra.mxu0 %v7330
    %7454 = vmatprep.subr.bf16.mxu0 %v7329
    %7455 = vmatpush1.bf16.msra.mxu0 %v7328
    %7456 = vmatprep.subr.bf16.mxu0 %v7327
    %7457 = vmatpush1.bf16.msra.mxu0 %v7326
    %7458 = vmatprep.subr.bf16.mxu0 %v7325
    %7459 = vmatpush1.bf16.msra.mxu0 %v7324
    %7460 = vmatprep.subr.bf16.mxu0 %v7323
    %7461 = vmatpush1.bf16.msra.mxu0 %v7322
    %7462 = vmatprep.subr.bf16.mxu0 %v7321
    %7463 = vmatpush1.bf16.msra.mxu0 %v7320
    %7464 = vmatprep.subr.bf16.mxu0 %v7351
    %7465 = vmatpush2.bf16.msra.mxu0 %v7350
    %7466 = vmatprep.subr.bf16.mxu0 %v7349
    %7467 = vmatpush2.bf16.msra.mxu0 %v7348
    %7468 = vmatprep.subr.bf16.mxu0 %v7347
    %7469 = vmatpush2.bf16.msra.mxu0 %v7346
    %7470 = vmatprep.subr.bf16.mxu0 %v7345
    %7471 = vmatpush2.bf16.msra.mxu0 %v7344
    %7472 = vmatprep.subr.bf16.mxu0 %v7343
    %7473 = vmatpush2.bf16.msra.mxu0 %v7342
    %7474 = vmatprep.subr.bf16.mxu0 %v7341
    %7475 = vmatpush2.bf16.msra.mxu0 %v7340
    %7476 = vmatprep.subr.bf16.mxu0 %v7339
    %7477 = vmatpush2.bf16.msra.mxu0 %v7338
    %7478 = vmatprep.subr.bf16.mxu0 %v7337
    %7479 = vmatpush2.bf16.msra.mxu0 %v7336
    %7480 = vmatprep.mubr.bf16.mxu0 %v7056
    %7481 = vmatmul.mubr.bf16.gmra.mxu0 %v7055
    %v7482 = vpop.f32.mrf.mxu0
    %v7483 = vadd.f32 0.0, %v7482
    %v7484 = vpop.f32.mrf.mxu0
    %v7485 = vadd.f32 0.0, %v7484
    %v7486 = vpop.f32.mrf.mxu0
    %v7487 = vadd.f32 0.0, %v7486
    %v7488 = vpop.f32.mrf.mxu0
    %v7489 = vadd.f32 0.0, %v7488
    %7490 = vmatprep.mubr.bf16.mxu0 %v7060
    %7491 = vmatmul.mubr.bf16.gmra.mxu0 %v7059
    %v7492 = vpop.f32.mrf.mxu0
    %v7493 = vadd.f32 0.0, %v7492
    %v7494 = vpop.f32.mrf.mxu0
    %v7495 = vadd.f32 0.0, %v7494
    %v7496 = vpop.f32.mrf.mxu0
    %v7497 = vadd.f32 0.0, %v7496
    %v7498 = vpop.f32.mrf.mxu0
    %v7499 = vadd.f32 0.0, %v7498
    %7500 = vdwg.mxu0
    %7501 = vmatprep.subr.bf16.mxu0 %v7367
    %7502 = vmatpush1.bf16.msra.mxu0 %v7366
    %7503 = vmatprep.subr.bf16.mxu0 %v7365
    %7504 = vmatpush1.bf16.msra.mxu0 %v7364
    %7505 = vmatprep.subr.bf16.mxu0 %v7363
    %7506 = vmatpush1.bf16.msra.mxu0 %v7362
    %7507 = vmatprep.subr.bf16.mxu0 %v7361
    %7508 = vmatpush1.bf16.msra.mxu0 %v7360
    %7509 = vmatprep.subr.bf16.mxu0 %v7359
    %7510 = vmatpush1.bf16.msra.mxu0 %v7358
    %7511 = vmatprep.subr.bf16.mxu0 %v7357
    %7512 = vmatpush1.bf16.msra.mxu0 %v7356
    %7513 = vmatprep.subr.bf16.mxu0 %v7355
    %7514 = vmatpush1.bf16.msra.mxu0 %v7354
    %7515 = vmatprep.subr.bf16.mxu0 %v7353
    %7516 = vmatpush1.bf16.msra.mxu0 %v7352
    %7517 = vmatprep.subr.bf16.mxu0 %v7383
    %7518 = vmatpush2.bf16.msra.mxu0 %v7382
    %7519 = vmatprep.subr.bf16.mxu0 %v7381
    %7520 = vmatpush2.bf16.msra.mxu0 %v7380
    %7521 = vmatprep.subr.bf16.mxu0 %v7379
    %7522 = vmatpush2.bf16.msra.mxu0 %v7378
    %7523 = vmatprep.subr.bf16.mxu0 %v7377
    %7524 = vmatpush2.bf16.msra.mxu0 %v7376
    %7525 = vmatprep.subr.bf16.mxu0 %v7375
    %7526 = vmatpush2.bf16.msra.mxu0 %v7374
    %7527 = vmatprep.subr.bf16.mxu0 %v7373
    %7528 = vmatpush2.bf16.msra.mxu0 %v7372
    %7529 = vmatprep.subr.bf16.mxu0 %v7371
    %7530 = vmatpush2.bf16.msra.mxu0 %v7370
    %7531 = vmatprep.subr.bf16.mxu0 %v7369
    %7532 = vmatpush2.bf16.msra.mxu0 %v7368
    %7533 = vmatprep.mubr.bf16.mxu0 %v7058
    %7534 = vmatmul.mubr.bf16.gmra.mxu0 %v7057
    %v7535 = vpop.f32.mrf.mxu0
    %v7536 = vadd.f32 %v7483, %v7535
    %v7537 = vpop.f32.mrf.mxu0
    %v7538 = vadd.f32 %v7485, %v7537
    %v7539 = vpop.f32.mrf.mxu0
    %v7540 = vadd.f32 %v7487, %v7539
    %v7541 = vpop.f32.mrf.mxu0
    %v7542 = vadd.f32 %v7489, %v7541
    %7543 = vmatprep.mubr.bf16.mxu0 %v7062
    %7544 = vmatmul.mubr.bf16.gmra.mxu0 %v7061
    %v7545 = vpop.f32.mrf.mxu0
    %v7546 = vadd.f32 %v7493, %v7545
    %v7547 = vpop.f32.mrf.mxu0
    %v7548 = vadd.f32 %v7495, %v7547
    %v7549 = vpop.f32.mrf.mxu0
    %v7550 = vadd.f32 %v7497, %v7549
    %v7551 = vpop.f32.mrf.mxu0
    %v7552 = vadd.f32 %v7499, %v7551
    %7553 = vdwg.mxu0
    %v7554 = vadd.f32 %v6959, %v7536
    %v7555 = vadd.f32 %v6960, %v7538
    %v7556 = vadd.f32 %v6961, %v7540
    %v7557 = vadd.f32 %v6962, %v7542
    %v7558 = vadd.f32 %v6963, %v7546
    %v7559 = vadd.f32 %v6964, %v7548
    %v7560 = vadd.f32 %v6965, %v7550
    %v7561 = vadd.f32 %v6966, %v7552
    %v7562 = vld [vmem:[#allocation2 + $0x40] sm:$0xff]
    %v7563 = vld [vmem:[#allocation2 + $0x48] sm:$0xff]
    %v7564 = vld [vmem:[#allocation2 + $0x50] sm:$0xff]
    %v7565 = vld [vmem:[#allocation2 + $0x58] sm:$0xff]
    %v7566 = vld [vmem:[#allocation2 + $0xa0] sm:$0xff]
    %v7567 = vld [vmem:[#allocation2 + $0xa8] sm:$0xff]
    %v7568 = vld [vmem:[#allocation2 + $0xb0] sm:$0xff]
    %v7569 = vld [vmem:[#allocation2 + $0xb8] sm:$0xff]
    %v7570 = vpack.c.bf16 %v7562, %v5347
    %v7571 = vpack.c.bf16 %v7563, %v5348
    %v7572 = vpack.c.bf16 %v7564, %v5349
    %v7573 = vpack.c.bf16 %v7565, %v5350
    %v7574 = vpack.c.bf16 %v7566, %v5359
    %v7575 = vpack.c.bf16 %v7567, %v5360
    %v7576 = vpack.c.bf16 %v7568, %v5361
    %v7577 = vpack.c.bf16 %v7569, %v5362
    %s7578 = scalar_lea.vmem [#allocation15], 2048
    %v7579 = vld [vmem:[%s7578] sm:$0xff]
    %v7580 = vld [vmem:[%s7578 + $0x8] sm:$0xff]
    %v7581 = vld [vmem:[%s7578 + $0x10] sm:$0xff]
    %v7582 = vld [vmem:[%s7578 + $0x18] sm:$0xff]
    %v7583 = vld [vmem:[%s7578 + $0x20] sm:$0xff]
    %v7584 = vld [vmem:[%s7578 + $0x28] sm:$0xff]
    %v7585 = vld [vmem:[%s7578 + $0x30] sm:$0xff]
    %v7586 = vld [vmem:[%s7578 + $0x38] sm:$0xff]
    %v7587 = vld [vmem:[%s7578 + $0x40] sm:$0xff]
    %v7588 = vld [vmem:[%s7578 + $0x48] sm:$0xff]
    %v7589 = vld [vmem:[%s7578 + $0x50] sm:$0xff]
    %v7590 = vld [vmem:[%s7578 + $0x58] sm:$0xff]
    %v7591 = vld [vmem:[%s7578 + $0x60] sm:$0xff]
    %v7592 = vld [vmem:[%s7578 + $0x68] sm:$0xff]
    %v7593 = vld [vmem:[%s7578 + $0x70] sm:$0xff]
    %v7594 = vld [vmem:[%s7578 + $0x78] sm:$0xff]
    %v7595 = vld [vmem:[%s7578 + $0x80] sm:$0xff]
    %v7596 = vld [vmem:[%s7578 + $0x88] sm:$0xff]
    %v7597 = vld [vmem:[%s7578 + $0x90] sm:$0xff]
    %v7598 = vld [vmem:[%s7578 + $0x98] sm:$0xff]
    %v7599 = vld [vmem:[%s7578 + $0xa0] sm:$0xff]
    %v7600 = vld [vmem:[%s7578 + $0xa8] sm:$0xff]
    %v7601 = vld [vmem:[%s7578 + $0xb0] sm:$0xff]
    %v7602 = vld [vmem:[%s7578 + $0xb8] sm:$0xff]
    %v7603 = vld [vmem:[%s7578 + $0xc0] sm:$0xff]
    %v7604 = vld [vmem:[%s7578 + $0xc8] sm:$0xff]
    %v7605 = vld [vmem:[%s7578 + $0xd0] sm:$0xff]
    %v7606 = vld [vmem:[%s7578 + $0xd8] sm:$0xff]
    %v7607 = vld [vmem:[%s7578 + $0xe0] sm:$0xff]
    %v7608 = vld [vmem:[%s7578 + $0xe8] sm:$0xff]
    %v7609 = vld [vmem:[%s7578 + $0xf0] sm:$0xff]
    %v7610 = vld [vmem:[%s7578 + $0xf8] sm:$0xff]
    %v7611 = vld [vmem:[%s7578 + $0x100] sm:$0xff]
    %v7612 = vld [vmem:[%s7578 + $0x108] sm:$0xff]
    %v7613 = vld [vmem:[%s7578 + $0x110] sm:$0xff]
    %v7614 = vld [vmem:[%s7578 + $0x118] sm:$0xff]
    %v7615 = vld [vmem:[%s7578 + $0x120] sm:$0xff]
    %v7616 = vld [vmem:[%s7578 + $0x128] sm:$0xff]
    %v7617 = vld [vmem:[%s7578 + $0x130] sm:$0xff]
    %v7618 = vld [vmem:[%s7578 + $0x138] sm:$0xff]
    %v7619 = vld [vmem:[%s7578 + $0x140] sm:$0xff]
    %v7620 = vld [vmem:[%s7578 + $0x148] sm:$0xff]
    %v7621 = vld [vmem:[%s7578 + $0x150] sm:$0xff]
    %v7622 = vld [vmem:[%s7578 + $0x158] sm:$0xff]
    %v7623 = vld [vmem:[%s7578 + $0x160] sm:$0xff]
    %v7624 = vld [vmem:[%s7578 + $0x168] sm:$0xff]
    %v7625 = vld [vmem:[%s7578 + $0x170] sm:$0xff]
    %v7626 = vld [vmem:[%s7578 + $0x178] sm:$0xff]
    %v7627 = vld [vmem:[%s7578 + $0x180] sm:$0xff]
    %v7628 = vld [vmem:[%s7578 + $0x188] sm:$0xff]
    %v7629 = vld [vmem:[%s7578 + $0x190] sm:$0xff]
    %v7630 = vld [vmem:[%s7578 + $0x198] sm:$0xff]
    %v7631 = vld [vmem:[%s7578 + $0x1a0] sm:$0xff]
    %v7632 = vld [vmem:[%s7578 + $0x1a8] sm:$0xff]
    %v7633 = vld [vmem:[%s7578 + $0x1b0] sm:$0xff]
    %v7634 = vld [vmem:[%s7578 + $0x1b8] sm:$0xff]
    %v7635 = vld [vmem:[%s7578 + $0x1c0] sm:$0xff]
    %v7636 = vld [vmem:[%s7578 + $0x1c8] sm:$0xff]
    %v7637 = vld [vmem:[%s7578 + $0x1d0] sm:$0xff]
    %v7638 = vld [vmem:[%s7578 + $0x1d8] sm:$0xff]
    %v7639 = vld [vmem:[%s7578 + $0x1e0] sm:$0xff]
    %v7640 = vld [vmem:[%s7578 + $0x1e8] sm:$0xff]
    %v7641 = vld [vmem:[%s7578 + $0x1f0] sm:$0xff]
    %v7642 = vld [vmem:[%s7578 + $0x1f8] sm:$0xff]
    %v7707 = vunpack.c.l.b16 %v7579
    %v7708 = vunpack.c.h.b16 %v7579
    %v7709 = vunpack.c.l.b16 %v7580
    %v7710 = vunpack.c.h.b16 %v7580
    %v7711 = vunpack.c.l.b16 %v7581
    %v7712 = vunpack.c.h.b16 %v7581
    %v7713 = vunpack.c.l.b16 %v7582
    %v7714 = vunpack.c.h.b16 %v7582
    %v7715 = vunpack.c.l.b16 %v7583
    %v7716 = vunpack.c.h.b16 %v7583
    %v7717 = vunpack.c.l.b16 %v7584
    %v7718 = vunpack.c.h.b16 %v7584
    %v7719 = vunpack.c.l.b16 %v7585
    %v7720 = vunpack.c.h.b16 %v7585
    %v7721 = vunpack.c.l.b16 %v7586
    %v7722 = vunpack.c.h.b16 %v7586
    %v7723 = vunpack.c.l.b16 %v7587
    %v7724 = vunpack.c.h.b16 %v7587
    %v7725 = vunpack.c.l.b16 %v7588
    %v7726 = vunpack.c.h.b16 %v7588
    %v7727 = vunpack.c.l.b16 %v7589
    %v7728 = vunpack.c.h.b16 %v7589
    %v7729 = vunpack.c.l.b16 %v7590
    %v7730 = vunpack.c.h.b16 %v7590
    %v7731 = vunpack.c.l.b16 %v7591
    %v7732 = vunpack.c.h.b16 %v7591
    %v7733 = vunpack.c.l.b16 %v7592
    %v7734 = vunpack.c.h.b16 %v7592
    %v7735 = vunpack.c.l.b16 %v7593
    %v7736 = vunpack.c.h.b16 %v7593
    %v7737 = vunpack.c.l.b16 %v7594
    %v7738 = vunpack.c.h.b16 %v7594
    %v7739 = vunpack.c.l.b16 %v7595
    %v7740 = vunpack.c.h.b16 %v7595
    %v7741 = vunpack.c.l.b16 %v7596
    %v7742 = vunpack.c.h.b16 %v7596
    %v7743 = vunpack.c.l.b16 %v7597
    %v7744 = vunpack.c.h.b16 %v7597
    %v7745 = vunpack.c.l.b16 %v7598
    %v7746 = vunpack.c.h.b16 %v7598
    %v7747 = vunpack.c.l.b16 %v7599
    %v7748 = vunpack.c.h.b16 %v7599
    %v7749 = vunpack.c.l.b16 %v7600
    %v7750 = vunpack.c.h.b16 %v7600
    %v7751 = vunpack.c.l.b16 %v7601
    %v7752 = vunpack.c.h.b16 %v7601
    %v7753 = vunpack.c.l.b16 %v7602
    %v7754 = vunpack.c.h.b16 %v7602
    %v7755 = vunpack.c.l.b16 %v7603
    %v7756 = vunpack.c.h.b16 %v7603
    %v7757 = vunpack.c.l.b16 %v7604
    %v7758 = vunpack.c.h.b16 %v7604
    %v7759 = vunpack.c.l.b16 %v7605
    %v7760 = vunpack.c.h.b16 %v7605
    %v7761 = vunpack.c.l.b16 %v7606
    %v7762 = vunpack.c.h.b16 %v7606
    %v7763 = vunpack.c.l.b16 %v7607
    %v7764 = vunpack.c.h.b16 %v7607
    %v7765 = vunpack.c.l.b16 %v7608
    %v7766 = vunpack.c.h.b16 %v7608
    %v7767 = vunpack.c.l.b16 %v7609
    %v7768 = vunpack.c.h.b16 %v7609
    %v7769 = vunpack.c.l.b16 %v7610
    %v7770 = vunpack.c.h.b16 %v7610
    %v7771 = vunpack.c.l.b16 %v7611
    %v7772 = vunpack.c.h.b16 %v7611
    %v7773 = vunpack.c.l.b16 %v7612
    %v7774 = vunpack.c.h.b16 %v7612
    %v7775 = vunpack.c.l.b16 %v7613
    %v7776 = vunpack.c.h.b16 %v7613
    %v7777 = vunpack.c.l.b16 %v7614
    %v7778 = vunpack.c.h.b16 %v7614
    %v7779 = vunpack.c.l.b16 %v7615
    %v7780 = vunpack.c.h.b16 %v7615
    %v7781 = vunpack.c.l.b16 %v7616
    %v7782 = vunpack.c.h.b16 %v7616
    %v7783 = vunpack.c.l.b16 %v7617
    %v7784 = vunpack.c.h.b16 %v7617
    %v7785 = vunpack.c.l.b16 %v7618
    %v7786 = vunpack.c.h.b16 %v7618
    %v7787 = vunpack.c.l.b16 %v7619
    %v7788 = vunpack.c.h.b16 %v7619
    %v7789 = vunpack.c.l.b16 %v7620
    %v7790 = vunpack.c.h.b16 %v7620
    %v7791 = vunpack.c.l.b16 %v7621
    %v7792 = vunpack.c.h.b16 %v7621
    %v7793 = vunpack.c.l.b16 %v7622
    %v7794 = vunpack.c.h.b16 %v7622
    %v7795 = vunpack.c.l.b16 %v7623
    %v7796 = vunpack.c.h.b16 %v7623
    %v7797 = vunpack.c.l.b16 %v7624
    %v7798 = vunpack.c.h.b16 %v7624
    %v7799 = vunpack.c.l.b16 %v7625
    %v7800 = vunpack.c.h.b16 %v7625
    %v7801 = vunpack.c.l.b16 %v7626
    %v7802 = vunpack.c.h.b16 %v7626
    %v7803 = vunpack.c.l.b16 %v7627
    %v7804 = vunpack.c.h.b16 %v7627
    %v7805 = vunpack.c.l.b16 %v7628
    %v7806 = vunpack.c.h.b16 %v7628
    %v7807 = vunpack.c.l.b16 %v7629
    %v7808 = vunpack.c.h.b16 %v7629
    %v7809 = vunpack.c.l.b16 %v7630
    %v7810 = vunpack.c.h.b16 %v7630
    %v7811 = vunpack.c.l.b16 %v7631
    %v7812 = vunpack.c.h.b16 %v7631
    %v7813 = vunpack.c.l.b16 %v7632
    %v7814 = vunpack.c.h.b16 %v7632
    %v7815 = vunpack.c.l.b16 %v7633
    %v7816 = vunpack.c.h.b16 %v7633
    %v7817 = vunpack.c.l.b16 %v7634
    %v7818 = vunpack.c.h.b16 %v7634
    %v7819 = vunpack.c.l.b16 %v7635
    %v7820 = vunpack.c.h.b16 %v7635
    %v7821 = vunpack.c.l.b16 %v7636
    %v7822 = vunpack.c.h.b16 %v7636
    %v7823 = vunpack.c.l.b16 %v7637
    %v7824 = vunpack.c.h.b16 %v7637
    %v7825 = vunpack.c.l.b16 %v7638
    %v7826 = vunpack.c.h.b16 %v7638
    %v7827 = vunpack.c.l.b16 %v7639
    %v7828 = vunpack.c.h.b16 %v7639
    %v7829 = vunpack.c.l.b16 %v7640
    %v7830 = vunpack.c.h.b16 %v7640
    %v7831 = vunpack.c.l.b16 %v7641
    %v7832 = vunpack.c.h.b16 %v7641
    %v7833 = vunpack.c.l.b16 %v7642
    %v7834 = vunpack.c.h.b16 %v7642
    %v7835 = vpack.c.b16 %v7709, %v7707
    %v7836 = vpack.c.b16 %v7710, %v7708
    %v7837 = vpack.c.b16 %v7713, %v7711
    %v7838 = vpack.c.b16 %v7714, %v7712
    %v7839 = vpack.c.b16 %v7717, %v7715
    %v7840 = vpack.c.b16 %v7718, %v7716
    %v7841 = vpack.c.b16 %v7721, %v7719
    %v7842 = vpack.c.b16 %v7722, %v7720
    %v7843 = vpack.c.b16 %v7725, %v7723
    %v7844 = vpack.c.b16 %v7726, %v7724
    %v7845 = vpack.c.b16 %v7729, %v7727
    %v7846 = vpack.c.b16 %v7730, %v7728
    %v7847 = vpack.c.b16 %v7733, %v7731
    %v7848 = vpack.c.b16 %v7734, %v7732
    %v7849 = vpack.c.b16 %v7737, %v7735
    %v7850 = vpack.c.b16 %v7738, %v7736
    %v7851 = vpack.c.b16 %v7741, %v7739
    %v7852 = vpack.c.b16 %v7742, %v7740
    %v7853 = vpack.c.b16 %v7745, %v7743
    %v7854 = vpack.c.b16 %v7746, %v7744
    %v7855 = vpack.c.b16 %v7749, %v7747
    %v7856 = vpack.c.b16 %v7750, %v7748
    %v7857 = vpack.c.b16 %v7753, %v7751
    %v7858 = vpack.c.b16 %v7754, %v7752
    %v7859 = vpack.c.b16 %v7757, %v7755
    %v7860 = vpack.c.b16 %v7758, %v7756
    %v7861 = vpack.c.b16 %v7761, %v7759
    %v7862 = vpack.c.b16 %v7762, %v7760
    %v7863 = vpack.c.b16 %v7765, %v7763
    %v7864 = vpack.c.b16 %v7766, %v7764
    %v7865 = vpack.c.b16 %v7769, %v7767
    %v7866 = vpack.c.b16 %v7770, %v7768
    %v7867 = vpack.c.b16 %v7773, %v7771
    %v7868 = vpack.c.b16 %v7774, %v7772
    %v7869 = vpack.c.b16 %v7777, %v7775
    %v7870 = vpack.c.b16 %v7778, %v7776
    %v7871 = vpack.c.b16 %v7781, %v7779
    %v7872 = vpack.c.b16 %v7782, %v7780
    %v7873 = vpack.c.b16 %v7785, %v7783
    %v7874 = vpack.c.b16 %v7786, %v7784
    %v7875 = vpack.c.b16 %v7789, %v7787
    %v7876 = vpack.c.b16 %v7790, %v7788
    %v7877 = vpack.c.b16 %v7793, %v7791
    %v7878 = vpack.c.b16 %v7794, %v7792
    %v7879 = vpack.c.b16 %v7797, %v7795
    %v7880 = vpack.c.b16 %v7798, %v7796
    %v7881 = vpack.c.b16 %v7801, %v7799
    %v7882 = vpack.c.b16 %v7802, %v7800
    %v7883 = vpack.c.b16 %v7805, %v7803
    %v7884 = vpack.c.b16 %v7806, %v7804
    %v7885 = vpack.c.b16 %v7809, %v7807
    %v7886 = vpack.c.b16 %v7810, %v7808
    %v7887 = vpack.c.b16 %v7813, %v7811
    %v7888 = vpack.c.b16 %v7814, %v7812
    %v7889 = vpack.c.b16 %v7817, %v7815
    %v7890 = vpack.c.b16 %v7818, %v7816
    %v7891 = vpack.c.b16 %v7821, %v7819
    %v7892 = vpack.c.b16 %v7822, %v7820
    %v7893 = vpack.c.b16 %v7825, %v7823
    %v7894 = vpack.c.b16 %v7826, %v7824
    %v7895 = vpack.c.b16 %v7829, %v7827
    %v7896 = vpack.c.b16 %v7830, %v7828
    %v7897 = vpack.c.b16 %v7833, %v7831
    %v7898 = vpack.c.b16 %v7834, %v7832
    %7963 = vmatprep.subr.bf16.mxu0 %v7850
    %7964 = vmatpush1.bf16.msra.mxu0 %v7849
    %7965 = vmatprep.subr.bf16.mxu0 %v7848
    %7966 = vmatpush1.bf16.msra.mxu0 %v7847
    %7967 = vmatprep.subr.bf16.mxu0 %v7846
    %7968 = vmatpush1.bf16.msra.mxu0 %v7845
    %7969 = vmatprep.subr.bf16.mxu0 %v7844
    %7970 = vmatpush1.bf16.msra.mxu0 %v7843
    %7971 = vmatprep.subr.bf16.mxu0 %v7842
    %7972 = vmatpush1.bf16.msra.mxu0 %v7841
    %7973 = vmatprep.subr.bf16.mxu0 %v7840
    %7974 = vmatpush1.bf16.msra.mxu0 %v7839
    %7975 = vmatprep.subr.bf16.mxu0 %v7838
    %7976 = vmatpush1.bf16.msra.mxu0 %v7837
    %7977 = vmatprep.subr.bf16.mxu0 %v7836
    %7978 = vmatpush1.bf16.msra.mxu0 %v7835
    %7979 = vmatprep.subr.bf16.mxu0 %v7866
    %7980 = vmatpush2.bf16.msra.mxu0 %v7865
    %7981 = vmatprep.subr.bf16.mxu0 %v7864
    %7982 = vmatpush2.bf16.msra.mxu0 %v7863
    %7983 = vmatprep.subr.bf16.mxu0 %v7862
    %7984 = vmatpush2.bf16.msra.mxu0 %v7861
    %7985 = vmatprep.subr.bf16.mxu0 %v7860
    %7986 = vmatpush2.bf16.msra.mxu0 %v7859
    %7987 = vmatprep.subr.bf16.mxu0 %v7858
    %7988 = vmatpush2.bf16.msra.mxu0 %v7857
    %7989 = vmatprep.subr.bf16.mxu0 %v7856
    %7990 = vmatpush2.bf16.msra.mxu0 %v7855
    %7991 = vmatprep.subr.bf16.mxu0 %v7854
    %7992 = vmatpush2.bf16.msra.mxu0 %v7853
    %7993 = vmatprep.subr.bf16.mxu0 %v7852
    %7994 = vmatpush2.bf16.msra.mxu0 %v7851
    %7995 = vmatprep.mubr.bf16.mxu0 %v7571
    %7996 = vmatmul.mubr.bf16.gmra.mxu0 %v7570
    %v7997 = vpop.f32.mrf.mxu0
    %v7998 = vadd.f32 0.0, %v7997
    %v7999 = vpop.f32.mrf.mxu0
    %v8000 = vadd.f32 0.0, %v7999
    %v8001 = vpop.f32.mrf.mxu0
    %v8002 = vadd.f32 0.0, %v8001
    %v8003 = vpop.f32.mrf.mxu0
    %v8004 = vadd.f32 0.0, %v8003
    %8005 = vmatprep.mubr.bf16.mxu0 %v7575
    %8006 = vmatmul.mubr.bf16.gmra.mxu0 %v7574
    %v8007 = vpop.f32.mrf.mxu0
    %v8008 = vadd.f32 0.0, %v8007
    %v8009 = vpop.f32.mrf.mxu0
    %v8010 = vadd.f32 0.0, %v8009
    %v8011 = vpop.f32.mrf.mxu0
    %v8012 = vadd.f32 0.0, %v8011
    %v8013 = vpop.f32.mrf.mxu0
    %v8014 = vadd.f32 0.0, %v8013
    %8015 = vdwg.mxu0
    %8016 = vmatprep.subr.bf16.mxu0 %v7882
    %8017 = vmatpush1.bf16.msra.mxu0 %v7881
    %8018 = vmatprep.subr.bf16.mxu0 %v7880
    %8019 = vmatpush1.bf16.msra.mxu0 %v7879
    %8020 = vmatprep.subr.bf16.mxu0 %v7878
    %8021 = vmatpush1.bf16.msra.mxu0 %v7877
    %8022 = vmatprep.subr.bf16.mxu0 %v7876
    %8023 = vmatpush1.bf16.msra.mxu0 %v7875
    %8024 = vmatprep.subr.bf16.mxu0 %v7874
    %8025 = vmatpush1.bf16.msra.mxu0 %v7873
    %8026 = vmatprep.subr.bf16.mxu0 %v7872
    %8027 = vmatpush1.bf16.msra.mxu0 %v7871
    %8028 = vmatprep.subr.bf16.mxu0 %v7870
    %8029 = vmatpush1.bf16.msra.mxu0 %v7869
    %8030 = vmatprep.subr.bf16.mxu0 %v7868
    %8031 = vmatpush1.bf16.msra.mxu0 %v7867
    %8032 = vmatprep.subr.bf16.mxu0 %v7898
    %8033 = vmatpush2.bf16.msra.mxu0 %v7897
    %8034 = vmatprep.subr.bf16.mxu0 %v7896
    %8035 = vmatpush2.bf16.msra.mxu0 %v7895
    %8036 = vmatprep.subr.bf16.mxu0 %v7894
    %8037 = vmatpush2.bf16.msra.mxu0 %v7893
    %8038 = vmatprep.subr.bf16.mxu0 %v7892
    %8039 = vmatpush2.bf16.msra.mxu0 %v7891
    %8040 = vmatprep.subr.bf16.mxu0 %v7890
    %8041 = vmatpush2.bf16.msra.mxu0 %v7889
    %8042 = vmatprep.subr.bf16.mxu0 %v7888
    %8043 = vmatpush2.bf16.msra.mxu0 %v7887
    %8044 = vmatprep.subr.bf16.mxu0 %v7886
    %8045 = vmatpush2.bf16.msra.mxu0 %v7885
    %8046 = vmatprep.subr.bf16.mxu0 %v7884
    %8047 = vmatpush2.bf16.msra.mxu0 %v7883
    %8048 = vmatprep.mubr.bf16.mxu0 %v7573
    %8049 = vmatmul.mubr.bf16.gmra.mxu0 %v7572
    %v8050 = vpop.f32.mrf.mxu0
    %v8051 = vadd.f32 %v7998, %v8050
    %v8052 = vpop.f32.mrf.mxu0
    %v8053 = vadd.f32 %v8000, %v8052
    %v8054 = vpop.f32.mrf.mxu0
    %v8055 = vadd.f32 %v8002, %v8054
    %v8056 = vpop.f32.mrf.mxu0
    %v8057 = vadd.f32 %v8004, %v8056
    %8058 = vmatprep.mubr.bf16.mxu0 %v7577
    %8059 = vmatmul.mubr.bf16.gmra.mxu0 %v7576
    %v8060 = vpop.f32.mrf.mxu0
    %v8061 = vadd.f32 %v8008, %v8060
    %v8062 = vpop.f32.mrf.mxu0
    %v8063 = vadd.f32 %v8010, %v8062
    %v8064 = vpop.f32.mrf.mxu0
    %v8065 = vadd.f32 %v8012, %v8064
    %v8066 = vpop.f32.mrf.mxu0
    %v8067 = vadd.f32 %v8014, %v8066
    %8068 = vdwg.mxu0
    %v8069 = vadd.f32 %v7554, %v8051
    %v8070 = vadd.f32 %v7555, %v8053
    %v8071 = vadd.f32 %v7556, %v8055
    %v8072 = vadd.f32 %v7557, %v8057
    %v8073 = vadd.f32 %v7558, %v8061
    %v8074 = vadd.f32 %v7559, %v8063
    %v8075 = vadd.f32 %v7560, %v8065
    %v8076 = vadd.f32 %v7561, %v8067
    %v8077 = vld [vmem:[%s14] sm:$0xff]
    %v8078 = vld [vmem:[%s14 + $0x8] sm:$0xff]
    %v8079 = vld [vmem:[%s14 + $0x10] sm:$0xff]
    %v8080 = vld [vmem:[%s14 + $0x18] sm:$0xff]
    %v8081 = vld [vmem:[%s14 + $0x20] sm:$0xff]
    %v8082 = vld [vmem:[%s14 + $0x28] sm:$0xff]
    %v8083 = vld [vmem:[%s14 + $0x30] sm:$0xff]
    %v8084 = vld [vmem:[%s14 + $0x38] sm:$0xff]
    %v8085 = vld [vmem:[%s14 + $0x40] sm:$0xff]
    %v8086 = vld [vmem:[%s14 + $0x48] sm:$0xff]
    %v8087 = vld [vmem:[%s14 + $0x50] sm:$0xff]
    %v8088 = vld [vmem:[%s14 + $0x58] sm:$0xff]
    %v8089 = vld [vmem:[%s14 + $0x60] sm:$0xff]
    %v8090 = vld [vmem:[%s14 + $0x68] sm:$0xff]
    %v8091 = vld [vmem:[%s14 + $0x70] sm:$0xff]
    %v8092 = vld [vmem:[%s14 + $0x78] sm:$0xff]
    %v8093 = vld [vmem:[%s14 + $0x80] sm:$0xff]
    %v8094 = vld [vmem:[%s14 + $0x88] sm:$0xff]
    %v8095 = vld [vmem:[%s14 + $0x90] sm:$0xff]
    %v8096 = vld [vmem:[%s14 + $0x98] sm:$0xff]
    %v8097 = vld [vmem:[%s14 + $0xa0] sm:$0xff]
    %v8098 = vld [vmem:[%s14 + $0xa8] sm:$0xff]
    %v8099 = vld [vmem:[%s14 + $0xb0] sm:$0xff]
    %v8100 = vld [vmem:[%s14 + $0xb8] sm:$0xff]
    %v8101 = vld [vmem:[%s14 + $0xc0] sm:$0xff]
    %v8102 = vld [vmem:[%s14 + $0xc8] sm:$0xff]
    %v8103 = vld [vmem:[%s14 + $0xd0] sm:$0xff]
    %v8104 = vld [vmem:[%s14 + $0xd8] sm:$0xff]
    %v8105 = vld [vmem:[%s14 + $0xe0] sm:$0xff]
    %v8106 = vld [vmem:[%s14 + $0xe8] sm:$0xff]
    %v8107 = vld [vmem:[%s14 + $0xf0] sm:$0xff]
    %v8108 = vld [vmem:[%s14 + $0xf8] sm:$0xff]
    %8109 = vmatprep.subr.mxu0 0.0
    %8110 = vmatpush1.msra.mxu0 %v8092
    %8111 = vmatprep.subr.mxu0 0.0
    %8112 = vmatpush1.msra.mxu0 %v8091
    %8113 = vmatprep.subr.mxu0 0.0
    %8114 = vmatpush1.msra.mxu0 %v8090
    %8115 = vmatprep.subr.mxu0 0.0
    %8116 = vmatpush1.msra.mxu0 %v8089
    %8117 = vmatprep.subr.mxu0 0.0
    %8118 = vmatpush1.msra.mxu0 %v8088
    %8119 = vmatprep.subr.mxu0 0.0
    %8120 = vmatpush1.msra.mxu0 %v8087
    %8121 = vmatprep.subr.mxu0 0.0
    %8122 = vmatpush1.msra.mxu0 %v8086
    %8123 = vmatprep.subr.mxu0 0.0
    %8124 = vmatpush1.msra.mxu0 %v8085
    %8125 = vmatprep.subr.mxu0 0.0
    %8126 = vmatpush1.msra.mxu0 %v8084
    %8127 = vmatprep.subr.mxu0 0.0
    %8128 = vmatpush1.msra.mxu0 %v8083
    %8129 = vmatprep.subr.mxu0 0.0
    %8130 = vmatpush1.msra.mxu0 %v8082
    %8131 = vmatprep.subr.mxu0 0.0
    %8132 = vmatpush1.msra.mxu0 %v8081
    %8133 = vmatprep.subr.mxu0 0.0
    %8134 = vmatpush1.msra.mxu0 %v8080
    %8135 = vmatprep.subr.mxu0 0.0
    %8136 = vmatpush1.msra.mxu0 %v8079
    %8137 = vmatprep.subr.mxu0 0.0
    %8138 = vmatpush1.msra.mxu0 %v8078
    %8139 = vmatprep.subr.mxu0 0.0
    %8140 = vmatpush1.msra.mxu0 %v8077
    %8141 = vmatprep.subr.mxu0 0.0
    %8142 = vmatpush2.msra.mxu0 %v8108
    %8143 = vmatprep.subr.mxu0 0.0
    %8144 = vmatpush2.msra.mxu0 %v8107
    %8145 = vmatprep.subr.mxu0 0.0
    %8146 = vmatpush2.msra.mxu0 %v8106
    %8147 = vmatprep.subr.mxu0 0.0
    %8148 = vmatpush2.msra.mxu0 %v8105
    %8149 = vmatprep.subr.mxu0 0.0
    %8150 = vmatpush2.msra.mxu0 %v8104
    %8151 = vmatprep.subr.mxu0 0.0
    %8152 = vmatpush2.msra.mxu0 %v8103
    %8153 = vmatprep.subr.mxu0 0.0
    %8154 = vmatpush2.msra.mxu0 %v8102
    %8155 = vmatprep.subr.mxu0 0.0
    %8156 = vmatpush2.msra.mxu0 %v8101
    %8157 = vmatprep.subr.mxu0 0.0
    %8158 = vmatpush2.msra.mxu0 %v8100
    %8159 = vmatprep.subr.mxu0 0.0
    %8160 = vmatpush2.msra.mxu0 %v8099
    %8161 = vmatprep.subr.mxu0 0.0
    %8162 = vmatpush2.msra.mxu0 %v8098
    %8163 = vmatprep.subr.mxu0 0.0
    %8164 = vmatpush2.msra.mxu0 %v8097
    %8165 = vmatprep.subr.mxu0 0.0
    %8166 = vmatpush2.msra.mxu0 %v8096
    %8167 = vmatprep.subr.mxu0 0.0
    %8168 = vmatpush2.msra.mxu0 %v8095
    %8169 = vmatprep.subr.mxu0 0.0
    %8170 = vmatpush2.msra.mxu0 %v8094
    %8171 = vmatprep.subr.mxu0 0.0
    %8172 = vmatpush2.msra.mxu0 %v8093
    %8173 = vmatprep.mubr.f32.mxu0 %v8070
    %8174 = vmatmul.mubr.f32.gmra.mxu0 %v8069
    %v8175 = vpop.f32.mrf.mxu0
    %v8176 = vadd.f32 0.0, %v8175
    %v8177 = vpop.f32.mrf.mxu0
    %8178 = vmatprep.mubr.f32.mxu0 %v8072
    %8179 = vmatmul.mubr.f32.gmra.mxu0 %v8071
    %v8180 = vpop.f32.mrf.mxu0
    %v8181 = vadd.f32 0.0, %v8180
    %v8182 = vpop.f32.mrf.mxu0
    %8183 = vmatprep.mubr.f32.mxu0 %v8074
    %8184 = vmatmul.mubr.f32.gmra.mxu0 %v8073
    %v8185 = vpop.f32.mrf.mxu0
    %v8186 = vadd.f32 0.0, %v8185
    %v8187 = vpop.f32.mrf.mxu0
    %8188 = vmatprep.mubr.f32.mxu0 %v8076
    %8189 = vmatmul.mubr.f32.gmra.mxu0 %v8075
    %v8190 = vpop.f32.mrf.mxu0
    %v8191 = vadd.f32 0.0, %v8190
    %v8192 = vpop.f32.mrf.mxu0
    %8193 = vdwg.mxu0
    %v8194 = vmul.f32 %v8069, %v8069
    %v8195 = vmul.f32 %v8070, %v8070
    %v8196 = vmul.f32 %v8071, %v8071
    %v8197 = vmul.f32 %v8072, %v8072
    %v8198 = vmul.f32 %v8073, %v8073
    %v8199 = vmul.f32 %v8074, %v8074
    %v8200 = vmul.f32 %v8075, %v8075
    %v8201 = vmul.f32 %v8076, %v8076
    %8202 = vmatprep.subr.mxu0 0.0
    %8203 = vmatpush1.msra.mxu0 %v8092
    %8204 = vmatprep.subr.mxu0 0.0
    %8205 = vmatpush1.msra.mxu0 %v8091
    %8206 = vmatprep.subr.mxu0 0.0
    %8207 = vmatpush1.msra.mxu0 %v8090
    %8208 = vmatprep.subr.mxu0 0.0
    %8209 = vmatpush1.msra.mxu0 %v8089
    %8210 = vmatprep.subr.mxu0 0.0
    %8211 = vmatpush1.msra.mxu0 %v8088
    %8212 = vmatprep.subr.mxu0 0.0
    %8213 = vmatpush1.msra.mxu0 %v8087
    %8214 = vmatprep.subr.mxu0 0.0
    %8215 = vmatpush1.msra.mxu0 %v8086
    %8216 = vmatprep.subr.mxu0 0.0
    %8217 = vmatpush1.msra.mxu0 %v8085
    %8218 = vmatprep.subr.mxu0 0.0
    %8219 = vmatpush1.msra.mxu0 %v8084
    %8220 = vmatprep.subr.mxu0 0.0
    %8221 = vmatpush1.msra.mxu0 %v8083
    %8222 = vmatprep.subr.mxu0 0.0
    %8223 = vmatpush1.msra.mxu0 %v8082
    %8224 = vmatprep.subr.mxu0 0.0
    %8225 = vmatpush1.msra.mxu0 %v8081
    %8226 = vmatprep.subr.mxu0 0.0
    %8227 = vmatpush1.msra.mxu0 %v8080
    %8228 = vmatprep.subr.mxu0 0.0
    %8229 = vmatpush1.msra.mxu0 %v8079
    %8230 = vmatprep.subr.mxu0 0.0
    %8231 = vmatpush1.msra.mxu0 %v8078
    %8232 = vmatprep.subr.mxu0 0.0
    %8233 = vmatpush1.msra.mxu0 %v8077
    %8234 = vmatprep.subr.mxu0 0.0
    %8235 = vmatpush2.msra.mxu0 %v8108
    %8236 = vmatprep.subr.mxu0 0.0
    %8237 = vmatpush2.msra.mxu0 %v8107
    %8238 = vmatprep.subr.mxu0 0.0
    %8239 = vmatpush2.msra.mxu0 %v8106
    %8240 = vmatprep.subr.mxu0 0.0
    %8241 = vmatpush2.msra.mxu0 %v8105
    %8242 = vmatprep.subr.mxu0 0.0
    %8243 = vmatpush2.msra.mxu0 %v8104
    %8244 = vmatprep.subr.mxu0 0.0
    %8245 = vmatpush2.msra.mxu0 %v8103
    %8246 = vmatprep.subr.mxu0 0.0
    %8247 = vmatpush2.msra.mxu0 %v8102
    %8248 = vmatprep.subr.mxu0 0.0
    %8249 = vmatpush2.msra.mxu0 %v8101
    %8250 = vmatprep.subr.mxu0 0.0
    %8251 = vmatpush2.msra.mxu0 %v8100
    %8252 = vmatprep.subr.mxu0 0.0
    %8253 = vmatpush2.msra.mxu0 %v8099
    %8254 = vmatprep.subr.mxu0 0.0
    %8255 = vmatpush2.msra.mxu0 %v8098
    %8256 = vmatprep.subr.mxu0 0.0
    %8257 = vmatpush2.msra.mxu0 %v8097
    %8258 = vmatprep.subr.mxu0 0.0
    %8259 = vmatpush2.msra.mxu0 %v8096
    %8260 = vmatprep.subr.mxu0 0.0
    %8261 = vmatpush2.msra.mxu0 %v8095
    %8262 = vmatprep.subr.mxu0 0.0
    %8263 = vmatpush2.msra.mxu0 %v8094
    %8264 = vmatprep.subr.mxu0 0.0
    %8265 = vmatpush2.msra.mxu0 %v8093
    %8266 = vmatprep.mubr.f32.mxu0 %v8195
    %8267 = vmatmul.mubr.f32.gmra.mxu0 %v8194
    %v8268 = vpop.f32.mrf.mxu0
    %v8269 = vadd.f32 0.0, %v8268
    %v8270 = vpop.f32.mrf.mxu0
    %8271 = vmatprep.mubr.f32.mxu0 %v8197
    %8272 = vmatmul.mubr.f32.gmra.mxu0 %v8196
    %v8273 = vpop.f32.mrf.mxu0
    %v8274 = vadd.f32 0.0, %v8273
    %v8275 = vpop.f32.mrf.mxu0
    %8276 = vmatprep.mubr.f32.mxu0 %v8199
    %8277 = vmatmul.mubr.f32.gmra.mxu0 %v8198
    %v8278 = vpop.f32.mrf.mxu0
    %v8279 = vadd.f32 0.0, %v8278
    %v8280 = vpop.f32.mrf.mxu0
    %8281 = vmatprep.mubr.f32.mxu0 %v8201
    %8282 = vmatmul.mubr.f32.gmra.mxu0 %v8200
    %v8283 = vpop.f32.mrf.mxu0
    %v8284 = vadd.f32 0.0, %v8283
    %v8285 = vpop.f32.mrf.mxu0
    %8286 = vdwg.mxu0
    %v8287 = vsel %vm5055, %v8176, 0.0
    %v8288 = vsel %vm5055, %v8181, 0.0
    %v8289 = vadd.f32 %v8287, %v8288
    %v8290 = vsel %vm5055, %v8186, 0.0
    %v8291 = vadd.f32 %v8289, %v8290
    %v8292 = vsel %vm5055, %v8191, 0.0
    %v8293 = vadd.f32 %v8291, %v8292
    %v8294 = vrot.slane %v8293, 4
    %v8295 = vadd.f32 %v8293, %v8294
    %v8296 = vrot.slane %v8295, 2
    %v8297 = vadd.f32 %v8295, %v8296
    %v8298 = vrot.slane %v8297, 1
    %v8299 = vadd.f32 %v8297, %v8298
    %v8300 = vmul.f32 %v8299, 0.001953125
    %v8301 = vsel %vm5055, %v8269, 0.0
    %v8302 = vsel %vm5055, %v8274, 0.0
    %v8303 = vadd.f32 %v8301, %v8302
    %v8304 = vsel %vm5055, %v8279, 0.0
    %v8305 = vadd.f32 %v8303, %v8304
    %v8306 = vsel %vm5055, %v8284, 0.0
    %v8307 = vadd.f32 %v8305, %v8306
    %v8308 = vrot.slane %v8307, 4
    %v8309 = vadd.f32 %v8307, %v8308
    %v8310 = vrot.slane %v8309, 2
    %v8311 = vadd.f32 %v8309, %v8310
    %v8312 = vrot.slane %v8311, 1
    %v8313 = vadd.f32 %v8311, %v8312
    %v8314 = vmul.f32 %v8313, 0.001953125
    %v8315 = vmul.f32 %v8300, %v8300
    %v8316 = vsub.f32 %v8314, %v8315
    %v8317 = vmax.f32 %v8316, 0.0
    %v8318 = vadd.f32 %v8317, 1.001e-05
    %v8319 = vrsqrt.pop %v8318
    %v8320 = vld [vmem:[#allocation18] sm:$0x1]
    %v8321 = vmul.f32 %v8320, %v8319
    %v8322 = vld [vmem:[#allocation19] sm:$0x1]
    %v8323 = vmul.f32 %v8300, %v8321
    %v8324 = vsub.f32 %v8322, %v8323
    %v8326 = vlaneseq
    %v8327 = vshrl.u32 %v8326, 7
    %v8328 = vsub.s32 0, %v8327
    %v8329 = vrot.slane %v8321, %v8328
    %8330 = vrot.lane.b32.xlu0 %v8329, 16
    %v8331 = vpop.permute.xlu0 %8330
    %8333 = vrot.lane.b32.xlu0 %v8329, 32
    %v8334 = vpop.permute.xlu0 %8333
    %8336 = vrot.lane.b32.xlu0 %v8329, 48
    %v8337 = vpop.permute.xlu0 %8336
    %8339 = vrot.lane.b32.xlu0 %v8329, 64
    %v8340 = vpop.permute.xlu0 %8339
    %8342 = vrot.lane.b32.xlu0 %v8329, 80
    %v8343 = vpop.permute.xlu0 %8342
    %8345 = vrot.lane.b32.xlu0 %v8329, 96
    %v8346 = vpop.permute.xlu0 %8345
    %8348 = vrot.lane.b32.xlu0 %v8329, 112
    %v8349 = vpop.permute.xlu0 %8348
    %v8351 = vsel %vm5055, %v8321, %v8331
    %v8352 = vsel %vm1631, %v8351, %v8334
    %v8353 = vsel %vm5122, %v8352, %v8337
    %v8354 = vsel %vm1685, %v8353, %v8340
    %v8355 = vsel %vm5125, %v8354, %v8343
    %v8356 = vsel %vm1687, %v8355, %v8346
    %v8357 = vsel %vm5128, %v8356, %v8349
    %v8359 = vlaneseq
    %v8360 = vshrl.u32 %v8359, 7
    %v8361 = vsub.s32 0, %v8360
    %v8362 = vrot.slane %v8324, %v8361
    %8363 = vrot.lane.b32.xlu0 %v8362, 16
    %v8364 = vpop.permute.xlu0 %8363
    %8366 = vrot.lane.b32.xlu0 %v8362, 32
    %v8367 = vpop.permute.xlu0 %8366
    %8369 = vrot.lane.b32.xlu0 %v8362, 48
    %v8370 = vpop.permute.xlu0 %8369
    %8372 = vrot.lane.b32.xlu0 %v8362, 64
    %v8373 = vpop.permute.xlu0 %8372
    %8375 = vrot.lane.b32.xlu0 %v8362, 80
    %v8376 = vpop.permute.xlu0 %8375
    %8378 = vrot.lane.b32.xlu0 %v8362, 96
    %v8379 = vpop.permute.xlu0 %8378
    %8381 = vrot.lane.b32.xlu0 %v8362, 112
    %v8382 = vpop.permute.xlu0 %8381
    %v8384 = vsel %vm5055, %v8324, %v8364
    %v8385 = vsel %vm1631, %v8384, %v8367
    %v8386 = vsel %vm5122, %v8385, %v8370
    %v8387 = vsel %vm1685, %v8386, %v8373
    %v8388 = vsel %vm5125, %v8387, %v8376
    %v8389 = vsel %vm1687, %v8388, %v8379
    %v8390 = vsel %vm5128, %v8389, %v8382
    %v8391 = vlaneseq
    %v8392 = vshrl.u32 %v8391, 7
    %v8393 = vsub.s32 0, %v8392
    %v8394 = vrot.slane %v8357, %v8393
    %v8395 = vmul.f32 %v8069, %v8394
    %v8396 = vmul.f32 %v8070, %v8394
    %v8397 = vmul.f32 %v8071, %v8394
    %v8398 = vmul.f32 %v8072, %v8394
    %v8399 = vmul.f32 %v8073, %v8394
    %v8400 = vmul.f32 %v8074, %v8394
    %v8401 = vmul.f32 %v8075, %v8394
    %v8402 = vmul.f32 %v8076, %v8394
    %v8403 = vlaneseq
    %v8404 = vshrl.u32 %v8403, 7
    %v8405 = vsub.s32 0, %v8404
    %v8406 = vrot.slane %v8390, %v8405
    %v8407 = vadd.f32 %v8395, %v8406
    %v8408 = vadd.f32 %v8396, %v8406
    %v8409 = vadd.f32 %v8397, %v8406
    %v8410 = vadd.f32 %v8398, %v8406
    %v8411 = vadd.f32 %v8399, %v8406
    %v8412 = vadd.f32 %v8400, %v8406
    %v8413 = vadd.f32 %v8401, %v8406
    %v8414 = vadd.f32 %v8402, %v8406
    %v8415 = vmax.f32 %v8407, 0.0
    %v8416 = vmax.f32 %v8408, 0.0
    %v8417 = vmax.f32 %v8409, 0.0
    %v8418 = vmax.f32 %v8410, 0.0
    %v8419 = vmax.f32 %v8411, 0.0
    %v8420 = vmax.f32 %v8412, 0.0
    %v8421 = vmax.f32 %v8413, 0.0
    %v8422 = vmax.f32 %v8414, 0.0
    %8423 = vst.msk [vmem:[#allocation4] ss:$8 sm:$0x3] %vm5198, 0.0
    %8424 = vst.msk [vmem:[#allocation4] ss:$8 sm:$0x0] %vm5198, 0.0
    %s8425 = scalar_lea.vmem [#allocation4], 48
    %8426 = vst.msk [vmem:[%s8425] ss:$8 sm:$0x3] %vm5198, 0.0
    %8427 = vst.msk [vmem:[%s8425] ss:$8 sm:$0x0] %vm5198, 0.0
    %s8428 = scalar_lea.vmem [#allocation4], 33
    %8429 = vst.msk [vmem:[%s8428] ss:$8 sm:$0x3] %vm5198, 0.0
    %8430 = vst.msk [vmem:[%s8428] ss:$8 sm:$0x0] %vm5198, 0.0
    %s8431 = scalar_lea.vmem [#allocation4], 81
    %8432 = vst.msk [vmem:[%s8431] ss:$8 sm:$0x3] %vm5198, 0.0
    %8433 = vst.msk [vmem:[%s8431] ss:$8 sm:$0x0] %vm5198, 0.0
    %v8442 = vrot.slane %v8415, 7
    %v8443 = vrot.slane %v8416, 7
    %v8444 = vrot.slane %v8417, 7
    %v8445 = vsel %vm5218, %v8442, %v8444
    %v8446 = vrot.slane %v8418, 7
    %v8447 = vsel %vm5218, %v8443, %v8446
    %v8448 = vrot.slane %v8419, 7
    %v8449 = vrot.slane %v8420, 7
    %v8450 = vrot.slane %v8421, 7
    %v8451 = vsel %vm5218, %v8448, %v8450
    %v8452 = vrot.slane %v8422, 7
    %v8453 = vsel %vm5218, %v8449, %v8452
    %8466 = vst [vmem:[#allocation4] sm:$0xfe] %v8442
    %8467 = vst [vmem:[#allocation4 + $0x8] sm:$0xfe] %v8443
    %8468 = vst [vmem:[#allocation4 + $0x10] sm:$0xff] %v8445
    %8469 = vst [vmem:[#allocation4 + $0x18] sm:$0xff] %v8447
    %8470 = vst [vmem:[#allocation4 + $0x20] sm:$0x1] %v8444
    %8471 = vst [vmem:[#allocation4 + $0x28] sm:$0x1] %v8446
    %8472 = vst [vmem:[#allocation4 + $0x30] sm:$0xfe] %v8448
    %8473 = vst [vmem:[#allocation4 + $0x38] sm:$0xfe] %v8449
    %8474 = vst [vmem:[#allocation4 + $0x40] sm:$0xff] %v8451
    %8475 = vst [vmem:[#allocation4 + $0x48] sm:$0xff] %v8453
    %8476 = vst [vmem:[#allocation4 + $0x50] sm:$0x1] %v8450
    %8477 = vst [vmem:[#allocation4 + $0x58] sm:$0x1] %v8452
    %v8478 = vld [vmem:[#allocation3] sm:$0xff]
    %v8479 = vld [vmem:[#allocation3 + $0x8] sm:$0xff]
    %v8480 = vld [vmem:[#allocation3 + $0x10] sm:$0xff]
    %v8481 = vld [vmem:[#allocation3 + $0x18] sm:$0xff]
    %v8482 = vld [vmem:[#allocation3 + $0x30] sm:$0xff]
    %v8483 = vld [vmem:[#allocation3 + $0x38] sm:$0xff]
    %v8484 = vld [vmem:[#allocation3 + $0x40] sm:$0xff]
    %v8485 = vld [vmem:[#allocation3 + $0x48] sm:$0xff]
    %v8486 = vpack.c.bf16 %v8480, %v8478
    %v8487 = vpack.c.bf16 %v8481, %v8479
    %v8488 = vpack.c.bf16 %v8484, %v8482
    %v8489 = vpack.c.bf16 %v8485, %v8483
    %v8490 = vld [vmem:[#allocation10] sm:$0xf]
    %v8491 = vld [vmem:[#allocation10 + $0x4] sm:$0xf]
    %v8492 = vld [vmem:[#allocation10 + $0x8] sm:$0xf]
    %v8493 = vld [vmem:[#allocation10 + $0xc] sm:$0xf]
    %v8494 = vld [vmem:[#allocation10 + $0x10] sm:$0xf]
    %v8495 = vld [vmem:[#allocation10 + $0x14] sm:$0xf]
    %v8496 = vld [vmem:[#allocation10 + $0x18] sm:$0xf]
    %v8497 = vld [vmem:[#allocation10 + $0x1c] sm:$0xf]
    %v8498 = vld [vmem:[#allocation10 + $0x20] sm:$0xf]
    %v8499 = vld [vmem:[#allocation10 + $0x24] sm:$0xf]
    %v8500 = vld [vmem:[#allocation10 + $0x28] sm:$0xf]
    %v8501 = vld [vmem:[#allocation10 + $0x2c] sm:$0xf]
    %v8502 = vld [vmem:[#allocation10 + $0x30] sm:$0xf]
    %v8503 = vld [vmem:[#allocation10 + $0x34] sm:$0xf]
    %v8504 = vld [vmem:[#allocation10 + $0x38] sm:$0xf]
    %v8505 = vld [vmem:[#allocation10 + $0x3c] sm:$0xf]
    %v8506 = vld [vmem:[#allocation10 + $0x40] sm:$0xf]
    %v8507 = vld [vmem:[#allocation10 + $0x44] sm:$0xf]
    %v8508 = vld [vmem:[#allocation10 + $0x48] sm:$0xf]
    %v8509 = vld [vmem:[#allocation10 + $0x4c] sm:$0xf]
    %v8510 = vld [vmem:[#allocation10 + $0x50] sm:$0xf]
    %v8511 = vld [vmem:[#allocation10 + $0x54] sm:$0xf]
    %v8512 = vld [vmem:[#allocation10 + $0x58] sm:$0xf]
    %v8513 = vld [vmem:[#allocation10 + $0x5c] sm:$0xf]
    %v8514 = vld [vmem:[#allocation10 + $0x60] sm:$0xf]
    %v8515 = vld [vmem:[#allocation10 + $0x64] sm:$0xf]
    %v8516 = vld [vmem:[#allocation10 + $0x68] sm:$0xf]
    %v8517 = vld [vmem:[#allocation10 + $0x6c] sm:$0xf]
    %v8518 = vld [vmem:[#allocation10 + $0x70] sm:$0xf]
    %v8519 = vld [vmem:[#allocation10 + $0x74] sm:$0xf]
    %v8520 = vld [vmem:[#allocation10 + $0x78] sm:$0xf]
    %v8521 = vld [vmem:[#allocation10 + $0x7c] sm:$0xf]
    %v8522 = vld [vmem:[#allocation3] sm:$0xfe]
    %v8523 = vld [vmem:[#allocation3 + $0x8] sm:$0xfe]
    %v8524 = vld [vmem:[#allocation3 + $0x20] sm:$0x1]
    %v8525 = vld [vmem:[#allocation3 + $0x28] sm:$0x1]
    %v8526 = vld [vmem:[#allocation3 + $0x30] sm:$0xfe]
    %v8527 = vld [vmem:[#allocation3 + $0x38] sm:$0xfe]
    %v8528 = vld [vmem:[#allocation3 + $0x50] sm:$0x1]
    %v8529 = vld [vmem:[#allocation3 + $0x58] sm:$0x1]
    %vm8542 = vcmask 1046528
    %v8543 = vrot.slane %v8522, 1
    %v8544 = vrot.slane %v8480, 1
    %v8545 = vsel %vm8542, %v8543, %v8544
    %v8546 = vrot.slane %v8523, 1
    %v8547 = vrot.slane %v8481, 1
    %v8548 = vsel %vm8542, %v8546, %v8547
    %v8549 = vrot.slane %v8524, 1
    %v8550 = vsel %vm8542, %v8544, %v8549
    %v8551 = vrot.slane %v8525, 1
    %v8552 = vsel %vm8542, %v8547, %v8551
    %v8553 = vrot.slane %v8526, 1
    %v8554 = vrot.slane %v8484, 1
    %v8555 = vsel %vm8542, %v8553, %v8554
    %v8556 = vrot.slane %v8527, 1
    %v8557 = vrot.slane %v8485, 1
    %v8558 = vsel %vm8542, %v8556, %v8557
    %v8559 = vrot.slane %v8528, 1
    %v8560 = vsel %vm8542, %v8554, %v8559
    %v8561 = vrot.slane %v8529, 1
    %v8562 = vsel %vm8542, %v8557, %v8561
    %v8571 = vpack.c.bf16 %v8550, %v8545
    %v8572 = vpack.c.bf16 %v8552, %v8548
    %v8573 = vpack.c.bf16 %v8560, %v8555
    %v8574 = vpack.c.bf16 %v8562, %v8558
    %s8575 = scalar_lea.vmem [#allocation10], 128
    %v8576 = vld [vmem:[%s8575] sm:$0xf]
    %v8577 = vld [vmem:[%s8575 + $0x4] sm:$0xf]
    %v8578 = vld [vmem:[%s8575 + $0x8] sm:$0xf]
    %v8579 = vld [vmem:[%s8575 + $0xc] sm:$0xf]
    %v8580 = vld [vmem:[%s8575 + $0x10] sm:$0xf]
    %v8581 = vld [vmem:[%s8575 + $0x14] sm:$0xf]
    %v8582 = vld [vmem:[%s8575 + $0x18] sm:$0xf]
    %v8583 = vld [vmem:[%s8575 + $0x1c] sm:$0xf]
    %v8584 = vld [vmem:[%s8575 + $0x20] sm:$0xf]
    %v8585 = vld [vmem:[%s8575 + $0x24] sm:$0xf]
    %v8586 = vld [vmem:[%s8575 + $0x28] sm:$0xf]
    %v8587 = vld [vmem:[%s8575 + $0x2c] sm:$0xf]
    %v8588 = vld [vmem:[%s8575 + $0x30] sm:$0xf]
    %v8589 = vld [vmem:[%s8575 + $0x34] sm:$0xf]
    %v8590 = vld [vmem:[%s8575 + $0x38] sm:$0xf]
    %v8591 = vld [vmem:[%s8575 + $0x3c] sm:$0xf]
    %v8592 = vld [vmem:[%s8575 + $0x40] sm:$0xf]
    %v8593 = vld [vmem:[%s8575 + $0x44] sm:$0xf]
    %v8594 = vld [vmem:[%s8575 + $0x48] sm:$0xf]
    %v8595 = vld [vmem:[%s8575 + $0x4c] sm:$0xf]
    %v8596 = vld [vmem:[%s8575 + $0x50] sm:$0xf]
    %v8597 = vld [vmem:[%s8575 + $0x54] sm:$0xf]
    %v8598 = vld [vmem:[%s8575 + $0x58] sm:$0xf]
    %v8599 = vld [vmem:[%s8575 + $0x5c] sm:$0xf]
    %v8600 = vld [vmem:[%s8575 + $0x60] sm:$0xf]
    %v8601 = vld [vmem:[%s8575 + $0x64] sm:$0xf]
    %v8602 = vld [vmem:[%s8575 + $0x68] sm:$0xf]
    %v8603 = vld [vmem:[%s8575 + $0x6c] sm:$0xf]
    %v8604 = vld [vmem:[%s8575 + $0x70] sm:$0xf]
    %v8605 = vld [vmem:[%s8575 + $0x74] sm:$0xf]
    %v8606 = vld [vmem:[%s8575 + $0x78] sm:$0xf]
    %v8607 = vld [vmem:[%s8575 + $0x7c] sm:$0xf]
    %v8640 = vunpack.c.l.b16 %v8576
    %v8641 = vunpack.c.l.b16 %v8577
    %v8642 = vunpack.c.l.b16 %v8578
    %v8643 = vunpack.c.l.b16 %v8579
    %v8644 = vunpack.c.l.b16 %v8580
    %v8645 = vunpack.c.l.b16 %v8581
    %v8646 = vunpack.c.l.b16 %v8582
    %v8647 = vunpack.c.l.b16 %v8583
    %v8648 = vunpack.c.l.b16 %v8584
    %v8649 = vunpack.c.l.b16 %v8585
    %v8650 = vunpack.c.l.b16 %v8586
    %v8651 = vunpack.c.l.b16 %v8587
    %v8652 = vunpack.c.l.b16 %v8588
    %v8653 = vunpack.c.l.b16 %v8589
    %v8654 = vunpack.c.l.b16 %v8590
    %v8655 = vunpack.c.l.b16 %v8591
    %v8656 = vunpack.c.l.b16 %v8592
    %v8657 = vunpack.c.l.b16 %v8593
    %v8658 = vunpack.c.l.b16 %v8594
    %v8659 = vunpack.c.l.b16 %v8595
    %v8660 = vunpack.c.l.b16 %v8596
    %v8661 = vunpack.c.l.b16 %v8597
    %v8662 = vunpack.c.l.b16 %v8598
    %v8663 = vunpack.c.l.b16 %v8599
    %v8664 = vunpack.c.l.b16 %v8600
    %v8665 = vunpack.c.l.b16 %v8601
    %v8666 = vunpack.c.l.b16 %v8602
    %v8667 = vunpack.c.l.b16 %v8603
    %v8668 = vunpack.c.l.b16 %v8604
    %v8669 = vunpack.c.l.b16 %v8605
    %v8670 = vunpack.c.l.b16 %v8606
    %v8671 = vunpack.c.l.b16 %v8607
    %v8672 = vpack.c.b16 %v8641, %v8640
    %v8673 = vpack.c.b16 %v8643, %v8642
    %v8674 = vpack.c.b16 %v8645, %v8644
    %v8675 = vpack.c.b16 %v8647, %v8646
    %v8676 = vpack.c.b16 %v8649, %v8648
    %v8677 = vpack.c.b16 %v8651, %v8650
    %v8678 = vpack.c.b16 %v8653, %v8652
    %v8679 = vpack.c.b16 %v8655, %v8654
    %v8680 = vpack.c.b16 %v8657, %v8656
    %v8681 = vpack.c.b16 %v8659, %v8658
    %v8682 = vpack.c.b16 %v8661, %v8660
    %v8683 = vpack.c.b16 %v8663, %v8662
    %v8684 = vpack.c.b16 %v8665, %v8664
    %v8685 = vpack.c.b16 %v8667, %v8666
    %v8686 = vpack.c.b16 %v8669, %v8668
    %v8687 = vpack.c.b16 %v8671, %v8670
    %8704 = vmatprep.subr.bf16.mxu0 0
    %8705 = vmatpush1.bf16.msra.mxu0 %v8679
    %8706 = vmatprep.subr.bf16.mxu0 0
    %8707 = vmatpush1.bf16.msra.mxu0 %v8678
    %8708 = vmatprep.subr.bf16.mxu0 0
    %8709 = vmatpush1.bf16.msra.mxu0 %v8677
    %8710 = vmatprep.subr.bf16.mxu0 0
    %8711 = vmatpush1.bf16.msra.mxu0 %v8676
    %8712 = vmatprep.subr.bf16.mxu0 0
    %8713 = vmatpush1.bf16.msra.mxu0 %v8675
    %8714 = vmatprep.subr.bf16.mxu0 0
    %8715 = vmatpush1.bf16.msra.mxu0 %v8674
    %8716 = vmatprep.subr.bf16.mxu0 0
    %8717 = vmatpush1.bf16.msra.mxu0 %v8673
    %8718 = vmatprep.subr.bf16.mxu0 0
    %8719 = vmatpush1.bf16.msra.mxu0 %v8672
    %8720 = vmatprep.subr.bf16.mxu0 0
    %8721 = vmatpush2.bf16.msra.mxu0 %v8687
    %8722 = vmatprep.subr.bf16.mxu0 0
    %8723 = vmatpush2.bf16.msra.mxu0 %v8686
    %8724 = vmatprep.subr.bf16.mxu0 0
    %8725 = vmatpush2.bf16.msra.mxu0 %v8685
    %8726 = vmatprep.subr.bf16.mxu0 0
    %8727 = vmatpush2.bf16.msra.mxu0 %v8684
    %8728 = vmatprep.subr.bf16.mxu0 0
    %8729 = vmatpush2.bf16.msra.mxu0 %v8683
    %8730 = vmatprep.subr.bf16.mxu0 0
    %8731 = vmatpush2.bf16.msra.mxu0 %v8682
    %8732 = vmatprep.subr.bf16.mxu0 0
    %8733 = vmatpush2.bf16.msra.mxu0 %v8681
    %8734 = vmatprep.subr.bf16.mxu0 0
    %8735 = vmatpush2.bf16.msra.mxu0 %v8680
    %8736 = vmatprep.mubr.bf16.mxu0 %v8572
    %8737 = vmatmul.mubr.bf16.gmra.mxu0 %v8571
    %v8738 = vpop.f32.mrf.mxu0
    %v8739 = vadd.f32 0.0, %v8738
    %v8740 = vpop.f32.mrf.mxu0
    %v8741 = vpop.f32.mrf.mxu0
    %v8742 = vadd.f32 0.0, %v8741
    %v8743 = vpop.f32.mrf.mxu0
    %8744 = vmatprep.mubr.bf16.mxu0 %v8574
    %8745 = vmatmul.mubr.bf16.gmra.mxu0 %v8573
    %v8746 = vpop.f32.mrf.mxu0
    %v8747 = vadd.f32 0.0, %v8746
    %v8748 = vpop.f32.mrf.mxu0
    %v8749 = vpop.f32.mrf.mxu0
    %v8750 = vadd.f32 0.0, %v8749
    %v8751 = vpop.f32.mrf.mxu0
    %8752 = vdwg.mxu0
    %v8785 = vunpack.c.l.b16 %v8490
    %v8786 = vunpack.c.l.b16 %v8491
    %v8787 = vunpack.c.l.b16 %v8492
    %v8788 = vunpack.c.l.b16 %v8493
    %v8789 = vunpack.c.l.b16 %v8494
    %v8790 = vunpack.c.l.b16 %v8495
    %v8791 = vunpack.c.l.b16 %v8496
    %v8792 = vunpack.c.l.b16 %v8497
    %v8793 = vunpack.c.l.b16 %v8498
    %v8794 = vunpack.c.l.b16 %v8499
    %v8795 = vunpack.c.l.b16 %v8500
    %v8796 = vunpack.c.l.b16 %v8501
    %v8797 = vunpack.c.l.b16 %v8502
    %v8798 = vunpack.c.l.b16 %v8503
    %v8799 = vunpack.c.l.b16 %v8504
    %v8800 = vunpack.c.l.b16 %v8505
    %v8801 = vunpack.c.l.b16 %v8506
    %v8802 = vunpack.c.l.b16 %v8507
    %v8803 = vunpack.c.l.b16 %v8508
    %v8804 = vunpack.c.l.b16 %v8509
    %v8805 = vunpack.c.l.b16 %v8510
    %v8806 = vunpack.c.l.b16 %v8511
    %v8807 = vunpack.c.l.b16 %v8512
    %v8808 = vunpack.c.l.b16 %v8513
    %v8809 = vunpack.c.l.b16 %v8514
    %v8810 = vunpack.c.l.b16 %v8515
    %v8811 = vunpack.c.l.b16 %v8516
    %v8812 = vunpack.c.l.b16 %v8517
    %v8813 = vunpack.c.l.b16 %v8518
    %v8814 = vunpack.c.l.b16 %v8519
    %v8815 = vunpack.c.l.b16 %v8520
    %v8816 = vunpack.c.l.b16 %v8521
    %v8817 = vpack.c.b16 %v8786, %v8785
    %v8818 = vpack.c.b16 %v8788, %v8787
    %v8819 = vpack.c.b16 %v8790, %v8789
    %v8820 = vpack.c.b16 %v8792, %v8791
    %v8821 = vpack.c.b16 %v8794, %v8793
    %v8822 = vpack.c.b16 %v8796, %v8795
    %v8823 = vpack.c.b16 %v8798, %v8797
    %v8824 = vpack.c.b16 %v8800, %v8799
    %v8825 = vpack.c.b16 %v8802, %v8801
    %v8826 = vpack.c.b16 %v8804, %v8803
    %v8827 = vpack.c.b16 %v8806, %v8805
    %v8828 = vpack.c.b16 %v8808, %v8807
    %v8829 = vpack.c.b16 %v8810, %v8809
    %v8830 = vpack.c.b16 %v8812, %v8811
    %v8831 = vpack.c.b16 %v8814, %v8813
    %v8832 = vpack.c.b16 %v8816, %v8815
    %8849 = vmatprep.subr.bf16.mxu0 0
    %8850 = vmatpush1.bf16.msra.mxu0 %v8824
    %8851 = vmatprep.subr.bf16.mxu0 0
    %8852 = vmatpush1.bf16.msra.mxu0 %v8823
    %8853 = vmatprep.subr.bf16.mxu0 0
    %8854 = vmatpush1.bf16.msra.mxu0 %v8822
    %8855 = vmatprep.subr.bf16.mxu0 0
    %8856 = vmatpush1.bf16.msra.mxu0 %v8821
    %8857 = vmatprep.subr.bf16.mxu0 0
    %8858 = vmatpush1.bf16.msra.mxu0 %v8820
    %8859 = vmatprep.subr.bf16.mxu0 0
    %8860 = vmatpush1.bf16.msra.mxu0 %v8819
    %8861 = vmatprep.subr.bf16.mxu0 0
    %8862 = vmatpush1.bf16.msra.mxu0 %v8818
    %8863 = vmatprep.subr.bf16.mxu0 0
    %8864 = vmatpush1.bf16.msra.mxu0 %v8817
    %8865 = vmatprep.subr.bf16.mxu0 0
    %8866 = vmatpush2.bf16.msra.mxu0 %v8832
    %8867 = vmatprep.subr.bf16.mxu0 0
    %8868 = vmatpush2.bf16.msra.mxu0 %v8831
    %8869 = vmatprep.subr.bf16.mxu0 0
    %8870 = vmatpush2.bf16.msra.mxu0 %v8830
    %8871 = vmatprep.subr.bf16.mxu0 0
    %8872 = vmatpush2.bf16.msra.mxu0 %v8829
    %8873 = vmatprep.subr.bf16.mxu0 0
    %8874 = vmatpush2.bf16.msra.mxu0 %v8828
    %8875 = vmatprep.subr.bf16.mxu0 0
    %8876 = vmatpush2.bf16.msra.mxu0 %v8827
    %8877 = vmatprep.subr.bf16.mxu0 0
    %8878 = vmatpush2.bf16.msra.mxu0 %v8826
    %8879 = vmatprep.subr.bf16.mxu0 0
    %8880 = vmatpush2.bf16.msra.mxu0 %v8825
    %8881 = vmatprep.mubr.bf16.mxu0 %v8487
    %8882 = vmatmul.mubr.bf16.gmra.mxu0 %v8486
    %v8883 = vpop.f32.mrf.mxu0
    %v8884 = vadd.f32 %v8739, %v8883
    %v8885 = vpop.f32.mrf.mxu0
    %v8886 = vpop.f32.mrf.mxu0
    %v8887 = vadd.f32 %v8742, %v8886
    %v8888 = vpop.f32.mrf.mxu0
    %8889 = vmatprep.mubr.bf16.mxu0 %v8489
    %8890 = vmatmul.mubr.bf16.gmra.mxu0 %v8488
    %v8891 = vpop.f32.mrf.mxu0
    %v8892 = vadd.f32 %v8747, %v8891
    %v8893 = vpop.f32.mrf.mxu0
    %v8894 = vpop.f32.mrf.mxu0
    %v8895 = vadd.f32 %v8750, %v8894
    %v8896 = vpop.f32.mrf.mxu0
    %8897 = vdwg.mxu0
    %v8898 = vld [vmem:[#allocation3] sm:$0xfc]
    %v8899 = vld [vmem:[#allocation3 + $0x8] sm:$0xfc]
    %v8900 = vld [vmem:[#allocation3 + $0x20] sm:$0x3]
    %v8901 = vld [vmem:[#allocation3 + $0x28] sm:$0x3]
    %v8902 = vld [vmem:[#allocation3 + $0x30] sm:$0xfc]
    %v8903 = vld [vmem:[#allocation3 + $0x38] sm:$0xfc]
    %v8904 = vld [vmem:[#allocation3 + $0x50] sm:$0x3]
    %v8905 = vld [vmem:[#allocation3 + $0x58] sm:$0x3]
    %v8914 = vrot.slane %v8898, 2
    %v8915 = vrot.slane %v8480, 2
    %v8916 = vsel %vm1915, %v8914, %v8915
    %v8917 = vrot.slane %v8899, 2
    %v8918 = vrot.slane %v8481, 2
    %v8919 = vsel %vm1915, %v8917, %v8918
    %v8920 = vrot.slane %v8900, 2
    %v8921 = vsel %vm1915, %v8915, %v8920
    %v8922 = vrot.slane %v8901, 2
    %v8923 = vsel %vm1915, %v8918, %v8922
    %v8924 = vrot.slane %v8902, 2
    %v8925 = vrot.slane %v8484, 2
    %v8926 = vsel %vm1915, %v8924, %v8925
    %v8927 = vrot.slane %v8903, 2
    %v8928 = vrot.slane %v8485, 2
    %v8929 = vsel %vm1915, %v8927, %v8928
    %v8930 = vrot.slane %v8904, 2
    %v8931 = vsel %vm1915, %v8925, %v8930
    %v8932 = vrot.slane %v8905, 2
    %v8933 = vsel %vm1915, %v8928, %v8932
    %v8942 = vpack.c.bf16 %v8921, %v8916
    %v8943 = vpack.c.bf16 %v8923, %v8919
    %v8944 = vpack.c.bf16 %v8931, %v8926
    %v8945 = vpack.c.bf16 %v8933, %v8929
    %s8946 = scalar_lea.vmem [#allocation10], 256
    %v8947 = vld [vmem:[%s8946] sm:$0xf]
    %v8948 = vld [vmem:[%s8946 + $0x4] sm:$0xf]
    %v8949 = vld [vmem:[%s8946 + $0x8] sm:$0xf]
    %v8950 = vld [vmem:[%s8946 + $0xc] sm:$0xf]
    %v8951 = vld [vmem:[%s8946 + $0x10] sm:$0xf]
    %v8952 = vld [vmem:[%s8946 + $0x14] sm:$0xf]
    %v8953 = vld [vmem:[%s8946 + $0x18] sm:$0xf]
    %v8954 = vld [vmem:[%s8946 + $0x1c] sm:$0xf]
    %v8955 = vld [vmem:[%s8946 + $0x20] sm:$0xf]
    %v8956 = vld [vmem:[%s8946 + $0x24] sm:$0xf]
    %v8957 = vld [vmem:[%s8946 + $0x28] sm:$0xf]
    %v8958 = vld [vmem:[%s8946 + $0x2c] sm:$0xf]
    %v8959 = vld [vmem:[%s8946 + $0x30] sm:$0xf]
    %v8960 = vld [vmem:[%s8946 + $0x34] sm:$0xf]
    %v8961 = vld [vmem:[%s8946 + $0x38] sm:$0xf]
    %v8962 = vld [vmem:[%s8946 + $0x3c] sm:$0xf]
    %v8963 = vld [vmem:[%s8946 + $0x40] sm:$0xf]
    %v8964 = vld [vmem:[%s8946 + $0x44] sm:$0xf]
    %v8965 = vld [vmem:[%s8946 + $0x48] sm:$0xf]
    %v8966 = vld [vmem:[%s8946 + $0x4c] sm:$0xf]
    %v8967 = vld [vmem:[%s8946 + $0x50] sm:$0xf]
    %v8968 = vld [vmem:[%s8946 + $0x54] sm:$0xf]
    %v8969 = vld [vmem:[%s8946 + $0x58] sm:$0xf]
    %v8970 = vld [vmem:[%s8946 + $0x5c] sm:$0xf]
    %v8971 = vld [vmem:[%s8946 + $0x60] sm:$0xf]
    %v8972 = vld [vmem:[%s8946 + $0x64] sm:$0xf]
    %v8973 = vld [vmem:[%s8946 + $0x68] sm:$0xf]
    %v8974 = vld [vmem:[%s8946 + $0x6c] sm:$0xf]
    %v8975 = vld [vmem:[%s8946 + $0x70] sm:$0xf]
    %v8976 = vld [vmem:[%s8946 + $0x74] sm:$0xf]
    %v8977 = vld [vmem:[%s8946 + $0x78] sm:$0xf]
    %v8978 = vld [vmem:[%s8946 + $0x7c] sm:$0xf]
    %v9011 = vunpack.c.l.b16 %v8947
    %v9012 = vunpack.c.l.b16 %v8948
    %v9013 = vunpack.c.l.b16 %v8949
    %v9014 = vunpack.c.l.b16 %v8950
    %v9015 = vunpack.c.l.b16 %v8951
    %v9016 = vunpack.c.l.b16 %v8952
    %v9017 = vunpack.c.l.b16 %v8953
    %v9018 = vunpack.c.l.b16 %v8954
    %v9019 = vunpack.c.l.b16 %v8955
    %v9020 = vunpack.c.l.b16 %v8956
    %v9021 = vunpack.c.l.b16 %v8957
    %v9022 = vunpack.c.l.b16 %v8958
    %v9023 = vunpack.c.l.b16 %v8959
    %v9024 = vunpack.c.l.b16 %v8960
    %v9025 = vunpack.c.l.b16 %v8961
    %v9026 = vunpack.c.l.b16 %v8962
    %v9027 = vunpack.c.l.b16 %v8963
    %v9028 = vunpack.c.l.b16 %v8964
    %v9029 = vunpack.c.l.b16 %v8965
    %v9030 = vunpack.c.l.b16 %v8966
    %v9031 = vunpack.c.l.b16 %v8967
    %v9032 = vunpack.c.l.b16 %v8968
    %v9033 = vunpack.c.l.b16 %v8969
    %v9034 = vunpack.c.l.b16 %v8970
    %v9035 = vunpack.c.l.b16 %v8971
    %v9036 = vunpack.c.l.b16 %v8972
    %v9037 = vunpack.c.l.b16 %v8973
    %v9038 = vunpack.c.l.b16 %v8974
    %v9039 = vunpack.c.l.b16 %v8975
    %v9040 = vunpack.c.l.b16 %v8976
    %v9041 = vunpack.c.l.b16 %v8977
    %v9042 = vunpack.c.l.b16 %v8978
    %v9043 = vpack.c.b16 %v9012, %v9011
    %v9044 = vpack.c.b16 %v9014, %v9013
    %v9045 = vpack.c.b16 %v9016, %v9015
    %v9046 = vpack.c.b16 %v9018, %v9017
    %v9047 = vpack.c.b16 %v9020, %v9019
    %v9048 = vpack.c.b16 %v9022, %v9021
    %v9049 = vpack.c.b16 %v9024, %v9023
    %v9050 = vpack.c.b16 %v9026, %v9025
    %v9051 = vpack.c.b16 %v9028, %v9027
    %v9052 = vpack.c.b16 %v9030, %v9029
    %v9053 = vpack.c.b16 %v9032, %v9031
    %v9054 = vpack.c.b16 %v9034, %v9033
    %v9055 = vpack.c.b16 %v9036, %v9035
    %v9056 = vpack.c.b16 %v9038, %v9037
    %v9057 = vpack.c.b16 %v9040, %v9039
    %v9058 = vpack.c.b16 %v9042, %v9041
    %9075 = vmatprep.subr.bf16.mxu0 0
    %9076 = vmatpush1.bf16.msra.mxu0 %v9050
    %9077 = vmatprep.subr.bf16.mxu0 0
    %9078 = vmatpush1.bf16.msra.mxu0 %v9049
    %9079 = vmatprep.subr.bf16.mxu0 0
    %9080 = vmatpush1.bf16.msra.mxu0 %v9048
    %9081 = vmatprep.subr.bf16.mxu0 0
    %9082 = vmatpush1.bf16.msra.mxu0 %v9047
    %9083 = vmatprep.subr.bf16.mxu0 0
    %9084 = vmatpush1.bf16.msra.mxu0 %v9046
    %9085 = vmatprep.subr.bf16.mxu0 0
    %9086 = vmatpush1.bf16.msra.mxu0 %v9045
    %9087 = vmatprep.subr.bf16.mxu0 0
    %9088 = vmatpush1.bf16.msra.mxu0 %v9044
    %9089 = vmatprep.subr.bf16.mxu0 0
    %9090 = vmatpush1.bf16.msra.mxu0 %v9043
    %9091 = vmatprep.subr.bf16.mxu0 0
    %9092 = vmatpush2.bf16.msra.mxu0 %v9058
    %9093 = vmatprep.subr.bf16.mxu0 0
    %9094 = vmatpush2.bf16.msra.mxu0 %v9057
    %9095 = vmatprep.subr.bf16.mxu0 0
    %9096 = vmatpush2.bf16.msra.mxu0 %v9056
    %9097 = vmatprep.subr.bf16.mxu0 0
    %9098 = vmatpush2.bf16.msra.mxu0 %v9055
    %9099 = vmatprep.subr.bf16.mxu0 0
    %9100 = vmatpush2.bf16.msra.mxu0 %v9054
    %9101 = vmatprep.subr.bf16.mxu0 0
    %9102 = vmatpush2.bf16.msra.mxu0 %v9053
    %9103 = vmatprep.subr.bf16.mxu0 0
    %9104 = vmatpush2.bf16.msra.mxu0 %v9052
    %9105 = vmatprep.subr.bf16.mxu0 0
    %9106 = vmatpush2.bf16.msra.mxu0 %v9051
    %9107 = vmatprep.mubr.bf16.mxu0 %v8943
    %9108 = vmatmul.mubr.bf16.gmra.mxu0 %v8942
    %v9109 = vpop.f32.mrf.mxu0
    %v9110 = vadd.f32 0.0, %v9109
    %v9111 = vpop.f32.mrf.mxu0
    %v9112 = vpop.f32.mrf.mxu0
    %v9113 = vadd.f32 0.0, %v9112
    %v9114 = vpop.f32.mrf.mxu0
    %9115 = vmatprep.mubr.bf16.mxu0 %v8945
    %9116 = vmatmul.mubr.bf16.gmra.mxu0 %v8944
    %v9117 = vpop.f32.mrf.mxu0
    %v9118 = vadd.f32 0.0, %v9117
    %v9119 = vpop.f32.mrf.mxu0
    %v9120 = vpop.f32.mrf.mxu0
    %v9121 = vadd.f32 0.0, %v9120
    %v9122 = vpop.f32.mrf.mxu0
    %9123 = vdwg.mxu0
    %v9124 = vadd.f32 %v8884, %v9110
    %v9125 = vadd.f32 %v8887, %v9113
    %v9126 = vadd.f32 %v8892, %v9118
    %v9127 = vadd.f32 %v8895, %v9121
    %v9128 = vld [vmem:[#allocation4] sm:$0xff]
    %v9129 = vld [vmem:[#allocation4 + $0x8] sm:$0xff]
    %v9130 = vld [vmem:[#allocation4 + $0x10] sm:$0xff]
    %v9131 = vld [vmem:[#allocation4 + $0x18] sm:$0xff]
    %v9132 = vld [vmem:[#allocation4 + $0x30] sm:$0xff]
    %v9133 = vld [vmem:[#allocation4 + $0x38] sm:$0xff]
    %v9134 = vld [vmem:[#allocation4 + $0x40] sm:$0xff]
    %v9135 = vld [vmem:[#allocation4 + $0x48] sm:$0xff]
    %v9136 = vpack.c.bf16 %v9130, %v9128
    %v9137 = vpack.c.bf16 %v9131, %v9129
    %v9138 = vpack.c.bf16 %v9134, %v9132
    %v9139 = vpack.c.bf16 %v9135, %v9133
    %v9140 = vld [vmem:[#allocation16] sm:$0xf]
    %v9141 = vld [vmem:[#allocation16 + $0x4] sm:$0xf]
    %v9142 = vld [vmem:[#allocation16 + $0x8] sm:$0xf]
    %v9143 = vld [vmem:[#allocation16 + $0xc] sm:$0xf]
    %v9144 = vld [vmem:[#allocation16 + $0x10] sm:$0xf]
    %v9145 = vld [vmem:[#allocation16 + $0x14] sm:$0xf]
    %v9146 = vld [vmem:[#allocation16 + $0x18] sm:$0xf]
    %v9147 = vld [vmem:[#allocation16 + $0x1c] sm:$0xf]
    %v9148 = vld [vmem:[#allocation16 + $0x20] sm:$0xf]
    %v9149 = vld [vmem:[#allocation16 + $0x24] sm:$0xf]
    %v9150 = vld [vmem:[#allocation16 + $0x28] sm:$0xf]
    %v9151 = vld [vmem:[#allocation16 + $0x2c] sm:$0xf]
    %v9152 = vld [vmem:[#allocation16 + $0x30] sm:$0xf]
    %v9153 = vld [vmem:[#allocation16 + $0x34] sm:$0xf]
    %v9154 = vld [vmem:[#allocation16 + $0x38] sm:$0xf]
    %v9155 = vld [vmem:[#allocation16 + $0x3c] sm:$0xf]
    %v9156 = vld [vmem:[#allocation16 + $0x40] sm:$0xf]
    %v9157 = vld [vmem:[#allocation16 + $0x44] sm:$0xf]
    %v9158 = vld [vmem:[#allocation16 + $0x48] sm:$0xf]
    %v9159 = vld [vmem:[#allocation16 + $0x4c] sm:$0xf]
    %v9160 = vld [vmem:[#allocation16 + $0x50] sm:$0xf]
    %v9161 = vld [vmem:[#allocation16 + $0x54] sm:$0xf]
    %v9162 = vld [vmem:[#allocation16 + $0x58] sm:$0xf]
    %v9163 = vld [vmem:[#allocation16 + $0x5c] sm:$0xf]
    %v9164 = vld [vmem:[#allocation16 + $0x60] sm:$0xf]
    %v9165 = vld [vmem:[#allocation16 + $0x64] sm:$0xf]
    %v9166 = vld [vmem:[#allocation16 + $0x68] sm:$0xf]
    %v9167 = vld [vmem:[#allocation16 + $0x6c] sm:$0xf]
    %v9168 = vld [vmem:[#allocation16 + $0x70] sm:$0xf]
    %v9169 = vld [vmem:[#allocation16 + $0x74] sm:$0xf]
    %v9170 = vld [vmem:[#allocation16 + $0x78] sm:$0xf]
    %v9171 = vld [vmem:[#allocation16 + $0x7c] sm:$0xf]
    %v9204 = vunpack.c.l.b16 %v9140
    %v9205 = vunpack.c.l.b16 %v9141
    %v9206 = vunpack.c.l.b16 %v9142
    %v9207 = vunpack.c.l.b16 %v9143
    %v9208 = vunpack.c.l.b16 %v9144
    %v9209 = vunpack.c.l.b16 %v9145
    %v9210 = vunpack.c.l.b16 %v9146
    %v9211 = vunpack.c.l.b16 %v9147
    %v9212 = vunpack.c.l.b16 %v9148
    %v9213 = vunpack.c.l.b16 %v9149
    %v9214 = vunpack.c.l.b16 %v9150
    %v9215 = vunpack.c.l.b16 %v9151
    %v9216 = vunpack.c.l.b16 %v9152
    %v9217 = vunpack.c.l.b16 %v9153
    %v9218 = vunpack.c.l.b16 %v9154
    %v9219 = vunpack.c.l.b16 %v9155
    %v9220 = vunpack.c.l.b16 %v9156
    %v9221 = vunpack.c.l.b16 %v9157
    %v9222 = vunpack.c.l.b16 %v9158
    %v9223 = vunpack.c.l.b16 %v9159
    %v9224 = vunpack.c.l.b16 %v9160
    %v9225 = vunpack.c.l.b16 %v9161
    %v9226 = vunpack.c.l.b16 %v9162
    %v9227 = vunpack.c.l.b16 %v9163
    %v9228 = vunpack.c.l.b16 %v9164
    %v9229 = vunpack.c.l.b16 %v9165
    %v9230 = vunpack.c.l.b16 %v9166
    %v9231 = vunpack.c.l.b16 %v9167
    %v9232 = vunpack.c.l.b16 %v9168
    %v9233 = vunpack.c.l.b16 %v9169
    %v9234 = vunpack.c.l.b16 %v9170
    %v9235 = vunpack.c.l.b16 %v9171
    %v9236 = vpack.c.b16 %v9205, %v9204
    %v9237 = vpack.c.b16 %v9207, %v9206
    %v9238 = vpack.c.b16 %v9209, %v9208
    %v9239 = vpack.c.b16 %v9211, %v9210
    %v9240 = vpack.c.b16 %v9213, %v9212
    %v9241 = vpack.c.b16 %v9215, %v9214
    %v9242 = vpack.c.b16 %v9217, %v9216
    %v9243 = vpack.c.b16 %v9219, %v9218
    %v9244 = vpack.c.b16 %v9221, %v9220
    %v9245 = vpack.c.b16 %v9223, %v9222
    %v9246 = vpack.c.b16 %v9225, %v9224
    %v9247 = vpack.c.b16 %v9227, %v9226
    %v9248 = vpack.c.b16 %v9229, %v9228
    %v9249 = vpack.c.b16 %v9231, %v9230
    %v9250 = vpack.c.b16 %v9233, %v9232
    %v9251 = vpack.c.b16 %v9235, %v9234
    %9268 = vmatprep.subr.bf16.mxu0 0
    %9269 = vmatpush1.bf16.msra.mxu0 %v9243
    %9270 = vmatprep.subr.bf16.mxu0 0
    %9271 = vmatpush1.bf16.msra.mxu0 %v9242
    %9272 = vmatprep.subr.bf16.mxu0 0
    %9273 = vmatpush1.bf16.msra.mxu0 %v9241
    %9274 = vmatprep.subr.bf16.mxu0 0
    %9275 = vmatpush1.bf16.msra.mxu0 %v9240
    %9276 = vmatprep.subr.bf16.mxu0 0
    %9277 = vmatpush1.bf16.msra.mxu0 %v9239
    %9278 = vmatprep.subr.bf16.mxu0 0
    %9279 = vmatpush1.bf16.msra.mxu0 %v9238
    %9280 = vmatprep.subr.bf16.mxu0 0
    %9281 = vmatpush1.bf16.msra.mxu0 %v9237
    %9282 = vmatprep.subr.bf16.mxu0 0
    %9283 = vmatpush1.bf16.msra.mxu0 %v9236
    %9284 = vmatprep.subr.bf16.mxu0 0
    %9285 = vmatpush2.bf16.msra.mxu0 %v9251
    %9286 = vmatprep.subr.bf16.mxu0 0
    %9287 = vmatpush2.bf16.msra.mxu0 %v9250
    %9288 = vmatprep.subr.bf16.mxu0 0
    %9289 = vmatpush2.bf16.msra.mxu0 %v9249
    %9290 = vmatprep.subr.bf16.mxu0 0
    %9291 = vmatpush2.bf16.msra.mxu0 %v9248
    %9292 = vmatprep.subr.bf16.mxu0 0
    %9293 = vmatpush2.bf16.msra.mxu0 %v9247
    %9294 = vmatprep.subr.bf16.mxu0 0
    %9295 = vmatpush2.bf16.msra.mxu0 %v9246
    %9296 = vmatprep.subr.bf16.mxu0 0
    %9297 = vmatpush2.bf16.msra.mxu0 %v9245
    %9298 = vmatprep.subr.bf16.mxu0 0
    %9299 = vmatpush2.bf16.msra.mxu0 %v9244
    %9300 = vmatprep.mubr.bf16.mxu0 %v9137
    %9301 = vmatmul.mubr.bf16.gmra.mxu0 %v9136
    %v9302 = vpop.f32.mrf.mxu0
    %v9303 = vadd.f32 0.0, %v9302
    %v9304 = vpop.f32.mrf.mxu0
    %v9305 = vpop.f32.mrf.mxu0
    %v9306 = vadd.f32 0.0, %v9305
    %v9307 = vpop.f32.mrf.mxu0
    %9308 = vmatprep.mubr.bf16.mxu0 %v9139
    %9309 = vmatmul.mubr.bf16.gmra.mxu0 %v9138
    %v9310 = vpop.f32.mrf.mxu0
    %v9311 = vadd.f32 0.0, %v9310
    %v9312 = vpop.f32.mrf.mxu0
    %v9313 = vpop.f32.mrf.mxu0
    %v9314 = vadd.f32 0.0, %v9313
    %v9315 = vpop.f32.mrf.mxu0
    %9316 = vdwg.mxu0
    %v9317 = vadd.f32 %v9124, %v9303
    %v9318 = vadd.f32 %v9125, %v9306
    %v9319 = vadd.f32 %v9126, %v9311
    %v9320 = vadd.f32 %v9127, %v9314
    %v9321 = vld [vmem:[#allocation4] sm:$0xfe]
    %v9322 = vld [vmem:[#allocation4 + $0x8] sm:$0xfe]
    %v9323 = vld [vmem:[#allocation4 + $0x10] sm:$0xff]
    %v9324 = vld [vmem:[#allocation4 + $0x18] sm:$0xff]
    %v9325 = vld [vmem:[#allocation4 + $0x20] sm:$0x1]
    %v9326 = vld [vmem:[#allocation4 + $0x28] sm:$0x1]
    %v9327 = vld [vmem:[#allocation4 + $0x30] sm:$0xfe]
    %v9328 = vld [vmem:[#allocation4 + $0x38] sm:$0xfe]
    %v9329 = vld [vmem:[#allocation4 + $0x40] sm:$0xff]
    %v9330 = vld [vmem:[#allocation4 + $0x48] sm:$0xff]
    %v9331 = vld [vmem:[#allocation4 + $0x50] sm:$0x1]
    %v9332 = vld [vmem:[#allocation4 + $0x58] sm:$0x1]
    %v9345 = vrot.slane %v9321, 1
    %v9346 = vrot.slane %v9323, 1
    %v9347 = vsel %vm8542, %v9345, %v9346
    %v9348 = vrot.slane %v9322, 1
    %v9349 = vrot.slane %v9324, 1
    %v9350 = vsel %vm8542, %v9348, %v9349
    %v9351 = vrot.slane %v9325, 1
    %v9352 = vsel %vm8542, %v9346, %v9351
    %v9353 = vrot.slane %v9326, 1
    %v9354 = vsel %vm8542, %v9349, %v9353
    %v9355 = vrot.slane %v9327, 1
    %v9356 = vrot.slane %v9329, 1
    %v9357 = vsel %vm8542, %v9355, %v9356
    %v9358 = vrot.slane %v9328, 1
    %v9359 = vrot.slane %v9330, 1
    %v9360 = vsel %vm8542, %v9358, %v9359
    %v9361 = vrot.slane %v9331, 1
    %v9362 = vsel %vm8542, %v9356, %v9361
    %v9363 = vrot.slane %v9332, 1
    %v9364 = vsel %vm8542, %v9359, %v9363
    %v9373 = vpack.c.bf16 %v9352, %v9347
    %v9374 = vpack.c.bf16 %v9354, %v9350
    %v9375 = vpack.c.bf16 %v9362, %v9357
    %v9376 = vpack.c.bf16 %v9364, %v9360
    %s9377 = scalar_lea.vmem [#allocation16], 128
    %v9378 = vld [vmem:[%s9377] sm:$0xf]
    %v9379 = vld [vmem:[%s9377 + $0x4] sm:$0xf]
    %v9380 = vld [vmem:[%s9377 + $0x8] sm:$0xf]
    %v9381 = vld [vmem:[%s9377 + $0xc] sm:$0xf]
    %v9382 = vld [vmem:[%s9377 + $0x10] sm:$0xf]
    %v9383 = vld [vmem:[%s9377 + $0x14] sm:$0xf]
    %v9384 = vld [vmem:[%s9377 + $0x18] sm:$0xf]
    %v9385 = vld [vmem:[%s9377 + $0x1c] sm:$0xf]
    %v9386 = vld [vmem:[%s9377 + $0x20] sm:$0xf]
    %v9387 = vld [vmem:[%s9377 + $0x24] sm:$0xf]
    %v9388 = vld [vmem:[%s9377 + $0x28] sm:$0xf]
    %v9389 = vld [vmem:[%s9377 + $0x2c] sm:$0xf]
    %v9390 = vld [vmem:[%s9377 + $0x30] sm:$0xf]
    %v9391 = vld [vmem:[%s9377 + $0x34] sm:$0xf]
    %v9392 = vld [vmem:[%s9377 + $0x38] sm:$0xf]
    %v9393 = vld [vmem:[%s9377 + $0x3c] sm:$0xf]
    %v9394 = vld [vmem:[%s9377 + $0x40] sm:$0xf]
    %v9395 = vld [vmem:[%s9377 + $0x44] sm:$0xf]
    %v9396 = vld [vmem:[%s9377 + $0x48] sm:$0xf]
    %v9397 = vld [vmem:[%s9377 + $0x4c] sm:$0xf]
    %v9398 = vld [vmem:[%s9377 + $0x50] sm:$0xf]
    %v9399 = vld [vmem:[%s9377 + $0x54] sm:$0xf]
    %v9400 = vld [vmem:[%s9377 + $0x58] sm:$0xf]
    %v9401 = vld [vmem:[%s9377 + $0x5c] sm:$0xf]
    %v9402 = vld [vmem:[%s9377 + $0x60] sm:$0xf]
    %v9403 = vld [vmem:[%s9377 + $0x64] sm:$0xf]
    %v9404 = vld [vmem:[%s9377 + $0x68] sm:$0xf]
    %v9405 = vld [vmem:[%s9377 + $0x6c] sm:$0xf]
    %v9406 = vld [vmem:[%s9377 + $0x70] sm:$0xf]
    %v9407 = vld [vmem:[%s9377 + $0x74] sm:$0xf]
    %v9408 = vld [vmem:[%s9377 + $0x78] sm:$0xf]
    %v9409 = vld [vmem:[%s9377 + $0x7c] sm:$0xf]
    %v9442 = vunpack.c.l.b16 %v9378
    %v9443 = vunpack.c.l.b16 %v9379
    %v9444 = vunpack.c.l.b16 %v9380
    %v9445 = vunpack.c.l.b16 %v9381
    %v9446 = vunpack.c.l.b16 %v9382
    %v9447 = vunpack.c.l.b16 %v9383
    %v9448 = vunpack.c.l.b16 %v9384
    %v9449 = vunpack.c.l.b16 %v9385
    %v9450 = vunpack.c.l.b16 %v9386
    %v9451 = vunpack.c.l.b16 %v9387
    %v9452 = vunpack.c.l.b16 %v9388
    %v9453 = vunpack.c.l.b16 %v9389
    %v9454 = vunpack.c.l.b16 %v9390
    %v9455 = vunpack.c.l.b16 %v9391
    %v9456 = vunpack.c.l.b16 %v9392
    %v9457 = vunpack.c.l.b16 %v9393
    %v9458 = vunpack.c.l.b16 %v9394
    %v9459 = vunpack.c.l.b16 %v9395
    %v9460 = vunpack.c.l.b16 %v9396
    %v9461 = vunpack.c.l.b16 %v9397
    %v9462 = vunpack.c.l.b16 %v9398
    %v9463 = vunpack.c.l.b16 %v9399
    %v9464 = vunpack.c.l.b16 %v9400
    %v9465 = vunpack.c.l.b16 %v9401
    %v9466 = vunpack.c.l.b16 %v9402
    %v9467 = vunpack.c.l.b16 %v9403
    %v9468 = vunpack.c.l.b16 %v9404
    %v9469 = vunpack.c.l.b16 %v9405
    %v9470 = vunpack.c.l.b16 %v9406
    %v9471 = vunpack.c.l.b16 %v9407
    %v9472 = vunpack.c.l.b16 %v9408
    %v9473 = vunpack.c.l.b16 %v9409
    %v9474 = vpack.c.b16 %v9443, %v9442
    %v9475 = vpack.c.b16 %v9445, %v9444
    %v9476 = vpack.c.b16 %v9447, %v9446
    %v9477 = vpack.c.b16 %v9449, %v9448
    %v9478 = vpack.c.b16 %v9451, %v9450
    %v9479 = vpack.c.b16 %v9453, %v9452
    %v9480 = vpack.c.b16 %v9455, %v9454
    %v9481 = vpack.c.b16 %v9457, %v9456
    %v9482 = vpack.c.b16 %v9459, %v9458
    %v9483 = vpack.c.b16 %v9461, %v9460
    %v9484 = vpack.c.b16 %v9463, %v9462
    %v9485 = vpack.c.b16 %v9465, %v9464
    %v9486 = vpack.c.b16 %v9467, %v9466
    %v9487 = vpack.c.b16 %v9469, %v9468
    %v9488 = vpack.c.b16 %v9471, %v9470
    %v9489 = vpack.c.b16 %v9473, %v9472
    %9506 = vmatprep.subr.bf16.mxu0 0
    %9507 = vmatpush1.bf16.msra.mxu0 %v9481
    %9508 = vmatprep.subr.bf16.mxu0 0
    %9509 = vmatpush1.bf16.msra.mxu0 %v9480
    %9510 = vmatprep.subr.bf16.mxu0 0
    %9511 = vmatpush1.bf16.msra.mxu0 %v9479
    %9512 = vmatprep.subr.bf16.mxu0 0
    %9513 = vmatpush1.bf16.msra.mxu0 %v9478
    %9514 = vmatprep.subr.bf16.mxu0 0
    %9515 = vmatpush1.bf16.msra.mxu0 %v9477
    %9516 = vmatprep.subr.bf16.mxu0 0
    %9517 = vmatpush1.bf16.msra.mxu0 %v9476
    %9518 = vmatprep.subr.bf16.mxu0 0
    %9519 = vmatpush1.bf16.msra.mxu0 %v9475
    %9520 = vmatprep.subr.bf16.mxu0 0
    %9521 = vmatpush1.bf16.msra.mxu0 %v9474
    %9522 = vmatprep.subr.bf16.mxu0 0
    %9523 = vmatpush2.bf16.msra.mxu0 %v9489
    %9524 = vmatprep.subr.bf16.mxu0 0
    %9525 = vmatpush2.bf16.msra.mxu0 %v9488
    %9526 = vmatprep.subr.bf16.mxu0 0
    %9527 = vmatpush2.bf16.msra.mxu0 %v9487
    %9528 = vmatprep.subr.bf16.mxu0 0
    %9529 = vmatpush2.bf16.msra.mxu0 %v9486
    %9530 = vmatprep.subr.bf16.mxu0 0
    %9531 = vmatpush2.bf16.msra.mxu0 %v9485
    %9532 = vmatprep.subr.bf16.mxu0 0
    %9533 = vmatpush2.bf16.msra.mxu0 %v9484
    %9534 = vmatprep.subr.bf16.mxu0 0
    %9535 = vmatpush2.bf16.msra.mxu0 %v9483
    %9536 = vmatprep.subr.bf16.mxu0 0
    %9537 = vmatpush2.bf16.msra.mxu0 %v9482
    %9538 = vmatprep.mubr.bf16.mxu0 %v9374
    %9539 = vmatmul.mubr.bf16.gmra.mxu0 %v9373
    %v9540 = vpop.f32.mrf.mxu0
    %v9541 = vadd.f32 0.0, %v9540
    %v9542 = vpop.f32.mrf.mxu0
    %v9543 = vpop.f32.mrf.mxu0
    %v9544 = vadd.f32 0.0, %v9543
    %v9545 = vpop.f32.mrf.mxu0
    %9546 = vmatprep.mubr.bf16.mxu0 %v9376
    %9547 = vmatmul.mubr.bf16.gmra.mxu0 %v9375
    %v9548 = vpop.f32.mrf.mxu0
    %v9549 = vadd.f32 0.0, %v9548
    %v9550 = vpop.f32.mrf.mxu0
    %v9551 = vpop.f32.mrf.mxu0
    %v9552 = vadd.f32 0.0, %v9551
    %v9553 = vpop.f32.mrf.mxu0
    %9554 = vdwg.mxu0
    %v9555 = vadd.f32 %v9317, %v9541
    %v9556 = vadd.f32 %v9318, %v9544
    %v9557 = vadd.f32 %v9319, %v9549
    %v9558 = vadd.f32 %v9320, %v9552
    %v9559 = vld [vmem:[#allocation4] sm:$0xfc]
    %v9560 = vld [vmem:[#allocation4 + $0x8] sm:$0xfc]
    %v9561 = vld [vmem:[#allocation4 + $0x20] sm:$0x3]
    %v9562 = vld [vmem:[#allocation4 + $0x28] sm:$0x3]
    %v9563 = vld [vmem:[#allocation4 + $0x30] sm:$0xfc]
    %v9564 = vld [vmem:[#allocation4 + $0x38] sm:$0xfc]
    %v9565 = vld [vmem:[#allocation4 + $0x50] sm:$0x3]
    %v9566 = vld [vmem:[#allocation4 + $0x58] sm:$0x3]
    %v9575 = vrot.slane %v9559, 2
    %v9576 = vrot.slane %v9323, 2
    %v9577 = vsel %vm1915, %v9575, %v9576
    %v9578 = vrot.slane %v9560, 2
    %v9579 = vrot.slane %v9324, 2
    %v9580 = vsel %vm1915, %v9578, %v9579
    %v9581 = vrot.slane %v9561, 2
    %v9582 = vsel %vm1915, %v9576, %v9581
    %v9583 = vrot.slane %v9562, 2
    %v9584 = vsel %vm1915, %v9579, %v9583
    %v9585 = vrot.slane %v9563, 2
    %v9586 = vrot.slane %v9329, 2
    %v9587 = vsel %vm1915, %v9585, %v9586
    %v9588 = vrot.slane %v9564, 2
    %v9589 = vrot.slane %v9330, 2
    %v9590 = vsel %vm1915, %v9588, %v9589
    %v9591 = vrot.slane %v9565, 2
    %v9592 = vsel %vm1915, %v9586, %v9591
    %v9593 = vrot.slane %v9566, 2
    %v9594 = vsel %vm1915, %v9589, %v9593
    %v9603 = vpack.c.bf16 %v9582, %v9577
    %v9604 = vpack.c.bf16 %v9584, %v9580
    %v9605 = vpack.c.bf16 %v9592, %v9587
    %v9606 = vpack.c.bf16 %v9594, %v9590
    %s9607 = scalar_lea.vmem [#allocation16], 256
    %v9608 = vld [vmem:[%s9607] sm:$0xf]
    %v9609 = vld [vmem:[%s9607 + $0x4] sm:$0xf]
    %v9610 = vld [vmem:[%s9607 + $0x8] sm:$0xf]
    %v9611 = vld [vmem:[%s9607 + $0xc] sm:$0xf]
    %v9612 = vld [vmem:[%s9607 + $0x10] sm:$0xf]
    %v9613 = vld [vmem:[%s9607 + $0x14] sm:$0xf]
    %v9614 = vld [vmem:[%s9607 + $0x18] sm:$0xf]
    %v9615 = vld [vmem:[%s9607 + $0x1c] sm:$0xf]
    %v9616 = vld [vmem:[%s9607 + $0x20] sm:$0xf]
    %v9617 = vld [vmem:[%s9607 + $0x24] sm:$0xf]
    %v9618 = vld [vmem:[%s9607 + $0x28] sm:$0xf]
    %v9619 = vld [vmem:[%s9607 + $0x2c] sm:$0xf]
    %v9620 = vld [vmem:[%s9607 + $0x30] sm:$0xf]
    %v9621 = vld [vmem:[%s9607 + $0x34] sm:$0xf]
    %v9622 = vld [vmem:[%s9607 + $0x38] sm:$0xf]
    %v9623 = vld [vmem:[%s9607 + $0x3c] sm:$0xf]
    %v9624 = vld [vmem:[%s9607 + $0x40] sm:$0xf]
    %v9625 = vld [vmem:[%s9607 + $0x44] sm:$0xf]
    %v9626 = vld [vmem:[%s9607 + $0x48] sm:$0xf]
    %v9627 = vld [vmem:[%s9607 + $0x4c] sm:$0xf]
    %v9628 = vld [vmem:[%s9607 + $0x50] sm:$0xf]
    %v9629 = vld [vmem:[%s9607 + $0x54] sm:$0xf]
    %v9630 = vld [vmem:[%s9607 + $0x58] sm:$0xf]
    %v9631 = vld [vmem:[%s9607 + $0x5c] sm:$0xf]
    %v9632 = vld [vmem:[%s9607 + $0x60] sm:$0xf]
    %v9633 = vld [vmem:[%s9607 + $0x64] sm:$0xf]
    %v9634 = vld [vmem:[%s9607 + $0x68] sm:$0xf]
    %v9635 = vld [vmem:[%s9607 + $0x6c] sm:$0xf]
    %v9636 = vld [vmem:[%s9607 + $0x70] sm:$0xf]
    %v9637 = vld [vmem:[%s9607 + $0x74] sm:$0xf]
    %v9638 = vld [vmem:[%s9607 + $0x78] sm:$0xf]
    %v9639 = vld [vmem:[%s9607 + $0x7c] sm:$0xf]
    %v9672 = vunpack.c.l.b16 %v9608
    %v9673 = vunpack.c.l.b16 %v9609
    %v9674 = vunpack.c.l.b16 %v9610
    %v9675 = vunpack.c.l.b16 %v9611
    %v9676 = vunpack.c.l.b16 %v9612
    %v9677 = vunpack.c.l.b16 %v9613
    %v9678 = vunpack.c.l.b16 %v9614
    %v9679 = vunpack.c.l.b16 %v9615
    %v9680 = vunpack.c.l.b16 %v9616
    %v9681 = vunpack.c.l.b16 %v9617
    %v9682 = vunpack.c.l.b16 %v9618
    %v9683 = vunpack.c.l.b16 %v9619
    %v9684 = vunpack.c.l.b16 %v9620
    %v9685 = vunpack.c.l.b16 %v9621
    %v9686 = vunpack.c.l.b16 %v9622
    %v9687 = vunpack.c.l.b16 %v9623
    %v9688 = vunpack.c.l.b16 %v9624
    %v9689 = vunpack.c.l.b16 %v9625
    %v9690 = vunpack.c.l.b16 %v9626
    %v9691 = vunpack.c.l.b16 %v9627
    %v9692 = vunpack.c.l.b16 %v9628
    %v9693 = vunpack.c.l.b16 %v9629
    %v9694 = vunpack.c.l.b16 %v9630
    %v9695 = vunpack.c.l.b16 %v9631
    %v9696 = vunpack.c.l.b16 %v9632
    %v9697 = vunpack.c.l.b16 %v9633
    %v9698 = vunpack.c.l.b16 %v9634
    %v9699 = vunpack.c.l.b16 %v9635
    %v9700 = vunpack.c.l.b16 %v9636
    %v9701 = vunpack.c.l.b16 %v9637
    %v9702 = vunpack.c.l.b16 %v9638
    %v9703 = vunpack.c.l.b16 %v9639
    %v9704 = vpack.c.b16 %v9673, %v9672
    %v9705 = vpack.c.b16 %v9675, %v9674
    %v9706 = vpack.c.b16 %v9677, %v9676
    %v9707 = vpack.c.b16 %v9679, %v9678
    %v9708 = vpack.c.b16 %v9681, %v9680
    %v9709 = vpack.c.b16 %v9683, %v9682
    %v9710 = vpack.c.b16 %v9685, %v9684
    %v9711 = vpack.c.b16 %v9687, %v9686
    %v9712 = vpack.c.b16 %v9689, %v9688
    %v9713 = vpack.c.b16 %v9691, %v9690
    %v9714 = vpack.c.b16 %v9693, %v9692
    %v9715 = vpack.c.b16 %v9695, %v9694
    %v9716 = vpack.c.b16 %v9697, %v9696
    %v9717 = vpack.c.b16 %v9699, %v9698
    %v9718 = vpack.c.b16 %v9701, %v9700
    %v9719 = vpack.c.b16 %v9703, %v9702
    %9736 = vmatprep.subr.bf16.mxu0 0
    %9737 = vmatpush1.bf16.msra.mxu0 %v9711
    %9738 = vmatprep.subr.bf16.mxu0 0
    %9739 = vmatpush1.bf16.msra.mxu0 %v9710
    %9740 = vmatprep.subr.bf16.mxu0 0
    %9741 = vmatpush1.bf16.msra.mxu0 %v9709
    %9742 = vmatprep.subr.bf16.mxu0 0
    %9743 = vmatpush1.bf16.msra.mxu0 %v9708
    %9744 = vmatprep.subr.bf16.mxu0 0
    %9745 = vmatpush1.bf16.msra.mxu0 %v9707
    %9746 = vmatprep.subr.bf16.mxu0 0
    %9747 = vmatpush1.bf16.msra.mxu0 %v9706
    %9748 = vmatprep.subr.bf16.mxu0 0
    %9749 = vmatpush1.bf16.msra.mxu0 %v9705
    %9750 = vmatprep.subr.bf16.mxu0 0
    %9751 = vmatpush1.bf16.msra.mxu0 %v9704
    %9752 = vmatprep.subr.bf16.mxu0 0
    %9753 = vmatpush2.bf16.msra.mxu0 %v9719
    %9754 = vmatprep.subr.bf16.mxu0 0
    %9755 = vmatpush2.bf16.msra.mxu0 %v9718
    %9756 = vmatprep.subr.bf16.mxu0 0
    %9757 = vmatpush2.bf16.msra.mxu0 %v9717
    %9758 = vmatprep.subr.bf16.mxu0 0
    %9759 = vmatpush2.bf16.msra.mxu0 %v9716
    %9760 = vmatprep.subr.bf16.mxu0 0
    %9761 = vmatpush2.bf16.msra.mxu0 %v9715
    %9762 = vmatprep.subr.bf16.mxu0 0
    %9763 = vmatpush2.bf16.msra.mxu0 %v9714
    %9764 = vmatprep.subr.bf16.mxu0 0
    %9765 = vmatpush2.bf16.msra.mxu0 %v9713
    %9766 = vmatprep.subr.bf16.mxu0 0
    %9767 = vmatpush2.bf16.msra.mxu0 %v9712
    %9768 = vmatprep.mubr.bf16.mxu0 %v9604
    %9769 = vmatmul.mubr.bf16.gmra.mxu0 %v9603
    %v9770 = vpop.f32.mrf.mxu0
    %v9771 = vadd.f32 0.0, %v9770
    %v9772 = vpop.f32.mrf.mxu0
    %v9773 = vpop.f32.mrf.mxu0
    %v9774 = vadd.f32 0.0, %v9773
    %v9775 = vpop.f32.mrf.mxu0
    %9776 = vmatprep.mubr.bf16.mxu0 %v9606
    %9777 = vmatmul.mubr.bf16.gmra.mxu0 %v9605
    %v9778 = vpop.f32.mrf.mxu0
    %v9779 = vadd.f32 0.0, %v9778
    %v9780 = vpop.f32.mrf.mxu0
    %v9781 = vpop.f32.mrf.mxu0
    %v9782 = vadd.f32 0.0, %v9781
    %v9783 = vpop.f32.mrf.mxu0
    %9784 = vdwg.mxu0
    %v9785 = vadd.f32 %v9555, %v9771
    %v9786 = vadd.f32 %v9556, %v9774
    %v9787 = vadd.f32 %v9557, %v9779
    %v9788 = vadd.f32 %v9558, %v9782
    %v9789 = vld [vmem:[%s17] sm:$0xff]
    %v9790 = vld [vmem:[%s17 + $0x8] sm:$0xff]
    %v9791 = vld [vmem:[%s17 + $0x10] sm:$0xff]
    %v9792 = vld [vmem:[%s17 + $0x18] sm:$0xff]
    %v9793 = vld [vmem:[%s17 + $0x20] sm:$0xff]
    %v9794 = vld [vmem:[%s17 + $0x28] sm:$0xff]
    %v9795 = vld [vmem:[%s17 + $0x30] sm:$0xff]
    %v9796 = vld [vmem:[%s17 + $0x38] sm:$0xff]
    %v9797 = vld [vmem:[%s17 + $0x40] sm:$0xff]
    %v9798 = vld [vmem:[%s17 + $0x48] sm:$0xff]
    %v9799 = vld [vmem:[%s17 + $0x50] sm:$0xff]
    %v9800 = vld [vmem:[%s17 + $0x58] sm:$0xff]
    %v9801 = vld [vmem:[%s17 + $0x60] sm:$0xff]
    %v9802 = vld [vmem:[%s17 + $0x68] sm:$0xff]
    %v9803 = vld [vmem:[%s17 + $0x70] sm:$0xff]
    %v9804 = vld [vmem:[%s17 + $0x78] sm:$0xff]
    %9805 = vmatprep.subr.mxu0 0.0
    %9806 = vmatpush1.msra.mxu0 %v9804
    %9807 = vmatprep.subr.mxu0 0.0
    %9808 = vmatpush1.msra.mxu0 %v9803
    %9809 = vmatprep.subr.mxu0 0.0
    %9810 = vmatpush1.msra.mxu0 %v9802
    %9811 = vmatprep.subr.mxu0 0.0
    %9812 = vmatpush1.msra.mxu0 %v9801
    %9813 = vmatprep.subr.mxu0 0.0
    %9814 = vmatpush1.msra.mxu0 %v9800
    %9815 = vmatprep.subr.mxu0 0.0
    %9816 = vmatpush1.msra.mxu0 %v9799
    %9817 = vmatprep.subr.mxu0 0.0
    %9818 = vmatpush1.msra.mxu0 %v9798
    %9819 = vmatprep.subr.mxu0 0.0
    %9820 = vmatpush1.msra.mxu0 %v9797
    %9821 = vmatprep.subr.mxu0 0.0
    %9822 = vmatpush1.msra.mxu0 %v9796
    %9823 = vmatprep.subr.mxu0 0.0
    %9824 = vmatpush1.msra.mxu0 %v9795
    %9825 = vmatprep.subr.mxu0 0.0
    %9826 = vmatpush1.msra.mxu0 %v9794
    %9827 = vmatprep.subr.mxu0 0.0
    %9828 = vmatpush1.msra.mxu0 %v9793
    %9829 = vmatprep.subr.mxu0 0.0
    %9830 = vmatpush1.msra.mxu0 %v9792
    %9831 = vmatprep.subr.mxu0 0.0
    %9832 = vmatpush1.msra.mxu0 %v9791
    %9833 = vmatprep.subr.mxu0 0.0
    %9834 = vmatpush1.msra.mxu0 %v9790
    %9835 = vmatprep.subr.mxu0 0.0
    %9836 = vmatpush1.msra.mxu0 %v9789
    %9837 = vmatprep.subr.mxu0 0.0
    %9838 = vmatpush2.msra.mxu0 0.0
    %9839 = vmatprep.subr.mxu0 0.0
    %9840 = vmatpush2.msra.mxu0 0.0
    %9841 = vmatprep.subr.mxu0 0.0
    %9842 = vmatpush2.msra.mxu0 0.0
    %9843 = vmatprep.subr.mxu0 0.0
    %9844 = vmatpush2.msra.mxu0 0.0
    %9845 = vmatprep.subr.mxu0 0.0
    %9846 = vmatpush2.msra.mxu0 0.0
    %9847 = vmatprep.subr.mxu0 0.0
    %9848 = vmatpush2.msra.mxu0 0.0
    %9849 = vmatprep.subr.mxu0 0.0
    %9850 = vmatpush2.msra.mxu0 0.0
    %9851 = vmatprep.subr.mxu0 0.0
    %9852 = vmatpush2.msra.mxu0 0.0
    %9853 = vmatprep.subr.mxu0 0.0
    %9854 = vmatpush2.msra.mxu0 0.0
    %9855 = vmatprep.subr.mxu0 0.0
    %9856 = vmatpush2.msra.mxu0 0.0
    %9857 = vmatprep.subr.mxu0 0.0
    %9858 = vmatpush2.msra.mxu0 0.0
    %9859 = vmatprep.subr.mxu0 0.0
    %9860 = vmatpush2.msra.mxu0 0.0
    %9861 = vmatprep.subr.mxu0 0.0
    %9862 = vmatpush2.msra.mxu0 0.0
    %9863 = vmatprep.subr.mxu0 0.0
    %9864 = vmatpush2.msra.mxu0 0.0
    %9865 = vmatprep.subr.mxu0 0.0
    %9866 = vmatpush2.msra.mxu0 0.0
    %9867 = vmatprep.subr.mxu0 0.0
    %9868 = vmatpush2.msra.mxu0 0.0
    %9869 = vmatprep.mubr.f32.mxu0 0.0
    %9870 = vmatmul.mubr.f32.gmra.mxu0 %v9785
    %v9871 = vpop.f32.mrf.mxu0
    %v9872 = vadd.f32 0.0, %v9871
    %v9873 = vpop.f32.mrf.mxu0
    %9874 = vmatprep.mubr.f32.mxu0 0.0
    %9875 = vmatmul.mubr.f32.gmra.mxu0 %v9786
    %v9876 = vpop.f32.mrf.mxu0
    %v9877 = vadd.f32 0.0, %v9876
    %v9878 = vpop.f32.mrf.mxu0
    %9879 = vmatprep.mubr.f32.mxu0 0.0
    %9880 = vmatmul.mubr.f32.gmra.mxu0 %v9787
    %v9881 = vpop.f32.mrf.mxu0
    %v9882 = vadd.f32 0.0, %v9881
    %v9883 = vpop.f32.mrf.mxu0
    %9884 = vmatprep.mubr.f32.mxu0 0.0
    %9885 = vmatmul.mubr.f32.gmra.mxu0 %v9788
    %v9886 = vpop.f32.mrf.mxu0
    %v9887 = vadd.f32 0.0, %v9886
    %v9888 = vpop.f32.mrf.mxu0
    %9889 = vdwg.mxu0
    %v9890 = vmul.f32 %v9785, %v9785
    %v9891 = vmul.f32 %v9786, %v9786
    %v9892 = vmul.f32 %v9787, %v9787
    %v9893 = vmul.f32 %v9788, %v9788
    %9894 = vmatprep.subr.mxu0 0.0
    %9895 = vmatpush1.msra.mxu0 %v9804
    %9896 = vmatprep.subr.mxu0 0.0
    %9897 = vmatpush1.msra.mxu0 %v9803
    %9898 = vmatprep.subr.mxu0 0.0
    %9899 = vmatpush1.msra.mxu0 %v9802
    %9900 = vmatprep.subr.mxu0 0.0
    %9901 = vmatpush1.msra.mxu0 %v9801
    %9902 = vmatprep.subr.mxu0 0.0
    %9903 = vmatpush1.msra.mxu0 %v9800
    %9904 = vmatprep.subr.mxu0 0.0
    %9905 = vmatpush1.msra.mxu0 %v9799
    %9906 = vmatprep.subr.mxu0 0.0
    %9907 = vmatpush1.msra.mxu0 %v9798
    %9908 = vmatprep.subr.mxu0 0.0
    %9909 = vmatpush1.msra.mxu0 %v9797
    %9910 = vmatprep.subr.mxu0 0.0
    %9911 = vmatpush1.msra.mxu0 %v9796
    %9912 = vmatprep.subr.mxu0 0.0
    %9913 = vmatpush1.msra.mxu0 %v9795
    %9914 = vmatprep.subr.mxu0 0.0
    %9915 = vmatpush1.msra.mxu0 %v9794
    %9916 = vmatprep.subr.mxu0 0.0
    %9917 = vmatpush1.msra.mxu0 %v9793
    %9918 = vmatprep.subr.mxu0 0.0
    %9919 = vmatpush1.msra.mxu0 %v9792
    %9920 = vmatprep.subr.mxu0 0.0
    %9921 = vmatpush1.msra.mxu0 %v9791
    %9922 = vmatprep.subr.mxu0 0.0
    %9923 = vmatpush1.msra.mxu0 %v9790
    %9924 = vmatprep.subr.mxu0 0.0
    %9925 = vmatpush1.msra.mxu0 %v9789
    %9926 = vmatprep.subr.mxu0 0.0
    %9927 = vmatpush2.msra.mxu0 0.0
    %9928 = vmatprep.subr.mxu0 0.0
    %9929 = vmatpush2.msra.mxu0 0.0
    %9930 = vmatprep.subr.mxu0 0.0
    %9931 = vmatpush2.msra.mxu0 0.0
    %9932 = vmatprep.subr.mxu0 0.0
    %9933 = vmatpush2.msra.mxu0 0.0
    %9934 = vmatprep.subr.mxu0 0.0
    %9935 = vmatpush2.msra.mxu0 0.0
    %9936 = vmatprep.subr.mxu0 0.0
    %9937 = vmatpush2.msra.mxu0 0.0
    %9938 = vmatprep.subr.mxu0 0.0
    %9939 = vmatpush2.msra.mxu0 0.0
    %9940 = vmatprep.subr.mxu0 0.0
    %9941 = vmatpush2.msra.mxu0 0.0
    %9942 = vmatprep.subr.mxu0 0.0
    %9943 = vmatpush2.msra.mxu0 0.0
    %9944 = vmatprep.subr.mxu0 0.0
    %9945 = vmatpush2.msra.mxu0 0.0
    %9946 = vmatprep.subr.mxu0 0.0
    %9947 = vmatpush2.msra.mxu0 0.0
    %9948 = vmatprep.subr.mxu0 0.0
    %9949 = vmatpush2.msra.mxu0 0.0
    %9950 = vmatprep.subr.mxu0 0.0
    %9951 = vmatpush2.msra.mxu0 0.0
    %9952 = vmatprep.subr.mxu0 0.0
    %9953 = vmatpush2.msra.mxu0 0.0
    %9954 = vmatprep.subr.mxu0 0.0
    %9955 = vmatpush2.msra.mxu0 0.0
    %9956 = vmatprep.subr.mxu0 0.0
    %9957 = vmatpush2.msra.mxu0 0.0
    %9958 = vmatprep.mubr.f32.mxu0 0.0
    %9959 = vmatmul.mubr.f32.gmra.mxu0 %v9890
    %v9960 = vpop.f32.mrf.mxu0
    %v9961 = vadd.f32 0.0, %v9960
    %v9962 = vpop.f32.mrf.mxu0
    %9963 = vmatprep.mubr.f32.mxu0 0.0
    %9964 = vmatmul.mubr.f32.gmra.mxu0 %v9891
    %v9965 = vpop.f32.mrf.mxu0
    %v9966 = vadd.f32 0.0, %v9965
    %v9967 = vpop.f32.mrf.mxu0
    %9968 = vmatprep.mubr.f32.mxu0 0.0
    %9969 = vmatmul.mubr.f32.gmra.mxu0 %v9892
    %v9970 = vpop.f32.mrf.mxu0
    %v9971 = vadd.f32 0.0, %v9970
    %v9972 = vpop.f32.mrf.mxu0
    %9973 = vmatprep.mubr.f32.mxu0 0.0
    %9974 = vmatmul.mubr.f32.gmra.mxu0 %v9893
    %v9975 = vpop.f32.mrf.mxu0
    %v9976 = vadd.f32 0.0, %v9975
    %v9977 = vpop.f32.mrf.mxu0
    %9978 = vdwg.mxu0
    %vm9979 = vcmask 64512
    %v9980 = vsel %vm9979, %v9872, 0.0
    %v9981 = vsel %vm9979, %v9877, 0.0
    %v9982 = vadd.f32 %v9980, %v9981
    %v9983 = vsel %vm9979, %v9882, 0.0
    %v9984 = vadd.f32 %v9982, %v9983
    %v9985 = vsel %vm9979, %v9887, 0.0
    %v9986 = vadd.f32 %v9984, %v9985
    %v9987 = vrot.slane %v9986, 4
    %v9988 = vadd.f32 %v9986, %v9987
    %v9989 = vrot.slane %v9988, 2
    %v9990 = vadd.f32 %v9988, %v9989
    %v9991 = vrot.slane %v9990, 1
    %v9992 = vadd.f32 %v9990, %v9991
    %v9993 = vmul.f32 %v9992, 0.001953125
    %v9994 = vsel %vm9979, %v9961, 0.0
    %v9995 = vsel %vm9979, %v9966, 0.0
    %v9996 = vadd.f32 %v9994, %v9995
    %v9997 = vsel %vm9979, %v9971, 0.0
    %v9998 = vadd.f32 %v9996, %v9997
    %v9999 = vsel %vm9979, %v9976, 0.0
    %v10000 = vadd.f32 %v9998, %v9999
    %v10001 = vrot.slane %v10000, 4
    %v10002 = vadd.f32 %v10000, %v10001
    %v10003 = vrot.slane %v10002, 2
    %v10004 = vadd.f32 %v10002, %v10003
    %v10005 = vrot.slane %v10004, 1
    %v10006 = vadd.f32 %v10004, %v10005
    %v10007 = vmul.f32 %v10006, 0.001953125
    %v10008 = vmul.f32 %v9993, %v9993
    %v10009 = vsub.f32 %v10007, %v10008
    %v10010 = vmax.f32 %v10009, 0.0
    %v10011 = vadd.f32 %v10010, 1.001e-05
    %v10012 = vrsqrt.pop %v10011
    %v10013 = vld [vmem:[#allocation21] sm:$0x1]
    %v10014 = vmul.f32 %v10013, %v10012
    %v10015 = vld [vmem:[#allocation22] sm:$0x1]
    %v10016 = vmul.f32 %v9993, %v10014
    %v10017 = vsub.f32 %v10015, %v10016
    %v10019 = vlaneseq
    %v10020 = vshrl.u32 %v10019, 7
    %v10021 = vsub.s32 0, %v10020
    %v10022 = vrot.slane %v10014, %v10021
    %10023 = vrot.lane.b32.xlu0 %v10022, 8
    %v10024 = vpop.permute.xlu0 %10023
    %10026 = vrot.lane.b32.xlu0 %v10022, 16
    %v10027 = vpop.permute.xlu0 %10026
    %10029 = vrot.lane.b32.xlu0 %v10022, 24
    %v10030 = vpop.permute.xlu0 %10029
    %10032 = vrot.lane.b32.xlu0 %v10022, 32
    %v10033 = vpop.permute.xlu0 %10032
    %10035 = vrot.lane.b32.xlu0 %v10022, 40
    %v10036 = vpop.permute.xlu0 %10035
    %10038 = vrot.lane.b32.xlu0 %v10022, 48
    %v10039 = vpop.permute.xlu0 %10038
    %10041 = vrot.lane.b32.xlu0 %v10022, 56
    %v10042 = vpop.permute.xlu0 %10041
    %10044 = vrot.lane.b32.xlu0 %v10022, 64
    %v10045 = vpop.permute.xlu0 %10044
    %10047 = vrot.lane.b32.xlu0 %v10022, 72
    %v10048 = vpop.permute.xlu0 %10047
    %10050 = vrot.lane.b32.xlu0 %v10022, 80
    %v10051 = vpop.permute.xlu0 %10050
    %10053 = vrot.lane.b32.xlu0 %v10022, 88
    %v10054 = vpop.permute.xlu0 %10053
    %10056 = vrot.lane.b32.xlu0 %v10022, 96
    %v10057 = vpop.permute.xlu0 %10056
    %10059 = vrot.lane.b32.xlu0 %v10022, 104
    %v10060 = vpop.permute.xlu0 %10059
    %10062 = vrot.lane.b32.xlu0 %v10022, 112
    %v10063 = vpop.permute.xlu0 %10062
    %10065 = vrot.lane.b32.xlu0 %v10022, 120
    %v10066 = vpop.permute.xlu0 %10065
    %v10068 = vsel %vm9979, %v10014, %v10024
    %v10069 = vsel %vm5055, %v10068, %v10027
    %vm10070 = vcmask 195584
    %v10071 = vsel %vm10070, %v10069, %v10030
    %v10072 = vsel %vm1631, %v10071, %v10033
    %vm10073 = vcmask 326656
    %v10074 = vsel %vm10073, %v10072, %v10036
    %v10075 = vsel %vm5122, %v10074, %v10039
    %vm10076 = vcmask 457728
    %v10077 = vsel %vm10076, %v10075, %v10042
    %v10078 = vsel %vm1685, %v10077, %v10045
    %vm10079 = vcmask 588800
    %v10080 = vsel %vm10079, %v10078, %v10048
    %v10081 = vsel %vm5125, %v10080, %v10051
    %vm10082 = vcmask 719872
    %v10083 = vsel %vm10082, %v10081, %v10054
    %v10084 = vsel %vm1687, %v10083, %v10057
    %vm10085 = vcmask 850944
    %v10086 = vsel %vm10085, %v10084, %v10060
    %v10087 = vsel %vm5128, %v10086, %v10063
    %vm10088 = vcmask 982016
    %v10089 = vsel %vm10088, %v10087, %v10066
    %v10091 = vlaneseq
    %v10092 = vshrl.u32 %v10091, 7
    %v10093 = vsub.s32 0, %v10092
    %v10094 = vrot.slane %v10017, %v10093
    %10095 = vrot.lane.b32.xlu0 %v10094, 8
    %v10096 = vpop.permute.xlu0 %10095
    %10098 = vrot.lane.b32.xlu0 %v10094, 16
    %v10099 = vpop.permute.xlu0 %10098
    %10101 = vrot.lane.b32.xlu0 %v10094, 24
    %v10102 = vpop.permute.xlu0 %10101
    %10104 = vrot.lane.b32.xlu0 %v10094, 32
    %v10105 = vpop.permute.xlu0 %10104
    %10107 = vrot.lane.b32.xlu0 %v10094, 40
    %v10108 = vpop.permute.xlu0 %10107
    %10110 = vrot.lane.b32.xlu0 %v10094, 48
    %v10111 = vpop.permute.xlu0 %10110
    %10113 = vrot.lane.b32.xlu0 %v10094, 56
    %v10114 = vpop.permute.xlu0 %10113
    %10116 = vrot.lane.b32.xlu0 %v10094, 64
    %v10117 = vpop.permute.xlu0 %10116
    %10119 = vrot.lane.b32.xlu0 %v10094, 72
    %v10120 = vpop.permute.xlu0 %10119
    %10122 = vrot.lane.b32.xlu0 %v10094, 80
    %v10123 = vpop.permute.xlu0 %10122
    %10125 = vrot.lane.b32.xlu0 %v10094, 88
    %v10126 = vpop.permute.xlu0 %10125
    %10128 = vrot.lane.b32.xlu0 %v10094, 96
    %v10129 = vpop.permute.xlu0 %10128
    %10131 = vrot.lane.b32.xlu0 %v10094, 104
    %v10132 = vpop.permute.xlu0 %10131
    %10134 = vrot.lane.b32.xlu0 %v10094, 112
    %v10135 = vpop.permute.xlu0 %10134
    %10137 = vrot.lane.b32.xlu0 %v10094, 120
    %v10138 = vpop.permute.xlu0 %10137
    %v10140 = vsel %vm9979, %v10017, %v10096
    %v10141 = vsel %vm5055, %v10140, %v10099
    %v10142 = vsel %vm10070, %v10141, %v10102
    %v10143 = vsel %vm1631, %v10142, %v10105
    %v10144 = vsel %vm10073, %v10143, %v10108
    %v10145 = vsel %vm5122, %v10144, %v10111
    %v10146 = vsel %vm10076, %v10145, %v10114
    %v10147 = vsel %vm1685, %v10146, %v10117
    %v10148 = vsel %vm10079, %v10147, %v10120
    %v10149 = vsel %vm5125, %v10148, %v10123
    %v10150 = vsel %vm10082, %v10149, %v10126
    %v10151 = vsel %vm1687, %v10150, %v10129
    %v10152 = vsel %vm10085, %v10151, %v10132
    %v10153 = vsel %vm5128, %v10152, %v10135
    %v10154 = vsel %vm10088, %v10153, %v10138
    %v10155 = vlaneseq
    %v10156 = vshrl.u32 %v10155, 7
    %v10157 = vsub.s32 0, %v10156
    %v10158 = vrot.slane %v10089, %v10157
    %v10159 = vmul.f32 %v9785, %v10158
    %v10160 = vmul.f32 %v9786, %v10158
    %v10161 = vmul.f32 %v9787, %v10158
    %v10162 = vmul.f32 %v9788, %v10158
    %v10163 = vlaneseq
    %v10164 = vshrl.u32 %v10163, 7
    %v10165 = vsub.s32 0, %v10164
    %v10166 = vrot.slane %v10154, %v10165
    %v10167 = vadd.f32 %v10159, %v10166
    %v10168 = vadd.f32 %v10160, %v10166
    %v10169 = vadd.f32 %v10161, %v10166
    %v10170 = vadd.f32 %v10162, %v10166
    %v10171 = vmax.f32 %v10167, 0.0
    %v10172 = vmax.f32 %v10168, 0.0
    %v10173 = vmax.f32 %v10169, 0.0
    %v10174 = vmax.f32 %v10170, 0.0
    %10175 = vst [vmem:[%s18] sm:$0xff] %v10171
    %10176 = vst [vmem:[%s18 + $0x8] sm:$0xff] %v10172
    %10177 = vst [vmem:[%s18 + $0x10] sm:$0xff] %v10173
    %10178 = vst [vmem:[%s18 + $0x18] sm:$0xff] %v10174
    // Predicated region
    $region122: #{forward.1} parent=1 // pred_check
      _
    $region123: #{forward.1} parent=1 // pred_check_branch
      %10180 = sbr.rel (0) target = $region125
    $region124: #{forward.1} parent=1 // pred_region
      _
    $region125: #{forward.1} parent=1 // pred_fallthru
      _
    // Predicated region
    $region126: #{forward.1} parent=1 // pred_check
      _
    $region127: #{forward.1} parent=1 // pred_check_branch
      %10182 = sbr.rel (0) target = $region129
    $region128: #{forward.1} parent=1 // pred_region
      _
    $region129: #{forward.1} parent=1 // pred_fallthru
      _
    %10183 = vsyncpa [#allocation6], 1
    %10184 = vsyncpa [#allocation8], 1
    %10185 = vsyncpa [#allocation11], 1
    %10186 = vsyncpa [#allocation14], 1
    %10187 = vsyncpa [#allocation17], 1
    %10188 = vsyncpa [#allocation20], 1
    %10189 = vsyncpa [#allocation23], 1

</llo_original>
